<compile_context>
chip_gen: v7x
topology: tpu7x:2x2x1
jax: 0.10.0
libtpu: 0.0.40
codegen_flags: <defaults>
</compile_context>

<pallas_src>
import functools

import jax
import jax.numpy as jnp
import numpy as np
from jax.experimental import pallas as pl
from jax.experimental.pallas import tpu as pltpu


def _block3d_kernel(xp_ref, w_ref, b_ref, gamma_ref, beta_ref, gmat_ref, mask_ref,
                    *rest, tap_offsets, inv_s, eps, has_mod, approx_silu):
    """Fused conv + GroupNorm + (optional FiLM) + SiLU for one batch element.

    xp_ref   : (1, Cin_p, Sp)   zero-padded input, spatial flattened w/ padded strides
    w_ref    : (27, Cout, Cin_p) conv weight, one (Cout, Cin_p) GEMM LHS per tap
    b_ref    : (Cout, 1)         conv bias
    gamma_ref, beta_ref : (Cout, 1) GroupNorm affine params
    gmat_ref : (Cout, Cout)      group-averaging matrix (1/cpg within a group)
    mask_ref : (1, L)            1.0 on valid voxels of the padded-stride layout
    rest     : (scale_ref, shift_ref, o_ref) if has_mod else (o_ref,)
    """
    if has_mod:
        scale_ref, shift_ref, o_ref = rest
    else:
        (o_ref,) = rest

    width = o_ref.shape[-1]  # L = lane-padded output width

    # ---- Conv3d as 27 constant-offset slice loads + MXU GEMMs (f32 accumulate) ----
    acc = None
    for t, off in enumerate(tap_offsets):
        x_t = xp_ref[0, :, pl.ds(off, width)]                          # (Cin_p, L)
        y_t = jnp.dot(w_ref[t], x_t, preferred_element_type=jnp.float32)
        acc = y_t if acc is None else acc + y_t
    y = acc + b_ref[...]                                               # (Cout, L)

    # ---- GroupNorm: masked two-pass moments (mean, then E[(y-mu)^2]) ----
    mask = mask_ref[...]                                               # (1, L)
    mu_c = jnp.sum(y * mask, axis=1, keepdims=True) * inv_s            # (Cout, 1)
    mu_g = jnp.dot(gmat_ref[...], mu_c, preferred_element_type=jnp.float32)
    d = y - mu_g
    ss_c = jnp.sum(d * d * mask, axis=1, keepdims=True) * inv_s        # (Cout, 1)
    var_g = jnp.dot(gmat_ref[...], ss_c, preferred_element_type=jnp.float32)
    yn = d * jax.lax.rsqrt(var_g + eps)
    yn = yn * gamma_ref[...] + beta_ref[...]

    if has_mod:
        # FiLM modulation: x * (scale + 1) + shift
        yn = yn * (scale_ref[0] + 1.0) + shift_ref[0]

    # ---- SiLU: x * sigmoid(x); exp and reciprocal run on the EUP slot ----
    sig = pl.reciprocal(1.0 + jnp.exp(-yn), approx=approx_silu)
    o_ref[0] = (yn * sig).astype(o_ref.dtype)


def block3d_forward(x, w, b, gamma, beta, groups, scale=None, shift=None, *,
                    eps=1e-5, matmul_dtype=jnp.float32, approx_silu=False):
    """Block3D forward.

    x: (N, Cin, D, H, W)  NCDHW (PyTorch layout)
    w: (Cout, Cin, 3, 3, 3)  (PyTorch Conv3d weight layout)
    scale, shift: optional (N, Cout) FiLM modulation.
    Returns (N, Cout, D, H, W).
    """
    N, Cin, D, H, W = x.shape
    Cout = w.shape[0]
    assert Cout % groups == 0
    cpg = Cout // groups
    Dp, Hp, Wp = D + 2, H + 2, W + 2
    S = D * H * W
    has_mod = scale is not None
    if has_mod:
        assert shift is not None

    # Output lives in a "padded-stride" flat layout: voxel (d,h,w) at
    # sp = d*Hp*Wp + h*Wp + w.  Conv tap (kd,kh,kw) then reads the zero-padded
    # flat input at the constant offset sp + kd*Hp*Wp + kh*Wp + kw.
    tap_offsets = tuple(kd * Hp * Wp + kh * Wp + kw
                        for kd in range(3) for kh in range(3) for kw in range(3))
    max_off = tap_offsets[-1]
    l_out = (D - 1) * Hp * Wp + (H - 1) * Wp + W        # last valid flat index + 1
    l_pad = ((l_out + 127) // 128) * 128                # lane-dense output width
    sp_in = max_off + l_pad                             # flat input length needed
    cin_p = ((Cin + 7) // 8) * 8                        # sublane-align the K dim

    # Zero-pad once (channels to cin_p, spatial halo) and flatten spatial.
    xp = jnp.pad(x, ((0, 0), (0, cin_p - Cin), (1, 1), (1, 1), (1, 1)))
    xp = xp.reshape(N, cin_p, Dp * Hp * Wp)
    if sp_in > Dp * Hp * Wp:
        xp = jnp.pad(xp, ((0, 0), (0, 0), (0, sp_in - Dp * Hp * Wp)))
    xp = xp.astype(matmul_dtype)

    # Conv weight as 27 (Cout, Cin_p) GEMM LHS tiles, (kd, kh, kw)-major.
    w_taps = jnp.transpose(w, (2, 3, 4, 0, 1)).reshape(27, Cout, Cin)
    w_taps = jnp.pad(w_taps, ((0, 0), (0, 0), (0, cin_p - Cin))).astype(matmul_dtype)

    # Validity mask over the padded-stride flat layout (1.0 on real voxels).
    sp = np.arange(l_pad)
    valid = ((sp // (Hp * Wp) < D) & ((sp // Wp) % Hp < H) & (sp % Wp < W))
    mask = jnp.asarray(valid[None, :], dtype=jnp.float32)

    # Group-averaging matrix: gmat[i, j] = 1/cpg iff channels i and j share a group.
    gid = np.arange(Cout) // cpg
    gmat = jnp.asarray((gid[:, None] == gid[None, :]).astype(np.float32) / float(cpg))

    b_col = b.reshape(Cout, 1).astype(jnp.float32)
    gamma_col = gamma.reshape(Cout, 1).astype(jnp.float32)
    beta_col = beta.reshape(Cout, 1).astype(jnp.float32)

    in_specs = [
        pl.BlockSpec((1, cin_p, sp_in), lambda n: (n, 0, 0)),   # padded flat input
        pl.BlockSpec((27, Cout, cin_p), lambda n: (0, 0, 0)),   # conv weight taps
        pl.BlockSpec((Cout, 1), lambda n: (0, 0)),              # conv bias
        pl.BlockSpec((Cout, 1), lambda n: (0, 0)),              # GN gamma
        pl.BlockSpec((Cout, 1), lambda n: (0, 0)),              # GN beta
        pl.BlockSpec((Cout, Cout), lambda n: (0, 0)),           # group-avg matrix
        pl.BlockSpec((1, l_pad), lambda n: (0, 0)),             # validity mask
    ]
    operands = [xp, w_taps, b_col, gamma_col, beta_col, gmat, mask]
    if has_mod:
        in_specs += [pl.BlockSpec((1, Cout, 1), lambda n: (n, 0, 0)),   # scale
                     pl.BlockSpec((1, Cout, 1), lambda n: (n, 0, 0))]   # shift
        operands += [scale.reshape(N, Cout, 1).astype(jnp.float32),
                     shift.reshape(N, Cout, 1).astype(jnp.float32)]

    # Explicit VMEM budget: double-buffered input/output blocks + params + headroom.
    itemsize = jnp.dtype(matmul_dtype).itemsize
    in_block = cin_p * sp_in * itemsize
    out_block = Cout * l_pad * 4
    w_bytes = 27 * Cout * cin_p * itemsize
    vmem_limit = int(min(100 * 2**20,
                         max(32 * 2**20,
                             4 * (in_block + out_block) + w_bytes + (8 << 20))))

    kernel = functools.partial(
        _block3d_kernel, tap_offsets=tap_offsets, inv_s=1.0 / float(S),
        eps=float(eps), has_mod=has_mod, approx_silu=approx_silu)

    out_flat = pl.pallas_call(
        kernel,
        out_shape=jax.ShapeDtypeStruct((N, Cout, l_pad), x.dtype),
        grid_spec=pltpu.PrefetchScalarGridSpec(
            num_scalar_prefetch=0,
            grid=(N,),
            in_specs=in_specs,
            out_specs=pl.BlockSpec((1, Cout, l_pad), lambda n: (n, 0, 0)),
        ),
        compiler_params=pltpu.CompilerParams(
            dimension_semantics=("parallel",),
            vmem_limit_bytes=vmem_limit,
        ),
    )(*operands)

    # Undo the padded-stride layout: (N, Cout, l_pad) -> (N, Cout, D, H, W).
    full = Dp * Hp * Wp
    out_flat = out_flat[:, :, :l_out]
    out_flat = jnp.pad(out_flat, ((0, 0), (0, 0), (0, full - l_out)))
    out = out_flat.reshape(N, Cout, Dp, Hp, Wp)[:, :, :D, :H, :W]
    return out


def block3d_reference(x, w, b, gamma, beta, groups, scale=None, shift=None, eps=1e-5):
    """Pure-JAX reference mirroring the PyTorch module (NCDHW layout)."""
    y = jax.lax.conv_general_dilated(
        x, w, window_strides=(1, 1, 1), padding=((1, 1), (1, 1), (1, 1)),
        dimension_numbers=("NCDHW", "OIDHW", "NCDHW"))
    y = y + b[None, :, None, None, None]
    N, C, D, H, W = y.shape
    cpg = C // groups
    yg = y.reshape(N, groups, cpg, D, H, W)
    mean = yg.mean(axis=(2, 3, 4, 5), keepdims=True)
    var = ((yg - mean) ** 2).mean(axis=(2, 3, 4, 5), keepdims=True)
    yn = ((yg - mean) * jax.lax.rsqrt(var + eps)).reshape(N, C, D, H, W)
    yn = yn * gamma[None, :, None, None, None] + beta[None, :, None, None, None]
    if scale is not None:
        yn = yn * (scale[:, :, None, None, None] + 1.0) + shift[:, :, None, None, None]
    return yn * jax.nn.sigmoid(yn)


if __name__ == "__main__":
    # Small shapes consistent with Block3D(dim=4, dim_out=8, groups=8), input NCDHW.
    N, Cin, Cout, groups = 2, 4, 8, 8
    D = H = W = 8

    key = jax.random.PRNGKey(0)
    kx, kw_, kb, ks, kt = jax.random.split(key, 5)

    x = jax.random.normal(kx, (N, Cin, D, H, W), jnp.float32)
    w = jax.random.normal(kw_, (Cout, Cin, 3, 3, 3), jnp.float32) * 0.1
    b = jax.random.normal(kb, (Cout,), jnp.float32) * 0.1
    gamma = jnp.ones((Cout,), jnp.float32)     # nn.GroupNorm default affine init
    beta = jnp.zeros((Cout,), jnp.float32)
    scale = jax.random.normal(ks, (N, Cout), jnp.float32) * 0.1
    shift = jax.random.normal(kt, (N, Cout), jnp.float32) * 0.1

    # Precise path: f32 GEMMs, exact sigmoid, with FiLM modulation.
    out = jax.block_until_ready(
        block3d_forward(x, w, b, gamma, beta, groups, scale, shift))
    ref = jax.block_until_ready(
        block3d_reference(x, w, b, gamma, beta, groups, scale, shift))
    np.testing.assert_allclose(np.asarray(out), np.asarray(ref), atol=1e-4, rtol=1e-4)

    # Fast path: bf16 MXU operands (f32 accumulate) + approx EUP sigmoid, no FiLM.
    out_fast = jax.block_until_ready(
        block3d_forward(x, w, b, gamma, beta, groups, None, None,
                        matmul_dtype=jnp.bfloat16, approx_silu=True))
    ref_nomod = jax.block_until_ready(
        block3d_reference(x, w, b, gamma, beta, groups))
    np.testing.assert_allclose(np.asarray(out_fast), np.asarray(ref_nomod),
                               atol=5e-2, rtol=5e-2)

    print("KERNEL_OK")
</pallas_src>

<mosaic_0001>
module attributes {stable_mosaic.version = 11 : i64} {
  func.func @_block3d_kernel(%arg0: i32, %arg1: memref<1x8x1118xf32, #tpu.memory_space<vmem>>, %arg2: memref<27x8x8xf32, #tpu.memory_space<vmem>>, %arg3: memref<8x1xf32, #tpu.memory_space<vmem>>, %arg4: memref<8x1xf32, #tpu.memory_space<vmem>>, %arg5: memref<8x1xf32, #tpu.memory_space<vmem>>, %arg6: memref<8x8xf32, #tpu.memory_space<vmem>>, %arg7: memref<1x896xf32, #tpu.memory_space<vmem>>, %arg8: memref<1x8x1xf32, #tpu.memory_space<vmem>>, %arg9: memref<1x8x1xf32, #tpu.memory_space<vmem>>, %arg10: memref<1x8x896xf32, #tpu.memory_space<vmem>>) attributes {dimension_semantics = [#tpu.dimension_semantics<parallel>], iteration_bounds = array<i64: 2>, scalar_prefetch = 0 : i64, scratch_operands = 0 : i64, tpu.core_type = #tpu.core_type<tc>, window_params = [{transform_indices = @transform_0, window_bounds = array<i64: 1, 8, 1118>}, {pipeline_mode = #tpu.pipeline_mode<synchronous>, transform_indices = @transform_1, window_bounds = array<i64: 27, 8, 8>}, {pipeline_mode = #tpu.pipeline_mode<synchronous>, transform_indices = @transform_2, window_bounds = array<i64: 8, 1>}, {pipeline_mode = #tpu.pipeline_mode<synchronous>, transform_indices = @transform_3, window_bounds = array<i64: 8, 1>}, {pipeline_mode = #tpu.pipeline_mode<synchronous>, transform_indices = @transform_4, window_bounds = array<i64: 8, 1>}, {pipeline_mode = #tpu.pipeline_mode<synchronous>, transform_indices = @transform_5, window_bounds = array<i64: 8, 8>}, {pipeline_mode = #tpu.pipeline_mode<synchronous>, transform_indices = @transform_6, window_bounds = array<i64: 1, 896>}, {transform_indices = @transform_7, window_bounds = array<i64: 1, 8, 1>}, {transform_indices = @transform_8, window_bounds = array<i64: 1, 8, 1>}, {transform_indices = @transform_9, window_bounds = array<i64: 1, 8, 896>}]} {
    %c0 = arith.constant 0 : index
    %c0_0 = arith.constant 0 : index
    %c0_1 = arith.constant 0 : index
    %0 = vector.load %arg1[%c0, %c0_0, %c0_1] : memref<1x8x1118xf32, #tpu.memory_space<vmem>>, vector<1x8x896xf32>
    %1 = vector.shape_cast %0 : vector<1x8x896xf32> to vector<8x896xf32>
    %c0_2 = arith.constant 0 : index
    %c0_3 = arith.constant 0 : index
    %c0_4 = arith.constant 0 : index
    %2 = vector.load %arg2[%c0_2, %c0_3, %c0_4] : memref<27x8x8xf32, #tpu.memory_space<vmem>>, vector<1x8x8xf32>
    %3 = vector.shape_cast %2 : vector<1x8x8xf32> to vector<8x8xf32>
    %cst = arith.constant dense<0.000000e+00> : vector<8x896xf32>
    %4 = tpu.matmul %3, %1, %cst {dimension_numbers = #tpu.dot_dimension_numbers<[1], [0], [0], [1], [0, 0, 1, 1], [], []>} : vector<8x8xf32>, vector<8x896xf32>, vector<8x896xf32> -> vector<8x896xf32>
    %c0_5 = arith.constant 0 : index
    %c0_6 = arith.constant 0 : index
    %c1 = arith.constant 1 : index
    %5 = vector.load %arg1[%c0_5, %c0_6, %c1] : memref<1x8x1118xf32, #tpu.memory_space<vmem>>, vector<1x8x896xf32>
    %6 = vector.shape_cast %5 : vector<1x8x896xf32> to vector<8x896xf32>
    %c1_7 = arith.constant 1 : index
    %c0_8 = arith.constant 0 : index
    %c0_9 = arith.constant 0 : index
    %7 = vector.load %arg2[%c1_7, %c0_8, %c0_9] : memref<27x8x8xf32, #tpu.memory_space<vmem>>, vector<1x8x8xf32>
    %8 = vector.shape_cast %7 : vector<1x8x8xf32> to vector<8x8xf32>
    %cst_10 = arith.constant dense<0.000000e+00> : vector<8x896xf32>
    %9 = tpu.matmul %8, %6, %cst_10 {dimension_numbers = #tpu.dot_dimension_numbers<[1], [0], [0], [1], [0, 0, 1, 1], [], []>} : vector<8x8xf32>, vector<8x896xf32>, vector<8x896xf32> -> vector<8x896xf32>
    %10 = arith.addf %4, %9 : vector<8x896xf32>
    %c0_11 = arith.constant 0 : index
    %c0_12 = arith.constant 0 : index
    %c2 = arith.constant 2 : index
    %11 = vector.load %arg1[%c0_11, %c0_12, %c2] : memref<1x8x1118xf32, #tpu.memory_space<vmem>>, vector<1x8x896xf32>
    %12 = vector.shape_cast %11 : vector<1x8x896xf32> to vector<8x896xf32>
    %c2_13 = arith.constant 2 : index
    %c0_14 = arith.constant 0 : index
    %c0_15 = arith.constant 0 : index
    %13 = vector.load %arg2[%c2_13, %c0_14, %c0_15] : memref<27x8x8xf32, #tpu.memory_space<vmem>>, vector<1x8x8xf32>
    %14 = vector.shape_cast %13 : vector<1x8x8xf32> to vector<8x8xf32>
    %cst_16 = arith.constant dense<0.000000e+00> : vector<8x896xf32>
    %15 = tpu.matmul %14, %12, %cst_16 {dimension_numbers = #tpu.dot_dimension_numbers<[1], [0], [0], [1], [0, 0, 1, 1], [], []>} : vector<8x8xf32>, vector<8x896xf32>, vector<8x896xf32> -> vector<8x896xf32>
    %16 = arith.addf %10, %15 : vector<8x896xf32>
    %c0_17 = arith.constant 0 : index
    %c0_18 = arith.constant 0 : index
    %c10 = arith.constant 10 : index
    %17 = vector.load %arg1[%c0_17, %c0_18, %c10] : memref<1x8x1118xf32, #tpu.memory_space<vmem>>, vector<1x8x896xf32>
    %18 = vector.shape_cast %17 : vector<1x8x896xf32> to vector<8x896xf32>
    %c3 = arith.constant 3 : index
    %c0_19 = arith.constant 0 : index
    %c0_20 = arith.constant 0 : index
    %19 = vector.load %arg2[%c3, %c0_19, %c0_20] : memref<27x8x8xf32, #tpu.memory_space<vmem>>, vector<1x8x8xf32>
    %20 = vector.shape_cast %19 : vector<1x8x8xf32> to vector<8x8xf32>
    %cst_21 = arith.constant dense<0.000000e+00> : vector<8x896xf32>
    %21 = tpu.matmul %20, %18, %cst_21 {dimension_numbers = #tpu.dot_dimension_numbers<[1], [0], [0], [1], [0, 0, 1, 1], [], []>} : vector<8x8xf32>, vector<8x896xf32>, vector<8x896xf32> -> vector<8x896xf32>
    %22 = arith.addf %16, %21 : vector<8x896xf32>
    %c0_22 = arith.constant 0 : index
    %c0_23 = arith.constant 0 : index
    %c11 = arith.constant 11 : index
    %23 = vector.load %arg1[%c0_22, %c0_23, %c11] : memref<1x8x1118xf32, #tpu.memory_space<vmem>>, vector<1x8x896xf32>
    %24 = vector.shape_cast %23 : vector<1x8x896xf32> to vector<8x896xf32>
    %c4 = arith.constant 4 : index
    %c0_24 = arith.constant 0 : index
    %c0_25 = arith.constant 0 : index
    %25 = vector.load %arg2[%c4, %c0_24, %c0_25] : memref<27x8x8xf32, #tpu.memory_space<vmem>>, vector<1x8x8xf32>
    %26 = vector.shape_cast %25 : vector<1x8x8xf32> to vector<8x8xf32>
    %cst_26 = arith.constant dense<0.000000e+00> : vector<8x896xf32>
    %27 = tpu.matmul %26, %24, %cst_26 {dimension_numbers = #tpu.dot_dimension_numbers<[1], [0], [0], [1], [0, 0, 1, 1], [], []>} : vector<8x8xf32>, vector<8x896xf32>, vector<8x896xf32> -> vector<8x896xf32>
    %28 = arith.addf %22, %27 : vector<8x896xf32>
    %c0_27 = arith.constant 0 : index
    %c0_28 = arith.constant 0 : index
    %c12 = arith.constant 12 : index
    %29 = vector.load %arg1[%c0_27, %c0_28, %c12] : memref<1x8x1118xf32, #tpu.memory_space<vmem>>, vector<1x8x896xf32>
    %30 = vector.shape_cast %29 : vector<1x8x896xf32> to vector<8x896xf32>
    %c5 = arith.constant 5 : index
    %c0_29 = arith.constant 0 : index
    %c0_30 = arith.constant 0 : index
    %31 = vector.load %arg2[%c5, %c0_29, %c0_30] : memref<27x8x8xf32, #tpu.memory_space<vmem>>, vector<1x8x8xf32>
    %32 = vector.shape_cast %31 : vector<1x8x8xf32> to vector<8x8xf32>
    %cst_31 = arith.constant dense<0.000000e+00> : vector<8x896xf32>
    %33 = tpu.matmul %32, %30, %cst_31 {dimension_numbers = #tpu.dot_dimension_numbers<[1], [0], [0], [1], [0, 0, 1, 1], [], []>} : vector<8x8xf32>, vector<8x896xf32>, vector<8x896xf32> -> vector<8x896xf32>
    %34 = arith.addf %28, %33 : vector<8x896xf32>
    %c0_32 = arith.constant 0 : index
    %c0_33 = arith.constant 0 : index
    %c20 = arith.constant 20 : index
    %35 = vector.load %arg1[%c0_32, %c0_33, %c20] : memref<1x8x1118xf32, #tpu.memory_space<vmem>>, vector<1x8x896xf32>
    %36 = vector.shape_cast %35 : vector<1x8x896xf32> to vector<8x896xf32>
    %c6 = arith.constant 6 : index
    %c0_34 = arith.constant 0 : index
    %c0_35 = arith.constant 0 : index
    %37 = vector.load %arg2[%c6, %c0_34, %c0_35] : memref<27x8x8xf32, #tpu.memory_space<vmem>>, vector<1x8x8xf32>
    %38 = vector.shape_cast %37 : vector<1x8x8xf32> to vector<8x8xf32>
    %cst_36 = arith.constant dense<0.000000e+00> : vector<8x896xf32>
    %39 = tpu.matmul %38, %36, %cst_36 {dimension_numbers = #tpu.dot_dimension_numbers<[1], [0], [0], [1], [0, 0, 1, 1], [], []>} : vector<8x8xf32>, vector<8x896xf32>, vector<8x896xf32> -> vector<8x896xf32>
    %40 = arith.addf %34, %39 : vector<8x896xf32>
    %c0_37 = arith.constant 0 : index
    %c0_38 = arith.constant 0 : index
    %c21 = arith.constant 21 : index
    %41 = vector.load %arg1[%c0_37, %c0_38, %c21] : memref<1x8x1118xf32, #tpu.memory_space<vmem>>, vector<1x8x896xf32>
    %42 = vector.shape_cast %41 : vector<1x8x896xf32> to vector<8x896xf32>
    %c7 = arith.constant 7 : index
    %c0_39 = arith.constant 0 : index
    %c0_40 = arith.constant 0 : index
    %43 = vector.load %arg2[%c7, %c0_39, %c0_40] : memref<27x8x8xf32, #tpu.memory_space<vmem>>, vector<1x8x8xf32>
    %44 = vector.shape_cast %43 : vector<1x8x8xf32> to vector<8x8xf32>
    %cst_41 = arith.constant dense<0.000000e+00> : vector<8x896xf32>
    %45 = tpu.matmul %44, %42, %cst_41 {dimension_numbers = #tpu.dot_dimension_numbers<[1], [0], [0], [1], [0, 0, 1, 1], [], []>} : vector<8x8xf32>, vector<8x896xf32>, vector<8x896xf32> -> vector<8x896xf32>
    %46 = arith.addf %40, %45 : vector<8x896xf32>
    %c0_42 = arith.constant 0 : index
    %c0_43 = arith.constant 0 : index
    %c22 = arith.constant 22 : index
    %47 = vector.load %arg1[%c0_42, %c0_43, %c22] : memref<1x8x1118xf32, #tpu.memory_space<vmem>>, vector<1x8x896xf32>
    %48 = vector.shape_cast %47 : vector<1x8x896xf32> to vector<8x896xf32>
    %c8 = arith.constant 8 : index
    %c0_44 = arith.constant 0 : index
    %c0_45 = arith.constant 0 : index
    %49 = vector.load %arg2[%c8, %c0_44, %c0_45] : memref<27x8x8xf32, #tpu.memory_space<vmem>>, vector<1x8x8xf32>
    %50 = vector.shape_cast %49 : vector<1x8x8xf32> to vector<8x8xf32>
    %cst_46 = arith.constant dense<0.000000e+00> : vector<8x896xf32>
    %51 = tpu.matmul %50, %48, %cst_46 {dimension_numbers = #tpu.dot_dimension_numbers<[1], [0], [0], [1], [0, 0, 1, 1], [], []>} : vector<8x8xf32>, vector<8x896xf32>, vector<8x896xf32> -> vector<8x896xf32>
    %52 = arith.addf %46, %51 : vector<8x896xf32>
    %c0_47 = arith.constant 0 : index
    %c0_48 = arith.constant 0 : index
    %c100 = arith.constant 100 : index
    %53 = vector.load %arg1[%c0_47, %c0_48, %c100] : memref<1x8x1118xf32, #tpu.memory_space<vmem>>, vector<1x8x896xf32>
    %54 = vector.shape_cast %53 : vector<1x8x896xf32> to vector<8x896xf32>
    %c9 = arith.constant 9 : index
    %c0_49 = arith.constant 0 : index
    %c0_50 = arith.constant 0 : index
    %55 = vector.load %arg2[%c9, %c0_49, %c0_50] : memref<27x8x8xf32, #tpu.memory_space<vmem>>, vector<1x8x8xf32>
    %56 = vector.shape_cast %55 : vector<1x8x8xf32> to vector<8x8xf32>
    %cst_51 = arith.constant dense<0.000000e+00> : vector<8x896xf32>
    %57 = tpu.matmul %56, %54, %cst_51 {dimension_numbers = #tpu.dot_dimension_numbers<[1], [0], [0], [1], [0, 0, 1, 1], [], []>} : vector<8x8xf32>, vector<8x896xf32>, vector<8x896xf32> -> vector<8x896xf32>
    %58 = arith.addf %52, %57 : vector<8x896xf32>
    %c0_52 = arith.constant 0 : index
    %c0_53 = arith.constant 0 : index
    %c101 = arith.constant 101 : index
    %59 = vector.load %arg1[%c0_52, %c0_53, %c101] : memref<1x8x1118xf32, #tpu.memory_space<vmem>>, vector<1x8x896xf32>
    %60 = vector.shape_cast %59 : vector<1x8x896xf32> to vector<8x896xf32>
    %c10_54 = arith.constant 10 : index
    %c0_55 = arith.constant 0 : index
    %c0_56 = arith.constant 0 : index
    %61 = vector.load %arg2[%c10_54, %c0_55, %c0_56] : memref<27x8x8xf32, #tpu.memory_space<vmem>>, vector<1x8x8xf32>
    %62 = vector.shape_cast %61 : vector<1x8x8xf32> to vector<8x8xf32>
    %cst_57 = arith.constant dense<0.000000e+00> : vector<8x896xf32>
    %63 = tpu.matmul %62, %60, %cst_57 {dimension_numbers = #tpu.dot_dimension_numbers<[1], [0], [0], [1], [0, 0, 1, 1], [], []>} : vector<8x8xf32>, vector<8x896xf32>, vector<8x896xf32> -> vector<8x896xf32>
    %64 = arith.addf %58, %63 : vector<8x896xf32>
    %c0_58 = arith.constant 0 : index
    %c0_59 = arith.constant 0 : index
    %c102 = arith.constant 102 : index
    %65 = vector.load %arg1[%c0_58, %c0_59, %c102] : memref<1x8x1118xf32, #tpu.memory_space<vmem>>, vector<1x8x896xf32>
    %66 = vector.shape_cast %65 : vector<1x8x896xf32> to vector<8x896xf32>
    %c11_60 = arith.constant 11 : index
    %c0_61 = arith.constant 0 : index
    %c0_62 = arith.constant 0 : index
    %67 = vector.load %arg2[%c11_60, %c0_61, %c0_62] : memref<27x8x8xf32, #tpu.memory_space<vmem>>, vector<1x8x8xf32>
    %68 = vector.shape_cast %67 : vector<1x8x8xf32> to vector<8x8xf32>
    %cst_63 = arith.constant dense<0.000000e+00> : vector<8x896xf32>
    %69 = tpu.matmul %68, %66, %cst_63 {dimension_numbers = #tpu.dot_dimension_numbers<[1], [0], [0], [1], [0, 0, 1, 1], [], []>} : vector<8x8xf32>, vector<8x896xf32>, vector<8x896xf32> -> vector<8x896xf32>
    %70 = arith.addf %64, %69 : vector<8x896xf32>
    %c0_64 = arith.constant 0 : index
    %c0_65 = arith.constant 0 : index
    %c110 = arith.constant 110 : index
    %71 = vector.load %arg1[%c0_64, %c0_65, %c110] : memref<1x8x1118xf32, #tpu.memory_space<vmem>>, vector<1x8x896xf32>
    %72 = vector.shape_cast %71 : vector<1x8x896xf32> to vector<8x896xf32>
    %c12_66 = arith.constant 12 : index
    %c0_67 = arith.constant 0 : index
    %c0_68 = arith.constant 0 : index
    %73 = vector.load %arg2[%c12_66, %c0_67, %c0_68] : memref<27x8x8xf32, #tpu.memory_space<vmem>>, vector<1x8x8xf32>
    %74 = vector.shape_cast %73 : vector<1x8x8xf32> to vector<8x8xf32>
    %cst_69 = arith.constant dense<0.000000e+00> : vector<8x896xf32>
    %75 = tpu.matmul %74, %72, %cst_69 {dimension_numbers = #tpu.dot_dimension_numbers<[1], [0], [0], [1], [0, 0, 1, 1], [], []>} : vector<8x8xf32>, vector<8x896xf32>, vector<8x896xf32> -> vector<8x896xf32>
    %76 = arith.addf %70, %75 : vector<8x896xf32>
    %c0_70 = arith.constant 0 : index
    %c0_71 = arith.constant 0 : index
    %c111 = arith.constant 111 : index
    %77 = vector.load %arg1[%c0_70, %c0_71, %c111] : memref<1x8x1118xf32, #tpu.memory_space<vmem>>, vector<1x8x896xf32>
    %78 = vector.shape_cast %77 : vector<1x8x896xf32> to vector<8x896xf32>
    %c13 = arith.constant 13 : index
    %c0_72 = arith.constant 0 : index
    %c0_73 = arith.constant 0 : index
    %79 = vector.load %arg2[%c13, %c0_72, %c0_73] : memref<27x8x8xf32, #tpu.memory_space<vmem>>, vector<1x8x8xf32>
    %80 = vector.shape_cast %79 : vector<1x8x8xf32> to vector<8x8xf32>
    %cst_74 = arith.constant dense<0.000000e+00> : vector<8x896xf32>
    %81 = tpu.matmul %80, %78, %cst_74 {dimension_numbers = #tpu.dot_dimension_numbers<[1], [0], [0], [1], [0, 0, 1, 1], [], []>} : vector<8x8xf32>, vector<8x896xf32>, vector<8x896xf32> -> vector<8x896xf32>
    %82 = arith.addf %76, %81 : vector<8x896xf32>
    %c0_75 = arith.constant 0 : index
    %c0_76 = arith.constant 0 : index
    %c112 = arith.constant 112 : index
    %83 = vector.load %arg1[%c0_75, %c0_76, %c112] : memref<1x8x1118xf32, #tpu.memory_space<vmem>>, vector<1x8x896xf32>
    %84 = vector.shape_cast %83 : vector<1x8x896xf32> to vector<8x896xf32>
    %c14 = arith.constant 14 : index
    %c0_77 = arith.constant 0 : index
    %c0_78 = arith.constant 0 : index
    %85 = vector.load %arg2[%c14, %c0_77, %c0_78] : memref<27x8x8xf32, #tpu.memory_space<vmem>>, vector<1x8x8xf32>
    %86 = vector.shape_cast %85 : vector<1x8x8xf32> to vector<8x8xf32>
    %cst_79 = arith.constant dense<0.000000e+00> : vector<8x896xf32>
    %87 = tpu.matmul %86, %84, %cst_79 {dimension_numbers = #tpu.dot_dimension_numbers<[1], [0], [0], [1], [0, 0, 1, 1], [], []>} : vector<8x8xf32>, vector<8x896xf32>, vector<8x896xf32> -> vector<8x896xf32>
    %88 = arith.addf %82, %87 : vector<8x896xf32>
    %c0_80 = arith.constant 0 : index
    %c0_81 = arith.constant 0 : index
    %c120 = arith.constant 120 : index
    %89 = vector.load %arg1[%c0_80, %c0_81, %c120] : memref<1x8x1118xf32, #tpu.memory_space<vmem>>, vector<1x8x896xf32>
    %90 = vector.shape_cast %89 : vector<1x8x896xf32> to vector<8x896xf32>
    %c15 = arith.constant 15 : index
    %c0_82 = arith.constant 0 : index
    %c0_83 = arith.constant 0 : index
    %91 = vector.load %arg2[%c15, %c0_82, %c0_83] : memref<27x8x8xf32, #tpu.memory_space<vmem>>, vector<1x8x8xf32>
    %92 = vector.shape_cast %91 : vector<1x8x8xf32> to vector<8x8xf32>
    %cst_84 = arith.constant dense<0.000000e+00> : vector<8x896xf32>
    %93 = tpu.matmul %92, %90, %cst_84 {dimension_numbers = #tpu.dot_dimension_numbers<[1], [0], [0], [1], [0, 0, 1, 1], [], []>} : vector<8x8xf32>, vector<8x896xf32>, vector<8x896xf32> -> vector<8x896xf32>
    %94 = arith.addf %88, %93 : vector<8x896xf32>
    %c0_85 = arith.constant 0 : index
    %c0_86 = arith.constant 0 : index
    %c121 = arith.constant 121 : index
    %95 = vector.load %arg1[%c0_85, %c0_86, %c121] : memref<1x8x1118xf32, #tpu.memory_space<vmem>>, vector<1x8x896xf32>
    %96 = vector.shape_cast %95 : vector<1x8x896xf32> to vector<8x896xf32>
    %c16 = arith.constant 16 : index
    %c0_87 = arith.constant 0 : index
    %c0_88 = arith.constant 0 : index
    %97 = vector.load %arg2[%c16, %c0_87, %c0_88] : memref<27x8x8xf32, #tpu.memory_space<vmem>>, vector<1x8x8xf32>
    %98 = vector.shape_cast %97 : vector<1x8x8xf32> to vector<8x8xf32>
    %cst_89 = arith.constant dense<0.000000e+00> : vector<8x896xf32>
    %99 = tpu.matmul %98, %96, %cst_89 {dimension_numbers = #tpu.dot_dimension_numbers<[1], [0], [0], [1], [0, 0, 1, 1], [], []>} : vector<8x8xf32>, vector<8x896xf32>, vector<8x896xf32> -> vector<8x896xf32>
    %100 = arith.addf %94, %99 : vector<8x896xf32>
    %c0_90 = arith.constant 0 : index
    %c0_91 = arith.constant 0 : index
    %c122 = arith.constant 122 : index
    %101 = vector.load %arg1[%c0_90, %c0_91, %c122] : memref<1x8x1118xf32, #tpu.memory_space<vmem>>, vector<1x8x896xf32>
    %102 = vector.shape_cast %101 : vector<1x8x896xf32> to vector<8x896xf32>
    %c17 = arith.constant 17 : index
    %c0_92 = arith.constant 0 : index
    %c0_93 = arith.constant 0 : index
    %103 = vector.load %arg2[%c17, %c0_92, %c0_93] : memref<27x8x8xf32, #tpu.memory_space<vmem>>, vector<1x8x8xf32>
    %104 = vector.shape_cast %103 : vector<1x8x8xf32> to vector<8x8xf32>
    %cst_94 = arith.constant dense<0.000000e+00> : vector<8x896xf32>
    %105 = tpu.matmul %104, %102, %cst_94 {dimension_numbers = #tpu.dot_dimension_numbers<[1], [0], [0], [1], [0, 0, 1, 1], [], []>} : vector<8x8xf32>, vector<8x896xf32>, vector<8x896xf32> -> vector<8x896xf32>
    %106 = arith.addf %100, %105 : vector<8x896xf32>
    %c0_95 = arith.constant 0 : index
    %c0_96 = arith.constant 0 : index
    %c200 = arith.constant 200 : index
    %107 = vector.load %arg1[%c0_95, %c0_96, %c200] : memref<1x8x1118xf32, #tpu.memory_space<vmem>>, vector<1x8x896xf32>
    %108 = vector.shape_cast %107 : vector<1x8x896xf32> to vector<8x896xf32>
    %c18 = arith.constant 18 : index
    %c0_97 = arith.constant 0 : index
    %c0_98 = arith.constant 0 : index
    %109 = vector.load %arg2[%c18, %c0_97, %c0_98] : memref<27x8x8xf32, #tpu.memory_space<vmem>>, vector<1x8x8xf32>
    %110 = vector.shape_cast %109 : vector<1x8x8xf32> to vector<8x8xf32>
    %cst_99 = arith.constant dense<0.000000e+00> : vector<8x896xf32>
    %111 = tpu.matmul %110, %108, %cst_99 {dimension_numbers = #tpu.dot_dimension_numbers<[1], [0], [0], [1], [0, 0, 1, 1], [], []>} : vector<8x8xf32>, vector<8x896xf32>, vector<8x896xf32> -> vector<8x896xf32>
    %112 = arith.addf %106, %111 : vector<8x896xf32>
    %c0_100 = arith.constant 0 : index
    %c0_101 = arith.constant 0 : index
    %c201 = arith.constant 201 : index
    %113 = vector.load %arg1[%c0_100, %c0_101, %c201] : memref<1x8x1118xf32, #tpu.memory_space<vmem>>, vector<1x8x896xf32>
    %114 = vector.shape_cast %113 : vector<1x8x896xf32> to vector<8x896xf32>
    %c19 = arith.constant 19 : index
    %c0_102 = arith.constant 0 : index
    %c0_103 = arith.constant 0 : index
    %115 = vector.load %arg2[%c19, %c0_102, %c0_103] : memref<27x8x8xf32, #tpu.memory_space<vmem>>, vector<1x8x8xf32>
    %116 = vector.shape_cast %115 : vector<1x8x8xf32> to vector<8x8xf32>
    %cst_104 = arith.constant dense<0.000000e+00> : vector<8x896xf32>
    %117 = tpu.matmul %116, %114, %cst_104 {dimension_numbers = #tpu.dot_dimension_numbers<[1], [0], [0], [1], [0, 0, 1, 1], [], []>} : vector<8x8xf32>, vector<8x896xf32>, vector<8x896xf32> -> vector<8x896xf32>
    %118 = arith.addf %112, %117 : vector<8x896xf32>
    %c0_105 = arith.constant 0 : index
    %c0_106 = arith.constant 0 : index
    %c202 = arith.constant 202 : index
    %119 = vector.load %arg1[%c0_105, %c0_106, %c202] : memref<1x8x1118xf32, #tpu.memory_space<vmem>>, vector<1x8x896xf32>
    %120 = vector.shape_cast %119 : vector<1x8x896xf32> to vector<8x896xf32>
    %c20_107 = arith.constant 20 : index
    %c0_108 = arith.constant 0 : index
    %c0_109 = arith.constant 0 : index
    %121 = vector.load %arg2[%c20_107, %c0_108, %c0_109] : memref<27x8x8xf32, #tpu.memory_space<vmem>>, vector<1x8x8xf32>
    %122 = vector.shape_cast %121 : vector<1x8x8xf32> to vector<8x8xf32>
    %cst_110 = arith.constant dense<0.000000e+00> : vector<8x896xf32>
    %123 = tpu.matmul %122, %120, %cst_110 {dimension_numbers = #tpu.dot_dimension_numbers<[1], [0], [0], [1], [0, 0, 1, 1], [], []>} : vector<8x8xf32>, vector<8x896xf32>, vector<8x896xf32> -> vector<8x896xf32>
    %124 = arith.addf %118, %123 : vector<8x896xf32>
    %c0_111 = arith.constant 0 : index
    %c0_112 = arith.constant 0 : index
    %c210 = arith.constant 210 : index
    %125 = vector.load %arg1[%c0_111, %c0_112, %c210] : memref<1x8x1118xf32, #tpu.memory_space<vmem>>, vector<1x8x896xf32>
    %126 = vector.shape_cast %125 : vector<1x8x896xf32> to vector<8x896xf32>
    %c21_113 = arith.constant 21 : index
    %c0_114 = arith.constant 0 : index
    %c0_115 = arith.constant 0 : index
    %127 = vector.load %arg2[%c21_113, %c0_114, %c0_115] : memref<27x8x8xf32, #tpu.memory_space<vmem>>, vector<1x8x8xf32>
    %128 = vector.shape_cast %127 : vector<1x8x8xf32> to vector<8x8xf32>
    %cst_116 = arith.constant dense<0.000000e+00> : vector<8x896xf32>
    %129 = tpu.matmul %128, %126, %cst_116 {dimension_numbers = #tpu.dot_dimension_numbers<[1], [0], [0], [1], [0, 0, 1, 1], [], []>} : vector<8x8xf32>, vector<8x896xf32>, vector<8x896xf32> -> vector<8x896xf32>
    %130 = arith.addf %124, %129 : vector<8x896xf32>
    %c0_117 = arith.constant 0 : index
    %c0_118 = arith.constant 0 : index
    %c211 = arith.constant 211 : index
    %131 = vector.load %arg1[%c0_117, %c0_118, %c211] : memref<1x8x1118xf32, #tpu.memory_space<vmem>>, vector<1x8x896xf32>
    %132 = vector.shape_cast %131 : vector<1x8x896xf32> to vector<8x896xf32>
    %c22_119 = arith.constant 22 : index
    %c0_120 = arith.constant 0 : index
    %c0_121 = arith.constant 0 : index
    %133 = vector.load %arg2[%c22_119, %c0_120, %c0_121] : memref<27x8x8xf32, #tpu.memory_space<vmem>>, vector<1x8x8xf32>
    %134 = vector.shape_cast %133 : vector<1x8x8xf32> to vector<8x8xf32>
    %cst_122 = arith.constant dense<0.000000e+00> : vector<8x896xf32>
    %135 = tpu.matmul %134, %132, %cst_122 {dimension_numbers = #tpu.dot_dimension_numbers<[1], [0], [0], [1], [0, 0, 1, 1], [], []>} : vector<8x8xf32>, vector<8x896xf32>, vector<8x896xf32> -> vector<8x896xf32>
    %136 = arith.addf %130, %135 : vector<8x896xf32>
    %c0_123 = arith.constant 0 : index
    %c0_124 = arith.constant 0 : index
    %c212 = arith.constant 212 : index
    %137 = vector.load %arg1[%c0_123, %c0_124, %c212] : memref<1x8x1118xf32, #tpu.memory_space<vmem>>, vector<1x8x896xf32>
    %138 = vector.shape_cast %137 : vector<1x8x896xf32> to vector<8x896xf32>
    %c23 = arith.constant 23 : index
    %c0_125 = arith.constant 0 : index
    %c0_126 = arith.constant 0 : index
    %139 = vector.load %arg2[%c23, %c0_125, %c0_126] : memref<27x8x8xf32, #tpu.memory_space<vmem>>, vector<1x8x8xf32>
    %140 = vector.shape_cast %139 : vector<1x8x8xf32> to vector<8x8xf32>
    %cst_127 = arith.constant dense<0.000000e+00> : vector<8x896xf32>
    %141 = tpu.matmul %140, %138, %cst_127 {dimension_numbers = #tpu.dot_dimension_numbers<[1], [0], [0], [1], [0, 0, 1, 1], [], []>} : vector<8x8xf32>, vector<8x896xf32>, vector<8x896xf32> -> vector<8x896xf32>
    %142 = arith.addf %136, %141 : vector<8x896xf32>
    %c0_128 = arith.constant 0 : index
    %c0_129 = arith.constant 0 : index
    %c220 = arith.constant 220 : index
    %143 = vector.load %arg1[%c0_128, %c0_129, %c220] : memref<1x8x1118xf32, #tpu.memory_space<vmem>>, vector<1x8x896xf32>
    %144 = vector.shape_cast %143 : vector<1x8x896xf32> to vector<8x896xf32>
    %c24 = arith.constant 24 : index
    %c0_130 = arith.constant 0 : index
    %c0_131 = arith.constant 0 : index
    %145 = vector.load %arg2[%c24, %c0_130, %c0_131] : memref<27x8x8xf32, #tpu.memory_space<vmem>>, vector<1x8x8xf32>
    %146 = vector.shape_cast %145 : vector<1x8x8xf32> to vector<8x8xf32>
    %cst_132 = arith.constant dense<0.000000e+00> : vector<8x896xf32>
    %147 = tpu.matmul %146, %144, %cst_132 {dimension_numbers = #tpu.dot_dimension_numbers<[1], [0], [0], [1], [0, 0, 1, 1], [], []>} : vector<8x8xf32>, vector<8x896xf32>, vector<8x896xf32> -> vector<8x896xf32>
    %148 = arith.addf %142, %147 : vector<8x896xf32>
    %c0_133 = arith.constant 0 : index
    %c0_134 = arith.constant 0 : index
    %c221 = arith.constant 221 : index
    %149 = vector.load %arg1[%c0_133, %c0_134, %c221] : memref<1x8x1118xf32, #tpu.memory_space<vmem>>, vector<1x8x896xf32>
    %150 = vector.shape_cast %149 : vector<1x8x896xf32> to vector<8x896xf32>
    %c25 = arith.constant 25 : index
    %c0_135 = arith.constant 0 : index
    %c0_136 = arith.constant 0 : index
    %151 = vector.load %arg2[%c25, %c0_135, %c0_136] : memref<27x8x8xf32, #tpu.memory_space<vmem>>, vector<1x8x8xf32>
    %152 = vector.shape_cast %151 : vector<1x8x8xf32> to vector<8x8xf32>
    %cst_137 = arith.constant dense<0.000000e+00> : vector<8x896xf32>
    %153 = tpu.matmul %152, %150, %cst_137 {dimension_numbers = #tpu.dot_dimension_numbers<[1], [0], [0], [1], [0, 0, 1, 1], [], []>} : vector<8x8xf32>, vector<8x896xf32>, vector<8x896xf32> -> vector<8x896xf32>
    %154 = arith.addf %148, %153 : vector<8x896xf32>
    %c0_138 = arith.constant 0 : index
    %c0_139 = arith.constant 0 : index
    %c222 = arith.constant 222 : index
    %155 = vector.load %arg1[%c0_138, %c0_139, %c222] : memref<1x8x1118xf32, #tpu.memory_space<vmem>>, vector<1x8x896xf32>
    %156 = vector.shape_cast %155 : vector<1x8x896xf32> to vector<8x896xf32>
    %c26 = arith.constant 26 : index
    %c0_140 = arith.constant 0 : index
    %c0_141 = arith.constant 0 : index
    %157 = vector.load %arg2[%c26, %c0_140, %c0_141] : memref<27x8x8xf32, #tpu.memory_space<vmem>>, vector<1x8x8xf32>
    %158 = vector.shape_cast %157 : vector<1x8x8xf32> to vector<8x8xf32>
    %cst_142 = arith.constant dense<0.000000e+00> : vector<8x896xf32>
    %159 = tpu.matmul %158, %156, %cst_142 {dimension_numbers = #tpu.dot_dimension_numbers<[1], [0], [0], [1], [0, 0, 1, 1], [], []>} : vector<8x8xf32>, vector<8x896xf32>, vector<8x896xf32> -> vector<8x896xf32>
    %160 = arith.addf %154, %159 : vector<8x896xf32>
    %c0_143 = arith.constant 0 : index
    %c0_144 = arith.constant 0 : index
    %161 = vector.load %arg3[%c0_143, %c0_144] : memref<8x1xf32, #tpu.memory_space<vmem>>, vector<8x1xf32>
    %162 = vector.broadcast %161 : vector<8x1xf32> to vector<8x896xf32>
    %163 = arith.addf %160, %162 : vector<8x896xf32>
    %c0_145 = arith.constant 0 : index
    %c0_146 = arith.constant 0 : index
    %164 = vector.load %arg7[%c0_145, %c0_146] : memref<1x896xf32, #tpu.memory_space<vmem>>, vector<1x896xf32>
    %165 = vector.broadcast %164 : vector<1x896xf32> to vector<8x896xf32>
    %166 = arith.mulf %163, %165 : vector<8x896xf32>
    %cst_147 = arith.constant dense<0.000000e+00> : vector<8xf32>
    %167 = vector.multi_reduction <add>, %166, %cst_147 [1] : vector<8x896xf32> to vector<8xf32>
    %168 = vector.shape_cast %167 : vector<8xf32> to vector<8x1xf32>
    %cst_148 = arith.constant 0.001953125 : f32
    %169 = vector.broadcast %cst_148 : f32 to vector<8x1xf32>
    %170 = arith.mulf %168, %169 : vector<8x1xf32>
    %c0_149 = arith.constant 0 : index
    %c0_150 = arith.constant 0 : index
    %171 = vector.load %arg6[%c0_149, %c0_150] : memref<8x8xf32, #tpu.memory_space<vmem>>, vector<8x8xf32>
    %cst_151 = arith.constant dense<0.000000e+00> : vector<8x1xf32>
    %172 = tpu.matmul %171, %170, %cst_151 {dimension_numbers = #tpu.dot_dimension_numbers<[1], [0], [0], [1], [0, 0, 1, 1], [], []>} : vector<8x8xf32>, vector<8x1xf32>, vector<8x1xf32> -> vector<8x1xf32>
    %173 = vector.broadcast %172 : vector<8x1xf32> to vector<8x896xf32>
    %174 = arith.subf %163, %173 : vector<8x896xf32>
    %175 = arith.mulf %174, %174 : vector<8x896xf32>
    %176 = vector.broadcast %164 : vector<1x896xf32> to vector<8x896xf32>
    %177 = arith.mulf %175, %176 : vector<8x896xf32>
    %cst_152 = arith.constant dense<0.000000e+00> : vector<8xf32>
    %178 = vector.multi_reduction <add>, %177, %cst_152 [1] : vector<8x896xf32> to vector<8xf32>
    %179 = vector.shape_cast %178 : vector<8xf32> to vector<8x1xf32>
    %cst_153 = arith.constant 0.001953125 : f32
    %180 = vector.broadcast %cst_153 : f32 to vector<8x1xf32>
    %181 = arith.mulf %179, %180 : vector<8x1xf32>
    %c0_154 = arith.constant 0 : index
    %c0_155 = arith.constant 0 : index
    %182 = vector.load %arg6[%c0_154, %c0_155] : memref<8x8xf32, #tpu.memory_space<vmem>>, vector<8x8xf32>
    %cst_156 = arith.constant dense<0.000000e+00> : vector<8x1xf32>
    %183 = tpu.matmul %182, %181, %cst_156 {dimension_numbers = #tpu.dot_dimension_numbers<[1], [0], [0], [1], [0, 0, 1, 1], [], []>} : vector<8x8xf32>, vector<8x1xf32>, vector<8x1xf32> -> vector<8x1xf32>
    %cst_157 = arith.constant 9.99999974E-6 : f32
    %184 = vector.broadcast %cst_157 : f32 to vector<8x1xf32>
    %185 = arith.addf %183, %184 : vector<8x1xf32>
    %186 = math.rsqrt %185 : vector<8x1xf32>
    %187 = vector.broadcast %186 : vector<8x1xf32> to vector<8x896xf32>
    %188 = arith.mulf %174, %187 : vector<8x896xf32>
    %c0_158 = arith.constant 0 : index
    %c0_159 = arith.constant 0 : index
    %189 = vector.load %arg4[%c0_158, %c0_159] : memref<8x1xf32, #tpu.memory_space<vmem>>, vector<8x1xf32>
    %190 = vector.broadcast %189 : vector<8x1xf32> to vector<8x896xf32>
    %191 = arith.mulf %188, %190 : vector<8x896xf32>
    %c0_160 = arith.constant 0 : index
    %c0_161 = arith.constant 0 : index
    %192 = vector.load %arg5[%c0_160, %c0_161] : memref<8x1xf32, #tpu.memory_space<vmem>>, vector<8x1xf32>
    %193 = vector.broadcast %192 : vector<8x1xf32> to vector<8x896xf32>
    %194 = arith.addf %191, %193 : vector<8x896xf32>
    %c0_162 = arith.constant 0 : index
    %c0_163 = arith.constant 0 : index
    %c0_164 = arith.constant 0 : index
    %195 = vector.load %arg8[%c0_162, %c0_163, %c0_164] : memref<1x8x1xf32, #tpu.memory_space<vmem>>, vector<1x8x1xf32>
    %196 = vector.shape_cast %195 : vector<1x8x1xf32> to vector<8x1xf32>
    %cst_165 = arith.constant 1.000000e+00 : f32
    %197 = vector.broadcast %cst_165 : f32 to vector<8x1xf32>
    %198 = arith.addf %196, %197 : vector<8x1xf32>
    %199 = vector.broadcast %198 : vector<8x1xf32> to vector<8x896xf32>
    %200 = arith.mulf %194, %199 : vector<8x896xf32>
    %c0_166 = arith.constant 0 : index
    %c0_167 = arith.constant 0 : index
    %c0_168 = arith.constant 0 : index
    %201 = vector.load %arg9[%c0_166, %c0_167, %c0_168] : memref<1x8x1xf32, #tpu.memory_space<vmem>>, vector<1x8x1xf32>
    %202 = vector.shape_cast %201 : vector<1x8x1xf32> to vector<8x1xf32>
    %203 = vector.broadcast %202 : vector<8x1xf32> to vector<8x896xf32>
    %204 = arith.addf %200, %203 : vector<8x896xf32>
    %cst_169 = arith.constant 0.000000e+00 : f32
    %205 = vector.broadcast %cst_169 : f32 to vector<8x896xf32>
    %206 = arith.subf %205, %204 : vector<8x896xf32>
    %207 = math.exp %206 : vector<8x896xf32>
    %cst_170 = arith.constant 1.000000e+00 : f32
    %208 = vector.broadcast %cst_170 : f32 to vector<8x896xf32>
    %209 = arith.addf %208, %207 : vector<8x896xf32>
    %210 = tpu.reciprocal %209 : vector<8x896xf32> -> vector<8x896xf32>
    %211 = arith.mulf %204, %210 : vector<8x896xf32>
    %c0_171 = arith.constant 0 : index
    %c0_172 = arith.constant 0 : index
    %c0_173 = arith.constant 0 : index
    %212 = vector.load %arg10[%c0_171, %c0_172, %c0_173] : memref<1x8x896xf32, #tpu.memory_space<vmem>>, vector<1x8x896xf32>
    %213 = vector.shape_cast %212 : vector<1x8x896xf32> to vector<8x896xf32>
    %214 = vector.shape_cast %211 : vector<8x896xf32> to vector<1x8x896xf32>
    tpu.vector_store %arg10[%c0_171, %c0_172, %c0_173], %214 {strides = array<i32>} : memref<1x8x896xf32, #tpu.memory_space<vmem>>, vector<1x8x896xf32>,
    return
  }
  func.func @transform_0(%arg0: i32) -> (i32, i32, i32) {
    %c0_i32 = arith.constant 0 : i32
    %c0_i32_0 = arith.constant 0 : i32
    %c0_i32_1 = arith.constant 0 : i32
    return %arg0, %c0_i32, %c0_i32_0 : i32, i32, i32
  }
  func.func @transform_1(%arg0: i32) -> (i32, i32, i32) {
    %c0_i32 = arith.constant 0 : i32
    %c0_i32_0 = arith.constant 0 : i32
    %c0_i32_1 = arith.constant 0 : i32
    %c0_i32_2 = arith.constant 0 : i32
    return %c0_i32, %c0_i32_0, %c0_i32_1 : i32, i32, i32
  }
  func.func @transform_2(%arg0: i32) -> (i32, i32) {
    %c0_i32 = arith.constant 0 : i32
    %c0_i32_0 = arith.constant 0 : i32
    %c0_i32_1 = arith.constant 0 : i32
    return %c0_i32, %c0_i32_0 : i32, i32
  }
  func.func @transform_3(%arg0: i32) -> (i32, i32) {
    %c0_i32 = arith.constant 0 : i32
    %c0_i32_0 = arith.constant 0 : i32
    %c0_i32_1 = arith.constant 0 : i32
    return %c0_i32, %c0_i32_0 : i32, i32
  }
  func.func @transform_4(%arg0: i32) -> (i32, i32) {
    %c0_i32 = arith.constant 0 : i32
    %c0_i32_0 = arith.constant 0 : i32
    %c0_i32_1 = arith.constant 0 : i32
    return %c0_i32, %c0_i32_0 : i32, i32
  }
  func.func @transform_5(%arg0: i32) -> (i32, i32) {
    %c0_i32 = arith.constant 0 : i32
    %c0_i32_0 = arith.constant 0 : i32
    %c0_i32_1 = arith.constant 0 : i32
    return %c0_i32, %c0_i32_0 : i32, i32
  }
  func.func @transform_6(%arg0: i32) -> (i32, i32) {
    %c0_i32 = arith.constant 0 : i32
    %c0_i32_0 = arith.constant 0 : i32
    %c0_i32_1 = arith.constant 0 : i32
    return %c0_i32, %c0_i32_0 : i32, i32
  }
  func.func @transform_7(%arg0: i32) -> (i32, i32, i32) {
    %c0_i32 = arith.constant 0 : i32
    %c0_i32_0 = arith.constant 0 : i32
    %c0_i32_1 = arith.constant 0 : i32
    return %arg0, %c0_i32, %c0_i32_0 : i32, i32, i32
  }
  func.func @transform_8(%arg0: i32) -> (i32, i32, i32) {
    %c0_i32 = arith.constant 0 : i32
    %c0_i32_0 = arith.constant 0 : i32
    %c0_i32_1 = arith.constant 0 : i32
    return %arg0, %c0_i32, %c0_i32_0 : i32, i32, i32
  }
  func.func @transform_9(%arg0: i32) -> (i32, i32, i32) {
    %c0_i32 = arith.constant 0 : i32
    %c0_i32_0 = arith.constant 0 : i32
    %c0_i32_1 = arith.constant 0 : i32
    return %arg0, %c0_i32, %c0_i32_0 : i32, i32, i32
  }
}

</mosaic_0001>

<llo_original>
// kernel: tpu_custom_call.1
$region0: #{tpu_custom_call.1}
  #allocation0 [shape = 'u32[]', space=smem, size = 0x4, offset = 0x4, fixed_abs, tag = 'smem constant byte address 0x4 - core index']
  #allocation1 [shape = 'u32[144,128]{1,0:T(1,128)}', space=vmem, size = 0x12000, scoped, tag = 'internal scratch']
  %s0 = inlined_call_operand.vmem [shape: f32[2,8,1118], index: 0, kind: input, shape index: {}]
  %s1 = inlined_call_operand.vmem [shape: f32[27,8,8], index: 1, kind: input, shape index: {}]
  %s2 = inlined_call_operand.vmem [shape: f32[8,1], index: 2, kind: input, shape index: {}]
  %s3 = inlined_call_operand.vmem [shape: f32[8,1], index: 3, kind: input, shape index: {}]
  %s4 = inlined_call_operand.vmem [shape: f32[8,1], index: 4, kind: input, shape index: {}]
  %s5 = inlined_call_operand.vmem [shape: f32[8,8], index: 5, kind: input, shape index: {}]
  %s6 = inlined_call_operand.vmem [shape: f32[1,896], index: 6, kind: input, shape index: {}]
  %s7 = inlined_call_operand.vmem [shape: f32[2,8,1], index: 7, kind: input, shape index: {}]
  %s8 = inlined_call_operand.vmem [shape: f32[2,8,1], index: 8, kind: input, shape index: {}]
  %s9 = inlined_call_operand.hbm [shape: f32[2,8,896], index: 9, kind: output, shape index: {}]
  %s10 = sld [smem:[#allocation0]]
  $region69: #{tpu_custom_call.1} parent=0
    _
  %s12 = ssub.s32 1, %s10
  %s13 = scalar_select 0, %s12, %s10
  $region1: #{tpu_custom_call.1} parent=0
    #allocation2 [shape = 'u8[57344]{0}', space=vmem, size = 0xe000, scoped, tag = 'output window, operand 0']
    #allocation3 [shape = 's32[2]{0}', space=sflag, size = 0x8, scoped, tag = 'scoped memory for tpu_custom_call.1']
    %14 = vsyncpa [#allocation3], 0
    %s15 = scalar_lea.sflag [#allocation3], 1
    %16 = vsyncpa %s15, 0
    loop: start=0, step=1, limit=4
    $region2: #{tpu_custom_call.1} parent=1 // loop_pre_header
      _
    $region3: #{tpu_custom_call.1} parent=1 // loop_header
      %s18 = sphi 0, %s22
      %p19 = scmp.ge.s32.totalorder %s18, 4
      %s28 = sphi 0, %s30
      %s31 = sphi 0, %s28
      %s32 = sphi 0, %s31
      %s48 = sphi 0, %s32
      %s52 = sphi 0, %s52
      %s54 = sphi 0, %s52
      %s55 = sphi 0, %s54
      %s69 = sphi 0, %s55
      %s73 = sphi 0, %s73
      %s75 = sphi 0, %s73
      %s76 = sphi 0, %s75
      %s90 = sphi 0, %s76
      %s94 = sphi 0, %s94
      %s96 = sphi 0, %s94
      %s97 = sphi 0, %s96
      %s111 = sphi 0, %s97
      %s115 = sphi 0, %s115
      %s117 = sphi 0, %s115
      %s118 = sphi 0, %s117
      %s132 = sphi 0, %s118
      %s136 = sphi 0, %s136
      %s138 = sphi 0, %s136
      %s139 = sphi 0, %s138
      %s153 = sphi 0, %s139
      %s157 = sphi 0, %s157
      %s159 = sphi 0, %s157
      %s160 = sphi 0, %s159
      %s174 = sphi 0, %s160
      %s180 = sphi 0, %s182
      %s183 = sphi 0, %s180
      %s184 = sphi 0, %s183
      %s200 = sphi 0, %s184
      %s206 = sphi 0, %s208
      %s209 = sphi 0, %s206
      %s210 = sphi 0, %s209
      %s226 = sphi 0, %s210
      %s232 = sphi 0, %s234
      %s235 = sphi 0, %s232
      %s236 = sphi 0, %s235
      %s252 = sphi 0, %s236
    $region4: #{tpu_custom_call.1} parent=1 // loop_header_branch
      %21 = sbr.rel (%p19) target = $region8
    $region5: #{tpu_custom_call.1} parent=1 // loop_body
      %s23 = ssub.s32 %s18, 1
      %s24 = ssub.s32 %s18, 2
      %s25 = sadd.s32 %s18, 1
      %s26 = ssub.s32 %s18, %s25
      %p27 = scmp.eq.s32.totalorder %s26, 0
      %s29 = sadd.s32 %s28, 1
      %s30 = scalar_select %p27, %s28, %s29
      %p33 = pneg %p27
      %p34 = scmp.eq.s32.totalorder %s18, 1
      %p35 = por %p33, %p34
      %p36 = scmp.ne.s32.totalorder %s28, %s31
      %p37 = scmp.eq.s32.totalorder %s18, 0
      %p38 = por %p36, %p37
      %p39 = scmp.ne.s32.totalorder %s28, %s31
      %p40 = scmp.eq.s32.totalorder %s23, 1
      %p41 = por %p39, %p40
      %p42 = scmp.ne.s32.totalorder %s31, %s32
      %p43 = scmp.eq.s32.totalorder %s23, 0
      %p44 = por %p42, %p43
      %p45 = scmp.ne.s32.totalorder %s31, %s32
      %p46 = scmp.eq.s32.totalorder %s24, 1
      %p47 = por %p45, %p46
      %p49 = scmp.ne.s32.totalorder %s32, %s48
      %p50 = scmp.eq.s32.totalorder %s24, 0
      %p51 = por %p49, %p50
      %s53 = sadd.s32 %s52, 1
      %p56 = scmp.eq.s32.totalorder %s18, 1
      %p57 = scmp.ne.s32.totalorder %s52, %s54
      %p58 = scmp.eq.s32.totalorder %s18, 0
      %p59 = por %p57, %p58
      %p60 = scmp.ne.s32.totalorder %s52, %s54
      %p61 = scmp.eq.s32.totalorder %s23, 1
      %p62 = por %p60, %p61
      %p63 = scmp.ne.s32.totalorder %s54, %s55
      %p64 = scmp.eq.s32.totalorder %s23, 0
      %p65 = por %p63, %p64
      %p66 = scmp.ne.s32.totalorder %s54, %s55
      %p67 = scmp.eq.s32.totalorder %s24, 1
      %p68 = por %p66, %p67
      %p70 = scmp.ne.s32.totalorder %s55, %s69
      %p71 = scmp.eq.s32.totalorder %s24, 0
      %p72 = por %p70, %p71
      %s74 = sadd.s32 %s73, 1
      %p77 = scmp.eq.s32.totalorder %s18, 1
      %p78 = scmp.ne.s32.totalorder %s73, %s75
      %p79 = scmp.eq.s32.totalorder %s18, 0
      %p80 = por %p78, %p79
      %p81 = scmp.ne.s32.totalorder %s73, %s75
      %p82 = scmp.eq.s32.totalorder %s23, 1
      %p83 = por %p81, %p82
      %p84 = scmp.ne.s32.totalorder %s75, %s76
      %p85 = scmp.eq.s32.totalorder %s23, 0
      %p86 = por %p84, %p85
      %p87 = scmp.ne.s32.totalorder %s75, %s76
      %p88 = scmp.eq.s32.totalorder %s24, 1
      %p89 = por %p87, %p88
      %p91 = scmp.ne.s32.totalorder %s76, %s90
      %p92 = scmp.eq.s32.totalorder %s24, 0
      %p93 = por %p91, %p92
      %s95 = sadd.s32 %s94, 1
      %p98 = scmp.eq.s32.totalorder %s18, 1
      %p99 = scmp.ne.s32.totalorder %s94, %s96
      %p100 = scmp.eq.s32.totalorder %s18, 0
      %p101 = por %p99, %p100
      %p102 = scmp.ne.s32.totalorder %s94, %s96
      %p103 = scmp.eq.s32.totalorder %s23, 1
      %p104 = por %p102, %p103
      %p105 = scmp.ne.s32.totalorder %s96, %s97
      %p106 = scmp.eq.s32.totalorder %s23, 0
      %p107 = por %p105, %p106
      %p108 = scmp.ne.s32.totalorder %s96, %s97
      %p109 = scmp.eq.s32.totalorder %s24, 1
      %p110 = por %p108, %p109
      %p112 = scmp.ne.s32.totalorder %s97, %s111
      %p113 = scmp.eq.s32.totalorder %s24, 0
      %p114 = por %p112, %p113
      %s116 = sadd.s32 %s115, 1
      %p119 = scmp.eq.s32.totalorder %s18, 1
      %p120 = scmp.ne.s32.totalorder %s115, %s117
      %p121 = scmp.eq.s32.totalorder %s18, 0
      %p122 = por %p120, %p121
      %p123 = scmp.ne.s32.totalorder %s115, %s117
      %p124 = scmp.eq.s32.totalorder %s23, 1
      %p125 = por %p123, %p124
      %p126 = scmp.ne.s32.totalorder %s117, %s118
      %p127 = scmp.eq.s32.totalorder %s23, 0
      %p128 = por %p126, %p127
      %p129 = scmp.ne.s32.totalorder %s117, %s118
      %p130 = scmp.eq.s32.totalorder %s24, 1
      %p131 = por %p129, %p130
      %p133 = scmp.ne.s32.totalorder %s118, %s132
      %p134 = scmp.eq.s32.totalorder %s24, 0
      %p135 = por %p133, %p134
      %s137 = sadd.s32 %s136, 1
      %p140 = scmp.eq.s32.totalorder %s18, 1
      %p141 = scmp.ne.s32.totalorder %s136, %s138
      %p142 = scmp.eq.s32.totalorder %s18, 0
      %p143 = por %p141, %p142
      %p144 = scmp.ne.s32.totalorder %s136, %s138
      %p145 = scmp.eq.s32.totalorder %s23, 1
      %p146 = por %p144, %p145
      %p147 = scmp.ne.s32.totalorder %s138, %s139
      %p148 = scmp.eq.s32.totalorder %s23, 0
      %p149 = por %p147, %p148
      %p150 = scmp.ne.s32.totalorder %s138, %s139
      %p151 = scmp.eq.s32.totalorder %s24, 1
      %p152 = por %p150, %p151
      %p154 = scmp.ne.s32.totalorder %s139, %s153
      %p155 = scmp.eq.s32.totalorder %s24, 0
      %p156 = por %p154, %p155
      %s158 = sadd.s32 %s157, 1
      %p161 = scmp.eq.s32.totalorder %s18, 1
      %p162 = scmp.ne.s32.totalorder %s157, %s159
      %p163 = scmp.eq.s32.totalorder %s18, 0
      %p164 = por %p162, %p163
      %p165 = scmp.ne.s32.totalorder %s157, %s159
      %p166 = scmp.eq.s32.totalorder %s23, 1
      %p167 = por %p165, %p166
      %p168 = scmp.ne.s32.totalorder %s159, %s160
      %p169 = scmp.eq.s32.totalorder %s23, 0
      %p170 = por %p168, %p169
      %p171 = scmp.ne.s32.totalorder %s159, %s160
      %p172 = scmp.eq.s32.totalorder %s24, 1
      %p173 = por %p171, %p172
      %p175 = scmp.ne.s32.totalorder %s160, %s174
      %p176 = scmp.eq.s32.totalorder %s24, 0
      %p177 = por %p175, %p176
      %s178 = ssub.s32 %s18, %s25
      %p179 = scmp.eq.s32.totalorder %s178, 0
      %s181 = sadd.s32 %s180, 1
      %s182 = scalar_select %p179, %s180, %s181
      %p185 = pneg %p179
      %p186 = scmp.eq.s32.totalorder %s18, 1
      %p187 = por %p185, %p186
      %p188 = scmp.ne.s32.totalorder %s180, %s183
      %p189 = scmp.eq.s32.totalorder %s18, 0
      %p190 = por %p188, %p189
      %p191 = scmp.ne.s32.totalorder %s180, %s183
      %p192 = scmp.eq.s32.totalorder %s23, 1
      %p193 = por %p191, %p192
      %p194 = scmp.ne.s32.totalorder %s183, %s184
      %p195 = scmp.eq.s32.totalorder %s23, 0
      %p196 = por %p194, %p195
      %p197 = scmp.ne.s32.totalorder %s183, %s184
      %p198 = scmp.eq.s32.totalorder %s24, 1
      %p199 = por %p197, %p198
      %p201 = scmp.ne.s32.totalorder %s184, %s200
      %p202 = scmp.eq.s32.totalorder %s24, 0
      %p203 = por %p201, %p202
      %s204 = ssub.s32 %s18, %s25
      %p205 = scmp.eq.s32.totalorder %s204, 0
      %s207 = sadd.s32 %s206, 1
      %s208 = scalar_select %p205, %s206, %s207
      %p211 = pneg %p205
      %p212 = scmp.eq.s32.totalorder %s18, 1
      %p213 = por %p211, %p212
      %p214 = scmp.ne.s32.totalorder %s206, %s209
      %p215 = scmp.eq.s32.totalorder %s18, 0
      %p216 = por %p214, %p215
      %p217 = scmp.ne.s32.totalorder %s206, %s209
      %p218 = scmp.eq.s32.totalorder %s23, 1
      %p219 = por %p217, %p218
      %p220 = scmp.ne.s32.totalorder %s209, %s210
      %p221 = scmp.eq.s32.totalorder %s23, 0
      %p222 = por %p220, %p221
      %p223 = scmp.ne.s32.totalorder %s209, %s210
      %p224 = scmp.eq.s32.totalorder %s24, 1
      %p225 = por %p223, %p224
      %p227 = scmp.ne.s32.totalorder %s210, %s226
      %p228 = scmp.eq.s32.totalorder %s24, 0
      %p229 = por %p227, %p228
      %s230 = ssub.s32 %s18, %s25
      %p231 = scmp.eq.s32.totalorder %s230, 0
      %s233 = sadd.s32 %s232, 1
      %s234 = scalar_select %p231, %s232, %s233
      %p237 = pneg %p231
      %p238 = scmp.eq.s32.totalorder %s18, 1
      %p239 = por %p237, %p238
      %p240 = scmp.ne.s32.totalorder %s232, %s235
      %p241 = scmp.eq.s32.totalorder %s18, 0
      %p242 = por %p240, %p241
      %p243 = scmp.ne.s32.totalorder %s232, %s235
      %p244 = scmp.eq.s32.totalorder %s23, 1
      %p245 = por %p243, %p244
      %p246 = scmp.ne.s32.totalorder %s235, %s236
      %p247 = scmp.eq.s32.totalorder %s23, 0
      %p248 = por %p246, %p247
      %p249 = scmp.ne.s32.totalorder %s235, %s236
      %p250 = scmp.eq.s32.totalorder %s24, 1
      %p251 = por %p249, %p250
      %p253 = scmp.ne.s32.totalorder %s236, %s252
      %p254 = scmp.eq.s32.totalorder %s24, 0
      %p255 = por %p253, %p254
      %p256 = scmp.le.s32.totalorder 1, %s18
      %p257 = scmp.lt.s32.totalorder %s18, 3
      %p258 = pnand %p256, %p257
      %p259 = pneg %p258
      // Predicated region
      $region9: #{tpu_custom_call.1} parent=5 // pred_check
        _
      $region10: #{tpu_custom_call.1} parent=5 // pred_check_branch
        %261 = sbr.rel (%p258) target = $region12
      $region11: #{tpu_custom_call.1} parent=5 // pred_region
        %s262 = ssub.s32 %s18, 1
        // Predicated region
        $region13: #{tpu_custom_call.1} parent=11 // pred_check
          %p263 = pneg %p65
        $region14: #{tpu_custom_call.1} parent=11 // pred_check_branch
          %265 = sbr.rel (%p263) target = $region16
        $region15: #{tpu_custom_call.1} parent=11 // pred_region
          _
        $region16: #{tpu_custom_call.1} parent=11 // pred_fallthru
          _
        // Predicated region
        $region17: #{tpu_custom_call.1} parent=11 // pred_check
          %p266 = pneg %p86
        $region18: #{tpu_custom_call.1} parent=11 // pred_check_branch
          %268 = sbr.rel (%p266) target = $region20
        $region19: #{tpu_custom_call.1} parent=11 // pred_region
          _
        $region20: #{tpu_custom_call.1} parent=11 // pred_fallthru
          _
        // Predicated region
        $region21: #{tpu_custom_call.1} parent=11 // pred_check
          %p269 = pneg %p107
        $region22: #{tpu_custom_call.1} parent=11 // pred_check_branch
          %271 = sbr.rel (%p269) target = $region24
        $region23: #{tpu_custom_call.1} parent=11 // pred_region
          _
        $region24: #{tpu_custom_call.1} parent=11 // pred_fallthru
          _
        // Predicated region
        $region25: #{tpu_custom_call.1} parent=11 // pred_check
          %p272 = pneg %p128
        $region26: #{tpu_custom_call.1} parent=11 // pred_check_branch
          %274 = sbr.rel (%p272) target = $region28
        $region27: #{tpu_custom_call.1} parent=11 // pred_region
          _
        $region28: #{tpu_custom_call.1} parent=11 // pred_fallthru
          _
        // Predicated region
        $region29: #{tpu_custom_call.1} parent=11 // pred_check
          %p275 = pneg %p149
        $region30: #{tpu_custom_call.1} parent=11 // pred_check_branch
          %277 = sbr.rel (%p275) target = $region32
        $region31: #{tpu_custom_call.1} parent=11 // pred_region
          _
        $region32: #{tpu_custom_call.1} parent=11 // pred_fallthru
          _
        // Predicated region
        $region33: #{tpu_custom_call.1} parent=11 // pred_check
          %p278 = pneg %p170
        $region34: #{tpu_custom_call.1} parent=11 // pred_check_branch
          %280 = sbr.rel (%p278) target = $region36
        $region35: #{tpu_custom_call.1} parent=11 // pred_region
          _
        $region36: #{tpu_custom_call.1} parent=11 // pred_fallthru
          _
      $region12: #{tpu_custom_call.1} parent=5 // pred_fallthru
        _
      %p281 = scmp.lt.s32.totalorder %s18, 2
      // Predicated region
      $region37: #{tpu_custom_call.1} parent=5 // pred_check
        %p282 = pneg %p281
      $region38: #{tpu_custom_call.1} parent=5 // pred_check_branch
        %284 = sbr.rel (%p282) target = $region40
      $region39: #{tpu_custom_call.1} parent=5 // pred_region
        // Predicated region
        $region41: #{tpu_custom_call.1} parent=39 // pred_check
          %p285 = pneg %p38
        $region42: #{tpu_custom_call.1} parent=39 // pred_check_branch
          %287 = sbr.rel (%p285) target = $region44
        $region43: #{tpu_custom_call.1} parent=39 // pred_region
          %p288 = scmp.lt.s32.totalorder %s18, 1
          %s289 = scalar_select %p288, %s18, 1
          %s290 = smul.addr %s289, 9
          %s291 = smul.addr %s290, 8
          %s292 = scalar_lea.vmem %s0, %s291
        $region44: #{tpu_custom_call.1} parent=39 // pred_fallthru
          _
        // Predicated region
        $region45: #{tpu_custom_call.1} parent=39 // pred_check
          %p293 = pneg %p190
        $region46: #{tpu_custom_call.1} parent=39 // pred_check_branch
          %295 = sbr.rel (%p293) target = $region48
        $region47: #{tpu_custom_call.1} parent=39 // pred_region
          %p296 = scmp.lt.s32.totalorder %s18, 1
          %s297 = scalar_select %p296, %s18, 1
          %s298 = smul.addr %s297, 8
          %s299 = scalar_lea.vmem %s7, %s298
        $region48: #{tpu_custom_call.1} parent=39 // pred_fallthru
          _
        // Predicated region
        $region49: #{tpu_custom_call.1} parent=39 // pred_check
          %p300 = pneg %p216
        $region50: #{tpu_custom_call.1} parent=39 // pred_check_branch
          %302 = sbr.rel (%p300) target = $region52
        $region51: #{tpu_custom_call.1} parent=39 // pred_region
          %p303 = scmp.lt.s32.totalorder %s18, 1
          %s304 = scalar_select %p303, %s18, 1
          %s305 = smul.addr %s304, 8
          %s306 = scalar_lea.vmem %s8, %s305
        $region52: #{tpu_custom_call.1} parent=39 // pred_fallthru
          _
      $region40: #{tpu_custom_call.1} parent=5 // pred_fallthru
        _
      %p307 = scmp.le.s32.totalorder 1, %s18
      %p308 = scmp.lt.s32.totalorder %s18, 3
      %p309 = pnand %p307, %p308
      %p310 = pneg %p309
      // Predicated region
      $region53: #{tpu_custom_call.1} parent=5 // pred_check
        _
      $region54: #{tpu_custom_call.1} parent=5 // pred_check_branch
        %312 = sbr.rel (%p309) target = $region56
      $region55: #{tpu_custom_call.1} parent=5 // pred_region
        %s313 = ssub.s32 %s18, 1
        %p314 = scmp.lt.s32.totalorder %s23, 1
        %s315 = scalar_select %p314, %s23, 1
        %s316 = smul.addr %s315, 9
        %s317 = smul.addr %s316, 8
        %s318 = scalar_lea.vmem %s0, %s317
        %p319 = pneg %p44
        %p320 = pneg %p41
        %p321 = pneg %p65
        %p322 = pneg %p62
        %p323 = pneg %p86
        %p324 = pneg %p83
        %p325 = pneg %p107
        %p326 = pneg %p104
        %p327 = pneg %p128
        %p328 = pneg %p125
        %p329 = pneg %p149
        %p330 = pneg %p146
        %p331 = pneg %p170
        %p332 = pneg %p167
        %p333 = scmp.lt.s32.totalorder %s23, 1
        %s334 = scalar_select %p333, %s23, 1
        %s335 = smul.addr %s334, 8
        %s336 = scalar_lea.vmem %s7, %s335
        %p337 = pneg %p196
        %p338 = pneg %p193
        %p339 = scmp.lt.s32.totalorder %s23, 1
        %s340 = scalar_select %p339, %s23, 1
        %s341 = smul.addr %s340, 8
        %s342 = scalar_lea.vmem %s8, %s341
        %p343 = pneg %p222
        %p344 = pneg %p219
        %p345 = pneg %p248
        %p346 = pneg %p245
        %s347 = sand.u32 %s235, 1
        %s348 = scalar_lea.sflag [#allocation3], %s347
        %s349 = sand.u32 %s235, 1
        %s350 = smul.addr %s349, 56
        %s351 = scalar_lea.vmem [#allocation2], %s350
        %p352 = scmp.lt.s32.totalorder %s23, 1
        %s353 = scalar_select %p352, %s23, 1
        %s354 = smul.addr %s353, 9
        %s355 = smul.addr %s354, 8
        %s356 = scalar_lea.vmem %s0, %s355
        %p357 = scmp.lt.s32.totalorder %s23, 1
        %s358 = scalar_select %p357, %s23, 1
        %s359 = smul.addr %s358, 8
        %s360 = scalar_lea.vmem %s7, %s359
        %p361 = scmp.lt.s32.totalorder %s23, 1
        %s362 = scalar_select %p361, %s23, 1
        %s363 = smul.addr %s362, 8
        %s364 = scalar_lea.vmem %s8, %s363
        %v365 = vld [vmem:[%s356] sm:$0xff]
        %v366 = vld [vmem:[%s356 + $0x8] sm:$0xff]
        %v367 = vld [vmem:[%s356 + $0x10] sm:$0xff]
        %v368 = vld [vmem:[%s356 + $0x18] sm:$0xff]
        %v369 = vld [vmem:[%s356 + $0x20] sm:$0xff]
        %v370 = vld [vmem:[%s356 + $0x28] sm:$0xff]
        %v371 = vld [vmem:[%s356 + $0x30] sm:$0xff]
        %v372 = vld [vmem:[%s1] sm:$0xff]
        %v373 = vld [vmem:[%s356 + $0x38] sm:$0xff]
        %s374 = scalar_lea.vmem %s1, 8
        %v375 = vld [vmem:[%s374] sm:$0xff]
        %384 = vrot.lane.b32.xlu0 %v365, 127
        %v385 = vpop.permute.xlu0 %384
        %386 = vrot.lane.b32.xlu0 %v366, 127
        %v387 = vpop.permute.xlu0 %386
        %388 = vrot.lane.b32.xlu0 %v367, 127
        %v389 = vpop.permute.xlu0 %388
        %390 = vrot.lane.b32.xlu0 %v368, 127
        %v391 = vpop.permute.xlu0 %390
        %392 = vrot.lane.b32.xlu0 %v369, 127
        %v393 = vpop.permute.xlu0 %392
        %394 = vrot.lane.b32.xlu0 %v370, 127
        %v395 = vpop.permute.xlu0 %394
        %396 = vrot.lane.b32.xlu0 %v371, 127
        %v397 = vpop.permute.xlu0 %396
        %398 = vrot.lane.b32.xlu0 %v373, 127
        %v399 = vpop.permute.xlu0 %398
        %vm400 = vcmask 1039360
        %v401 = vsel %vm400, %v385, %v387
        %v402 = vsel %vm400, %v387, %v389
        %v403 = vsel %vm400, %v389, %v391
        %v404 = vsel %vm400, %v391, %v393
        %v405 = vsel %vm400, %v393, %v395
        %v406 = vsel %vm400, %v395, %v397
        %v407 = vsel %vm400, %v397, %v399
        %vm415 = vcmask 64512
        %v417 = vsel %vm415, %v375, 0
        %419 = vmatprep.subr.mxu0 %v402
        %420 = vmatpush1.msra.mxu0 %v401
        %421 = vmatprep.subr.mxu0 0.0
        %422 = vmatpush1.msra.mxu0 0.0
        %423 = vmatprep.subr.mxu0 0.0
        %424 = vmatpush1.msra.mxu0 0.0
        %425 = vmatprep.subr.mxu0 0.0
        %426 = vmatpush1.msra.mxu0 0.0
        %427 = vmatprep.subr.mxu0 0.0
        %428 = vmatpush1.msra.mxu0 0.0
        %429 = vmatprep.subr.mxu0 0.0
        %430 = vmatpush1.msra.mxu0 0.0
        %431 = vmatprep.subr.mxu0 0.0
        %432 = vmatpush1.msra.mxu0 0.0
        %433 = vmatprep.subr.mxu0 0.0
        %434 = vmatpush1.msra.mxu0 0.0
        %435 = vmatprep.subr.mxu0 0.0
        %436 = vmatpush1.msra.mxu0 0.0
        %437 = vmatprep.subr.mxu0 0.0
        %438 = vmatpush1.msra.mxu0 0.0
        %439 = vmatprep.subr.mxu0 0.0
        %440 = vmatpush1.msra.mxu0 0.0
        %441 = vmatprep.subr.mxu0 0.0
        %442 = vmatpush1.msra.mxu0 0.0
        %443 = vmatprep.subr.mxu0 0.0
        %444 = vmatpush1.msra.mxu0 0.0
        %445 = vmatprep.subr.mxu0 0.0
        %446 = vmatpush1.msra.mxu0 0.0
        %447 = vmatprep.subr.mxu0 0.0
        %448 = vmatpush1.msra.mxu0 0.0
        %449 = vmatprep.subr.mxu0 0.0
        %450 = vmatpush1.msra.mxu0 0.0
        %451 = vmatprep.subr.mxu0 0.0
        %452 = vmatpush1.msra.mxu0 0.0
        %453 = vmatprep.subr.mxu0 0.0
        %454 = vmatpush1.msra.mxu0 0.0
        %455 = vmatprep.subr.mxu0 0.0
        %456 = vmatpush1.msra.mxu0 0.0
        %457 = vmatprep.subr.mxu0 0.0
        %458 = vmatpush1.msra.mxu0 0.0
        %459 = vmatprep.subr.mxu0 0.0
        %460 = vmatpush1.msra.mxu0 0.0
        %461 = vmatprep.subr.mxu0 0.0
        %462 = vmatpush1.msra.mxu0 0.0
        %463 = vmatprep.subr.mxu0 0.0
        %464 = vmatpush1.msra.mxu0 0.0
        %465 = vmatprep.subr.mxu0 0.0
        %466 = vmatpush1.msra.mxu0 0.0
        %467 = vmatprep.subr.mxu0 0.0
        %468 = vmatpush1.msra.mxu0 0.0
        %469 = vmatprep.subr.mxu0 0.0
        %470 = vmatpush1.msra.mxu0 0.0
        %471 = vmatprep.subr.mxu0 0.0
        %472 = vmatpush1.msra.mxu0 0.0
        %473 = vmatprep.subr.mxu0 0.0
        %474 = vmatpush1.msra.mxu0 0.0
        %475 = vmatprep.subr.mxu0 0.0
        %476 = vmatpush1.msra.mxu0 0.0
        %477 = vmatprep.subr.mxu0 0.0
        %478 = vmatpush1.msra.mxu0 0.0
        %479 = vmatprep.subr.mxu0 0.0
        %480 = vmatpush1.msra.mxu0 0.0
        %481 = vmatprep.subr.mxu0 0.0
        %482 = vmatpush1.msra.mxu0 0.0
        %483 = vmatprep.mubr.f32.mxu0 0.0
        %484 = vmatmul.mubr.f32.gmra.mrb[0].mxu0 %v417
        %v485 = vpop.f32.mrb[0].mxu0
        %v486 = vadd.f32 0.0, %v485
        %v487 = vpop.f32.mrb[0].mxu0
        %v488 = vadd.f32 0.0, %v487
        %489 = vdwg.mxu0
        %490 = vmatprep.subr.mxu0 %v404
        %491 = vmatpush1.msra.mxu0 %v403
        %492 = vmatprep.subr.mxu0 0.0
        %493 = vmatpush1.msra.mxu0 0.0
        %494 = vmatprep.subr.mxu0 0.0
        %495 = vmatpush1.msra.mxu0 0.0
        %496 = vmatprep.subr.mxu0 0.0
        %497 = vmatpush1.msra.mxu0 0.0
        %498 = vmatprep.subr.mxu0 0.0
        %499 = vmatpush1.msra.mxu0 0.0
        %500 = vmatprep.subr.mxu0 0.0
        %501 = vmatpush1.msra.mxu0 0.0
        %502 = vmatprep.subr.mxu0 0.0
        %503 = vmatpush1.msra.mxu0 0.0
        %504 = vmatprep.subr.mxu0 0.0
        %505 = vmatpush1.msra.mxu0 0.0
        %506 = vmatprep.subr.mxu0 0.0
        %507 = vmatpush1.msra.mxu0 0.0
        %508 = vmatprep.subr.mxu0 0.0
        %509 = vmatpush1.msra.mxu0 0.0
        %510 = vmatprep.subr.mxu0 0.0
        %511 = vmatpush1.msra.mxu0 0.0
        %512 = vmatprep.subr.mxu0 0.0
        %513 = vmatpush1.msra.mxu0 0.0
        %514 = vmatprep.subr.mxu0 0.0
        %515 = vmatpush1.msra.mxu0 0.0
        %516 = vmatprep.subr.mxu0 0.0
        %517 = vmatpush1.msra.mxu0 0.0
        %518 = vmatprep.subr.mxu0 0.0
        %519 = vmatpush1.msra.mxu0 0.0
        %520 = vmatprep.subr.mxu0 0.0
        %521 = vmatpush1.msra.mxu0 0.0
        %522 = vmatprep.subr.mxu0 0.0
        %523 = vmatpush1.msra.mxu0 0.0
        %524 = vmatprep.subr.mxu0 0.0
        %525 = vmatpush1.msra.mxu0 0.0
        %526 = vmatprep.subr.mxu0 0.0
        %527 = vmatpush1.msra.mxu0 0.0
        %528 = vmatprep.subr.mxu0 0.0
        %529 = vmatpush1.msra.mxu0 0.0
        %530 = vmatprep.subr.mxu0 0.0
        %531 = vmatpush1.msra.mxu0 0.0
        %532 = vmatprep.subr.mxu0 0.0
        %533 = vmatpush1.msra.mxu0 0.0
        %534 = vmatprep.subr.mxu0 0.0
        %535 = vmatpush1.msra.mxu0 0.0
        %536 = vmatprep.subr.mxu0 0.0
        %537 = vmatpush1.msra.mxu0 0.0
        %538 = vmatprep.subr.mxu0 0.0
        %539 = vmatpush1.msra.mxu0 0.0
        %540 = vmatprep.subr.mxu0 0.0
        %541 = vmatpush1.msra.mxu0 0.0
        %542 = vmatprep.subr.mxu0 0.0
        %543 = vmatpush1.msra.mxu0 0.0
        %544 = vmatprep.subr.mxu0 0.0
        %545 = vmatpush1.msra.mxu0 0.0
        %546 = vmatprep.subr.mxu0 0.0
        %547 = vmatpush1.msra.mxu0 0.0
        %548 = vmatprep.subr.mxu0 0.0
        %549 = vmatpush1.msra.mxu0 0.0
        %550 = vmatprep.subr.mxu0 0.0
        %551 = vmatpush1.msra.mxu0 0.0
        %552 = vmatprep.subr.mxu0 0.0
        %553 = vmatpush1.msra.mxu0 0.0
        %554 = vmatprep.mubr.f32.mxu0 0.0
        %555 = vmatmul.mubr.f32.gmra.mrb[0].mxu0 %v417
        %v556 = vpop.f32.mrb[0].mxu0
        %v557 = vadd.f32 0.0, %v556
        %v558 = vpop.f32.mrb[0].mxu0
        %v559 = vadd.f32 0.0, %v558
        %560 = vdwg.mxu0
        %561 = vmatprep.subr.mxu0 %v406
        %562 = vmatpush1.msra.mxu0 %v405
        %563 = vmatprep.subr.mxu0 0.0
        %564 = vmatpush1.msra.mxu0 0.0
        %565 = vmatprep.subr.mxu0 0.0
        %566 = vmatpush1.msra.mxu0 0.0
        %567 = vmatprep.subr.mxu0 0.0
        %568 = vmatpush1.msra.mxu0 0.0
        %569 = vmatprep.subr.mxu0 0.0
        %570 = vmatpush1.msra.mxu0 0.0
        %571 = vmatprep.subr.mxu0 0.0
        %572 = vmatpush1.msra.mxu0 0.0
        %573 = vmatprep.subr.mxu0 0.0
        %574 = vmatpush1.msra.mxu0 0.0
        %575 = vmatprep.subr.mxu0 0.0
        %576 = vmatpush1.msra.mxu0 0.0
        %577 = vmatprep.subr.mxu0 0.0
        %578 = vmatpush1.msra.mxu0 0.0
        %579 = vmatprep.subr.mxu0 0.0
        %580 = vmatpush1.msra.mxu0 0.0
        %581 = vmatprep.subr.mxu0 0.0
        %582 = vmatpush1.msra.mxu0 0.0
        %583 = vmatprep.subr.mxu0 0.0
        %584 = vmatpush1.msra.mxu0 0.0
        %585 = vmatprep.subr.mxu0 0.0
        %586 = vmatpush1.msra.mxu0 0.0
        %587 = vmatprep.subr.mxu0 0.0
        %588 = vmatpush1.msra.mxu0 0.0
        %589 = vmatprep.subr.mxu0 0.0
        %590 = vmatpush1.msra.mxu0 0.0
        %591 = vmatprep.subr.mxu0 0.0
        %592 = vmatpush1.msra.mxu0 0.0
        %593 = vmatprep.subr.mxu0 0.0
        %594 = vmatpush1.msra.mxu0 0.0
        %595 = vmatprep.subr.mxu0 0.0
        %596 = vmatpush1.msra.mxu0 0.0
        %597 = vmatprep.subr.mxu0 0.0
        %598 = vmatpush1.msra.mxu0 0.0
        %599 = vmatprep.subr.mxu0 0.0
        %600 = vmatpush1.msra.mxu0 0.0
        %601 = vmatprep.subr.mxu0 0.0
        %602 = vmatpush1.msra.mxu0 0.0
        %603 = vmatprep.subr.mxu0 0.0
        %604 = vmatpush1.msra.mxu0 0.0
        %605 = vmatprep.subr.mxu0 0.0
        %606 = vmatpush1.msra.mxu0 0.0
        %607 = vmatprep.subr.mxu0 0.0
        %608 = vmatpush1.msra.mxu0 0.0
        %609 = vmatprep.subr.mxu0 0.0
        %610 = vmatpush1.msra.mxu0 0.0
        %611 = vmatprep.subr.mxu0 0.0
        %612 = vmatpush1.msra.mxu0 0.0
        %613 = vmatprep.subr.mxu0 0.0
        %614 = vmatpush1.msra.mxu0 0.0
        %615 = vmatprep.subr.mxu0 0.0
        %616 = vmatpush1.msra.mxu0 0.0
        %617 = vmatprep.subr.mxu0 0.0
        %618 = vmatpush1.msra.mxu0 0.0
        %619 = vmatprep.subr.mxu0 0.0
        %620 = vmatpush1.msra.mxu0 0.0
        %621 = vmatprep.subr.mxu0 0.0
        %622 = vmatpush1.msra.mxu0 0.0
        %623 = vmatprep.subr.mxu0 0.0
        %624 = vmatpush1.msra.mxu0 0.0
        %625 = vmatprep.mubr.f32.mxu0 0.0
        %626 = vmatmul.mubr.f32.gmra.mrb[0].mxu0 %v417
        %v627 = vpop.f32.mrb[0].mxu0
        %v628 = vadd.f32 0.0, %v627
        %v629 = vpop.f32.mrb[0].mxu0
        %v630 = vadd.f32 0.0, %v629
        %631 = vdwg.mxu0
        %632 = vmatprep.subr.mxu0 0.0
        %633 = vmatpush1.msra.mxu0 %v407
        %634 = vmatprep.subr.mxu0 0.0
        %635 = vmatpush1.msra.mxu0 0.0
        %636 = vmatprep.subr.mxu0 0.0
        %637 = vmatpush1.msra.mxu0 0.0
        %638 = vmatprep.subr.mxu0 0.0
        %639 = vmatpush1.msra.mxu0 0.0
        %640 = vmatprep.subr.mxu0 0.0
        %641 = vmatpush1.msra.mxu0 0.0
        %642 = vmatprep.subr.mxu0 0.0
        %643 = vmatpush1.msra.mxu0 0.0
        %644 = vmatprep.subr.mxu0 0.0
        %645 = vmatpush1.msra.mxu0 0.0
        %646 = vmatprep.subr.mxu0 0.0
        %647 = vmatpush1.msra.mxu0 0.0
        %648 = vmatprep.subr.mxu0 0.0
        %649 = vmatpush1.msra.mxu0 0.0
        %650 = vmatprep.subr.mxu0 0.0
        %651 = vmatpush1.msra.mxu0 0.0
        %652 = vmatprep.subr.mxu0 0.0
        %653 = vmatpush1.msra.mxu0 0.0
        %654 = vmatprep.subr.mxu0 0.0
        %655 = vmatpush1.msra.mxu0 0.0
        %656 = vmatprep.subr.mxu0 0.0
        %657 = vmatpush1.msra.mxu0 0.0
        %658 = vmatprep.subr.mxu0 0.0
        %659 = vmatpush1.msra.mxu0 0.0
        %660 = vmatprep.subr.mxu0 0.0
        %661 = vmatpush1.msra.mxu0 0.0
        %662 = vmatprep.subr.mxu0 0.0
        %663 = vmatpush1.msra.mxu0 0.0
        %664 = vmatprep.subr.mxu0 0.0
        %665 = vmatpush1.msra.mxu0 0.0
        %666 = vmatprep.subr.mxu0 0.0
        %667 = vmatpush1.msra.mxu0 0.0
        %668 = vmatprep.subr.mxu0 0.0
        %669 = vmatpush1.msra.mxu0 0.0
        %670 = vmatprep.subr.mxu0 0.0
        %671 = vmatpush1.msra.mxu0 0.0
        %672 = vmatprep.subr.mxu0 0.0
        %673 = vmatpush1.msra.mxu0 0.0
        %674 = vmatprep.subr.mxu0 0.0
        %675 = vmatpush1.msra.mxu0 0.0
        %676 = vmatprep.subr.mxu0 0.0
        %677 = vmatpush1.msra.mxu0 0.0
        %678 = vmatprep.subr.mxu0 0.0
        %679 = vmatpush1.msra.mxu0 0.0
        %680 = vmatprep.subr.mxu0 0.0
        %681 = vmatpush1.msra.mxu0 0.0
        %682 = vmatprep.subr.mxu0 0.0
        %683 = vmatpush1.msra.mxu0 0.0
        %684 = vmatprep.subr.mxu0 0.0
        %685 = vmatpush1.msra.mxu0 0.0
        %686 = vmatprep.subr.mxu0 0.0
        %687 = vmatpush1.msra.mxu0 0.0
        %688 = vmatprep.subr.mxu0 0.0
        %689 = vmatpush1.msra.mxu0 0.0
        %690 = vmatprep.subr.mxu0 0.0
        %691 = vmatpush1.msra.mxu0 0.0
        %692 = vmatprep.subr.mxu0 0.0
        %693 = vmatpush1.msra.mxu0 0.0
        %694 = vmatprep.subr.mxu0 0.0
        %695 = vmatpush1.msra.mxu0 0.0
        %696 = vmatprep.mubr.f32.mxu0 0.0
        %697 = vmatmul.mubr.f32.gmra.mrb[0].mxu0 %v417
        %v698 = vpop.f32.mrb[0].mxu0
        %v699 = vadd.f32 0.0, %v698
        %v700 = vpop.f32.mrb[0].mxu0
        %701 = vdwg.mxu0
        %v703 = vsel %vm415, %v372, 0
        %705 = vmatprep.subr.mxu0 %v366
        %706 = vmatpush1.msra.mxu0 %v365
        %707 = vmatprep.subr.mxu0 0.0
        %708 = vmatpush1.msra.mxu0 0.0
        %709 = vmatprep.subr.mxu0 0.0
        %710 = vmatpush1.msra.mxu0 0.0
        %711 = vmatprep.subr.mxu0 0.0
        %712 = vmatpush1.msra.mxu0 0.0
        %713 = vmatprep.subr.mxu0 0.0
        %714 = vmatpush1.msra.mxu0 0.0
        %715 = vmatprep.subr.mxu0 0.0
        %716 = vmatpush1.msra.mxu0 0.0
        %717 = vmatprep.subr.mxu0 0.0
        %718 = vmatpush1.msra.mxu0 0.0
        %719 = vmatprep.subr.mxu0 0.0
        %720 = vmatpush1.msra.mxu0 0.0
        %721 = vmatprep.subr.mxu0 0.0
        %722 = vmatpush1.msra.mxu0 0.0
        %723 = vmatprep.subr.mxu0 0.0
        %724 = vmatpush1.msra.mxu0 0.0
        %725 = vmatprep.subr.mxu0 0.0
        %726 = vmatpush1.msra.mxu0 0.0
        %727 = vmatprep.subr.mxu0 0.0
        %728 = vmatpush1.msra.mxu0 0.0
        %729 = vmatprep.subr.mxu0 0.0
        %730 = vmatpush1.msra.mxu0 0.0
        %731 = vmatprep.subr.mxu0 0.0
        %732 = vmatpush1.msra.mxu0 0.0
        %733 = vmatprep.subr.mxu0 0.0
        %734 = vmatpush1.msra.mxu0 0.0
        %735 = vmatprep.subr.mxu0 0.0
        %736 = vmatpush1.msra.mxu0 0.0
        %737 = vmatprep.subr.mxu0 0.0
        %738 = vmatpush1.msra.mxu0 0.0
        %739 = vmatprep.subr.mxu0 0.0
        %740 = vmatpush1.msra.mxu0 0.0
        %741 = vmatprep.subr.mxu0 0.0
        %742 = vmatpush1.msra.mxu0 0.0
        %743 = vmatprep.subr.mxu0 0.0
        %744 = vmatpush1.msra.mxu0 0.0
        %745 = vmatprep.subr.mxu0 0.0
        %746 = vmatpush1.msra.mxu0 0.0
        %747 = vmatprep.subr.mxu0 0.0
        %748 = vmatpush1.msra.mxu0 0.0
        %749 = vmatprep.subr.mxu0 0.0
        %750 = vmatpush1.msra.mxu0 0.0
        %751 = vmatprep.subr.mxu0 0.0
        %752 = vmatpush1.msra.mxu0 0.0
        %753 = vmatprep.subr.mxu0 0.0
        %754 = vmatpush1.msra.mxu0 0.0
        %755 = vmatprep.subr.mxu0 0.0
        %756 = vmatpush1.msra.mxu0 0.0
        %757 = vmatprep.subr.mxu0 0.0
        %758 = vmatpush1.msra.mxu0 0.0
        %759 = vmatprep.subr.mxu0 0.0
        %760 = vmatpush1.msra.mxu0 0.0
        %761 = vmatprep.subr.mxu0 0.0
        %762 = vmatpush1.msra.mxu0 0.0
        %763 = vmatprep.subr.mxu0 0.0
        %764 = vmatpush1.msra.mxu0 0.0
        %765 = vmatprep.subr.mxu0 0.0
        %766 = vmatpush1.msra.mxu0 0.0
        %767 = vmatprep.subr.mxu0 0.0
        %768 = vmatpush1.msra.mxu0 0.0
        %769 = vmatprep.mubr.f32.mxu0 0.0
        %770 = vmatmul.mubr.f32.gmra.mrb[0].mxu0 %v703
        %v771 = vpop.f32.mrb[0].mxu0
        %v772 = vadd.f32 %v486, %v771
        %v773 = vpop.f32.mrb[0].mxu0
        %v774 = vadd.f32 %v488, %v773
        %775 = vdwg.mxu0
        %776 = vmatprep.subr.mxu0 %v368
        %777 = vmatpush1.msra.mxu0 %v367
        %778 = vmatprep.subr.mxu0 0.0
        %779 = vmatpush1.msra.mxu0 0.0
        %780 = vmatprep.subr.mxu0 0.0
        %781 = vmatpush1.msra.mxu0 0.0
        %782 = vmatprep.subr.mxu0 0.0
        %783 = vmatpush1.msra.mxu0 0.0
        %784 = vmatprep.subr.mxu0 0.0
        %785 = vmatpush1.msra.mxu0 0.0
        %786 = vmatprep.subr.mxu0 0.0
        %787 = vmatpush1.msra.mxu0 0.0
        %788 = vmatprep.subr.mxu0 0.0
        %789 = vmatpush1.msra.mxu0 0.0
        %790 = vmatprep.subr.mxu0 0.0
        %791 = vmatpush1.msra.mxu0 0.0
        %792 = vmatprep.subr.mxu0 0.0
        %793 = vmatpush1.msra.mxu0 0.0
        %794 = vmatprep.subr.mxu0 0.0
        %795 = vmatpush1.msra.mxu0 0.0
        %796 = vmatprep.subr.mxu0 0.0
        %797 = vmatpush1.msra.mxu0 0.0
        %798 = vmatprep.subr.mxu0 0.0
        %799 = vmatpush1.msra.mxu0 0.0
        %800 = vmatprep.subr.mxu0 0.0
        %801 = vmatpush1.msra.mxu0 0.0
        %802 = vmatprep.subr.mxu0 0.0
        %803 = vmatpush1.msra.mxu0 0.0
        %804 = vmatprep.subr.mxu0 0.0
        %805 = vmatpush1.msra.mxu0 0.0
        %806 = vmatprep.subr.mxu0 0.0
        %807 = vmatpush1.msra.mxu0 0.0
        %808 = vmatprep.subr.mxu0 0.0
        %809 = vmatpush1.msra.mxu0 0.0
        %810 = vmatprep.subr.mxu0 0.0
        %811 = vmatpush1.msra.mxu0 0.0
        %812 = vmatprep.subr.mxu0 0.0
        %813 = vmatpush1.msra.mxu0 0.0
        %814 = vmatprep.subr.mxu0 0.0
        %815 = vmatpush1.msra.mxu0 0.0
        %816 = vmatprep.subr.mxu0 0.0
        %817 = vmatpush1.msra.mxu0 0.0
        %818 = vmatprep.subr.mxu0 0.0
        %819 = vmatpush1.msra.mxu0 0.0
        %820 = vmatprep.subr.mxu0 0.0
        %821 = vmatpush1.msra.mxu0 0.0
        %822 = vmatprep.subr.mxu0 0.0
        %823 = vmatpush1.msra.mxu0 0.0
        %824 = vmatprep.subr.mxu0 0.0
        %825 = vmatpush1.msra.mxu0 0.0
        %826 = vmatprep.subr.mxu0 0.0
        %827 = vmatpush1.msra.mxu0 0.0
        %828 = vmatprep.subr.mxu0 0.0
        %829 = vmatpush1.msra.mxu0 0.0
        %830 = vmatprep.subr.mxu0 0.0
        %831 = vmatpush1.msra.mxu0 0.0
        %832 = vmatprep.subr.mxu0 0.0
        %833 = vmatpush1.msra.mxu0 0.0
        %834 = vmatprep.subr.mxu0 0.0
        %835 = vmatpush1.msra.mxu0 0.0
        %836 = vmatprep.subr.mxu0 0.0
        %837 = vmatpush1.msra.mxu0 0.0
        %838 = vmatprep.subr.mxu0 0.0
        %839 = vmatpush1.msra.mxu0 0.0
        %840 = vmatprep.mubr.f32.mxu0 0.0
        %841 = vmatmul.mubr.f32.gmra.mrb[0].mxu0 %v703
        %v842 = vpop.f32.mrb[0].mxu0
        %v843 = vadd.f32 %v557, %v842
        %v844 = vpop.f32.mrb[0].mxu0
        %v845 = vadd.f32 %v559, %v844
        %846 = vdwg.mxu0
        %847 = vmatprep.subr.mxu0 %v370
        %848 = vmatpush1.msra.mxu0 %v369
        %849 = vmatprep.subr.mxu0 0.0
        %850 = vmatpush1.msra.mxu0 0.0
        %851 = vmatprep.subr.mxu0 0.0
        %852 = vmatpush1.msra.mxu0 0.0
        %853 = vmatprep.subr.mxu0 0.0
        %854 = vmatpush1.msra.mxu0 0.0
        %855 = vmatprep.subr.mxu0 0.0
        %856 = vmatpush1.msra.mxu0 0.0
        %857 = vmatprep.subr.mxu0 0.0
        %858 = vmatpush1.msra.mxu0 0.0
        %859 = vmatprep.subr.mxu0 0.0
        %860 = vmatpush1.msra.mxu0 0.0
        %861 = vmatprep.subr.mxu0 0.0
        %862 = vmatpush1.msra.mxu0 0.0
        %863 = vmatprep.subr.mxu0 0.0
        %864 = vmatpush1.msra.mxu0 0.0
        %865 = vmatprep.subr.mxu0 0.0
        %866 = vmatpush1.msra.mxu0 0.0
        %867 = vmatprep.subr.mxu0 0.0
        %868 = vmatpush1.msra.mxu0 0.0
        %869 = vmatprep.subr.mxu0 0.0
        %870 = vmatpush1.msra.mxu0 0.0
        %871 = vmatprep.subr.mxu0 0.0
        %872 = vmatpush1.msra.mxu0 0.0
        %873 = vmatprep.subr.mxu0 0.0
        %874 = vmatpush1.msra.mxu0 0.0
        %875 = vmatprep.subr.mxu0 0.0
        %876 = vmatpush1.msra.mxu0 0.0
        %877 = vmatprep.subr.mxu0 0.0
        %878 = vmatpush1.msra.mxu0 0.0
        %879 = vmatprep.subr.mxu0 0.0
        %880 = vmatpush1.msra.mxu0 0.0
        %881 = vmatprep.subr.mxu0 0.0
        %882 = vmatpush1.msra.mxu0 0.0
        %883 = vmatprep.subr.mxu0 0.0
        %884 = vmatpush1.msra.mxu0 0.0
        %885 = vmatprep.subr.mxu0 0.0
        %886 = vmatpush1.msra.mxu0 0.0
        %887 = vmatprep.subr.mxu0 0.0
        %888 = vmatpush1.msra.mxu0 0.0
        %889 = vmatprep.subr.mxu0 0.0
        %890 = vmatpush1.msra.mxu0 0.0
        %891 = vmatprep.subr.mxu0 0.0
        %892 = vmatpush1.msra.mxu0 0.0
        %893 = vmatprep.subr.mxu0 0.0
        %894 = vmatpush1.msra.mxu0 0.0
        %895 = vmatprep.subr.mxu0 0.0
        %896 = vmatpush1.msra.mxu0 0.0
        %897 = vmatprep.subr.mxu0 0.0
        %898 = vmatpush1.msra.mxu0 0.0
        %899 = vmatprep.subr.mxu0 0.0
        %900 = vmatpush1.msra.mxu0 0.0
        %901 = vmatprep.subr.mxu0 0.0
        %902 = vmatpush1.msra.mxu0 0.0
        %903 = vmatprep.subr.mxu0 0.0
        %904 = vmatpush1.msra.mxu0 0.0
        %905 = vmatprep.subr.mxu0 0.0
        %906 = vmatpush1.msra.mxu0 0.0
        %907 = vmatprep.subr.mxu0 0.0
        %908 = vmatpush1.msra.mxu0 0.0
        %909 = vmatprep.subr.mxu0 0.0
        %910 = vmatpush1.msra.mxu0 0.0
        %911 = vmatprep.mubr.f32.mxu0 0.0
        %912 = vmatmul.mubr.f32.gmra.mrb[0].mxu0 %v703
        %v913 = vpop.f32.mrb[0].mxu0
        %v914 = vadd.f32 %v628, %v913
        %v915 = vpop.f32.mrb[0].mxu0
        %v916 = vadd.f32 %v630, %v915
        %917 = vdwg.mxu0
        %918 = vmatprep.subr.mxu0 0.0
        %919 = vmatpush1.msra.mxu0 %v371
        %920 = vmatprep.subr.mxu0 0.0
        %921 = vmatpush1.msra.mxu0 0.0
        %922 = vmatprep.subr.mxu0 0.0
        %923 = vmatpush1.msra.mxu0 0.0
        %924 = vmatprep.subr.mxu0 0.0
        %925 = vmatpush1.msra.mxu0 0.0
        %926 = vmatprep.subr.mxu0 0.0
        %927 = vmatpush1.msra.mxu0 0.0
        %928 = vmatprep.subr.mxu0 0.0
        %929 = vmatpush1.msra.mxu0 0.0
        %930 = vmatprep.subr.mxu0 0.0
        %931 = vmatpush1.msra.mxu0 0.0
        %932 = vmatprep.subr.mxu0 0.0
        %933 = vmatpush1.msra.mxu0 0.0
        %934 = vmatprep.subr.mxu0 0.0
        %935 = vmatpush1.msra.mxu0 0.0
        %936 = vmatprep.subr.mxu0 0.0
        %937 = vmatpush1.msra.mxu0 0.0
        %938 = vmatprep.subr.mxu0 0.0
        %939 = vmatpush1.msra.mxu0 0.0
        %940 = vmatprep.subr.mxu0 0.0
        %941 = vmatpush1.msra.mxu0 0.0
        %942 = vmatprep.subr.mxu0 0.0
        %943 = vmatpush1.msra.mxu0 0.0
        %944 = vmatprep.subr.mxu0 0.0
        %945 = vmatpush1.msra.mxu0 0.0
        %946 = vmatprep.subr.mxu0 0.0
        %947 = vmatpush1.msra.mxu0 0.0
        %948 = vmatprep.subr.mxu0 0.0
        %949 = vmatpush1.msra.mxu0 0.0
        %950 = vmatprep.subr.mxu0 0.0
        %951 = vmatpush1.msra.mxu0 0.0
        %952 = vmatprep.subr.mxu0 0.0
        %953 = vmatpush1.msra.mxu0 0.0
        %954 = vmatprep.subr.mxu0 0.0
        %955 = vmatpush1.msra.mxu0 0.0
        %956 = vmatprep.subr.mxu0 0.0
        %957 = vmatpush1.msra.mxu0 0.0
        %958 = vmatprep.subr.mxu0 0.0
        %959 = vmatpush1.msra.mxu0 0.0
        %960 = vmatprep.subr.mxu0 0.0
        %961 = vmatpush1.msra.mxu0 0.0
        %962 = vmatprep.subr.mxu0 0.0
        %963 = vmatpush1.msra.mxu0 0.0
        %964 = vmatprep.subr.mxu0 0.0
        %965 = vmatpush1.msra.mxu0 0.0
        %966 = vmatprep.subr.mxu0 0.0
        %967 = vmatpush1.msra.mxu0 0.0
        %968 = vmatprep.subr.mxu0 0.0
        %969 = vmatpush1.msra.mxu0 0.0
        %970 = vmatprep.subr.mxu0 0.0
        %971 = vmatpush1.msra.mxu0 0.0
        %972 = vmatprep.subr.mxu0 0.0
        %973 = vmatpush1.msra.mxu0 0.0
        %974 = vmatprep.subr.mxu0 0.0
        %975 = vmatpush1.msra.mxu0 0.0
        %976 = vmatprep.subr.mxu0 0.0
        %977 = vmatpush1.msra.mxu0 0.0
        %978 = vmatprep.subr.mxu0 0.0
        %979 = vmatpush1.msra.mxu0 0.0
        %980 = vmatprep.subr.mxu0 0.0
        %981 = vmatpush1.msra.mxu0 0.0
        %982 = vmatprep.mubr.f32.mxu0 0.0
        %983 = vmatmul.mubr.f32.gmra.mrb[0].mxu0 %v703
        %v984 = vpop.f32.mrb[0].mxu0
        %v985 = vadd.f32 %v699, %v984
        %v986 = vpop.f32.mrb[0].mxu0
        %987 = vdwg.mxu0
        %s988 = scalar_lea.vmem %s1, 16
        %v989 = vld [vmem:[%s988] sm:$0xff]
        %990 = vrot.lane.b32.xlu0 %v365, 126
        %v991 = vpop.permute.xlu0 %990
        %992 = vrot.lane.b32.xlu0 %v366, 126
        %v993 = vpop.permute.xlu0 %992
        %994 = vrot.lane.b32.xlu0 %v367, 126
        %v995 = vpop.permute.xlu0 %994
        %996 = vrot.lane.b32.xlu0 %v368, 126
        %v997 = vpop.permute.xlu0 %996
        %998 = vrot.lane.b32.xlu0 %v369, 126
        %v999 = vpop.permute.xlu0 %998
        %1000 = vrot.lane.b32.xlu0 %v370, 126
        %v1001 = vpop.permute.xlu0 %1000
        %1002 = vrot.lane.b32.xlu0 %v371, 126
        %v1003 = vpop.permute.xlu0 %1002
        %1004 = vrot.lane.b32.xlu0 %v373, 126
        %v1005 = vpop.permute.xlu0 %1004
        %vm1006 = vcmask 1031168
        %v1007 = vsel %vm1006, %v991, %v993
        %v1008 = vsel %vm1006, %v993, %v995
        %v1009 = vsel %vm1006, %v995, %v997
        %v1010 = vsel %vm1006, %v997, %v999
        %v1011 = vsel %vm1006, %v999, %v1001
        %v1012 = vsel %vm1006, %v1001, %v1003
        %v1013 = vsel %vm1006, %v1003, %v1005
        %v1022 = vsel %vm415, %v989, 0
        %1024 = vmatprep.subr.mxu0 %v1008
        %1025 = vmatpush1.msra.mxu0 %v1007
        %1026 = vmatprep.subr.mxu0 0.0
        %1027 = vmatpush1.msra.mxu0 0.0
        %1028 = vmatprep.subr.mxu0 0.0
        %1029 = vmatpush1.msra.mxu0 0.0
        %1030 = vmatprep.subr.mxu0 0.0
        %1031 = vmatpush1.msra.mxu0 0.0
        %1032 = vmatprep.subr.mxu0 0.0
        %1033 = vmatpush1.msra.mxu0 0.0
        %1034 = vmatprep.subr.mxu0 0.0
        %1035 = vmatpush1.msra.mxu0 0.0
        %1036 = vmatprep.subr.mxu0 0.0
        %1037 = vmatpush1.msra.mxu0 0.0
        %1038 = vmatprep.subr.mxu0 0.0
        %1039 = vmatpush1.msra.mxu0 0.0
        %1040 = vmatprep.subr.mxu0 0.0
        %1041 = vmatpush1.msra.mxu0 0.0
        %1042 = vmatprep.subr.mxu0 0.0
        %1043 = vmatpush1.msra.mxu0 0.0
        %1044 = vmatprep.subr.mxu0 0.0
        %1045 = vmatpush1.msra.mxu0 0.0
        %1046 = vmatprep.subr.mxu0 0.0
        %1047 = vmatpush1.msra.mxu0 0.0
        %1048 = vmatprep.subr.mxu0 0.0
        %1049 = vmatpush1.msra.mxu0 0.0
        %1050 = vmatprep.subr.mxu0 0.0
        %1051 = vmatpush1.msra.mxu0 0.0
        %1052 = vmatprep.subr.mxu0 0.0
        %1053 = vmatpush1.msra.mxu0 0.0
        %1054 = vmatprep.subr.mxu0 0.0
        %1055 = vmatpush1.msra.mxu0 0.0
        %1056 = vmatprep.subr.mxu0 0.0
        %1057 = vmatpush1.msra.mxu0 0.0
        %1058 = vmatprep.subr.mxu0 0.0
        %1059 = vmatpush1.msra.mxu0 0.0
        %1060 = vmatprep.subr.mxu0 0.0
        %1061 = vmatpush1.msra.mxu0 0.0
        %1062 = vmatprep.subr.mxu0 0.0
        %1063 = vmatpush1.msra.mxu0 0.0
        %1064 = vmatprep.subr.mxu0 0.0
        %1065 = vmatpush1.msra.mxu0 0.0
        %1066 = vmatprep.subr.mxu0 0.0
        %1067 = vmatpush1.msra.mxu0 0.0
        %1068 = vmatprep.subr.mxu0 0.0
        %1069 = vmatpush1.msra.mxu0 0.0
        %1070 = vmatprep.subr.mxu0 0.0
        %1071 = vmatpush1.msra.mxu0 0.0
        %1072 = vmatprep.subr.mxu0 0.0
        %1073 = vmatpush1.msra.mxu0 0.0
        %1074 = vmatprep.subr.mxu0 0.0
        %1075 = vmatpush1.msra.mxu0 0.0
        %1076 = vmatprep.subr.mxu0 0.0
        %1077 = vmatpush1.msra.mxu0 0.0
        %1078 = vmatprep.subr.mxu0 0.0
        %1079 = vmatpush1.msra.mxu0 0.0
        %1080 = vmatprep.subr.mxu0 0.0
        %1081 = vmatpush1.msra.mxu0 0.0
        %1082 = vmatprep.subr.mxu0 0.0
        %1083 = vmatpush1.msra.mxu0 0.0
        %1084 = vmatprep.subr.mxu0 0.0
        %1085 = vmatpush1.msra.mxu0 0.0
        %1086 = vmatprep.subr.mxu0 0.0
        %1087 = vmatpush1.msra.mxu0 0.0
        %1088 = vmatprep.mubr.f32.mxu0 0.0
        %1089 = vmatmul.mubr.f32.gmra.mrb[0].mxu0 %v1022
        %v1090 = vpop.f32.mrb[0].mxu0
        %v1091 = vadd.f32 0.0, %v1090
        %v1092 = vpop.f32.mrb[0].mxu0
        %v1093 = vadd.f32 0.0, %v1092
        %1094 = vdwg.mxu0
        %1095 = vmatprep.subr.mxu0 %v1010
        %1096 = vmatpush1.msra.mxu0 %v1009
        %1097 = vmatprep.subr.mxu0 0.0
        %1098 = vmatpush1.msra.mxu0 0.0
        %1099 = vmatprep.subr.mxu0 0.0
        %1100 = vmatpush1.msra.mxu0 0.0
        %1101 = vmatprep.subr.mxu0 0.0
        %1102 = vmatpush1.msra.mxu0 0.0
        %1103 = vmatprep.subr.mxu0 0.0
        %1104 = vmatpush1.msra.mxu0 0.0
        %1105 = vmatprep.subr.mxu0 0.0
        %1106 = vmatpush1.msra.mxu0 0.0
        %1107 = vmatprep.subr.mxu0 0.0
        %1108 = vmatpush1.msra.mxu0 0.0
        %1109 = vmatprep.subr.mxu0 0.0
        %1110 = vmatpush1.msra.mxu0 0.0
        %1111 = vmatprep.subr.mxu0 0.0
        %1112 = vmatpush1.msra.mxu0 0.0
        %1113 = vmatprep.subr.mxu0 0.0
        %1114 = vmatpush1.msra.mxu0 0.0
        %1115 = vmatprep.subr.mxu0 0.0
        %1116 = vmatpush1.msra.mxu0 0.0
        %1117 = vmatprep.subr.mxu0 0.0
        %1118 = vmatpush1.msra.mxu0 0.0
        %1119 = vmatprep.subr.mxu0 0.0
        %1120 = vmatpush1.msra.mxu0 0.0
        %1121 = vmatprep.subr.mxu0 0.0
        %1122 = vmatpush1.msra.mxu0 0.0
        %1123 = vmatprep.subr.mxu0 0.0
        %1124 = vmatpush1.msra.mxu0 0.0
        %1125 = vmatprep.subr.mxu0 0.0
        %1126 = vmatpush1.msra.mxu0 0.0
        %1127 = vmatprep.subr.mxu0 0.0
        %1128 = vmatpush1.msra.mxu0 0.0
        %1129 = vmatprep.subr.mxu0 0.0
        %1130 = vmatpush1.msra.mxu0 0.0
        %1131 = vmatprep.subr.mxu0 0.0
        %1132 = vmatpush1.msra.mxu0 0.0
        %1133 = vmatprep.subr.mxu0 0.0
        %1134 = vmatpush1.msra.mxu0 0.0
        %1135 = vmatprep.subr.mxu0 0.0
        %1136 = vmatpush1.msra.mxu0 0.0
        %1137 = vmatprep.subr.mxu0 0.0
        %1138 = vmatpush1.msra.mxu0 0.0
        %1139 = vmatprep.subr.mxu0 0.0
        %1140 = vmatpush1.msra.mxu0 0.0
        %1141 = vmatprep.subr.mxu0 0.0
        %1142 = vmatpush1.msra.mxu0 0.0
        %1143 = vmatprep.subr.mxu0 0.0
        %1144 = vmatpush1.msra.mxu0 0.0
        %1145 = vmatprep.subr.mxu0 0.0
        %1146 = vmatpush1.msra.mxu0 0.0
        %1147 = vmatprep.subr.mxu0 0.0
        %1148 = vmatpush1.msra.mxu0 0.0
        %1149 = vmatprep.subr.mxu0 0.0
        %1150 = vmatpush1.msra.mxu0 0.0
        %1151 = vmatprep.subr.mxu0 0.0
        %1152 = vmatpush1.msra.mxu0 0.0
        %1153 = vmatprep.subr.mxu0 0.0
        %1154 = vmatpush1.msra.mxu0 0.0
        %1155 = vmatprep.subr.mxu0 0.0
        %1156 = vmatpush1.msra.mxu0 0.0
        %1157 = vmatprep.subr.mxu0 0.0
        %1158 = vmatpush1.msra.mxu0 0.0
        %1159 = vmatprep.mubr.f32.mxu0 0.0
        %1160 = vmatmul.mubr.f32.gmra.mrb[0].mxu0 %v1022
        %v1161 = vpop.f32.mrb[0].mxu0
        %v1162 = vadd.f32 0.0, %v1161
        %v1163 = vpop.f32.mrb[0].mxu0
        %v1164 = vadd.f32 0.0, %v1163
        %1165 = vdwg.mxu0
        %1166 = vmatprep.subr.mxu0 %v1012
        %1167 = vmatpush1.msra.mxu0 %v1011
        %1168 = vmatprep.subr.mxu0 0.0
        %1169 = vmatpush1.msra.mxu0 0.0
        %1170 = vmatprep.subr.mxu0 0.0
        %1171 = vmatpush1.msra.mxu0 0.0
        %1172 = vmatprep.subr.mxu0 0.0
        %1173 = vmatpush1.msra.mxu0 0.0
        %1174 = vmatprep.subr.mxu0 0.0
        %1175 = vmatpush1.msra.mxu0 0.0
        %1176 = vmatprep.subr.mxu0 0.0
        %1177 = vmatpush1.msra.mxu0 0.0
        %1178 = vmatprep.subr.mxu0 0.0
        %1179 = vmatpush1.msra.mxu0 0.0
        %1180 = vmatprep.subr.mxu0 0.0
        %1181 = vmatpush1.msra.mxu0 0.0
        %1182 = vmatprep.subr.mxu0 0.0
        %1183 = vmatpush1.msra.mxu0 0.0
        %1184 = vmatprep.subr.mxu0 0.0
        %1185 = vmatpush1.msra.mxu0 0.0
        %1186 = vmatprep.subr.mxu0 0.0
        %1187 = vmatpush1.msra.mxu0 0.0
        %1188 = vmatprep.subr.mxu0 0.0
        %1189 = vmatpush1.msra.mxu0 0.0
        %1190 = vmatprep.subr.mxu0 0.0
        %1191 = vmatpush1.msra.mxu0 0.0
        %1192 = vmatprep.subr.mxu0 0.0
        %1193 = vmatpush1.msra.mxu0 0.0
        %1194 = vmatprep.subr.mxu0 0.0
        %1195 = vmatpush1.msra.mxu0 0.0
        %1196 = vmatprep.subr.mxu0 0.0
        %1197 = vmatpush1.msra.mxu0 0.0
        %1198 = vmatprep.subr.mxu0 0.0
        %1199 = vmatpush1.msra.mxu0 0.0
        %1200 = vmatprep.subr.mxu0 0.0
        %1201 = vmatpush1.msra.mxu0 0.0
        %1202 = vmatprep.subr.mxu0 0.0
        %1203 = vmatpush1.msra.mxu0 0.0
        %1204 = vmatprep.subr.mxu0 0.0
        %1205 = vmatpush1.msra.mxu0 0.0
        %1206 = vmatprep.subr.mxu0 0.0
        %1207 = vmatpush1.msra.mxu0 0.0
        %1208 = vmatprep.subr.mxu0 0.0
        %1209 = vmatpush1.msra.mxu0 0.0
        %1210 = vmatprep.subr.mxu0 0.0
        %1211 = vmatpush1.msra.mxu0 0.0
        %1212 = vmatprep.subr.mxu0 0.0
        %1213 = vmatpush1.msra.mxu0 0.0
        %1214 = vmatprep.subr.mxu0 0.0
        %1215 = vmatpush1.msra.mxu0 0.0
        %1216 = vmatprep.subr.mxu0 0.0
        %1217 = vmatpush1.msra.mxu0 0.0
        %1218 = vmatprep.subr.mxu0 0.0
        %1219 = vmatpush1.msra.mxu0 0.0
        %1220 = vmatprep.subr.mxu0 0.0
        %1221 = vmatpush1.msra.mxu0 0.0
        %1222 = vmatprep.subr.mxu0 0.0
        %1223 = vmatpush1.msra.mxu0 0.0
        %1224 = vmatprep.subr.mxu0 0.0
        %1225 = vmatpush1.msra.mxu0 0.0
        %1226 = vmatprep.subr.mxu0 0.0
        %1227 = vmatpush1.msra.mxu0 0.0
        %1228 = vmatprep.subr.mxu0 0.0
        %1229 = vmatpush1.msra.mxu0 0.0
        %1230 = vmatprep.mubr.f32.mxu0 0.0
        %1231 = vmatmul.mubr.f32.gmra.mrb[0].mxu0 %v1022
        %v1232 = vpop.f32.mrb[0].mxu0
        %v1233 = vadd.f32 0.0, %v1232
        %v1234 = vpop.f32.mrb[0].mxu0
        %v1235 = vadd.f32 0.0, %v1234
        %1236 = vdwg.mxu0
        %1237 = vmatprep.subr.mxu0 0.0
        %1238 = vmatpush1.msra.mxu0 %v1013
        %1239 = vmatprep.subr.mxu0 0.0
        %1240 = vmatpush1.msra.mxu0 0.0
        %1241 = vmatprep.subr.mxu0 0.0
        %1242 = vmatpush1.msra.mxu0 0.0
        %1243 = vmatprep.subr.mxu0 0.0
        %1244 = vmatpush1.msra.mxu0 0.0
        %1245 = vmatprep.subr.mxu0 0.0
        %1246 = vmatpush1.msra.mxu0 0.0
        %1247 = vmatprep.subr.mxu0 0.0
        %1248 = vmatpush1.msra.mxu0 0.0
        %1249 = vmatprep.subr.mxu0 0.0
        %1250 = vmatpush1.msra.mxu0 0.0
        %1251 = vmatprep.subr.mxu0 0.0
        %1252 = vmatpush1.msra.mxu0 0.0
        %1253 = vmatprep.subr.mxu0 0.0
        %1254 = vmatpush1.msra.mxu0 0.0
        %1255 = vmatprep.subr.mxu0 0.0
        %1256 = vmatpush1.msra.mxu0 0.0
        %1257 = vmatprep.subr.mxu0 0.0
        %1258 = vmatpush1.msra.mxu0 0.0
        %1259 = vmatprep.subr.mxu0 0.0
        %1260 = vmatpush1.msra.mxu0 0.0
        %1261 = vmatprep.subr.mxu0 0.0
        %1262 = vmatpush1.msra.mxu0 0.0
        %1263 = vmatprep.subr.mxu0 0.0
        %1264 = vmatpush1.msra.mxu0 0.0
        %1265 = vmatprep.subr.mxu0 0.0
        %1266 = vmatpush1.msra.mxu0 0.0
        %1267 = vmatprep.subr.mxu0 0.0
        %1268 = vmatpush1.msra.mxu0 0.0
        %1269 = vmatprep.subr.mxu0 0.0
        %1270 = vmatpush1.msra.mxu0 0.0
        %1271 = vmatprep.subr.mxu0 0.0
        %1272 = vmatpush1.msra.mxu0 0.0
        %1273 = vmatprep.subr.mxu0 0.0
        %1274 = vmatpush1.msra.mxu0 0.0
        %1275 = vmatprep.subr.mxu0 0.0
        %1276 = vmatpush1.msra.mxu0 0.0
        %1277 = vmatprep.subr.mxu0 0.0
        %1278 = vmatpush1.msra.mxu0 0.0
        %1279 = vmatprep.subr.mxu0 0.0
        %1280 = vmatpush1.msra.mxu0 0.0
        %1281 = vmatprep.subr.mxu0 0.0
        %1282 = vmatpush1.msra.mxu0 0.0
        %1283 = vmatprep.subr.mxu0 0.0
        %1284 = vmatpush1.msra.mxu0 0.0
        %1285 = vmatprep.subr.mxu0 0.0
        %1286 = vmatpush1.msra.mxu0 0.0
        %1287 = vmatprep.subr.mxu0 0.0
        %1288 = vmatpush1.msra.mxu0 0.0
        %1289 = vmatprep.subr.mxu0 0.0
        %1290 = vmatpush1.msra.mxu0 0.0
        %1291 = vmatprep.subr.mxu0 0.0
        %1292 = vmatpush1.msra.mxu0 0.0
        %1293 = vmatprep.subr.mxu0 0.0
        %1294 = vmatpush1.msra.mxu0 0.0
        %1295 = vmatprep.subr.mxu0 0.0
        %1296 = vmatpush1.msra.mxu0 0.0
        %1297 = vmatprep.subr.mxu0 0.0
        %1298 = vmatpush1.msra.mxu0 0.0
        %1299 = vmatprep.subr.mxu0 0.0
        %1300 = vmatpush1.msra.mxu0 0.0
        %1301 = vmatprep.mubr.f32.mxu0 0.0
        %1302 = vmatmul.mubr.f32.gmra.mrb[0].mxu0 %v1022
        %v1303 = vpop.f32.mrb[0].mxu0
        %v1304 = vadd.f32 0.0, %v1303
        %v1305 = vpop.f32.mrb[0].mxu0
        %1306 = vdwg.mxu0
        %v1307 = vadd.f32 %v772, %v1091
        %v1308 = vadd.f32 %v774, %v1093
        %v1309 = vadd.f32 %v843, %v1162
        %v1310 = vadd.f32 %v845, %v1164
        %v1311 = vadd.f32 %v914, %v1233
        %v1312 = vadd.f32 %v916, %v1235
        %v1313 = vadd.f32 %v985, %v1304
        %s1314 = scalar_lea.vmem %s1, 24
        %v1315 = vld [vmem:[%s1314] sm:$0xff]
        %1316 = vrot.lane.b32.xlu0 %v365, 118
        %v1317 = vpop.permute.xlu0 %1316
        %1318 = vrot.lane.b32.xlu0 %v366, 118
        %v1319 = vpop.permute.xlu0 %1318
        %1320 = vrot.lane.b32.xlu0 %v367, 118
        %v1321 = vpop.permute.xlu0 %1320
        %1322 = vrot.lane.b32.xlu0 %v368, 118
        %v1323 = vpop.permute.xlu0 %1322
        %1324 = vrot.lane.b32.xlu0 %v369, 118
        %v1325 = vpop.permute.xlu0 %1324
        %1326 = vrot.lane.b32.xlu0 %v370, 118
        %v1327 = vpop.permute.xlu0 %1326
        %1328 = vrot.lane.b32.xlu0 %v371, 118
        %v1329 = vpop.permute.xlu0 %1328
        %1330 = vrot.lane.b32.xlu0 %v373, 118
        %v1331 = vpop.permute.xlu0 %1330
        %vm1332 = vcmask 965632
        %v1333 = vsel %vm1332, %v1317, %v1319
        %v1334 = vsel %vm1332, %v1319, %v1321
        %v1335 = vsel %vm1332, %v1321, %v1323
        %v1336 = vsel %vm1332, %v1323, %v1325
        %v1337 = vsel %vm1332, %v1325, %v1327
        %v1338 = vsel %vm1332, %v1327, %v1329
        %v1339 = vsel %vm1332, %v1329, %v1331
        %v1348 = vsel %vm415, %v1315, 0
        %1350 = vmatprep.subr.mxu0 %v1334
        %1351 = vmatpush1.msra.mxu0 %v1333
        %1352 = vmatprep.subr.mxu0 0.0
        %1353 = vmatpush1.msra.mxu0 0.0
        %1354 = vmatprep.subr.mxu0 0.0
        %1355 = vmatpush1.msra.mxu0 0.0
        %1356 = vmatprep.subr.mxu0 0.0
        %1357 = vmatpush1.msra.mxu0 0.0
        %1358 = vmatprep.subr.mxu0 0.0
        %1359 = vmatpush1.msra.mxu0 0.0
        %1360 = vmatprep.subr.mxu0 0.0
        %1361 = vmatpush1.msra.mxu0 0.0
        %1362 = vmatprep.subr.mxu0 0.0
        %1363 = vmatpush1.msra.mxu0 0.0
        %1364 = vmatprep.subr.mxu0 0.0
        %1365 = vmatpush1.msra.mxu0 0.0
        %1366 = vmatprep.subr.mxu0 0.0
        %1367 = vmatpush1.msra.mxu0 0.0
        %1368 = vmatprep.subr.mxu0 0.0
        %1369 = vmatpush1.msra.mxu0 0.0
        %1370 = vmatprep.subr.mxu0 0.0
        %1371 = vmatpush1.msra.mxu0 0.0
        %1372 = vmatprep.subr.mxu0 0.0
        %1373 = vmatpush1.msra.mxu0 0.0
        %1374 = vmatprep.subr.mxu0 0.0
        %1375 = vmatpush1.msra.mxu0 0.0
        %1376 = vmatprep.subr.mxu0 0.0
        %1377 = vmatpush1.msra.mxu0 0.0
        %1378 = vmatprep.subr.mxu0 0.0
        %1379 = vmatpush1.msra.mxu0 0.0
        %1380 = vmatprep.subr.mxu0 0.0
        %1381 = vmatpush1.msra.mxu0 0.0
        %1382 = vmatprep.subr.mxu0 0.0
        %1383 = vmatpush1.msra.mxu0 0.0
        %1384 = vmatprep.subr.mxu0 0.0
        %1385 = vmatpush1.msra.mxu0 0.0
        %1386 = vmatprep.subr.mxu0 0.0
        %1387 = vmatpush1.msra.mxu0 0.0
        %1388 = vmatprep.subr.mxu0 0.0
        %1389 = vmatpush1.msra.mxu0 0.0
        %1390 = vmatprep.subr.mxu0 0.0
        %1391 = vmatpush1.msra.mxu0 0.0
        %1392 = vmatprep.subr.mxu0 0.0
        %1393 = vmatpush1.msra.mxu0 0.0
        %1394 = vmatprep.subr.mxu0 0.0
        %1395 = vmatpush1.msra.mxu0 0.0
        %1396 = vmatprep.subr.mxu0 0.0
        %1397 = vmatpush1.msra.mxu0 0.0
        %1398 = vmatprep.subr.mxu0 0.0
        %1399 = vmatpush1.msra.mxu0 0.0
        %1400 = vmatprep.subr.mxu0 0.0
        %1401 = vmatpush1.msra.mxu0 0.0
        %1402 = vmatprep.subr.mxu0 0.0
        %1403 = vmatpush1.msra.mxu0 0.0
        %1404 = vmatprep.subr.mxu0 0.0
        %1405 = vmatpush1.msra.mxu0 0.0
        %1406 = vmatprep.subr.mxu0 0.0
        %1407 = vmatpush1.msra.mxu0 0.0
        %1408 = vmatprep.subr.mxu0 0.0
        %1409 = vmatpush1.msra.mxu0 0.0
        %1410 = vmatprep.subr.mxu0 0.0
        %1411 = vmatpush1.msra.mxu0 0.0
        %1412 = vmatprep.subr.mxu0 0.0
        %1413 = vmatpush1.msra.mxu0 0.0
        %1414 = vmatprep.mubr.f32.mxu0 0.0
        %1415 = vmatmul.mubr.f32.gmra.mrb[0].mxu0 %v1348
        %v1416 = vpop.f32.mrb[0].mxu0
        %v1417 = vadd.f32 0.0, %v1416
        %v1418 = vpop.f32.mrb[0].mxu0
        %v1419 = vadd.f32 0.0, %v1418
        %1420 = vdwg.mxu0
        %1421 = vmatprep.subr.mxu0 %v1336
        %1422 = vmatpush1.msra.mxu0 %v1335
        %1423 = vmatprep.subr.mxu0 0.0
        %1424 = vmatpush1.msra.mxu0 0.0
        %1425 = vmatprep.subr.mxu0 0.0
        %1426 = vmatpush1.msra.mxu0 0.0
        %1427 = vmatprep.subr.mxu0 0.0
        %1428 = vmatpush1.msra.mxu0 0.0
        %1429 = vmatprep.subr.mxu0 0.0
        %1430 = vmatpush1.msra.mxu0 0.0
        %1431 = vmatprep.subr.mxu0 0.0
        %1432 = vmatpush1.msra.mxu0 0.0
        %1433 = vmatprep.subr.mxu0 0.0
        %1434 = vmatpush1.msra.mxu0 0.0
        %1435 = vmatprep.subr.mxu0 0.0
        %1436 = vmatpush1.msra.mxu0 0.0
        %1437 = vmatprep.subr.mxu0 0.0
        %1438 = vmatpush1.msra.mxu0 0.0
        %1439 = vmatprep.subr.mxu0 0.0
        %1440 = vmatpush1.msra.mxu0 0.0
        %1441 = vmatprep.subr.mxu0 0.0
        %1442 = vmatpush1.msra.mxu0 0.0
        %1443 = vmatprep.subr.mxu0 0.0
        %1444 = vmatpush1.msra.mxu0 0.0
        %1445 = vmatprep.subr.mxu0 0.0
        %1446 = vmatpush1.msra.mxu0 0.0
        %1447 = vmatprep.subr.mxu0 0.0
        %1448 = vmatpush1.msra.mxu0 0.0
        %1449 = vmatprep.subr.mxu0 0.0
        %1450 = vmatpush1.msra.mxu0 0.0
        %1451 = vmatprep.subr.mxu0 0.0
        %1452 = vmatpush1.msra.mxu0 0.0
        %1453 = vmatprep.subr.mxu0 0.0
        %1454 = vmatpush1.msra.mxu0 0.0
        %1455 = vmatprep.subr.mxu0 0.0
        %1456 = vmatpush1.msra.mxu0 0.0
        %1457 = vmatprep.subr.mxu0 0.0
        %1458 = vmatpush1.msra.mxu0 0.0
        %1459 = vmatprep.subr.mxu0 0.0
        %1460 = vmatpush1.msra.mxu0 0.0
        %1461 = vmatprep.subr.mxu0 0.0
        %1462 = vmatpush1.msra.mxu0 0.0
        %1463 = vmatprep.subr.mxu0 0.0
        %1464 = vmatpush1.msra.mxu0 0.0
        %1465 = vmatprep.subr.mxu0 0.0
        %1466 = vmatpush1.msra.mxu0 0.0
        %1467 = vmatprep.subr.mxu0 0.0
        %1468 = vmatpush1.msra.mxu0 0.0
        %1469 = vmatprep.subr.mxu0 0.0
        %1470 = vmatpush1.msra.mxu0 0.0
        %1471 = vmatprep.subr.mxu0 0.0
        %1472 = vmatpush1.msra.mxu0 0.0
        %1473 = vmatprep.subr.mxu0 0.0
        %1474 = vmatpush1.msra.mxu0 0.0
        %1475 = vmatprep.subr.mxu0 0.0
        %1476 = vmatpush1.msra.mxu0 0.0
        %1477 = vmatprep.subr.mxu0 0.0
        %1478 = vmatpush1.msra.mxu0 0.0
        %1479 = vmatprep.subr.mxu0 0.0
        %1480 = vmatpush1.msra.mxu0 0.0
        %1481 = vmatprep.subr.mxu0 0.0
        %1482 = vmatpush1.msra.mxu0 0.0
        %1483 = vmatprep.subr.mxu0 0.0
        %1484 = vmatpush1.msra.mxu0 0.0
        %1485 = vmatprep.mubr.f32.mxu0 0.0
        %1486 = vmatmul.mubr.f32.gmra.mrb[0].mxu0 %v1348
        %v1487 = vpop.f32.mrb[0].mxu0
        %v1488 = vadd.f32 0.0, %v1487
        %v1489 = vpop.f32.mrb[0].mxu0
        %v1490 = vadd.f32 0.0, %v1489
        %1491 = vdwg.mxu0
        %1492 = vmatprep.subr.mxu0 %v1338
        %1493 = vmatpush1.msra.mxu0 %v1337
        %1494 = vmatprep.subr.mxu0 0.0
        %1495 = vmatpush1.msra.mxu0 0.0
        %1496 = vmatprep.subr.mxu0 0.0
        %1497 = vmatpush1.msra.mxu0 0.0
        %1498 = vmatprep.subr.mxu0 0.0
        %1499 = vmatpush1.msra.mxu0 0.0
        %1500 = vmatprep.subr.mxu0 0.0
        %1501 = vmatpush1.msra.mxu0 0.0
        %1502 = vmatprep.subr.mxu0 0.0
        %1503 = vmatpush1.msra.mxu0 0.0
        %1504 = vmatprep.subr.mxu0 0.0
        %1505 = vmatpush1.msra.mxu0 0.0
        %1506 = vmatprep.subr.mxu0 0.0
        %1507 = vmatpush1.msra.mxu0 0.0
        %1508 = vmatprep.subr.mxu0 0.0
        %1509 = vmatpush1.msra.mxu0 0.0
        %1510 = vmatprep.subr.mxu0 0.0
        %1511 = vmatpush1.msra.mxu0 0.0
        %1512 = vmatprep.subr.mxu0 0.0
        %1513 = vmatpush1.msra.mxu0 0.0
        %1514 = vmatprep.subr.mxu0 0.0
        %1515 = vmatpush1.msra.mxu0 0.0
        %1516 = vmatprep.subr.mxu0 0.0
        %1517 = vmatpush1.msra.mxu0 0.0
        %1518 = vmatprep.subr.mxu0 0.0
        %1519 = vmatpush1.msra.mxu0 0.0
        %1520 = vmatprep.subr.mxu0 0.0
        %1521 = vmatpush1.msra.mxu0 0.0
        %1522 = vmatprep.subr.mxu0 0.0
        %1523 = vmatpush1.msra.mxu0 0.0
        %1524 = vmatprep.subr.mxu0 0.0
        %1525 = vmatpush1.msra.mxu0 0.0
        %1526 = vmatprep.subr.mxu0 0.0
        %1527 = vmatpush1.msra.mxu0 0.0
        %1528 = vmatprep.subr.mxu0 0.0
        %1529 = vmatpush1.msra.mxu0 0.0
        %1530 = vmatprep.subr.mxu0 0.0
        %1531 = vmatpush1.msra.mxu0 0.0
        %1532 = vmatprep.subr.mxu0 0.0
        %1533 = vmatpush1.msra.mxu0 0.0
        %1534 = vmatprep.subr.mxu0 0.0
        %1535 = vmatpush1.msra.mxu0 0.0
        %1536 = vmatprep.subr.mxu0 0.0
        %1537 = vmatpush1.msra.mxu0 0.0
        %1538 = vmatprep.subr.mxu0 0.0
        %1539 = vmatpush1.msra.mxu0 0.0
        %1540 = vmatprep.subr.mxu0 0.0
        %1541 = vmatpush1.msra.mxu0 0.0
        %1542 = vmatprep.subr.mxu0 0.0
        %1543 = vmatpush1.msra.mxu0 0.0
        %1544 = vmatprep.subr.mxu0 0.0
        %1545 = vmatpush1.msra.mxu0 0.0
        %1546 = vmatprep.subr.mxu0 0.0
        %1547 = vmatpush1.msra.mxu0 0.0
        %1548 = vmatprep.subr.mxu0 0.0
        %1549 = vmatpush1.msra.mxu0 0.0
        %1550 = vmatprep.subr.mxu0 0.0
        %1551 = vmatpush1.msra.mxu0 0.0
        %1552 = vmatprep.subr.mxu0 0.0
        %1553 = vmatpush1.msra.mxu0 0.0
        %1554 = vmatprep.subr.mxu0 0.0
        %1555 = vmatpush1.msra.mxu0 0.0
        %1556 = vmatprep.mubr.f32.mxu0 0.0
        %1557 = vmatmul.mubr.f32.gmra.mrb[0].mxu0 %v1348
        %v1558 = vpop.f32.mrb[0].mxu0
        %v1559 = vadd.f32 0.0, %v1558
        %v1560 = vpop.f32.mrb[0].mxu0
        %v1561 = vadd.f32 0.0, %v1560
        %1562 = vdwg.mxu0
        %1563 = vmatprep.subr.mxu0 0.0
        %1564 = vmatpush1.msra.mxu0 %v1339
        %1565 = vmatprep.subr.mxu0 0.0
        %1566 = vmatpush1.msra.mxu0 0.0
        %1567 = vmatprep.subr.mxu0 0.0
        %1568 = vmatpush1.msra.mxu0 0.0
        %1569 = vmatprep.subr.mxu0 0.0
        %1570 = vmatpush1.msra.mxu0 0.0
        %1571 = vmatprep.subr.mxu0 0.0
        %1572 = vmatpush1.msra.mxu0 0.0
        %1573 = vmatprep.subr.mxu0 0.0
        %1574 = vmatpush1.msra.mxu0 0.0
        %1575 = vmatprep.subr.mxu0 0.0
        %1576 = vmatpush1.msra.mxu0 0.0
        %1577 = vmatprep.subr.mxu0 0.0
        %1578 = vmatpush1.msra.mxu0 0.0
        %1579 = vmatprep.subr.mxu0 0.0
        %1580 = vmatpush1.msra.mxu0 0.0
        %1581 = vmatprep.subr.mxu0 0.0
        %1582 = vmatpush1.msra.mxu0 0.0
        %1583 = vmatprep.subr.mxu0 0.0
        %1584 = vmatpush1.msra.mxu0 0.0
        %1585 = vmatprep.subr.mxu0 0.0
        %1586 = vmatpush1.msra.mxu0 0.0
        %1587 = vmatprep.subr.mxu0 0.0
        %1588 = vmatpush1.msra.mxu0 0.0
        %1589 = vmatprep.subr.mxu0 0.0
        %1590 = vmatpush1.msra.mxu0 0.0
        %1591 = vmatprep.subr.mxu0 0.0
        %1592 = vmatpush1.msra.mxu0 0.0
        %1593 = vmatprep.subr.mxu0 0.0
        %1594 = vmatpush1.msra.mxu0 0.0
        %1595 = vmatprep.subr.mxu0 0.0
        %1596 = vmatpush1.msra.mxu0 0.0
        %1597 = vmatprep.subr.mxu0 0.0
        %1598 = vmatpush1.msra.mxu0 0.0
        %1599 = vmatprep.subr.mxu0 0.0
        %1600 = vmatpush1.msra.mxu0 0.0
        %1601 = vmatprep.subr.mxu0 0.0
        %1602 = vmatpush1.msra.mxu0 0.0
        %1603 = vmatprep.subr.mxu0 0.0
        %1604 = vmatpush1.msra.mxu0 0.0
        %1605 = vmatprep.subr.mxu0 0.0
        %1606 = vmatpush1.msra.mxu0 0.0
        %1607 = vmatprep.subr.mxu0 0.0
        %1608 = vmatpush1.msra.mxu0 0.0
        %1609 = vmatprep.subr.mxu0 0.0
        %1610 = vmatpush1.msra.mxu0 0.0
        %1611 = vmatprep.subr.mxu0 0.0
        %1612 = vmatpush1.msra.mxu0 0.0
        %1613 = vmatprep.subr.mxu0 0.0
        %1614 = vmatpush1.msra.mxu0 0.0
        %1615 = vmatprep.subr.mxu0 0.0
        %1616 = vmatpush1.msra.mxu0 0.0
        %1617 = vmatprep.subr.mxu0 0.0
        %1618 = vmatpush1.msra.mxu0 0.0
        %1619 = vmatprep.subr.mxu0 0.0
        %1620 = vmatpush1.msra.mxu0 0.0
        %1621 = vmatprep.subr.mxu0 0.0
        %1622 = vmatpush1.msra.mxu0 0.0
        %1623 = vmatprep.subr.mxu0 0.0
        %1624 = vmatpush1.msra.mxu0 0.0
        %1625 = vmatprep.subr.mxu0 0.0
        %1626 = vmatpush1.msra.mxu0 0.0
        %1627 = vmatprep.mubr.f32.mxu0 0.0
        %1628 = vmatmul.mubr.f32.gmra.mrb[0].mxu0 %v1348
        %v1629 = vpop.f32.mrb[0].mxu0
        %v1630 = vadd.f32 0.0, %v1629
        %v1631 = vpop.f32.mrb[0].mxu0
        %1632 = vdwg.mxu0
        %v1633 = vadd.f32 %v1307, %v1417
        %v1634 = vadd.f32 %v1308, %v1419
        %v1635 = vadd.f32 %v1309, %v1488
        %v1636 = vadd.f32 %v1310, %v1490
        %v1637 = vadd.f32 %v1311, %v1559
        %v1638 = vadd.f32 %v1312, %v1561
        %v1639 = vadd.f32 %v1313, %v1630
        %s1640 = scalar_lea.vmem %s1, 32
        %v1641 = vld [vmem:[%s1640] sm:$0xff]
        %1642 = vrot.lane.b32.xlu0 %v365, 117
        %v1643 = vpop.permute.xlu0 %1642
        %1644 = vrot.lane.b32.xlu0 %v366, 117
        %v1645 = vpop.permute.xlu0 %1644
        %1646 = vrot.lane.b32.xlu0 %v367, 117
        %v1647 = vpop.permute.xlu0 %1646
        %1648 = vrot.lane.b32.xlu0 %v368, 117
        %v1649 = vpop.permute.xlu0 %1648
        %1650 = vrot.lane.b32.xlu0 %v369, 117
        %v1651 = vpop.permute.xlu0 %1650
        %1652 = vrot.lane.b32.xlu0 %v370, 117
        %v1653 = vpop.permute.xlu0 %1652
        %1654 = vrot.lane.b32.xlu0 %v371, 117
        %v1655 = vpop.permute.xlu0 %1654
        %1656 = vrot.lane.b32.xlu0 %v373, 117
        %v1657 = vpop.permute.xlu0 %1656
        %vm1658 = vcmask 957440
        %v1659 = vsel %vm1658, %v1643, %v1645
        %v1660 = vsel %vm1658, %v1645, %v1647
        %v1661 = vsel %vm1658, %v1647, %v1649
        %v1662 = vsel %vm1658, %v1649, %v1651
        %v1663 = vsel %vm1658, %v1651, %v1653
        %v1664 = vsel %vm1658, %v1653, %v1655
        %v1665 = vsel %vm1658, %v1655, %v1657
        %v1674 = vsel %vm415, %v1641, 0
        %1676 = vmatprep.subr.mxu0 %v1660
        %1677 = vmatpush1.msra.mxu0 %v1659
        %1678 = vmatprep.subr.mxu0 0.0
        %1679 = vmatpush1.msra.mxu0 0.0
        %1680 = vmatprep.subr.mxu0 0.0
        %1681 = vmatpush1.msra.mxu0 0.0
        %1682 = vmatprep.subr.mxu0 0.0
        %1683 = vmatpush1.msra.mxu0 0.0
        %1684 = vmatprep.subr.mxu0 0.0
        %1685 = vmatpush1.msra.mxu0 0.0
        %1686 = vmatprep.subr.mxu0 0.0
        %1687 = vmatpush1.msra.mxu0 0.0
        %1688 = vmatprep.subr.mxu0 0.0
        %1689 = vmatpush1.msra.mxu0 0.0
        %1690 = vmatprep.subr.mxu0 0.0
        %1691 = vmatpush1.msra.mxu0 0.0
        %1692 = vmatprep.subr.mxu0 0.0
        %1693 = vmatpush1.msra.mxu0 0.0
        %1694 = vmatprep.subr.mxu0 0.0
        %1695 = vmatpush1.msra.mxu0 0.0
        %1696 = vmatprep.subr.mxu0 0.0
        %1697 = vmatpush1.msra.mxu0 0.0
        %1698 = vmatprep.subr.mxu0 0.0
        %1699 = vmatpush1.msra.mxu0 0.0
        %1700 = vmatprep.subr.mxu0 0.0
        %1701 = vmatpush1.msra.mxu0 0.0
        %1702 = vmatprep.subr.mxu0 0.0
        %1703 = vmatpush1.msra.mxu0 0.0
        %1704 = vmatprep.subr.mxu0 0.0
        %1705 = vmatpush1.msra.mxu0 0.0
        %1706 = vmatprep.subr.mxu0 0.0
        %1707 = vmatpush1.msra.mxu0 0.0
        %1708 = vmatprep.subr.mxu0 0.0
        %1709 = vmatpush1.msra.mxu0 0.0
        %1710 = vmatprep.subr.mxu0 0.0
        %1711 = vmatpush1.msra.mxu0 0.0
        %1712 = vmatprep.subr.mxu0 0.0
        %1713 = vmatpush1.msra.mxu0 0.0
        %1714 = vmatprep.subr.mxu0 0.0
        %1715 = vmatpush1.msra.mxu0 0.0
        %1716 = vmatprep.subr.mxu0 0.0
        %1717 = vmatpush1.msra.mxu0 0.0
        %1718 = vmatprep.subr.mxu0 0.0
        %1719 = vmatpush1.msra.mxu0 0.0
        %1720 = vmatprep.subr.mxu0 0.0
        %1721 = vmatpush1.msra.mxu0 0.0
        %1722 = vmatprep.subr.mxu0 0.0
        %1723 = vmatpush1.msra.mxu0 0.0
        %1724 = vmatprep.subr.mxu0 0.0
        %1725 = vmatpush1.msra.mxu0 0.0
        %1726 = vmatprep.subr.mxu0 0.0
        %1727 = vmatpush1.msra.mxu0 0.0
        %1728 = vmatprep.subr.mxu0 0.0
        %1729 = vmatpush1.msra.mxu0 0.0
        %1730 = vmatprep.subr.mxu0 0.0
        %1731 = vmatpush1.msra.mxu0 0.0
        %1732 = vmatprep.subr.mxu0 0.0
        %1733 = vmatpush1.msra.mxu0 0.0
        %1734 = vmatprep.subr.mxu0 0.0
        %1735 = vmatpush1.msra.mxu0 0.0
        %1736 = vmatprep.subr.mxu0 0.0
        %1737 = vmatpush1.msra.mxu0 0.0
        %1738 = vmatprep.subr.mxu0 0.0
        %1739 = vmatpush1.msra.mxu0 0.0
        %1740 = vmatprep.mubr.f32.mxu0 0.0
        %1741 = vmatmul.mubr.f32.gmra.mrb[0].mxu0 %v1674
        %v1742 = vpop.f32.mrb[0].mxu0
        %v1743 = vadd.f32 0.0, %v1742
        %v1744 = vpop.f32.mrb[0].mxu0
        %v1745 = vadd.f32 0.0, %v1744
        %1746 = vdwg.mxu0
        %1747 = vmatprep.subr.mxu0 %v1662
        %1748 = vmatpush1.msra.mxu0 %v1661
        %1749 = vmatprep.subr.mxu0 0.0
        %1750 = vmatpush1.msra.mxu0 0.0
        %1751 = vmatprep.subr.mxu0 0.0
        %1752 = vmatpush1.msra.mxu0 0.0
        %1753 = vmatprep.subr.mxu0 0.0
        %1754 = vmatpush1.msra.mxu0 0.0
        %1755 = vmatprep.subr.mxu0 0.0
        %1756 = vmatpush1.msra.mxu0 0.0
        %1757 = vmatprep.subr.mxu0 0.0
        %1758 = vmatpush1.msra.mxu0 0.0
        %1759 = vmatprep.subr.mxu0 0.0
        %1760 = vmatpush1.msra.mxu0 0.0
        %1761 = vmatprep.subr.mxu0 0.0
        %1762 = vmatpush1.msra.mxu0 0.0
        %1763 = vmatprep.subr.mxu0 0.0
        %1764 = vmatpush1.msra.mxu0 0.0
        %1765 = vmatprep.subr.mxu0 0.0
        %1766 = vmatpush1.msra.mxu0 0.0
        %1767 = vmatprep.subr.mxu0 0.0
        %1768 = vmatpush1.msra.mxu0 0.0
        %1769 = vmatprep.subr.mxu0 0.0
        %1770 = vmatpush1.msra.mxu0 0.0
        %1771 = vmatprep.subr.mxu0 0.0
        %1772 = vmatpush1.msra.mxu0 0.0
        %1773 = vmatprep.subr.mxu0 0.0
        %1774 = vmatpush1.msra.mxu0 0.0
        %1775 = vmatprep.subr.mxu0 0.0
        %1776 = vmatpush1.msra.mxu0 0.0
        %1777 = vmatprep.subr.mxu0 0.0
        %1778 = vmatpush1.msra.mxu0 0.0
        %1779 = vmatprep.subr.mxu0 0.0
        %1780 = vmatpush1.msra.mxu0 0.0
        %1781 = vmatprep.subr.mxu0 0.0
        %1782 = vmatpush1.msra.mxu0 0.0
        %1783 = vmatprep.subr.mxu0 0.0
        %1784 = vmatpush1.msra.mxu0 0.0
        %1785 = vmatprep.subr.mxu0 0.0
        %1786 = vmatpush1.msra.mxu0 0.0
        %1787 = vmatprep.subr.mxu0 0.0
        %1788 = vmatpush1.msra.mxu0 0.0
        %1789 = vmatprep.subr.mxu0 0.0
        %1790 = vmatpush1.msra.mxu0 0.0
        %1791 = vmatprep.subr.mxu0 0.0
        %1792 = vmatpush1.msra.mxu0 0.0
        %1793 = vmatprep.subr.mxu0 0.0
        %1794 = vmatpush1.msra.mxu0 0.0
        %1795 = vmatprep.subr.mxu0 0.0
        %1796 = vmatpush1.msra.mxu0 0.0
        %1797 = vmatprep.subr.mxu0 0.0
        %1798 = vmatpush1.msra.mxu0 0.0
        %1799 = vmatprep.subr.mxu0 0.0
        %1800 = vmatpush1.msra.mxu0 0.0
        %1801 = vmatprep.subr.mxu0 0.0
        %1802 = vmatpush1.msra.mxu0 0.0
        %1803 = vmatprep.subr.mxu0 0.0
        %1804 = vmatpush1.msra.mxu0 0.0
        %1805 = vmatprep.subr.mxu0 0.0
        %1806 = vmatpush1.msra.mxu0 0.0
        %1807 = vmatprep.subr.mxu0 0.0
        %1808 = vmatpush1.msra.mxu0 0.0
        %1809 = vmatprep.subr.mxu0 0.0
        %1810 = vmatpush1.msra.mxu0 0.0
        %1811 = vmatprep.mubr.f32.mxu0 0.0
        %1812 = vmatmul.mubr.f32.gmra.mrb[0].mxu0 %v1674
        %v1813 = vpop.f32.mrb[0].mxu0
        %v1814 = vadd.f32 0.0, %v1813
        %v1815 = vpop.f32.mrb[0].mxu0
        %v1816 = vadd.f32 0.0, %v1815
        %1817 = vdwg.mxu0
        %1818 = vmatprep.subr.mxu0 %v1664
        %1819 = vmatpush1.msra.mxu0 %v1663
        %1820 = vmatprep.subr.mxu0 0.0
        %1821 = vmatpush1.msra.mxu0 0.0
        %1822 = vmatprep.subr.mxu0 0.0
        %1823 = vmatpush1.msra.mxu0 0.0
        %1824 = vmatprep.subr.mxu0 0.0
        %1825 = vmatpush1.msra.mxu0 0.0
        %1826 = vmatprep.subr.mxu0 0.0
        %1827 = vmatpush1.msra.mxu0 0.0
        %1828 = vmatprep.subr.mxu0 0.0
        %1829 = vmatpush1.msra.mxu0 0.0
        %1830 = vmatprep.subr.mxu0 0.0
        %1831 = vmatpush1.msra.mxu0 0.0
        %1832 = vmatprep.subr.mxu0 0.0
        %1833 = vmatpush1.msra.mxu0 0.0
        %1834 = vmatprep.subr.mxu0 0.0
        %1835 = vmatpush1.msra.mxu0 0.0
        %1836 = vmatprep.subr.mxu0 0.0
        %1837 = vmatpush1.msra.mxu0 0.0
        %1838 = vmatprep.subr.mxu0 0.0
        %1839 = vmatpush1.msra.mxu0 0.0
        %1840 = vmatprep.subr.mxu0 0.0
        %1841 = vmatpush1.msra.mxu0 0.0
        %1842 = vmatprep.subr.mxu0 0.0
        %1843 = vmatpush1.msra.mxu0 0.0
        %1844 = vmatprep.subr.mxu0 0.0
        %1845 = vmatpush1.msra.mxu0 0.0
        %1846 = vmatprep.subr.mxu0 0.0
        %1847 = vmatpush1.msra.mxu0 0.0
        %1848 = vmatprep.subr.mxu0 0.0
        %1849 = vmatpush1.msra.mxu0 0.0
        %1850 = vmatprep.subr.mxu0 0.0
        %1851 = vmatpush1.msra.mxu0 0.0
        %1852 = vmatprep.subr.mxu0 0.0
        %1853 = vmatpush1.msra.mxu0 0.0
        %1854 = vmatprep.subr.mxu0 0.0
        %1855 = vmatpush1.msra.mxu0 0.0
        %1856 = vmatprep.subr.mxu0 0.0
        %1857 = vmatpush1.msra.mxu0 0.0
        %1858 = vmatprep.subr.mxu0 0.0
        %1859 = vmatpush1.msra.mxu0 0.0
        %1860 = vmatprep.subr.mxu0 0.0
        %1861 = vmatpush1.msra.mxu0 0.0
        %1862 = vmatprep.subr.mxu0 0.0
        %1863 = vmatpush1.msra.mxu0 0.0
        %1864 = vmatprep.subr.mxu0 0.0
        %1865 = vmatpush1.msra.mxu0 0.0
        %1866 = vmatprep.subr.mxu0 0.0
        %1867 = vmatpush1.msra.mxu0 0.0
        %1868 = vmatprep.subr.mxu0 0.0
        %1869 = vmatpush1.msra.mxu0 0.0
        %1870 = vmatprep.subr.mxu0 0.0
        %1871 = vmatpush1.msra.mxu0 0.0
        %1872 = vmatprep.subr.mxu0 0.0
        %1873 = vmatpush1.msra.mxu0 0.0
        %1874 = vmatprep.subr.mxu0 0.0
        %1875 = vmatpush1.msra.mxu0 0.0
        %1876 = vmatprep.subr.mxu0 0.0
        %1877 = vmatpush1.msra.mxu0 0.0
        %1878 = vmatprep.subr.mxu0 0.0
        %1879 = vmatpush1.msra.mxu0 0.0
        %1880 = vmatprep.subr.mxu0 0.0
        %1881 = vmatpush1.msra.mxu0 0.0
        %1882 = vmatprep.mubr.f32.mxu0 0.0
        %1883 = vmatmul.mubr.f32.gmra.mrb[0].mxu0 %v1674
        %v1884 = vpop.f32.mrb[0].mxu0
        %v1885 = vadd.f32 0.0, %v1884
        %v1886 = vpop.f32.mrb[0].mxu0
        %v1887 = vadd.f32 0.0, %v1886
        %1888 = vdwg.mxu0
        %1889 = vmatprep.subr.mxu0 0.0
        %1890 = vmatpush1.msra.mxu0 %v1665
        %1891 = vmatprep.subr.mxu0 0.0
        %1892 = vmatpush1.msra.mxu0 0.0
        %1893 = vmatprep.subr.mxu0 0.0
        %1894 = vmatpush1.msra.mxu0 0.0
        %1895 = vmatprep.subr.mxu0 0.0
        %1896 = vmatpush1.msra.mxu0 0.0
        %1897 = vmatprep.subr.mxu0 0.0
        %1898 = vmatpush1.msra.mxu0 0.0
        %1899 = vmatprep.subr.mxu0 0.0
        %1900 = vmatpush1.msra.mxu0 0.0
        %1901 = vmatprep.subr.mxu0 0.0
        %1902 = vmatpush1.msra.mxu0 0.0
        %1903 = vmatprep.subr.mxu0 0.0
        %1904 = vmatpush1.msra.mxu0 0.0
        %1905 = vmatprep.subr.mxu0 0.0
        %1906 = vmatpush1.msra.mxu0 0.0
        %1907 = vmatprep.subr.mxu0 0.0
        %1908 = vmatpush1.msra.mxu0 0.0
        %1909 = vmatprep.subr.mxu0 0.0
        %1910 = vmatpush1.msra.mxu0 0.0
        %1911 = vmatprep.subr.mxu0 0.0
        %1912 = vmatpush1.msra.mxu0 0.0
        %1913 = vmatprep.subr.mxu0 0.0
        %1914 = vmatpush1.msra.mxu0 0.0
        %1915 = vmatprep.subr.mxu0 0.0
        %1916 = vmatpush1.msra.mxu0 0.0
        %1917 = vmatprep.subr.mxu0 0.0
        %1918 = vmatpush1.msra.mxu0 0.0
        %1919 = vmatprep.subr.mxu0 0.0
        %1920 = vmatpush1.msra.mxu0 0.0
        %1921 = vmatprep.subr.mxu0 0.0
        %1922 = vmatpush1.msra.mxu0 0.0
        %1923 = vmatprep.subr.mxu0 0.0
        %1924 = vmatpush1.msra.mxu0 0.0
        %1925 = vmatprep.subr.mxu0 0.0
        %1926 = vmatpush1.msra.mxu0 0.0
        %1927 = vmatprep.subr.mxu0 0.0
        %1928 = vmatpush1.msra.mxu0 0.0
        %1929 = vmatprep.subr.mxu0 0.0
        %1930 = vmatpush1.msra.mxu0 0.0
        %1931 = vmatprep.subr.mxu0 0.0
        %1932 = vmatpush1.msra.mxu0 0.0
        %1933 = vmatprep.subr.mxu0 0.0
        %1934 = vmatpush1.msra.mxu0 0.0
        %1935 = vmatprep.subr.mxu0 0.0
        %1936 = vmatpush1.msra.mxu0 0.0
        %1937 = vmatprep.subr.mxu0 0.0
        %1938 = vmatpush1.msra.mxu0 0.0
        %1939 = vmatprep.subr.mxu0 0.0
        %1940 = vmatpush1.msra.mxu0 0.0
        %1941 = vmatprep.subr.mxu0 0.0
        %1942 = vmatpush1.msra.mxu0 0.0
        %1943 = vmatprep.subr.mxu0 0.0
        %1944 = vmatpush1.msra.mxu0 0.0
        %1945 = vmatprep.subr.mxu0 0.0
        %1946 = vmatpush1.msra.mxu0 0.0
        %1947 = vmatprep.subr.mxu0 0.0
        %1948 = vmatpush1.msra.mxu0 0.0
        %1949 = vmatprep.subr.mxu0 0.0
        %1950 = vmatpush1.msra.mxu0 0.0
        %1951 = vmatprep.subr.mxu0 0.0
        %1952 = vmatpush1.msra.mxu0 0.0
        %1953 = vmatprep.mubr.f32.mxu0 0.0
        %1954 = vmatmul.mubr.f32.gmra.mrb[0].mxu0 %v1674
        %v1955 = vpop.f32.mrb[0].mxu0
        %v1956 = vadd.f32 0.0, %v1955
        %v1957 = vpop.f32.mrb[0].mxu0
        %1958 = vdwg.mxu0
        %v1959 = vadd.f32 %v1633, %v1743
        %v1960 = vadd.f32 %v1634, %v1745
        %v1961 = vadd.f32 %v1635, %v1814
        %v1962 = vadd.f32 %v1636, %v1816
        %v1963 = vadd.f32 %v1637, %v1885
        %v1964 = vadd.f32 %v1638, %v1887
        %v1965 = vadd.f32 %v1639, %v1956
        %s1966 = scalar_lea.vmem %s1, 40
        %v1967 = vld [vmem:[%s1966] sm:$0xff]
        %1968 = vrot.lane.b32.xlu0 %v365, 116
        %v1969 = vpop.permute.xlu0 %1968
        %1970 = vrot.lane.b32.xlu0 %v366, 116
        %v1971 = vpop.permute.xlu0 %1970
        %1972 = vrot.lane.b32.xlu0 %v367, 116
        %v1973 = vpop.permute.xlu0 %1972
        %1974 = vrot.lane.b32.xlu0 %v368, 116
        %v1975 = vpop.permute.xlu0 %1974
        %1976 = vrot.lane.b32.xlu0 %v369, 116
        %v1977 = vpop.permute.xlu0 %1976
        %1978 = vrot.lane.b32.xlu0 %v370, 116
        %v1979 = vpop.permute.xlu0 %1978
        %1980 = vrot.lane.b32.xlu0 %v371, 116
        %v1981 = vpop.permute.xlu0 %1980
        %1982 = vrot.lane.b32.xlu0 %v373, 116
        %v1983 = vpop.permute.xlu0 %1982
        %vm1984 = vcmask 949248
        %v1985 = vsel %vm1984, %v1969, %v1971
        %v1986 = vsel %vm1984, %v1971, %v1973
        %v1987 = vsel %vm1984, %v1973, %v1975
        %v1988 = vsel %vm1984, %v1975, %v1977
        %v1989 = vsel %vm1984, %v1977, %v1979
        %v1990 = vsel %vm1984, %v1979, %v1981
        %v1991 = vsel %vm1984, %v1981, %v1983
        %v2000 = vsel %vm415, %v1967, 0
        %2002 = vmatprep.subr.mxu0 %v1986
        %2003 = vmatpush1.msra.mxu0 %v1985
        %2004 = vmatprep.subr.mxu0 0.0
        %2005 = vmatpush1.msra.mxu0 0.0
        %2006 = vmatprep.subr.mxu0 0.0
        %2007 = vmatpush1.msra.mxu0 0.0
        %2008 = vmatprep.subr.mxu0 0.0
        %2009 = vmatpush1.msra.mxu0 0.0
        %2010 = vmatprep.subr.mxu0 0.0
        %2011 = vmatpush1.msra.mxu0 0.0
        %2012 = vmatprep.subr.mxu0 0.0
        %2013 = vmatpush1.msra.mxu0 0.0
        %2014 = vmatprep.subr.mxu0 0.0
        %2015 = vmatpush1.msra.mxu0 0.0
        %2016 = vmatprep.subr.mxu0 0.0
        %2017 = vmatpush1.msra.mxu0 0.0
        %2018 = vmatprep.subr.mxu0 0.0
        %2019 = vmatpush1.msra.mxu0 0.0
        %2020 = vmatprep.subr.mxu0 0.0
        %2021 = vmatpush1.msra.mxu0 0.0
        %2022 = vmatprep.subr.mxu0 0.0
        %2023 = vmatpush1.msra.mxu0 0.0
        %2024 = vmatprep.subr.mxu0 0.0
        %2025 = vmatpush1.msra.mxu0 0.0
        %2026 = vmatprep.subr.mxu0 0.0
        %2027 = vmatpush1.msra.mxu0 0.0
        %2028 = vmatprep.subr.mxu0 0.0
        %2029 = vmatpush1.msra.mxu0 0.0
        %2030 = vmatprep.subr.mxu0 0.0
        %2031 = vmatpush1.msra.mxu0 0.0
        %2032 = vmatprep.subr.mxu0 0.0
        %2033 = vmatpush1.msra.mxu0 0.0
        %2034 = vmatprep.subr.mxu0 0.0
        %2035 = vmatpush1.msra.mxu0 0.0
        %2036 = vmatprep.subr.mxu0 0.0
        %2037 = vmatpush1.msra.mxu0 0.0
        %2038 = vmatprep.subr.mxu0 0.0
        %2039 = vmatpush1.msra.mxu0 0.0
        %2040 = vmatprep.subr.mxu0 0.0
        %2041 = vmatpush1.msra.mxu0 0.0
        %2042 = vmatprep.subr.mxu0 0.0
        %2043 = vmatpush1.msra.mxu0 0.0
        %2044 = vmatprep.subr.mxu0 0.0
        %2045 = vmatpush1.msra.mxu0 0.0
        %2046 = vmatprep.subr.mxu0 0.0
        %2047 = vmatpush1.msra.mxu0 0.0
        %2048 = vmatprep.subr.mxu0 0.0
        %2049 = vmatpush1.msra.mxu0 0.0
        %2050 = vmatprep.subr.mxu0 0.0
        %2051 = vmatpush1.msra.mxu0 0.0
        %2052 = vmatprep.subr.mxu0 0.0
        %2053 = vmatpush1.msra.mxu0 0.0
        %2054 = vmatprep.subr.mxu0 0.0
        %2055 = vmatpush1.msra.mxu0 0.0
        %2056 = vmatprep.subr.mxu0 0.0
        %2057 = vmatpush1.msra.mxu0 0.0
        %2058 = vmatprep.subr.mxu0 0.0
        %2059 = vmatpush1.msra.mxu0 0.0
        %2060 = vmatprep.subr.mxu0 0.0
        %2061 = vmatpush1.msra.mxu0 0.0
        %2062 = vmatprep.subr.mxu0 0.0
        %2063 = vmatpush1.msra.mxu0 0.0
        %2064 = vmatprep.subr.mxu0 0.0
        %2065 = vmatpush1.msra.mxu0 0.0
        %2066 = vmatprep.mubr.f32.mxu0 0.0
        %2067 = vmatmul.mubr.f32.gmra.mrb[0].mxu0 %v2000
        %v2068 = vpop.f32.mrb[0].mxu0
        %v2069 = vadd.f32 0.0, %v2068
        %v2070 = vpop.f32.mrb[0].mxu0
        %v2071 = vadd.f32 0.0, %v2070
        %2072 = vdwg.mxu0
        %2073 = vmatprep.subr.mxu0 %v1988
        %2074 = vmatpush1.msra.mxu0 %v1987
        %2075 = vmatprep.subr.mxu0 0.0
        %2076 = vmatpush1.msra.mxu0 0.0
        %2077 = vmatprep.subr.mxu0 0.0
        %2078 = vmatpush1.msra.mxu0 0.0
        %2079 = vmatprep.subr.mxu0 0.0
        %2080 = vmatpush1.msra.mxu0 0.0
        %2081 = vmatprep.subr.mxu0 0.0
        %2082 = vmatpush1.msra.mxu0 0.0
        %2083 = vmatprep.subr.mxu0 0.0
        %2084 = vmatpush1.msra.mxu0 0.0
        %2085 = vmatprep.subr.mxu0 0.0
        %2086 = vmatpush1.msra.mxu0 0.0
        %2087 = vmatprep.subr.mxu0 0.0
        %2088 = vmatpush1.msra.mxu0 0.0
        %2089 = vmatprep.subr.mxu0 0.0
        %2090 = vmatpush1.msra.mxu0 0.0
        %2091 = vmatprep.subr.mxu0 0.0
        %2092 = vmatpush1.msra.mxu0 0.0
        %2093 = vmatprep.subr.mxu0 0.0
        %2094 = vmatpush1.msra.mxu0 0.0
        %2095 = vmatprep.subr.mxu0 0.0
        %2096 = vmatpush1.msra.mxu0 0.0
        %2097 = vmatprep.subr.mxu0 0.0
        %2098 = vmatpush1.msra.mxu0 0.0
        %2099 = vmatprep.subr.mxu0 0.0
        %2100 = vmatpush1.msra.mxu0 0.0
        %2101 = vmatprep.subr.mxu0 0.0
        %2102 = vmatpush1.msra.mxu0 0.0
        %2103 = vmatprep.subr.mxu0 0.0
        %2104 = vmatpush1.msra.mxu0 0.0
        %2105 = vmatprep.subr.mxu0 0.0
        %2106 = vmatpush1.msra.mxu0 0.0
        %2107 = vmatprep.subr.mxu0 0.0
        %2108 = vmatpush1.msra.mxu0 0.0
        %2109 = vmatprep.subr.mxu0 0.0
        %2110 = vmatpush1.msra.mxu0 0.0
        %2111 = vmatprep.subr.mxu0 0.0
        %2112 = vmatpush1.msra.mxu0 0.0
        %2113 = vmatprep.subr.mxu0 0.0
        %2114 = vmatpush1.msra.mxu0 0.0
        %2115 = vmatprep.subr.mxu0 0.0
        %2116 = vmatpush1.msra.mxu0 0.0
        %2117 = vmatprep.subr.mxu0 0.0
        %2118 = vmatpush1.msra.mxu0 0.0
        %2119 = vmatprep.subr.mxu0 0.0
        %2120 = vmatpush1.msra.mxu0 0.0
        %2121 = vmatprep.subr.mxu0 0.0
        %2122 = vmatpush1.msra.mxu0 0.0
        %2123 = vmatprep.subr.mxu0 0.0
        %2124 = vmatpush1.msra.mxu0 0.0
        %2125 = vmatprep.subr.mxu0 0.0
        %2126 = vmatpush1.msra.mxu0 0.0
        %2127 = vmatprep.subr.mxu0 0.0
        %2128 = vmatpush1.msra.mxu0 0.0
        %2129 = vmatprep.subr.mxu0 0.0
        %2130 = vmatpush1.msra.mxu0 0.0
        %2131 = vmatprep.subr.mxu0 0.0
        %2132 = vmatpush1.msra.mxu0 0.0
        %2133 = vmatprep.subr.mxu0 0.0
        %2134 = vmatpush1.msra.mxu0 0.0
        %2135 = vmatprep.subr.mxu0 0.0
        %2136 = vmatpush1.msra.mxu0 0.0
        %2137 = vmatprep.mubr.f32.mxu0 0.0
        %2138 = vmatmul.mubr.f32.gmra.mrb[0].mxu0 %v2000
        %v2139 = vpop.f32.mrb[0].mxu0
        %v2140 = vadd.f32 0.0, %v2139
        %v2141 = vpop.f32.mrb[0].mxu0
        %v2142 = vadd.f32 0.0, %v2141
        %2143 = vdwg.mxu0
        %2144 = vmatprep.subr.mxu0 %v1990
        %2145 = vmatpush1.msra.mxu0 %v1989
        %2146 = vmatprep.subr.mxu0 0.0
        %2147 = vmatpush1.msra.mxu0 0.0
        %2148 = vmatprep.subr.mxu0 0.0
        %2149 = vmatpush1.msra.mxu0 0.0
        %2150 = vmatprep.subr.mxu0 0.0
        %2151 = vmatpush1.msra.mxu0 0.0
        %2152 = vmatprep.subr.mxu0 0.0
        %2153 = vmatpush1.msra.mxu0 0.0
        %2154 = vmatprep.subr.mxu0 0.0
        %2155 = vmatpush1.msra.mxu0 0.0
        %2156 = vmatprep.subr.mxu0 0.0
        %2157 = vmatpush1.msra.mxu0 0.0
        %2158 = vmatprep.subr.mxu0 0.0
        %2159 = vmatpush1.msra.mxu0 0.0
        %2160 = vmatprep.subr.mxu0 0.0
        %2161 = vmatpush1.msra.mxu0 0.0
        %2162 = vmatprep.subr.mxu0 0.0
        %2163 = vmatpush1.msra.mxu0 0.0
        %2164 = vmatprep.subr.mxu0 0.0
        %2165 = vmatpush1.msra.mxu0 0.0
        %2166 = vmatprep.subr.mxu0 0.0
        %2167 = vmatpush1.msra.mxu0 0.0
        %2168 = vmatprep.subr.mxu0 0.0
        %2169 = vmatpush1.msra.mxu0 0.0
        %2170 = vmatprep.subr.mxu0 0.0
        %2171 = vmatpush1.msra.mxu0 0.0
        %2172 = vmatprep.subr.mxu0 0.0
        %2173 = vmatpush1.msra.mxu0 0.0
        %2174 = vmatprep.subr.mxu0 0.0
        %2175 = vmatpush1.msra.mxu0 0.0
        %2176 = vmatprep.subr.mxu0 0.0
        %2177 = vmatpush1.msra.mxu0 0.0
        %2178 = vmatprep.subr.mxu0 0.0
        %2179 = vmatpush1.msra.mxu0 0.0
        %2180 = vmatprep.subr.mxu0 0.0
        %2181 = vmatpush1.msra.mxu0 0.0
        %2182 = vmatprep.subr.mxu0 0.0
        %2183 = vmatpush1.msra.mxu0 0.0
        %2184 = vmatprep.subr.mxu0 0.0
        %2185 = vmatpush1.msra.mxu0 0.0
        %2186 = vmatprep.subr.mxu0 0.0
        %2187 = vmatpush1.msra.mxu0 0.0
        %2188 = vmatprep.subr.mxu0 0.0
        %2189 = vmatpush1.msra.mxu0 0.0
        %2190 = vmatprep.subr.mxu0 0.0
        %2191 = vmatpush1.msra.mxu0 0.0
        %2192 = vmatprep.subr.mxu0 0.0
        %2193 = vmatpush1.msra.mxu0 0.0
        %2194 = vmatprep.subr.mxu0 0.0
        %2195 = vmatpush1.msra.mxu0 0.0
        %2196 = vmatprep.subr.mxu0 0.0
        %2197 = vmatpush1.msra.mxu0 0.0
        %2198 = vmatprep.subr.mxu0 0.0
        %2199 = vmatpush1.msra.mxu0 0.0
        %2200 = vmatprep.subr.mxu0 0.0
        %2201 = vmatpush1.msra.mxu0 0.0
        %2202 = vmatprep.subr.mxu0 0.0
        %2203 = vmatpush1.msra.mxu0 0.0
        %2204 = vmatprep.subr.mxu0 0.0
        %2205 = vmatpush1.msra.mxu0 0.0
        %2206 = vmatprep.subr.mxu0 0.0
        %2207 = vmatpush1.msra.mxu0 0.0
        %2208 = vmatprep.mubr.f32.mxu0 0.0
        %2209 = vmatmul.mubr.f32.gmra.mrb[0].mxu0 %v2000
        %v2210 = vpop.f32.mrb[0].mxu0
        %v2211 = vadd.f32 0.0, %v2210
        %v2212 = vpop.f32.mrb[0].mxu0
        %v2213 = vadd.f32 0.0, %v2212
        %2214 = vdwg.mxu0
        %2215 = vmatprep.subr.mxu0 0.0
        %2216 = vmatpush1.msra.mxu0 %v1991
        %2217 = vmatprep.subr.mxu0 0.0
        %2218 = vmatpush1.msra.mxu0 0.0
        %2219 = vmatprep.subr.mxu0 0.0
        %2220 = vmatpush1.msra.mxu0 0.0
        %2221 = vmatprep.subr.mxu0 0.0
        %2222 = vmatpush1.msra.mxu0 0.0
        %2223 = vmatprep.subr.mxu0 0.0
        %2224 = vmatpush1.msra.mxu0 0.0
        %2225 = vmatprep.subr.mxu0 0.0
        %2226 = vmatpush1.msra.mxu0 0.0
        %2227 = vmatprep.subr.mxu0 0.0
        %2228 = vmatpush1.msra.mxu0 0.0
        %2229 = vmatprep.subr.mxu0 0.0
        %2230 = vmatpush1.msra.mxu0 0.0
        %2231 = vmatprep.subr.mxu0 0.0
        %2232 = vmatpush1.msra.mxu0 0.0
        %2233 = vmatprep.subr.mxu0 0.0
        %2234 = vmatpush1.msra.mxu0 0.0
        %2235 = vmatprep.subr.mxu0 0.0
        %2236 = vmatpush1.msra.mxu0 0.0
        %2237 = vmatprep.subr.mxu0 0.0
        %2238 = vmatpush1.msra.mxu0 0.0
        %2239 = vmatprep.subr.mxu0 0.0
        %2240 = vmatpush1.msra.mxu0 0.0
        %2241 = vmatprep.subr.mxu0 0.0
        %2242 = vmatpush1.msra.mxu0 0.0
        %2243 = vmatprep.subr.mxu0 0.0
        %2244 = vmatpush1.msra.mxu0 0.0
        %2245 = vmatprep.subr.mxu0 0.0
        %2246 = vmatpush1.msra.mxu0 0.0
        %2247 = vmatprep.subr.mxu0 0.0
        %2248 = vmatpush1.msra.mxu0 0.0
        %2249 = vmatprep.subr.mxu0 0.0
        %2250 = vmatpush1.msra.mxu0 0.0
        %2251 = vmatprep.subr.mxu0 0.0
        %2252 = vmatpush1.msra.mxu0 0.0
        %2253 = vmatprep.subr.mxu0 0.0
        %2254 = vmatpush1.msra.mxu0 0.0
        %2255 = vmatprep.subr.mxu0 0.0
        %2256 = vmatpush1.msra.mxu0 0.0
        %2257 = vmatprep.subr.mxu0 0.0
        %2258 = vmatpush1.msra.mxu0 0.0
        %2259 = vmatprep.subr.mxu0 0.0
        %2260 = vmatpush1.msra.mxu0 0.0
        %2261 = vmatprep.subr.mxu0 0.0
        %2262 = vmatpush1.msra.mxu0 0.0
        %2263 = vmatprep.subr.mxu0 0.0
        %2264 = vmatpush1.msra.mxu0 0.0
        %2265 = vmatprep.subr.mxu0 0.0
        %2266 = vmatpush1.msra.mxu0 0.0
        %2267 = vmatprep.subr.mxu0 0.0
        %2268 = vmatpush1.msra.mxu0 0.0
        %2269 = vmatprep.subr.mxu0 0.0
        %2270 = vmatpush1.msra.mxu0 0.0
        %2271 = vmatprep.subr.mxu0 0.0
        %2272 = vmatpush1.msra.mxu0 0.0
        %2273 = vmatprep.subr.mxu0 0.0
        %2274 = vmatpush1.msra.mxu0 0.0
        %2275 = vmatprep.subr.mxu0 0.0
        %2276 = vmatpush1.msra.mxu0 0.0
        %2277 = vmatprep.subr.mxu0 0.0
        %2278 = vmatpush1.msra.mxu0 0.0
        %2279 = vmatprep.mubr.f32.mxu0 0.0
        %2280 = vmatmul.mubr.f32.gmra.mrb[0].mxu0 %v2000
        %v2281 = vpop.f32.mrb[0].mxu0
        %v2282 = vadd.f32 0.0, %v2281
        %v2283 = vpop.f32.mrb[0].mxu0
        %2284 = vdwg.mxu0
        %v2285 = vadd.f32 %v1959, %v2069
        %v2286 = vadd.f32 %v1960, %v2071
        %v2287 = vadd.f32 %v1961, %v2140
        %v2288 = vadd.f32 %v1962, %v2142
        %v2289 = vadd.f32 %v1963, %v2211
        %v2290 = vadd.f32 %v1964, %v2213
        %v2291 = vadd.f32 %v1965, %v2282
        %s2292 = scalar_lea.vmem %s1, 48
        %v2293 = vld [vmem:[%s2292] sm:$0xff]
        %2294 = vrot.lane.b32.xlu0 %v365, 108
        %v2295 = vpop.permute.xlu0 %2294
        %2296 = vrot.lane.b32.xlu0 %v366, 108
        %v2297 = vpop.permute.xlu0 %2296
        %2298 = vrot.lane.b32.xlu0 %v367, 108
        %v2299 = vpop.permute.xlu0 %2298
        %2300 = vrot.lane.b32.xlu0 %v368, 108
        %v2301 = vpop.permute.xlu0 %2300
        %2302 = vrot.lane.b32.xlu0 %v369, 108
        %v2303 = vpop.permute.xlu0 %2302
        %2304 = vrot.lane.b32.xlu0 %v370, 108
        %v2305 = vpop.permute.xlu0 %2304
        %2306 = vrot.lane.b32.xlu0 %v371, 108
        %v2307 = vpop.permute.xlu0 %2306
        %2308 = vrot.lane.b32.xlu0 %v373, 108
        %v2309 = vpop.permute.xlu0 %2308
        %vm2310 = vcmask 883712
        %v2311 = vsel %vm2310, %v2295, %v2297
        %v2312 = vsel %vm2310, %v2297, %v2299
        %v2313 = vsel %vm2310, %v2299, %v2301
        %v2314 = vsel %vm2310, %v2301, %v2303
        %v2315 = vsel %vm2310, %v2303, %v2305
        %v2316 = vsel %vm2310, %v2305, %v2307
        %v2317 = vsel %vm2310, %v2307, %v2309
        %v2326 = vsel %vm415, %v2293, 0
        %2328 = vmatprep.subr.mxu0 %v2312
        %2329 = vmatpush1.msra.mxu0 %v2311
        %2330 = vmatprep.subr.mxu0 0.0
        %2331 = vmatpush1.msra.mxu0 0.0
        %2332 = vmatprep.subr.mxu0 0.0
        %2333 = vmatpush1.msra.mxu0 0.0
        %2334 = vmatprep.subr.mxu0 0.0
        %2335 = vmatpush1.msra.mxu0 0.0
        %2336 = vmatprep.subr.mxu0 0.0
        %2337 = vmatpush1.msra.mxu0 0.0
        %2338 = vmatprep.subr.mxu0 0.0
        %2339 = vmatpush1.msra.mxu0 0.0
        %2340 = vmatprep.subr.mxu0 0.0
        %2341 = vmatpush1.msra.mxu0 0.0
        %2342 = vmatprep.subr.mxu0 0.0
        %2343 = vmatpush1.msra.mxu0 0.0
        %2344 = vmatprep.subr.mxu0 0.0
        %2345 = vmatpush1.msra.mxu0 0.0
        %2346 = vmatprep.subr.mxu0 0.0
        %2347 = vmatpush1.msra.mxu0 0.0
        %2348 = vmatprep.subr.mxu0 0.0
        %2349 = vmatpush1.msra.mxu0 0.0
        %2350 = vmatprep.subr.mxu0 0.0
        %2351 = vmatpush1.msra.mxu0 0.0
        %2352 = vmatprep.subr.mxu0 0.0
        %2353 = vmatpush1.msra.mxu0 0.0
        %2354 = vmatprep.subr.mxu0 0.0
        %2355 = vmatpush1.msra.mxu0 0.0
        %2356 = vmatprep.subr.mxu0 0.0
        %2357 = vmatpush1.msra.mxu0 0.0
        %2358 = vmatprep.subr.mxu0 0.0
        %2359 = vmatpush1.msra.mxu0 0.0
        %2360 = vmatprep.subr.mxu0 0.0
        %2361 = vmatpush1.msra.mxu0 0.0
        %2362 = vmatprep.subr.mxu0 0.0
        %2363 = vmatpush1.msra.mxu0 0.0
        %2364 = vmatprep.subr.mxu0 0.0
        %2365 = vmatpush1.msra.mxu0 0.0
        %2366 = vmatprep.subr.mxu0 0.0
        %2367 = vmatpush1.msra.mxu0 0.0
        %2368 = vmatprep.subr.mxu0 0.0
        %2369 = vmatpush1.msra.mxu0 0.0
        %2370 = vmatprep.subr.mxu0 0.0
        %2371 = vmatpush1.msra.mxu0 0.0
        %2372 = vmatprep.subr.mxu0 0.0
        %2373 = vmatpush1.msra.mxu0 0.0
        %2374 = vmatprep.subr.mxu0 0.0
        %2375 = vmatpush1.msra.mxu0 0.0
        %2376 = vmatprep.subr.mxu0 0.0
        %2377 = vmatpush1.msra.mxu0 0.0
        %2378 = vmatprep.subr.mxu0 0.0
        %2379 = vmatpush1.msra.mxu0 0.0
        %2380 = vmatprep.subr.mxu0 0.0
        %2381 = vmatpush1.msra.mxu0 0.0
        %2382 = vmatprep.subr.mxu0 0.0
        %2383 = vmatpush1.msra.mxu0 0.0
        %2384 = vmatprep.subr.mxu0 0.0
        %2385 = vmatpush1.msra.mxu0 0.0
        %2386 = vmatprep.subr.mxu0 0.0
        %2387 = vmatpush1.msra.mxu0 0.0
        %2388 = vmatprep.subr.mxu0 0.0
        %2389 = vmatpush1.msra.mxu0 0.0
        %2390 = vmatprep.subr.mxu0 0.0
        %2391 = vmatpush1.msra.mxu0 0.0
        %2392 = vmatprep.mubr.f32.mxu0 0.0
        %2393 = vmatmul.mubr.f32.gmra.mrb[0].mxu0 %v2326
        %v2394 = vpop.f32.mrb[0].mxu0
        %v2395 = vadd.f32 0.0, %v2394
        %v2396 = vpop.f32.mrb[0].mxu0
        %v2397 = vadd.f32 0.0, %v2396
        %2398 = vdwg.mxu0
        %2399 = vmatprep.subr.mxu0 %v2314
        %2400 = vmatpush1.msra.mxu0 %v2313
        %2401 = vmatprep.subr.mxu0 0.0
        %2402 = vmatpush1.msra.mxu0 0.0
        %2403 = vmatprep.subr.mxu0 0.0
        %2404 = vmatpush1.msra.mxu0 0.0
        %2405 = vmatprep.subr.mxu0 0.0
        %2406 = vmatpush1.msra.mxu0 0.0
        %2407 = vmatprep.subr.mxu0 0.0
        %2408 = vmatpush1.msra.mxu0 0.0
        %2409 = vmatprep.subr.mxu0 0.0
        %2410 = vmatpush1.msra.mxu0 0.0
        %2411 = vmatprep.subr.mxu0 0.0
        %2412 = vmatpush1.msra.mxu0 0.0
        %2413 = vmatprep.subr.mxu0 0.0
        %2414 = vmatpush1.msra.mxu0 0.0
        %2415 = vmatprep.subr.mxu0 0.0
        %2416 = vmatpush1.msra.mxu0 0.0
        %2417 = vmatprep.subr.mxu0 0.0
        %2418 = vmatpush1.msra.mxu0 0.0
        %2419 = vmatprep.subr.mxu0 0.0
        %2420 = vmatpush1.msra.mxu0 0.0
        %2421 = vmatprep.subr.mxu0 0.0
        %2422 = vmatpush1.msra.mxu0 0.0
        %2423 = vmatprep.subr.mxu0 0.0
        %2424 = vmatpush1.msra.mxu0 0.0
        %2425 = vmatprep.subr.mxu0 0.0
        %2426 = vmatpush1.msra.mxu0 0.0
        %2427 = vmatprep.subr.mxu0 0.0
        %2428 = vmatpush1.msra.mxu0 0.0
        %2429 = vmatprep.subr.mxu0 0.0
        %2430 = vmatpush1.msra.mxu0 0.0
        %2431 = vmatprep.subr.mxu0 0.0
        %2432 = vmatpush1.msra.mxu0 0.0
        %2433 = vmatprep.subr.mxu0 0.0
        %2434 = vmatpush1.msra.mxu0 0.0
        %2435 = vmatprep.subr.mxu0 0.0
        %2436 = vmatpush1.msra.mxu0 0.0
        %2437 = vmatprep.subr.mxu0 0.0
        %2438 = vmatpush1.msra.mxu0 0.0
        %2439 = vmatprep.subr.mxu0 0.0
        %2440 = vmatpush1.msra.mxu0 0.0
        %2441 = vmatprep.subr.mxu0 0.0
        %2442 = vmatpush1.msra.mxu0 0.0
        %2443 = vmatprep.subr.mxu0 0.0
        %2444 = vmatpush1.msra.mxu0 0.0
        %2445 = vmatprep.subr.mxu0 0.0
        %2446 = vmatpush1.msra.mxu0 0.0
        %2447 = vmatprep.subr.mxu0 0.0
        %2448 = vmatpush1.msra.mxu0 0.0
        %2449 = vmatprep.subr.mxu0 0.0
        %2450 = vmatpush1.msra.mxu0 0.0
        %2451 = vmatprep.subr.mxu0 0.0
        %2452 = vmatpush1.msra.mxu0 0.0
        %2453 = vmatprep.subr.mxu0 0.0
        %2454 = vmatpush1.msra.mxu0 0.0
        %2455 = vmatprep.subr.mxu0 0.0
        %2456 = vmatpush1.msra.mxu0 0.0
        %2457 = vmatprep.subr.mxu0 0.0
        %2458 = vmatpush1.msra.mxu0 0.0
        %2459 = vmatprep.subr.mxu0 0.0
        %2460 = vmatpush1.msra.mxu0 0.0
        %2461 = vmatprep.subr.mxu0 0.0
        %2462 = vmatpush1.msra.mxu0 0.0
        %2463 = vmatprep.mubr.f32.mxu0 0.0
        %2464 = vmatmul.mubr.f32.gmra.mrb[0].mxu0 %v2326
        %v2465 = vpop.f32.mrb[0].mxu0
        %v2466 = vadd.f32 0.0, %v2465
        %v2467 = vpop.f32.mrb[0].mxu0
        %v2468 = vadd.f32 0.0, %v2467
        %2469 = vdwg.mxu0
        %2470 = vmatprep.subr.mxu0 %v2316
        %2471 = vmatpush1.msra.mxu0 %v2315
        %2472 = vmatprep.subr.mxu0 0.0
        %2473 = vmatpush1.msra.mxu0 0.0
        %2474 = vmatprep.subr.mxu0 0.0
        %2475 = vmatpush1.msra.mxu0 0.0
        %2476 = vmatprep.subr.mxu0 0.0
        %2477 = vmatpush1.msra.mxu0 0.0
        %2478 = vmatprep.subr.mxu0 0.0
        %2479 = vmatpush1.msra.mxu0 0.0
        %2480 = vmatprep.subr.mxu0 0.0
        %2481 = vmatpush1.msra.mxu0 0.0
        %2482 = vmatprep.subr.mxu0 0.0
        %2483 = vmatpush1.msra.mxu0 0.0
        %2484 = vmatprep.subr.mxu0 0.0
        %2485 = vmatpush1.msra.mxu0 0.0
        %2486 = vmatprep.subr.mxu0 0.0
        %2487 = vmatpush1.msra.mxu0 0.0
        %2488 = vmatprep.subr.mxu0 0.0
        %2489 = vmatpush1.msra.mxu0 0.0
        %2490 = vmatprep.subr.mxu0 0.0
        %2491 = vmatpush1.msra.mxu0 0.0
        %2492 = vmatprep.subr.mxu0 0.0
        %2493 = vmatpush1.msra.mxu0 0.0
        %2494 = vmatprep.subr.mxu0 0.0
        %2495 = vmatpush1.msra.mxu0 0.0
        %2496 = vmatprep.subr.mxu0 0.0
        %2497 = vmatpush1.msra.mxu0 0.0
        %2498 = vmatprep.subr.mxu0 0.0
        %2499 = vmatpush1.msra.mxu0 0.0
        %2500 = vmatprep.subr.mxu0 0.0
        %2501 = vmatpush1.msra.mxu0 0.0
        %2502 = vmatprep.subr.mxu0 0.0
        %2503 = vmatpush1.msra.mxu0 0.0
        %2504 = vmatprep.subr.mxu0 0.0
        %2505 = vmatpush1.msra.mxu0 0.0
        %2506 = vmatprep.subr.mxu0 0.0
        %2507 = vmatpush1.msra.mxu0 0.0
        %2508 = vmatprep.subr.mxu0 0.0
        %2509 = vmatpush1.msra.mxu0 0.0
        %2510 = vmatprep.subr.mxu0 0.0
        %2511 = vmatpush1.msra.mxu0 0.0
        %2512 = vmatprep.subr.mxu0 0.0
        %2513 = vmatpush1.msra.mxu0 0.0
        %2514 = vmatprep.subr.mxu0 0.0
        %2515 = vmatpush1.msra.mxu0 0.0
        %2516 = vmatprep.subr.mxu0 0.0
        %2517 = vmatpush1.msra.mxu0 0.0
        %2518 = vmatprep.subr.mxu0 0.0
        %2519 = vmatpush1.msra.mxu0 0.0
        %2520 = vmatprep.subr.mxu0 0.0
        %2521 = vmatpush1.msra.mxu0 0.0
        %2522 = vmatprep.subr.mxu0 0.0
        %2523 = vmatpush1.msra.mxu0 0.0
        %2524 = vmatprep.subr.mxu0 0.0
        %2525 = vmatpush1.msra.mxu0 0.0
        %2526 = vmatprep.subr.mxu0 0.0
        %2527 = vmatpush1.msra.mxu0 0.0
        %2528 = vmatprep.subr.mxu0 0.0
        %2529 = vmatpush1.msra.mxu0 0.0
        %2530 = vmatprep.subr.mxu0 0.0
        %2531 = vmatpush1.msra.mxu0 0.0
        %2532 = vmatprep.subr.mxu0 0.0
        %2533 = vmatpush1.msra.mxu0 0.0
        %2534 = vmatprep.mubr.f32.mxu0 0.0
        %2535 = vmatmul.mubr.f32.gmra.mrb[0].mxu0 %v2326
        %v2536 = vpop.f32.mrb[0].mxu0
        %v2537 = vadd.f32 0.0, %v2536
        %v2538 = vpop.f32.mrb[0].mxu0
        %v2539 = vadd.f32 0.0, %v2538
        %2540 = vdwg.mxu0
        %2541 = vmatprep.subr.mxu0 0.0
        %2542 = vmatpush1.msra.mxu0 %v2317
        %2543 = vmatprep.subr.mxu0 0.0
        %2544 = vmatpush1.msra.mxu0 0.0
        %2545 = vmatprep.subr.mxu0 0.0
        %2546 = vmatpush1.msra.mxu0 0.0
        %2547 = vmatprep.subr.mxu0 0.0
        %2548 = vmatpush1.msra.mxu0 0.0
        %2549 = vmatprep.subr.mxu0 0.0
        %2550 = vmatpush1.msra.mxu0 0.0
        %2551 = vmatprep.subr.mxu0 0.0
        %2552 = vmatpush1.msra.mxu0 0.0
        %2553 = vmatprep.subr.mxu0 0.0
        %2554 = vmatpush1.msra.mxu0 0.0
        %2555 = vmatprep.subr.mxu0 0.0
        %2556 = vmatpush1.msra.mxu0 0.0
        %2557 = vmatprep.subr.mxu0 0.0
        %2558 = vmatpush1.msra.mxu0 0.0
        %2559 = vmatprep.subr.mxu0 0.0
        %2560 = vmatpush1.msra.mxu0 0.0
        %2561 = vmatprep.subr.mxu0 0.0
        %2562 = vmatpush1.msra.mxu0 0.0
        %2563 = vmatprep.subr.mxu0 0.0
        %2564 = vmatpush1.msra.mxu0 0.0
        %2565 = vmatprep.subr.mxu0 0.0
        %2566 = vmatpush1.msra.mxu0 0.0
        %2567 = vmatprep.subr.mxu0 0.0
        %2568 = vmatpush1.msra.mxu0 0.0
        %2569 = vmatprep.subr.mxu0 0.0
        %2570 = vmatpush1.msra.mxu0 0.0
        %2571 = vmatprep.subr.mxu0 0.0
        %2572 = vmatpush1.msra.mxu0 0.0
        %2573 = vmatprep.subr.mxu0 0.0
        %2574 = vmatpush1.msra.mxu0 0.0
        %2575 = vmatprep.subr.mxu0 0.0
        %2576 = vmatpush1.msra.mxu0 0.0
        %2577 = vmatprep.subr.mxu0 0.0
        %2578 = vmatpush1.msra.mxu0 0.0
        %2579 = vmatprep.subr.mxu0 0.0
        %2580 = vmatpush1.msra.mxu0 0.0
        %2581 = vmatprep.subr.mxu0 0.0
        %2582 = vmatpush1.msra.mxu0 0.0
        %2583 = vmatprep.subr.mxu0 0.0
        %2584 = vmatpush1.msra.mxu0 0.0
        %2585 = vmatprep.subr.mxu0 0.0
        %2586 = vmatpush1.msra.mxu0 0.0
        %2587 = vmatprep.subr.mxu0 0.0
        %2588 = vmatpush1.msra.mxu0 0.0
        %2589 = vmatprep.subr.mxu0 0.0
        %2590 = vmatpush1.msra.mxu0 0.0
        %2591 = vmatprep.subr.mxu0 0.0
        %2592 = vmatpush1.msra.mxu0 0.0
        %2593 = vmatprep.subr.mxu0 0.0
        %2594 = vmatpush1.msra.mxu0 0.0
        %2595 = vmatprep.subr.mxu0 0.0
        %2596 = vmatpush1.msra.mxu0 0.0
        %2597 = vmatprep.subr.mxu0 0.0
        %2598 = vmatpush1.msra.mxu0 0.0
        %2599 = vmatprep.subr.mxu0 0.0
        %2600 = vmatpush1.msra.mxu0 0.0
        %2601 = vmatprep.subr.mxu0 0.0
        %2602 = vmatpush1.msra.mxu0 0.0
        %2603 = vmatprep.subr.mxu0 0.0
        %2604 = vmatpush1.msra.mxu0 0.0
        %2605 = vmatprep.mubr.f32.mxu0 0.0
        %2606 = vmatmul.mubr.f32.gmra.mrb[0].mxu0 %v2326
        %v2607 = vpop.f32.mrb[0].mxu0
        %v2608 = vadd.f32 0.0, %v2607
        %v2609 = vpop.f32.mrb[0].mxu0
        %2610 = vdwg.mxu0
        %v2611 = vadd.f32 %v2285, %v2395
        %v2612 = vadd.f32 %v2286, %v2397
        %v2613 = vadd.f32 %v2287, %v2466
        %v2614 = vadd.f32 %v2288, %v2468
        %v2615 = vadd.f32 %v2289, %v2537
        %v2616 = vadd.f32 %v2290, %v2539
        %v2617 = vadd.f32 %v2291, %v2608
        %s2618 = scalar_lea.vmem %s1, 56
        %v2619 = vld [vmem:[%s2618] sm:$0xff]
        %2620 = vrot.lane.b32.xlu0 %v365, 107
        %v2621 = vpop.permute.xlu0 %2620
        %2622 = vrot.lane.b32.xlu0 %v366, 107
        %v2623 = vpop.permute.xlu0 %2622
        %2624 = vrot.lane.b32.xlu0 %v367, 107
        %v2625 = vpop.permute.xlu0 %2624
        %2626 = vrot.lane.b32.xlu0 %v368, 107
        %v2627 = vpop.permute.xlu0 %2626
        %2628 = vrot.lane.b32.xlu0 %v369, 107
        %v2629 = vpop.permute.xlu0 %2628
        %2630 = vrot.lane.b32.xlu0 %v370, 107
        %v2631 = vpop.permute.xlu0 %2630
        %2632 = vrot.lane.b32.xlu0 %v371, 107
        %v2633 = vpop.permute.xlu0 %2632
        %2634 = vrot.lane.b32.xlu0 %v373, 107
        %v2635 = vpop.permute.xlu0 %2634
        %vm2636 = vcmask 875520
        %v2637 = vsel %vm2636, %v2621, %v2623
        %v2638 = vsel %vm2636, %v2623, %v2625
        %v2639 = vsel %vm2636, %v2625, %v2627
        %v2640 = vsel %vm2636, %v2627, %v2629
        %v2641 = vsel %vm2636, %v2629, %v2631
        %v2642 = vsel %vm2636, %v2631, %v2633
        %v2643 = vsel %vm2636, %v2633, %v2635
        %v2652 = vsel %vm415, %v2619, 0
        %2654 = vmatprep.subr.mxu0 %v2638
        %2655 = vmatpush1.msra.mxu0 %v2637
        %2656 = vmatprep.subr.mxu0 0.0
        %2657 = vmatpush1.msra.mxu0 0.0
        %2658 = vmatprep.subr.mxu0 0.0
        %2659 = vmatpush1.msra.mxu0 0.0
        %2660 = vmatprep.subr.mxu0 0.0
        %2661 = vmatpush1.msra.mxu0 0.0
        %2662 = vmatprep.subr.mxu0 0.0
        %2663 = vmatpush1.msra.mxu0 0.0
        %2664 = vmatprep.subr.mxu0 0.0
        %2665 = vmatpush1.msra.mxu0 0.0
        %2666 = vmatprep.subr.mxu0 0.0
        %2667 = vmatpush1.msra.mxu0 0.0
        %2668 = vmatprep.subr.mxu0 0.0
        %2669 = vmatpush1.msra.mxu0 0.0
        %2670 = vmatprep.subr.mxu0 0.0
        %2671 = vmatpush1.msra.mxu0 0.0
        %2672 = vmatprep.subr.mxu0 0.0
        %2673 = vmatpush1.msra.mxu0 0.0
        %2674 = vmatprep.subr.mxu0 0.0
        %2675 = vmatpush1.msra.mxu0 0.0
        %2676 = vmatprep.subr.mxu0 0.0
        %2677 = vmatpush1.msra.mxu0 0.0
        %2678 = vmatprep.subr.mxu0 0.0
        %2679 = vmatpush1.msra.mxu0 0.0
        %2680 = vmatprep.subr.mxu0 0.0
        %2681 = vmatpush1.msra.mxu0 0.0
        %2682 = vmatprep.subr.mxu0 0.0
        %2683 = vmatpush1.msra.mxu0 0.0
        %2684 = vmatprep.subr.mxu0 0.0
        %2685 = vmatpush1.msra.mxu0 0.0
        %2686 = vmatprep.subr.mxu0 0.0
        %2687 = vmatpush1.msra.mxu0 0.0
        %2688 = vmatprep.subr.mxu0 0.0
        %2689 = vmatpush1.msra.mxu0 0.0
        %2690 = vmatprep.subr.mxu0 0.0
        %2691 = vmatpush1.msra.mxu0 0.0
        %2692 = vmatprep.subr.mxu0 0.0
        %2693 = vmatpush1.msra.mxu0 0.0
        %2694 = vmatprep.subr.mxu0 0.0
        %2695 = vmatpush1.msra.mxu0 0.0
        %2696 = vmatprep.subr.mxu0 0.0
        %2697 = vmatpush1.msra.mxu0 0.0
        %2698 = vmatprep.subr.mxu0 0.0
        %2699 = vmatpush1.msra.mxu0 0.0
        %2700 = vmatprep.subr.mxu0 0.0
        %2701 = vmatpush1.msra.mxu0 0.0
        %2702 = vmatprep.subr.mxu0 0.0
        %2703 = vmatpush1.msra.mxu0 0.0
        %2704 = vmatprep.subr.mxu0 0.0
        %2705 = vmatpush1.msra.mxu0 0.0
        %2706 = vmatprep.subr.mxu0 0.0
        %2707 = vmatpush1.msra.mxu0 0.0
        %2708 = vmatprep.subr.mxu0 0.0
        %2709 = vmatpush1.msra.mxu0 0.0
        %2710 = vmatprep.subr.mxu0 0.0
        %2711 = vmatpush1.msra.mxu0 0.0
        %2712 = vmatprep.subr.mxu0 0.0
        %2713 = vmatpush1.msra.mxu0 0.0
        %2714 = vmatprep.subr.mxu0 0.0
        %2715 = vmatpush1.msra.mxu0 0.0
        %2716 = vmatprep.subr.mxu0 0.0
        %2717 = vmatpush1.msra.mxu0 0.0
        %2718 = vmatprep.mubr.f32.mxu0 0.0
        %2719 = vmatmul.mubr.f32.gmra.mrb[0].mxu0 %v2652
        %v2720 = vpop.f32.mrb[0].mxu0
        %v2721 = vadd.f32 0.0, %v2720
        %v2722 = vpop.f32.mrb[0].mxu0
        %v2723 = vadd.f32 0.0, %v2722
        %2724 = vdwg.mxu0
        %2725 = vmatprep.subr.mxu0 %v2640
        %2726 = vmatpush1.msra.mxu0 %v2639
        %2727 = vmatprep.subr.mxu0 0.0
        %2728 = vmatpush1.msra.mxu0 0.0
        %2729 = vmatprep.subr.mxu0 0.0
        %2730 = vmatpush1.msra.mxu0 0.0
        %2731 = vmatprep.subr.mxu0 0.0
        %2732 = vmatpush1.msra.mxu0 0.0
        %2733 = vmatprep.subr.mxu0 0.0
        %2734 = vmatpush1.msra.mxu0 0.0
        %2735 = vmatprep.subr.mxu0 0.0
        %2736 = vmatpush1.msra.mxu0 0.0
        %2737 = vmatprep.subr.mxu0 0.0
        %2738 = vmatpush1.msra.mxu0 0.0
        %2739 = vmatprep.subr.mxu0 0.0
        %2740 = vmatpush1.msra.mxu0 0.0
        %2741 = vmatprep.subr.mxu0 0.0
        %2742 = vmatpush1.msra.mxu0 0.0
        %2743 = vmatprep.subr.mxu0 0.0
        %2744 = vmatpush1.msra.mxu0 0.0
        %2745 = vmatprep.subr.mxu0 0.0
        %2746 = vmatpush1.msra.mxu0 0.0
        %2747 = vmatprep.subr.mxu0 0.0
        %2748 = vmatpush1.msra.mxu0 0.0
        %2749 = vmatprep.subr.mxu0 0.0
        %2750 = vmatpush1.msra.mxu0 0.0
        %2751 = vmatprep.subr.mxu0 0.0
        %2752 = vmatpush1.msra.mxu0 0.0
        %2753 = vmatprep.subr.mxu0 0.0
        %2754 = vmatpush1.msra.mxu0 0.0
        %2755 = vmatprep.subr.mxu0 0.0
        %2756 = vmatpush1.msra.mxu0 0.0
        %2757 = vmatprep.subr.mxu0 0.0
        %2758 = vmatpush1.msra.mxu0 0.0
        %2759 = vmatprep.subr.mxu0 0.0
        %2760 = vmatpush1.msra.mxu0 0.0
        %2761 = vmatprep.subr.mxu0 0.0
        %2762 = vmatpush1.msra.mxu0 0.0
        %2763 = vmatprep.subr.mxu0 0.0
        %2764 = vmatpush1.msra.mxu0 0.0
        %2765 = vmatprep.subr.mxu0 0.0
        %2766 = vmatpush1.msra.mxu0 0.0
        %2767 = vmatprep.subr.mxu0 0.0
        %2768 = vmatpush1.msra.mxu0 0.0
        %2769 = vmatprep.subr.mxu0 0.0
        %2770 = vmatpush1.msra.mxu0 0.0
        %2771 = vmatprep.subr.mxu0 0.0
        %2772 = vmatpush1.msra.mxu0 0.0
        %2773 = vmatprep.subr.mxu0 0.0
        %2774 = vmatpush1.msra.mxu0 0.0
        %2775 = vmatprep.subr.mxu0 0.0
        %2776 = vmatpush1.msra.mxu0 0.0
        %2777 = vmatprep.subr.mxu0 0.0
        %2778 = vmatpush1.msra.mxu0 0.0
        %2779 = vmatprep.subr.mxu0 0.0
        %2780 = vmatpush1.msra.mxu0 0.0
        %2781 = vmatprep.subr.mxu0 0.0
        %2782 = vmatpush1.msra.mxu0 0.0
        %2783 = vmatprep.subr.mxu0 0.0
        %2784 = vmatpush1.msra.mxu0 0.0
        %2785 = vmatprep.subr.mxu0 0.0
        %2786 = vmatpush1.msra.mxu0 0.0
        %2787 = vmatprep.subr.mxu0 0.0
        %2788 = vmatpush1.msra.mxu0 0.0
        %2789 = vmatprep.mubr.f32.mxu0 0.0
        %2790 = vmatmul.mubr.f32.gmra.mrb[0].mxu0 %v2652
        %v2791 = vpop.f32.mrb[0].mxu0
        %v2792 = vadd.f32 0.0, %v2791
        %v2793 = vpop.f32.mrb[0].mxu0
        %v2794 = vadd.f32 0.0, %v2793
        %2795 = vdwg.mxu0
        %2796 = vmatprep.subr.mxu0 %v2642
        %2797 = vmatpush1.msra.mxu0 %v2641
        %2798 = vmatprep.subr.mxu0 0.0
        %2799 = vmatpush1.msra.mxu0 0.0
        %2800 = vmatprep.subr.mxu0 0.0
        %2801 = vmatpush1.msra.mxu0 0.0
        %2802 = vmatprep.subr.mxu0 0.0
        %2803 = vmatpush1.msra.mxu0 0.0
        %2804 = vmatprep.subr.mxu0 0.0
        %2805 = vmatpush1.msra.mxu0 0.0
        %2806 = vmatprep.subr.mxu0 0.0
        %2807 = vmatpush1.msra.mxu0 0.0
        %2808 = vmatprep.subr.mxu0 0.0
        %2809 = vmatpush1.msra.mxu0 0.0
        %2810 = vmatprep.subr.mxu0 0.0
        %2811 = vmatpush1.msra.mxu0 0.0
        %2812 = vmatprep.subr.mxu0 0.0
        %2813 = vmatpush1.msra.mxu0 0.0
        %2814 = vmatprep.subr.mxu0 0.0
        %2815 = vmatpush1.msra.mxu0 0.0
        %2816 = vmatprep.subr.mxu0 0.0
        %2817 = vmatpush1.msra.mxu0 0.0
        %2818 = vmatprep.subr.mxu0 0.0
        %2819 = vmatpush1.msra.mxu0 0.0
        %2820 = vmatprep.subr.mxu0 0.0
        %2821 = vmatpush1.msra.mxu0 0.0
        %2822 = vmatprep.subr.mxu0 0.0
        %2823 = vmatpush1.msra.mxu0 0.0
        %2824 = vmatprep.subr.mxu0 0.0
        %2825 = vmatpush1.msra.mxu0 0.0
        %2826 = vmatprep.subr.mxu0 0.0
        %2827 = vmatpush1.msra.mxu0 0.0
        %2828 = vmatprep.subr.mxu0 0.0
        %2829 = vmatpush1.msra.mxu0 0.0
        %2830 = vmatprep.subr.mxu0 0.0
        %2831 = vmatpush1.msra.mxu0 0.0
        %2832 = vmatprep.subr.mxu0 0.0
        %2833 = vmatpush1.msra.mxu0 0.0
        %2834 = vmatprep.subr.mxu0 0.0
        %2835 = vmatpush1.msra.mxu0 0.0
        %2836 = vmatprep.subr.mxu0 0.0
        %2837 = vmatpush1.msra.mxu0 0.0
        %2838 = vmatprep.subr.mxu0 0.0
        %2839 = vmatpush1.msra.mxu0 0.0
        %2840 = vmatprep.subr.mxu0 0.0
        %2841 = vmatpush1.msra.mxu0 0.0
        %2842 = vmatprep.subr.mxu0 0.0
        %2843 = vmatpush1.msra.mxu0 0.0
        %2844 = vmatprep.subr.mxu0 0.0
        %2845 = vmatpush1.msra.mxu0 0.0
        %2846 = vmatprep.subr.mxu0 0.0
        %2847 = vmatpush1.msra.mxu0 0.0
        %2848 = vmatprep.subr.mxu0 0.0
        %2849 = vmatpush1.msra.mxu0 0.0
        %2850 = vmatprep.subr.mxu0 0.0
        %2851 = vmatpush1.msra.mxu0 0.0
        %2852 = vmatprep.subr.mxu0 0.0
        %2853 = vmatpush1.msra.mxu0 0.0
        %2854 = vmatprep.subr.mxu0 0.0
        %2855 = vmatpush1.msra.mxu0 0.0
        %2856 = vmatprep.subr.mxu0 0.0
        %2857 = vmatpush1.msra.mxu0 0.0
        %2858 = vmatprep.subr.mxu0 0.0
        %2859 = vmatpush1.msra.mxu0 0.0
        %2860 = vmatprep.mubr.f32.mxu0 0.0
        %2861 = vmatmul.mubr.f32.gmra.mrb[0].mxu0 %v2652
        %v2862 = vpop.f32.mrb[0].mxu0
        %v2863 = vadd.f32 0.0, %v2862
        %v2864 = vpop.f32.mrb[0].mxu0
        %v2865 = vadd.f32 0.0, %v2864
        %2866 = vdwg.mxu0
        %2867 = vmatprep.subr.mxu0 0.0
        %2868 = vmatpush1.msra.mxu0 %v2643
        %2869 = vmatprep.subr.mxu0 0.0
        %2870 = vmatpush1.msra.mxu0 0.0
        %2871 = vmatprep.subr.mxu0 0.0
        %2872 = vmatpush1.msra.mxu0 0.0
        %2873 = vmatprep.subr.mxu0 0.0
        %2874 = vmatpush1.msra.mxu0 0.0
        %2875 = vmatprep.subr.mxu0 0.0
        %2876 = vmatpush1.msra.mxu0 0.0
        %2877 = vmatprep.subr.mxu0 0.0
        %2878 = vmatpush1.msra.mxu0 0.0
        %2879 = vmatprep.subr.mxu0 0.0
        %2880 = vmatpush1.msra.mxu0 0.0
        %2881 = vmatprep.subr.mxu0 0.0
        %2882 = vmatpush1.msra.mxu0 0.0
        %2883 = vmatprep.subr.mxu0 0.0
        %2884 = vmatpush1.msra.mxu0 0.0
        %2885 = vmatprep.subr.mxu0 0.0
        %2886 = vmatpush1.msra.mxu0 0.0
        %2887 = vmatprep.subr.mxu0 0.0
        %2888 = vmatpush1.msra.mxu0 0.0
        %2889 = vmatprep.subr.mxu0 0.0
        %2890 = vmatpush1.msra.mxu0 0.0
        %2891 = vmatprep.subr.mxu0 0.0
        %2892 = vmatpush1.msra.mxu0 0.0
        %2893 = vmatprep.subr.mxu0 0.0
        %2894 = vmatpush1.msra.mxu0 0.0
        %2895 = vmatprep.subr.mxu0 0.0
        %2896 = vmatpush1.msra.mxu0 0.0
        %2897 = vmatprep.subr.mxu0 0.0
        %2898 = vmatpush1.msra.mxu0 0.0
        %2899 = vmatprep.subr.mxu0 0.0
        %2900 = vmatpush1.msra.mxu0 0.0
        %2901 = vmatprep.subr.mxu0 0.0
        %2902 = vmatpush1.msra.mxu0 0.0
        %2903 = vmatprep.subr.mxu0 0.0
        %2904 = vmatpush1.msra.mxu0 0.0
        %2905 = vmatprep.subr.mxu0 0.0
        %2906 = vmatpush1.msra.mxu0 0.0
        %2907 = vmatprep.subr.mxu0 0.0
        %2908 = vmatpush1.msra.mxu0 0.0
        %2909 = vmatprep.subr.mxu0 0.0
        %2910 = vmatpush1.msra.mxu0 0.0
        %2911 = vmatprep.subr.mxu0 0.0
        %2912 = vmatpush1.msra.mxu0 0.0
        %2913 = vmatprep.subr.mxu0 0.0
        %2914 = vmatpush1.msra.mxu0 0.0
        %2915 = vmatprep.subr.mxu0 0.0
        %2916 = vmatpush1.msra.mxu0 0.0
        %2917 = vmatprep.subr.mxu0 0.0
        %2918 = vmatpush1.msra.mxu0 0.0
        %2919 = vmatprep.subr.mxu0 0.0
        %2920 = vmatpush1.msra.mxu0 0.0
        %2921 = vmatprep.subr.mxu0 0.0
        %2922 = vmatpush1.msra.mxu0 0.0
        %2923 = vmatprep.subr.mxu0 0.0
        %2924 = vmatpush1.msra.mxu0 0.0
        %2925 = vmatprep.subr.mxu0 0.0
        %2926 = vmatpush1.msra.mxu0 0.0
        %2927 = vmatprep.subr.mxu0 0.0
        %2928 = vmatpush1.msra.mxu0 0.0
        %2929 = vmatprep.subr.mxu0 0.0
        %2930 = vmatpush1.msra.mxu0 0.0
        %2931 = vmatprep.mubr.f32.mxu0 0.0
        %2932 = vmatmul.mubr.f32.gmra.mrb[0].mxu0 %v2652
        %v2933 = vpop.f32.mrb[0].mxu0
        %v2934 = vadd.f32 0.0, %v2933
        %v2935 = vpop.f32.mrb[0].mxu0
        %2936 = vdwg.mxu0
        %v2937 = vadd.f32 %v2611, %v2721
        %v2938 = vadd.f32 %v2612, %v2723
        %v2939 = vadd.f32 %v2613, %v2792
        %v2940 = vadd.f32 %v2614, %v2794
        %v2941 = vadd.f32 %v2615, %v2863
        %v2942 = vadd.f32 %v2616, %v2865
        %v2943 = vadd.f32 %v2617, %v2934
        %s2944 = scalar_lea.vmem %s1, 64
        %v2945 = vld [vmem:[%s2944] sm:$0xff]
        %2946 = vrot.lane.b32.xlu0 %v365, 106
        %v2947 = vpop.permute.xlu0 %2946
        %2948 = vrot.lane.b32.xlu0 %v366, 106
        %v2949 = vpop.permute.xlu0 %2948
        %2950 = vrot.lane.b32.xlu0 %v367, 106
        %v2951 = vpop.permute.xlu0 %2950
        %2952 = vrot.lane.b32.xlu0 %v368, 106
        %v2953 = vpop.permute.xlu0 %2952
        %2954 = vrot.lane.b32.xlu0 %v369, 106
        %v2955 = vpop.permute.xlu0 %2954
        %2956 = vrot.lane.b32.xlu0 %v370, 106
        %v2957 = vpop.permute.xlu0 %2956
        %2958 = vrot.lane.b32.xlu0 %v371, 106
        %v2959 = vpop.permute.xlu0 %2958
        %2960 = vrot.lane.b32.xlu0 %v373, 106
        %v2961 = vpop.permute.xlu0 %2960
        %vm2962 = vcmask 867328
        %v2963 = vsel %vm2962, %v2947, %v2949
        %v2964 = vsel %vm2962, %v2949, %v2951
        %v2965 = vsel %vm2962, %v2951, %v2953
        %v2966 = vsel %vm2962, %v2953, %v2955
        %v2967 = vsel %vm2962, %v2955, %v2957
        %v2968 = vsel %vm2962, %v2957, %v2959
        %v2969 = vsel %vm2962, %v2959, %v2961
        %v2978 = vsel %vm415, %v2945, 0
        %2980 = vmatprep.subr.mxu0 %v2964
        %2981 = vmatpush1.msra.mxu0 %v2963
        %2982 = vmatprep.subr.mxu0 0.0
        %2983 = vmatpush1.msra.mxu0 0.0
        %2984 = vmatprep.subr.mxu0 0.0
        %2985 = vmatpush1.msra.mxu0 0.0
        %2986 = vmatprep.subr.mxu0 0.0
        %2987 = vmatpush1.msra.mxu0 0.0
        %2988 = vmatprep.subr.mxu0 0.0
        %2989 = vmatpush1.msra.mxu0 0.0
        %2990 = vmatprep.subr.mxu0 0.0
        %2991 = vmatpush1.msra.mxu0 0.0
        %2992 = vmatprep.subr.mxu0 0.0
        %2993 = vmatpush1.msra.mxu0 0.0
        %2994 = vmatprep.subr.mxu0 0.0
        %2995 = vmatpush1.msra.mxu0 0.0
        %2996 = vmatprep.subr.mxu0 0.0
        %2997 = vmatpush1.msra.mxu0 0.0
        %2998 = vmatprep.subr.mxu0 0.0
        %2999 = vmatpush1.msra.mxu0 0.0
        %3000 = vmatprep.subr.mxu0 0.0
        %3001 = vmatpush1.msra.mxu0 0.0
        %3002 = vmatprep.subr.mxu0 0.0
        %3003 = vmatpush1.msra.mxu0 0.0
        %3004 = vmatprep.subr.mxu0 0.0
        %3005 = vmatpush1.msra.mxu0 0.0
        %3006 = vmatprep.subr.mxu0 0.0
        %3007 = vmatpush1.msra.mxu0 0.0
        %3008 = vmatprep.subr.mxu0 0.0
        %3009 = vmatpush1.msra.mxu0 0.0
        %3010 = vmatprep.subr.mxu0 0.0
        %3011 = vmatpush1.msra.mxu0 0.0
        %3012 = vmatprep.subr.mxu0 0.0
        %3013 = vmatpush1.msra.mxu0 0.0
        %3014 = vmatprep.subr.mxu0 0.0
        %3015 = vmatpush1.msra.mxu0 0.0
        %3016 = vmatprep.subr.mxu0 0.0
        %3017 = vmatpush1.msra.mxu0 0.0
        %3018 = vmatprep.subr.mxu0 0.0
        %3019 = vmatpush1.msra.mxu0 0.0
        %3020 = vmatprep.subr.mxu0 0.0
        %3021 = vmatpush1.msra.mxu0 0.0
        %3022 = vmatprep.subr.mxu0 0.0
        %3023 = vmatpush1.msra.mxu0 0.0
        %3024 = vmatprep.subr.mxu0 0.0
        %3025 = vmatpush1.msra.mxu0 0.0
        %3026 = vmatprep.subr.mxu0 0.0
        %3027 = vmatpush1.msra.mxu0 0.0
        %3028 = vmatprep.subr.mxu0 0.0
        %3029 = vmatpush1.msra.mxu0 0.0
        %3030 = vmatprep.subr.mxu0 0.0
        %3031 = vmatpush1.msra.mxu0 0.0
        %3032 = vmatprep.subr.mxu0 0.0
        %3033 = vmatpush1.msra.mxu0 0.0
        %3034 = vmatprep.subr.mxu0 0.0
        %3035 = vmatpush1.msra.mxu0 0.0
        %3036 = vmatprep.subr.mxu0 0.0
        %3037 = vmatpush1.msra.mxu0 0.0
        %3038 = vmatprep.subr.mxu0 0.0
        %3039 = vmatpush1.msra.mxu0 0.0
        %3040 = vmatprep.subr.mxu0 0.0
        %3041 = vmatpush1.msra.mxu0 0.0
        %3042 = vmatprep.subr.mxu0 0.0
        %3043 = vmatpush1.msra.mxu0 0.0
        %3044 = vmatprep.mubr.f32.mxu0 0.0
        %3045 = vmatmul.mubr.f32.gmra.mrb[0].mxu0 %v2978
        %v3046 = vpop.f32.mrb[0].mxu0
        %v3047 = vadd.f32 0.0, %v3046
        %v3048 = vpop.f32.mrb[0].mxu0
        %v3049 = vadd.f32 0.0, %v3048
        %3050 = vdwg.mxu0
        %3051 = vmatprep.subr.mxu0 %v2966
        %3052 = vmatpush1.msra.mxu0 %v2965
        %3053 = vmatprep.subr.mxu0 0.0
        %3054 = vmatpush1.msra.mxu0 0.0
        %3055 = vmatprep.subr.mxu0 0.0
        %3056 = vmatpush1.msra.mxu0 0.0
        %3057 = vmatprep.subr.mxu0 0.0
        %3058 = vmatpush1.msra.mxu0 0.0
        %3059 = vmatprep.subr.mxu0 0.0
        %3060 = vmatpush1.msra.mxu0 0.0
        %3061 = vmatprep.subr.mxu0 0.0
        %3062 = vmatpush1.msra.mxu0 0.0
        %3063 = vmatprep.subr.mxu0 0.0
        %3064 = vmatpush1.msra.mxu0 0.0
        %3065 = vmatprep.subr.mxu0 0.0
        %3066 = vmatpush1.msra.mxu0 0.0
        %3067 = vmatprep.subr.mxu0 0.0
        %3068 = vmatpush1.msra.mxu0 0.0
        %3069 = vmatprep.subr.mxu0 0.0
        %3070 = vmatpush1.msra.mxu0 0.0
        %3071 = vmatprep.subr.mxu0 0.0
        %3072 = vmatpush1.msra.mxu0 0.0
        %3073 = vmatprep.subr.mxu0 0.0
        %3074 = vmatpush1.msra.mxu0 0.0
        %3075 = vmatprep.subr.mxu0 0.0
        %3076 = vmatpush1.msra.mxu0 0.0
        %3077 = vmatprep.subr.mxu0 0.0
        %3078 = vmatpush1.msra.mxu0 0.0
        %3079 = vmatprep.subr.mxu0 0.0
        %3080 = vmatpush1.msra.mxu0 0.0
        %3081 = vmatprep.subr.mxu0 0.0
        %3082 = vmatpush1.msra.mxu0 0.0
        %3083 = vmatprep.subr.mxu0 0.0
        %3084 = vmatpush1.msra.mxu0 0.0
        %3085 = vmatprep.subr.mxu0 0.0
        %3086 = vmatpush1.msra.mxu0 0.0
        %3087 = vmatprep.subr.mxu0 0.0
        %3088 = vmatpush1.msra.mxu0 0.0
        %3089 = vmatprep.subr.mxu0 0.0
        %3090 = vmatpush1.msra.mxu0 0.0
        %3091 = vmatprep.subr.mxu0 0.0
        %3092 = vmatpush1.msra.mxu0 0.0
        %3093 = vmatprep.subr.mxu0 0.0
        %3094 = vmatpush1.msra.mxu0 0.0
        %3095 = vmatprep.subr.mxu0 0.0
        %3096 = vmatpush1.msra.mxu0 0.0
        %3097 = vmatprep.subr.mxu0 0.0
        %3098 = vmatpush1.msra.mxu0 0.0
        %3099 = vmatprep.subr.mxu0 0.0
        %3100 = vmatpush1.msra.mxu0 0.0
        %3101 = vmatprep.subr.mxu0 0.0
        %3102 = vmatpush1.msra.mxu0 0.0
        %3103 = vmatprep.subr.mxu0 0.0
        %3104 = vmatpush1.msra.mxu0 0.0
        %3105 = vmatprep.subr.mxu0 0.0
        %3106 = vmatpush1.msra.mxu0 0.0
        %3107 = vmatprep.subr.mxu0 0.0
        %3108 = vmatpush1.msra.mxu0 0.0
        %3109 = vmatprep.subr.mxu0 0.0
        %3110 = vmatpush1.msra.mxu0 0.0
        %3111 = vmatprep.subr.mxu0 0.0
        %3112 = vmatpush1.msra.mxu0 0.0
        %3113 = vmatprep.subr.mxu0 0.0
        %3114 = vmatpush1.msra.mxu0 0.0
        %3115 = vmatprep.mubr.f32.mxu0 0.0
        %3116 = vmatmul.mubr.f32.gmra.mrb[0].mxu0 %v2978
        %v3117 = vpop.f32.mrb[0].mxu0
        %v3118 = vadd.f32 0.0, %v3117
        %v3119 = vpop.f32.mrb[0].mxu0
        %v3120 = vadd.f32 0.0, %v3119
        %3121 = vdwg.mxu0
        %3122 = vmatprep.subr.mxu0 %v2968
        %3123 = vmatpush1.msra.mxu0 %v2967
        %3124 = vmatprep.subr.mxu0 0.0
        %3125 = vmatpush1.msra.mxu0 0.0
        %3126 = vmatprep.subr.mxu0 0.0
        %3127 = vmatpush1.msra.mxu0 0.0
        %3128 = vmatprep.subr.mxu0 0.0
        %3129 = vmatpush1.msra.mxu0 0.0
        %3130 = vmatprep.subr.mxu0 0.0
        %3131 = vmatpush1.msra.mxu0 0.0
        %3132 = vmatprep.subr.mxu0 0.0
        %3133 = vmatpush1.msra.mxu0 0.0
        %3134 = vmatprep.subr.mxu0 0.0
        %3135 = vmatpush1.msra.mxu0 0.0
        %3136 = vmatprep.subr.mxu0 0.0
        %3137 = vmatpush1.msra.mxu0 0.0
        %3138 = vmatprep.subr.mxu0 0.0
        %3139 = vmatpush1.msra.mxu0 0.0
        %3140 = vmatprep.subr.mxu0 0.0
        %3141 = vmatpush1.msra.mxu0 0.0
        %3142 = vmatprep.subr.mxu0 0.0
        %3143 = vmatpush1.msra.mxu0 0.0
        %3144 = vmatprep.subr.mxu0 0.0
        %3145 = vmatpush1.msra.mxu0 0.0
        %3146 = vmatprep.subr.mxu0 0.0
        %3147 = vmatpush1.msra.mxu0 0.0
        %3148 = vmatprep.subr.mxu0 0.0
        %3149 = vmatpush1.msra.mxu0 0.0
        %3150 = vmatprep.subr.mxu0 0.0
        %3151 = vmatpush1.msra.mxu0 0.0
        %3152 = vmatprep.subr.mxu0 0.0
        %3153 = vmatpush1.msra.mxu0 0.0
        %3154 = vmatprep.subr.mxu0 0.0
        %3155 = vmatpush1.msra.mxu0 0.0
        %3156 = vmatprep.subr.mxu0 0.0
        %3157 = vmatpush1.msra.mxu0 0.0
        %3158 = vmatprep.subr.mxu0 0.0
        %3159 = vmatpush1.msra.mxu0 0.0
        %3160 = vmatprep.subr.mxu0 0.0
        %3161 = vmatpush1.msra.mxu0 0.0
        %3162 = vmatprep.subr.mxu0 0.0
        %3163 = vmatpush1.msra.mxu0 0.0
        %3164 = vmatprep.subr.mxu0 0.0
        %3165 = vmatpush1.msra.mxu0 0.0
        %3166 = vmatprep.subr.mxu0 0.0
        %3167 = vmatpush1.msra.mxu0 0.0
        %3168 = vmatprep.subr.mxu0 0.0
        %3169 = vmatpush1.msra.mxu0 0.0
        %3170 = vmatprep.subr.mxu0 0.0
        %3171 = vmatpush1.msra.mxu0 0.0
        %3172 = vmatprep.subr.mxu0 0.0
        %3173 = vmatpush1.msra.mxu0 0.0
        %3174 = vmatprep.subr.mxu0 0.0
        %3175 = vmatpush1.msra.mxu0 0.0
        %3176 = vmatprep.subr.mxu0 0.0
        %3177 = vmatpush1.msra.mxu0 0.0
        %3178 = vmatprep.subr.mxu0 0.0
        %3179 = vmatpush1.msra.mxu0 0.0
        %3180 = vmatprep.subr.mxu0 0.0
        %3181 = vmatpush1.msra.mxu0 0.0
        %3182 = vmatprep.subr.mxu0 0.0
        %3183 = vmatpush1.msra.mxu0 0.0
        %3184 = vmatprep.subr.mxu0 0.0
        %3185 = vmatpush1.msra.mxu0 0.0
        %3186 = vmatprep.mubr.f32.mxu0 0.0
        %3187 = vmatmul.mubr.f32.gmra.mrb[0].mxu0 %v2978
        %v3188 = vpop.f32.mrb[0].mxu0
        %v3189 = vadd.f32 0.0, %v3188
        %v3190 = vpop.f32.mrb[0].mxu0
        %v3191 = vadd.f32 0.0, %v3190
        %3192 = vdwg.mxu0
        %3193 = vmatprep.subr.mxu0 0.0
        %3194 = vmatpush1.msra.mxu0 %v2969
        %3195 = vmatprep.subr.mxu0 0.0
        %3196 = vmatpush1.msra.mxu0 0.0
        %3197 = vmatprep.subr.mxu0 0.0
        %3198 = vmatpush1.msra.mxu0 0.0
        %3199 = vmatprep.subr.mxu0 0.0
        %3200 = vmatpush1.msra.mxu0 0.0
        %3201 = vmatprep.subr.mxu0 0.0
        %3202 = vmatpush1.msra.mxu0 0.0
        %3203 = vmatprep.subr.mxu0 0.0
        %3204 = vmatpush1.msra.mxu0 0.0
        %3205 = vmatprep.subr.mxu0 0.0
        %3206 = vmatpush1.msra.mxu0 0.0
        %3207 = vmatprep.subr.mxu0 0.0
        %3208 = vmatpush1.msra.mxu0 0.0
        %3209 = vmatprep.subr.mxu0 0.0
        %3210 = vmatpush1.msra.mxu0 0.0
        %3211 = vmatprep.subr.mxu0 0.0
        %3212 = vmatpush1.msra.mxu0 0.0
        %3213 = vmatprep.subr.mxu0 0.0
        %3214 = vmatpush1.msra.mxu0 0.0
        %3215 = vmatprep.subr.mxu0 0.0
        %3216 = vmatpush1.msra.mxu0 0.0
        %3217 = vmatprep.subr.mxu0 0.0
        %3218 = vmatpush1.msra.mxu0 0.0
        %3219 = vmatprep.subr.mxu0 0.0
        %3220 = vmatpush1.msra.mxu0 0.0
        %3221 = vmatprep.subr.mxu0 0.0
        %3222 = vmatpush1.msra.mxu0 0.0
        %3223 = vmatprep.subr.mxu0 0.0
        %3224 = vmatpush1.msra.mxu0 0.0
        %3225 = vmatprep.subr.mxu0 0.0
        %3226 = vmatpush1.msra.mxu0 0.0
        %3227 = vmatprep.subr.mxu0 0.0
        %3228 = vmatpush1.msra.mxu0 0.0
        %3229 = vmatprep.subr.mxu0 0.0
        %3230 = vmatpush1.msra.mxu0 0.0
        %3231 = vmatprep.subr.mxu0 0.0
        %3232 = vmatpush1.msra.mxu0 0.0
        %3233 = vmatprep.subr.mxu0 0.0
        %3234 = vmatpush1.msra.mxu0 0.0
        %3235 = vmatprep.subr.mxu0 0.0
        %3236 = vmatpush1.msra.mxu0 0.0
        %3237 = vmatprep.subr.mxu0 0.0
        %3238 = vmatpush1.msra.mxu0 0.0
        %3239 = vmatprep.subr.mxu0 0.0
        %3240 = vmatpush1.msra.mxu0 0.0
        %3241 = vmatprep.subr.mxu0 0.0
        %3242 = vmatpush1.msra.mxu0 0.0
        %3243 = vmatprep.subr.mxu0 0.0
        %3244 = vmatpush1.msra.mxu0 0.0
        %3245 = vmatprep.subr.mxu0 0.0
        %3246 = vmatpush1.msra.mxu0 0.0
        %3247 = vmatprep.subr.mxu0 0.0
        %3248 = vmatpush1.msra.mxu0 0.0
        %3249 = vmatprep.subr.mxu0 0.0
        %3250 = vmatpush1.msra.mxu0 0.0
        %3251 = vmatprep.subr.mxu0 0.0
        %3252 = vmatpush1.msra.mxu0 0.0
        %3253 = vmatprep.subr.mxu0 0.0
        %3254 = vmatpush1.msra.mxu0 0.0
        %3255 = vmatprep.subr.mxu0 0.0
        %3256 = vmatpush1.msra.mxu0 0.0
        %3257 = vmatprep.mubr.f32.mxu0 0.0
        %3258 = vmatmul.mubr.f32.gmra.mrb[0].mxu0 %v2978
        %v3259 = vpop.f32.mrb[0].mxu0
        %v3260 = vadd.f32 0.0, %v3259
        %v3261 = vpop.f32.mrb[0].mxu0
        %3262 = vdwg.mxu0
        %v3263 = vadd.f32 %v2937, %v3047
        %v3264 = vadd.f32 %v2938, %v3049
        %v3265 = vadd.f32 %v2939, %v3118
        %v3266 = vadd.f32 %v2940, %v3120
        %v3267 = vadd.f32 %v2941, %v3189
        %v3268 = vadd.f32 %v2942, %v3191
        %v3269 = vadd.f32 %v2943, %v3260
        %s3270 = scalar_lea.vmem %s1, 72
        %v3271 = vld [vmem:[%s3270] sm:$0xff]
        %3272 = vrot.lane.b32.xlu0 %v365, 28
        %v3273 = vpop.permute.xlu0 %3272
        %3274 = vrot.lane.b32.xlu0 %v366, 28
        %v3275 = vpop.permute.xlu0 %3274
        %3276 = vrot.lane.b32.xlu0 %v367, 28
        %v3277 = vpop.permute.xlu0 %3276
        %3278 = vrot.lane.b32.xlu0 %v368, 28
        %v3279 = vpop.permute.xlu0 %3278
        %3280 = vrot.lane.b32.xlu0 %v369, 28
        %v3281 = vpop.permute.xlu0 %3280
        %3282 = vrot.lane.b32.xlu0 %v370, 28
        %v3283 = vpop.permute.xlu0 %3282
        %3284 = vrot.lane.b32.xlu0 %v371, 28
        %v3285 = vpop.permute.xlu0 %3284
        %3286 = vrot.lane.b32.xlu0 %v373, 28
        %v3287 = vpop.permute.xlu0 %3286
        %vm3288 = vcmask 228352
        %v3289 = vsel %vm3288, %v3273, %v3275
        %v3290 = vsel %vm3288, %v3275, %v3277
        %v3291 = vsel %vm3288, %v3277, %v3279
        %v3292 = vsel %vm3288, %v3279, %v3281
        %v3293 = vsel %vm3288, %v3281, %v3283
        %v3294 = vsel %vm3288, %v3283, %v3285
        %v3295 = vsel %vm3288, %v3285, %v3287
        %v3304 = vsel %vm415, %v3271, 0
        %3306 = vmatprep.subr.mxu0 %v3290
        %3307 = vmatpush1.msra.mxu0 %v3289
        %3308 = vmatprep.subr.mxu0 0.0
        %3309 = vmatpush1.msra.mxu0 0.0
        %3310 = vmatprep.subr.mxu0 0.0
        %3311 = vmatpush1.msra.mxu0 0.0
        %3312 = vmatprep.subr.mxu0 0.0
        %3313 = vmatpush1.msra.mxu0 0.0
        %3314 = vmatprep.subr.mxu0 0.0
        %3315 = vmatpush1.msra.mxu0 0.0
        %3316 = vmatprep.subr.mxu0 0.0
        %3317 = vmatpush1.msra.mxu0 0.0
        %3318 = vmatprep.subr.mxu0 0.0
        %3319 = vmatpush1.msra.mxu0 0.0
        %3320 = vmatprep.subr.mxu0 0.0
        %3321 = vmatpush1.msra.mxu0 0.0
        %3322 = vmatprep.subr.mxu0 0.0
        %3323 = vmatpush1.msra.mxu0 0.0
        %3324 = vmatprep.subr.mxu0 0.0
        %3325 = vmatpush1.msra.mxu0 0.0
        %3326 = vmatprep.subr.mxu0 0.0
        %3327 = vmatpush1.msra.mxu0 0.0
        %3328 = vmatprep.subr.mxu0 0.0
        %3329 = vmatpush1.msra.mxu0 0.0
        %3330 = vmatprep.subr.mxu0 0.0
        %3331 = vmatpush1.msra.mxu0 0.0
        %3332 = vmatprep.subr.mxu0 0.0
        %3333 = vmatpush1.msra.mxu0 0.0
        %3334 = vmatprep.subr.mxu0 0.0
        %3335 = vmatpush1.msra.mxu0 0.0
        %3336 = vmatprep.subr.mxu0 0.0
        %3337 = vmatpush1.msra.mxu0 0.0
        %3338 = vmatprep.subr.mxu0 0.0
        %3339 = vmatpush1.msra.mxu0 0.0
        %3340 = vmatprep.subr.mxu0 0.0
        %3341 = vmatpush1.msra.mxu0 0.0
        %3342 = vmatprep.subr.mxu0 0.0
        %3343 = vmatpush1.msra.mxu0 0.0
        %3344 = vmatprep.subr.mxu0 0.0
        %3345 = vmatpush1.msra.mxu0 0.0
        %3346 = vmatprep.subr.mxu0 0.0
        %3347 = vmatpush1.msra.mxu0 0.0
        %3348 = vmatprep.subr.mxu0 0.0
        %3349 = vmatpush1.msra.mxu0 0.0
        %3350 = vmatprep.subr.mxu0 0.0
        %3351 = vmatpush1.msra.mxu0 0.0
        %3352 = vmatprep.subr.mxu0 0.0
        %3353 = vmatpush1.msra.mxu0 0.0
        %3354 = vmatprep.subr.mxu0 0.0
        %3355 = vmatpush1.msra.mxu0 0.0
        %3356 = vmatprep.subr.mxu0 0.0
        %3357 = vmatpush1.msra.mxu0 0.0
        %3358 = vmatprep.subr.mxu0 0.0
        %3359 = vmatpush1.msra.mxu0 0.0
        %3360 = vmatprep.subr.mxu0 0.0
        %3361 = vmatpush1.msra.mxu0 0.0
        %3362 = vmatprep.subr.mxu0 0.0
        %3363 = vmatpush1.msra.mxu0 0.0
        %3364 = vmatprep.subr.mxu0 0.0
        %3365 = vmatpush1.msra.mxu0 0.0
        %3366 = vmatprep.subr.mxu0 0.0
        %3367 = vmatpush1.msra.mxu0 0.0
        %3368 = vmatprep.subr.mxu0 0.0
        %3369 = vmatpush1.msra.mxu0 0.0
        %3370 = vmatprep.mubr.f32.mxu0 0.0
        %3371 = vmatmul.mubr.f32.gmra.mrb[0].mxu0 %v3304
        %v3372 = vpop.f32.mrb[0].mxu0
        %v3373 = vadd.f32 0.0, %v3372
        %v3374 = vpop.f32.mrb[0].mxu0
        %v3375 = vadd.f32 0.0, %v3374
        %3376 = vdwg.mxu0
        %3377 = vmatprep.subr.mxu0 %v3292
        %3378 = vmatpush1.msra.mxu0 %v3291
        %3379 = vmatprep.subr.mxu0 0.0
        %3380 = vmatpush1.msra.mxu0 0.0
        %3381 = vmatprep.subr.mxu0 0.0
        %3382 = vmatpush1.msra.mxu0 0.0
        %3383 = vmatprep.subr.mxu0 0.0
        %3384 = vmatpush1.msra.mxu0 0.0
        %3385 = vmatprep.subr.mxu0 0.0
        %3386 = vmatpush1.msra.mxu0 0.0
        %3387 = vmatprep.subr.mxu0 0.0
        %3388 = vmatpush1.msra.mxu0 0.0
        %3389 = vmatprep.subr.mxu0 0.0
        %3390 = vmatpush1.msra.mxu0 0.0
        %3391 = vmatprep.subr.mxu0 0.0
        %3392 = vmatpush1.msra.mxu0 0.0
        %3393 = vmatprep.subr.mxu0 0.0
        %3394 = vmatpush1.msra.mxu0 0.0
        %3395 = vmatprep.subr.mxu0 0.0
        %3396 = vmatpush1.msra.mxu0 0.0
        %3397 = vmatprep.subr.mxu0 0.0
        %3398 = vmatpush1.msra.mxu0 0.0
        %3399 = vmatprep.subr.mxu0 0.0
        %3400 = vmatpush1.msra.mxu0 0.0
        %3401 = vmatprep.subr.mxu0 0.0
        %3402 = vmatpush1.msra.mxu0 0.0
        %3403 = vmatprep.subr.mxu0 0.0
        %3404 = vmatpush1.msra.mxu0 0.0
        %3405 = vmatprep.subr.mxu0 0.0
        %3406 = vmatpush1.msra.mxu0 0.0
        %3407 = vmatprep.subr.mxu0 0.0
        %3408 = vmatpush1.msra.mxu0 0.0
        %3409 = vmatprep.subr.mxu0 0.0
        %3410 = vmatpush1.msra.mxu0 0.0
        %3411 = vmatprep.subr.mxu0 0.0
        %3412 = vmatpush1.msra.mxu0 0.0
        %3413 = vmatprep.subr.mxu0 0.0
        %3414 = vmatpush1.msra.mxu0 0.0
        %3415 = vmatprep.subr.mxu0 0.0
        %3416 = vmatpush1.msra.mxu0 0.0
        %3417 = vmatprep.subr.mxu0 0.0
        %3418 = vmatpush1.msra.mxu0 0.0
        %3419 = vmatprep.subr.mxu0 0.0
        %3420 = vmatpush1.msra.mxu0 0.0
        %3421 = vmatprep.subr.mxu0 0.0
        %3422 = vmatpush1.msra.mxu0 0.0
        %3423 = vmatprep.subr.mxu0 0.0
        %3424 = vmatpush1.msra.mxu0 0.0
        %3425 = vmatprep.subr.mxu0 0.0
        %3426 = vmatpush1.msra.mxu0 0.0
        %3427 = vmatprep.subr.mxu0 0.0
        %3428 = vmatpush1.msra.mxu0 0.0
        %3429 = vmatprep.subr.mxu0 0.0
        %3430 = vmatpush1.msra.mxu0 0.0
        %3431 = vmatprep.subr.mxu0 0.0
        %3432 = vmatpush1.msra.mxu0 0.0
        %3433 = vmatprep.subr.mxu0 0.0
        %3434 = vmatpush1.msra.mxu0 0.0
        %3435 = vmatprep.subr.mxu0 0.0
        %3436 = vmatpush1.msra.mxu0 0.0
        %3437 = vmatprep.subr.mxu0 0.0
        %3438 = vmatpush1.msra.mxu0 0.0
        %3439 = vmatprep.subr.mxu0 0.0
        %3440 = vmatpush1.msra.mxu0 0.0
        %3441 = vmatprep.mubr.f32.mxu0 0.0
        %3442 = vmatmul.mubr.f32.gmra.mrb[0].mxu0 %v3304
        %v3443 = vpop.f32.mrb[0].mxu0
        %v3444 = vadd.f32 0.0, %v3443
        %v3445 = vpop.f32.mrb[0].mxu0
        %v3446 = vadd.f32 0.0, %v3445
        %3447 = vdwg.mxu0
        %3448 = vmatprep.subr.mxu0 %v3294
        %3449 = vmatpush1.msra.mxu0 %v3293
        %3450 = vmatprep.subr.mxu0 0.0
        %3451 = vmatpush1.msra.mxu0 0.0
        %3452 = vmatprep.subr.mxu0 0.0
        %3453 = vmatpush1.msra.mxu0 0.0
        %3454 = vmatprep.subr.mxu0 0.0
        %3455 = vmatpush1.msra.mxu0 0.0
        %3456 = vmatprep.subr.mxu0 0.0
        %3457 = vmatpush1.msra.mxu0 0.0
        %3458 = vmatprep.subr.mxu0 0.0
        %3459 = vmatpush1.msra.mxu0 0.0
        %3460 = vmatprep.subr.mxu0 0.0
        %3461 = vmatpush1.msra.mxu0 0.0
        %3462 = vmatprep.subr.mxu0 0.0
        %3463 = vmatpush1.msra.mxu0 0.0
        %3464 = vmatprep.subr.mxu0 0.0
        %3465 = vmatpush1.msra.mxu0 0.0
        %3466 = vmatprep.subr.mxu0 0.0
        %3467 = vmatpush1.msra.mxu0 0.0
        %3468 = vmatprep.subr.mxu0 0.0
        %3469 = vmatpush1.msra.mxu0 0.0
        %3470 = vmatprep.subr.mxu0 0.0
        %3471 = vmatpush1.msra.mxu0 0.0
        %3472 = vmatprep.subr.mxu0 0.0
        %3473 = vmatpush1.msra.mxu0 0.0
        %3474 = vmatprep.subr.mxu0 0.0
        %3475 = vmatpush1.msra.mxu0 0.0
        %3476 = vmatprep.subr.mxu0 0.0
        %3477 = vmatpush1.msra.mxu0 0.0
        %3478 = vmatprep.subr.mxu0 0.0
        %3479 = vmatpush1.msra.mxu0 0.0
        %3480 = vmatprep.subr.mxu0 0.0
        %3481 = vmatpush1.msra.mxu0 0.0
        %3482 = vmatprep.subr.mxu0 0.0
        %3483 = vmatpush1.msra.mxu0 0.0
        %3484 = vmatprep.subr.mxu0 0.0
        %3485 = vmatpush1.msra.mxu0 0.0
        %3486 = vmatprep.subr.mxu0 0.0
        %3487 = vmatpush1.msra.mxu0 0.0
        %3488 = vmatprep.subr.mxu0 0.0
        %3489 = vmatpush1.msra.mxu0 0.0
        %3490 = vmatprep.subr.mxu0 0.0
        %3491 = vmatpush1.msra.mxu0 0.0
        %3492 = vmatprep.subr.mxu0 0.0
        %3493 = vmatpush1.msra.mxu0 0.0
        %3494 = vmatprep.subr.mxu0 0.0
        %3495 = vmatpush1.msra.mxu0 0.0
        %3496 = vmatprep.subr.mxu0 0.0
        %3497 = vmatpush1.msra.mxu0 0.0
        %3498 = vmatprep.subr.mxu0 0.0
        %3499 = vmatpush1.msra.mxu0 0.0
        %3500 = vmatprep.subr.mxu0 0.0
        %3501 = vmatpush1.msra.mxu0 0.0
        %3502 = vmatprep.subr.mxu0 0.0
        %3503 = vmatpush1.msra.mxu0 0.0
        %3504 = vmatprep.subr.mxu0 0.0
        %3505 = vmatpush1.msra.mxu0 0.0
        %3506 = vmatprep.subr.mxu0 0.0
        %3507 = vmatpush1.msra.mxu0 0.0
        %3508 = vmatprep.subr.mxu0 0.0
        %3509 = vmatpush1.msra.mxu0 0.0
        %3510 = vmatprep.subr.mxu0 0.0
        %3511 = vmatpush1.msra.mxu0 0.0
        %3512 = vmatprep.mubr.f32.mxu0 0.0
        %3513 = vmatmul.mubr.f32.gmra.mrb[0].mxu0 %v3304
        %v3514 = vpop.f32.mrb[0].mxu0
        %v3515 = vadd.f32 0.0, %v3514
        %v3516 = vpop.f32.mrb[0].mxu0
        %v3517 = vadd.f32 0.0, %v3516
        %3518 = vdwg.mxu0
        %3519 = vmatprep.subr.mxu0 0.0
        %3520 = vmatpush1.msra.mxu0 %v3295
        %3521 = vmatprep.subr.mxu0 0.0
        %3522 = vmatpush1.msra.mxu0 0.0
        %3523 = vmatprep.subr.mxu0 0.0
        %3524 = vmatpush1.msra.mxu0 0.0
        %3525 = vmatprep.subr.mxu0 0.0
        %3526 = vmatpush1.msra.mxu0 0.0
        %3527 = vmatprep.subr.mxu0 0.0
        %3528 = vmatpush1.msra.mxu0 0.0
        %3529 = vmatprep.subr.mxu0 0.0
        %3530 = vmatpush1.msra.mxu0 0.0
        %3531 = vmatprep.subr.mxu0 0.0
        %3532 = vmatpush1.msra.mxu0 0.0
        %3533 = vmatprep.subr.mxu0 0.0
        %3534 = vmatpush1.msra.mxu0 0.0
        %3535 = vmatprep.subr.mxu0 0.0
        %3536 = vmatpush1.msra.mxu0 0.0
        %3537 = vmatprep.subr.mxu0 0.0
        %3538 = vmatpush1.msra.mxu0 0.0
        %3539 = vmatprep.subr.mxu0 0.0
        %3540 = vmatpush1.msra.mxu0 0.0
        %3541 = vmatprep.subr.mxu0 0.0
        %3542 = vmatpush1.msra.mxu0 0.0
        %3543 = vmatprep.subr.mxu0 0.0
        %3544 = vmatpush1.msra.mxu0 0.0
        %3545 = vmatprep.subr.mxu0 0.0
        %3546 = vmatpush1.msra.mxu0 0.0
        %3547 = vmatprep.subr.mxu0 0.0
        %3548 = vmatpush1.msra.mxu0 0.0
        %3549 = vmatprep.subr.mxu0 0.0
        %3550 = vmatpush1.msra.mxu0 0.0
        %3551 = vmatprep.subr.mxu0 0.0
        %3552 = vmatpush1.msra.mxu0 0.0
        %3553 = vmatprep.subr.mxu0 0.0
        %3554 = vmatpush1.msra.mxu0 0.0
        %3555 = vmatprep.subr.mxu0 0.0
        %3556 = vmatpush1.msra.mxu0 0.0
        %3557 = vmatprep.subr.mxu0 0.0
        %3558 = vmatpush1.msra.mxu0 0.0
        %3559 = vmatprep.subr.mxu0 0.0
        %3560 = vmatpush1.msra.mxu0 0.0
        %3561 = vmatprep.subr.mxu0 0.0
        %3562 = vmatpush1.msra.mxu0 0.0
        %3563 = vmatprep.subr.mxu0 0.0
        %3564 = vmatpush1.msra.mxu0 0.0
        %3565 = vmatprep.subr.mxu0 0.0
        %3566 = vmatpush1.msra.mxu0 0.0
        %3567 = vmatprep.subr.mxu0 0.0
        %3568 = vmatpush1.msra.mxu0 0.0
        %3569 = vmatprep.subr.mxu0 0.0
        %3570 = vmatpush1.msra.mxu0 0.0
        %3571 = vmatprep.subr.mxu0 0.0
        %3572 = vmatpush1.msra.mxu0 0.0
        %3573 = vmatprep.subr.mxu0 0.0
        %3574 = vmatpush1.msra.mxu0 0.0
        %3575 = vmatprep.subr.mxu0 0.0
        %3576 = vmatpush1.msra.mxu0 0.0
        %3577 = vmatprep.subr.mxu0 0.0
        %3578 = vmatpush1.msra.mxu0 0.0
        %3579 = vmatprep.subr.mxu0 0.0
        %3580 = vmatpush1.msra.mxu0 0.0
        %3581 = vmatprep.subr.mxu0 0.0
        %3582 = vmatpush1.msra.mxu0 0.0
        %3583 = vmatprep.mubr.f32.mxu0 0.0
        %3584 = vmatmul.mubr.f32.gmra.mrb[0].mxu0 %v3304
        %v3585 = vpop.f32.mrb[0].mxu0
        %v3586 = vadd.f32 0.0, %v3585
        %v3587 = vpop.f32.mrb[0].mxu0
        %3588 = vdwg.mxu0
        %v3589 = vadd.f32 %v3263, %v3373
        %v3590 = vadd.f32 %v3264, %v3375
        %v3591 = vadd.f32 %v3265, %v3444
        %v3592 = vadd.f32 %v3266, %v3446
        %v3593 = vadd.f32 %v3267, %v3515
        %v3594 = vadd.f32 %v3268, %v3517
        %v3595 = vadd.f32 %v3269, %v3586
        %s3596 = scalar_lea.vmem %s1, 80
        %v3597 = vld [vmem:[%s3596] sm:$0xff]
        %3598 = vrot.lane.b32.xlu0 %v365, 27
        %v3599 = vpop.permute.xlu0 %3598
        %3600 = vrot.lane.b32.xlu0 %v366, 27
        %v3601 = vpop.permute.xlu0 %3600
        %3602 = vrot.lane.b32.xlu0 %v367, 27
        %v3603 = vpop.permute.xlu0 %3602
        %3604 = vrot.lane.b32.xlu0 %v368, 27
        %v3605 = vpop.permute.xlu0 %3604
        %3606 = vrot.lane.b32.xlu0 %v369, 27
        %v3607 = vpop.permute.xlu0 %3606
        %3608 = vrot.lane.b32.xlu0 %v370, 27
        %v3609 = vpop.permute.xlu0 %3608
        %3610 = vrot.lane.b32.xlu0 %v371, 27
        %v3611 = vpop.permute.xlu0 %3610
        %3612 = vrot.lane.b32.xlu0 %v373, 27
        %v3613 = vpop.permute.xlu0 %3612
        %vm3614 = vcmask 220160
        %v3615 = vsel %vm3614, %v3599, %v3601
        %v3616 = vsel %vm3614, %v3601, %v3603
        %v3617 = vsel %vm3614, %v3603, %v3605
        %v3618 = vsel %vm3614, %v3605, %v3607
        %v3619 = vsel %vm3614, %v3607, %v3609
        %v3620 = vsel %vm3614, %v3609, %v3611
        %v3621 = vsel %vm3614, %v3611, %v3613
        %v3630 = vsel %vm415, %v3597, 0
        %3632 = vmatprep.subr.mxu0 %v3616
        %3633 = vmatpush1.msra.mxu0 %v3615
        %3634 = vmatprep.subr.mxu0 0.0
        %3635 = vmatpush1.msra.mxu0 0.0
        %3636 = vmatprep.subr.mxu0 0.0
        %3637 = vmatpush1.msra.mxu0 0.0
        %3638 = vmatprep.subr.mxu0 0.0
        %3639 = vmatpush1.msra.mxu0 0.0
        %3640 = vmatprep.subr.mxu0 0.0
        %3641 = vmatpush1.msra.mxu0 0.0
        %3642 = vmatprep.subr.mxu0 0.0
        %3643 = vmatpush1.msra.mxu0 0.0
        %3644 = vmatprep.subr.mxu0 0.0
        %3645 = vmatpush1.msra.mxu0 0.0
        %3646 = vmatprep.subr.mxu0 0.0
        %3647 = vmatpush1.msra.mxu0 0.0
        %3648 = vmatprep.subr.mxu0 0.0
        %3649 = vmatpush1.msra.mxu0 0.0
        %3650 = vmatprep.subr.mxu0 0.0
        %3651 = vmatpush1.msra.mxu0 0.0
        %3652 = vmatprep.subr.mxu0 0.0
        %3653 = vmatpush1.msra.mxu0 0.0
        %3654 = vmatprep.subr.mxu0 0.0
        %3655 = vmatpush1.msra.mxu0 0.0
        %3656 = vmatprep.subr.mxu0 0.0
        %3657 = vmatpush1.msra.mxu0 0.0
        %3658 = vmatprep.subr.mxu0 0.0
        %3659 = vmatpush1.msra.mxu0 0.0
        %3660 = vmatprep.subr.mxu0 0.0
        %3661 = vmatpush1.msra.mxu0 0.0
        %3662 = vmatprep.subr.mxu0 0.0
        %3663 = vmatpush1.msra.mxu0 0.0
        %3664 = vmatprep.subr.mxu0 0.0
        %3665 = vmatpush1.msra.mxu0 0.0
        %3666 = vmatprep.subr.mxu0 0.0
        %3667 = vmatpush1.msra.mxu0 0.0
        %3668 = vmatprep.subr.mxu0 0.0
        %3669 = vmatpush1.msra.mxu0 0.0
        %3670 = vmatprep.subr.mxu0 0.0
        %3671 = vmatpush1.msra.mxu0 0.0
        %3672 = vmatprep.subr.mxu0 0.0
        %3673 = vmatpush1.msra.mxu0 0.0
        %3674 = vmatprep.subr.mxu0 0.0
        %3675 = vmatpush1.msra.mxu0 0.0
        %3676 = vmatprep.subr.mxu0 0.0
        %3677 = vmatpush1.msra.mxu0 0.0
        %3678 = vmatprep.subr.mxu0 0.0
        %3679 = vmatpush1.msra.mxu0 0.0
        %3680 = vmatprep.subr.mxu0 0.0
        %3681 = vmatpush1.msra.mxu0 0.0
        %3682 = vmatprep.subr.mxu0 0.0
        %3683 = vmatpush1.msra.mxu0 0.0
        %3684 = vmatprep.subr.mxu0 0.0
        %3685 = vmatpush1.msra.mxu0 0.0
        %3686 = vmatprep.subr.mxu0 0.0
        %3687 = vmatpush1.msra.mxu0 0.0
        %3688 = vmatprep.subr.mxu0 0.0
        %3689 = vmatpush1.msra.mxu0 0.0
        %3690 = vmatprep.subr.mxu0 0.0
        %3691 = vmatpush1.msra.mxu0 0.0
        %3692 = vmatprep.subr.mxu0 0.0
        %3693 = vmatpush1.msra.mxu0 0.0
        %3694 = vmatprep.subr.mxu0 0.0
        %3695 = vmatpush1.msra.mxu0 0.0
        %3696 = vmatprep.mubr.f32.mxu0 0.0
        %3697 = vmatmul.mubr.f32.gmra.mrb[0].mxu0 %v3630
        %v3698 = vpop.f32.mrb[0].mxu0
        %v3699 = vadd.f32 0.0, %v3698
        %v3700 = vpop.f32.mrb[0].mxu0
        %v3701 = vadd.f32 0.0, %v3700
        %3702 = vdwg.mxu0
        %3703 = vmatprep.subr.mxu0 %v3618
        %3704 = vmatpush1.msra.mxu0 %v3617
        %3705 = vmatprep.subr.mxu0 0.0
        %3706 = vmatpush1.msra.mxu0 0.0
        %3707 = vmatprep.subr.mxu0 0.0
        %3708 = vmatpush1.msra.mxu0 0.0
        %3709 = vmatprep.subr.mxu0 0.0
        %3710 = vmatpush1.msra.mxu0 0.0
        %3711 = vmatprep.subr.mxu0 0.0
        %3712 = vmatpush1.msra.mxu0 0.0
        %3713 = vmatprep.subr.mxu0 0.0
        %3714 = vmatpush1.msra.mxu0 0.0
        %3715 = vmatprep.subr.mxu0 0.0
        %3716 = vmatpush1.msra.mxu0 0.0
        %3717 = vmatprep.subr.mxu0 0.0
        %3718 = vmatpush1.msra.mxu0 0.0
        %3719 = vmatprep.subr.mxu0 0.0
        %3720 = vmatpush1.msra.mxu0 0.0
        %3721 = vmatprep.subr.mxu0 0.0
        %3722 = vmatpush1.msra.mxu0 0.0
        %3723 = vmatprep.subr.mxu0 0.0
        %3724 = vmatpush1.msra.mxu0 0.0
        %3725 = vmatprep.subr.mxu0 0.0
        %3726 = vmatpush1.msra.mxu0 0.0
        %3727 = vmatprep.subr.mxu0 0.0
        %3728 = vmatpush1.msra.mxu0 0.0
        %3729 = vmatprep.subr.mxu0 0.0
        %3730 = vmatpush1.msra.mxu0 0.0
        %3731 = vmatprep.subr.mxu0 0.0
        %3732 = vmatpush1.msra.mxu0 0.0
        %3733 = vmatprep.subr.mxu0 0.0
        %3734 = vmatpush1.msra.mxu0 0.0
        %3735 = vmatprep.subr.mxu0 0.0
        %3736 = vmatpush1.msra.mxu0 0.0
        %3737 = vmatprep.subr.mxu0 0.0
        %3738 = vmatpush1.msra.mxu0 0.0
        %3739 = vmatprep.subr.mxu0 0.0
        %3740 = vmatpush1.msra.mxu0 0.0
        %3741 = vmatprep.subr.mxu0 0.0
        %3742 = vmatpush1.msra.mxu0 0.0
        %3743 = vmatprep.subr.mxu0 0.0
        %3744 = vmatpush1.msra.mxu0 0.0
        %3745 = vmatprep.subr.mxu0 0.0
        %3746 = vmatpush1.msra.mxu0 0.0
        %3747 = vmatprep.subr.mxu0 0.0
        %3748 = vmatpush1.msra.mxu0 0.0
        %3749 = vmatprep.subr.mxu0 0.0
        %3750 = vmatpush1.msra.mxu0 0.0
        %3751 = vmatprep.subr.mxu0 0.0
        %3752 = vmatpush1.msra.mxu0 0.0
        %3753 = vmatprep.subr.mxu0 0.0
        %3754 = vmatpush1.msra.mxu0 0.0
        %3755 = vmatprep.subr.mxu0 0.0
        %3756 = vmatpush1.msra.mxu0 0.0
        %3757 = vmatprep.subr.mxu0 0.0
        %3758 = vmatpush1.msra.mxu0 0.0
        %3759 = vmatprep.subr.mxu0 0.0
        %3760 = vmatpush1.msra.mxu0 0.0
        %3761 = vmatprep.subr.mxu0 0.0
        %3762 = vmatpush1.msra.mxu0 0.0
        %3763 = vmatprep.subr.mxu0 0.0
        %3764 = vmatpush1.msra.mxu0 0.0
        %3765 = vmatprep.subr.mxu0 0.0
        %3766 = vmatpush1.msra.mxu0 0.0
        %3767 = vmatprep.mubr.f32.mxu0 0.0
        %3768 = vmatmul.mubr.f32.gmra.mrb[0].mxu0 %v3630
        %v3769 = vpop.f32.mrb[0].mxu0
        %v3770 = vadd.f32 0.0, %v3769
        %v3771 = vpop.f32.mrb[0].mxu0
        %v3772 = vadd.f32 0.0, %v3771
        %3773 = vdwg.mxu0
        %3774 = vmatprep.subr.mxu0 %v3620
        %3775 = vmatpush1.msra.mxu0 %v3619
        %3776 = vmatprep.subr.mxu0 0.0
        %3777 = vmatpush1.msra.mxu0 0.0
        %3778 = vmatprep.subr.mxu0 0.0
        %3779 = vmatpush1.msra.mxu0 0.0
        %3780 = vmatprep.subr.mxu0 0.0
        %3781 = vmatpush1.msra.mxu0 0.0
        %3782 = vmatprep.subr.mxu0 0.0
        %3783 = vmatpush1.msra.mxu0 0.0
        %3784 = vmatprep.subr.mxu0 0.0
        %3785 = vmatpush1.msra.mxu0 0.0
        %3786 = vmatprep.subr.mxu0 0.0
        %3787 = vmatpush1.msra.mxu0 0.0
        %3788 = vmatprep.subr.mxu0 0.0
        %3789 = vmatpush1.msra.mxu0 0.0
        %3790 = vmatprep.subr.mxu0 0.0
        %3791 = vmatpush1.msra.mxu0 0.0
        %3792 = vmatprep.subr.mxu0 0.0
        %3793 = vmatpush1.msra.mxu0 0.0
        %3794 = vmatprep.subr.mxu0 0.0
        %3795 = vmatpush1.msra.mxu0 0.0
        %3796 = vmatprep.subr.mxu0 0.0
        %3797 = vmatpush1.msra.mxu0 0.0
        %3798 = vmatprep.subr.mxu0 0.0
        %3799 = vmatpush1.msra.mxu0 0.0
        %3800 = vmatprep.subr.mxu0 0.0
        %3801 = vmatpush1.msra.mxu0 0.0
        %3802 = vmatprep.subr.mxu0 0.0
        %3803 = vmatpush1.msra.mxu0 0.0
        %3804 = vmatprep.subr.mxu0 0.0
        %3805 = vmatpush1.msra.mxu0 0.0
        %3806 = vmatprep.subr.mxu0 0.0
        %3807 = vmatpush1.msra.mxu0 0.0
        %3808 = vmatprep.subr.mxu0 0.0
        %3809 = vmatpush1.msra.mxu0 0.0
        %3810 = vmatprep.subr.mxu0 0.0
        %3811 = vmatpush1.msra.mxu0 0.0
        %3812 = vmatprep.subr.mxu0 0.0
        %3813 = vmatpush1.msra.mxu0 0.0
        %3814 = vmatprep.subr.mxu0 0.0
        %3815 = vmatpush1.msra.mxu0 0.0
        %3816 = vmatprep.subr.mxu0 0.0
        %3817 = vmatpush1.msra.mxu0 0.0
        %3818 = vmatprep.subr.mxu0 0.0
        %3819 = vmatpush1.msra.mxu0 0.0
        %3820 = vmatprep.subr.mxu0 0.0
        %3821 = vmatpush1.msra.mxu0 0.0
        %3822 = vmatprep.subr.mxu0 0.0
        %3823 = vmatpush1.msra.mxu0 0.0
        %3824 = vmatprep.subr.mxu0 0.0
        %3825 = vmatpush1.msra.mxu0 0.0
        %3826 = vmatprep.subr.mxu0 0.0
        %3827 = vmatpush1.msra.mxu0 0.0
        %3828 = vmatprep.subr.mxu0 0.0
        %3829 = vmatpush1.msra.mxu0 0.0
        %3830 = vmatprep.subr.mxu0 0.0
        %3831 = vmatpush1.msra.mxu0 0.0
        %3832 = vmatprep.subr.mxu0 0.0
        %3833 = vmatpush1.msra.mxu0 0.0
        %3834 = vmatprep.subr.mxu0 0.0
        %3835 = vmatpush1.msra.mxu0 0.0
        %3836 = vmatprep.subr.mxu0 0.0
        %3837 = vmatpush1.msra.mxu0 0.0
        %3838 = vmatprep.mubr.f32.mxu0 0.0
        %3839 = vmatmul.mubr.f32.gmra.mrb[0].mxu0 %v3630
        %v3840 = vpop.f32.mrb[0].mxu0
        %v3841 = vadd.f32 0.0, %v3840
        %v3842 = vpop.f32.mrb[0].mxu0
        %v3843 = vadd.f32 0.0, %v3842
        %3844 = vdwg.mxu0
        %3845 = vmatprep.subr.mxu0 0.0
        %3846 = vmatpush1.msra.mxu0 %v3621
        %3847 = vmatprep.subr.mxu0 0.0
        %3848 = vmatpush1.msra.mxu0 0.0
        %3849 = vmatprep.subr.mxu0 0.0
        %3850 = vmatpush1.msra.mxu0 0.0
        %3851 = vmatprep.subr.mxu0 0.0
        %3852 = vmatpush1.msra.mxu0 0.0
        %3853 = vmatprep.subr.mxu0 0.0
        %3854 = vmatpush1.msra.mxu0 0.0
        %3855 = vmatprep.subr.mxu0 0.0
        %3856 = vmatpush1.msra.mxu0 0.0
        %3857 = vmatprep.subr.mxu0 0.0
        %3858 = vmatpush1.msra.mxu0 0.0
        %3859 = vmatprep.subr.mxu0 0.0
        %3860 = vmatpush1.msra.mxu0 0.0
        %3861 = vmatprep.subr.mxu0 0.0
        %3862 = vmatpush1.msra.mxu0 0.0
        %3863 = vmatprep.subr.mxu0 0.0
        %3864 = vmatpush1.msra.mxu0 0.0
        %3865 = vmatprep.subr.mxu0 0.0
        %3866 = vmatpush1.msra.mxu0 0.0
        %3867 = vmatprep.subr.mxu0 0.0
        %3868 = vmatpush1.msra.mxu0 0.0
        %3869 = vmatprep.subr.mxu0 0.0
        %3870 = vmatpush1.msra.mxu0 0.0
        %3871 = vmatprep.subr.mxu0 0.0
        %3872 = vmatpush1.msra.mxu0 0.0
        %3873 = vmatprep.subr.mxu0 0.0
        %3874 = vmatpush1.msra.mxu0 0.0
        %3875 = vmatprep.subr.mxu0 0.0
        %3876 = vmatpush1.msra.mxu0 0.0
        %3877 = vmatprep.subr.mxu0 0.0
        %3878 = vmatpush1.msra.mxu0 0.0
        %3879 = vmatprep.subr.mxu0 0.0
        %3880 = vmatpush1.msra.mxu0 0.0
        %3881 = vmatprep.subr.mxu0 0.0
        %3882 = vmatpush1.msra.mxu0 0.0
        %3883 = vmatprep.subr.mxu0 0.0
        %3884 = vmatpush1.msra.mxu0 0.0
        %3885 = vmatprep.subr.mxu0 0.0
        %3886 = vmatpush1.msra.mxu0 0.0
        %3887 = vmatprep.subr.mxu0 0.0
        %3888 = vmatpush1.msra.mxu0 0.0
        %3889 = vmatprep.subr.mxu0 0.0
        %3890 = vmatpush1.msra.mxu0 0.0
        %3891 = vmatprep.subr.mxu0 0.0
        %3892 = vmatpush1.msra.mxu0 0.0
        %3893 = vmatprep.subr.mxu0 0.0
        %3894 = vmatpush1.msra.mxu0 0.0
        %3895 = vmatprep.subr.mxu0 0.0
        %3896 = vmatpush1.msra.mxu0 0.0
        %3897 = vmatprep.subr.mxu0 0.0
        %3898 = vmatpush1.msra.mxu0 0.0
        %3899 = vmatprep.subr.mxu0 0.0
        %3900 = vmatpush1.msra.mxu0 0.0
        %3901 = vmatprep.subr.mxu0 0.0
        %3902 = vmatpush1.msra.mxu0 0.0
        %3903 = vmatprep.subr.mxu0 0.0
        %3904 = vmatpush1.msra.mxu0 0.0
        %3905 = vmatprep.subr.mxu0 0.0
        %3906 = vmatpush1.msra.mxu0 0.0
        %3907 = vmatprep.subr.mxu0 0.0
        %3908 = vmatpush1.msra.mxu0 0.0
        %3909 = vmatprep.mubr.f32.mxu0 0.0
        %3910 = vmatmul.mubr.f32.gmra.mrb[0].mxu0 %v3630
        %v3911 = vpop.f32.mrb[0].mxu0
        %v3912 = vadd.f32 0.0, %v3911
        %v3913 = vpop.f32.mrb[0].mxu0
        %3914 = vdwg.mxu0
        %v3915 = vadd.f32 %v3589, %v3699
        %v3916 = vadd.f32 %v3590, %v3701
        %v3917 = vadd.f32 %v3591, %v3770
        %v3918 = vadd.f32 %v3592, %v3772
        %v3919 = vadd.f32 %v3593, %v3841
        %v3920 = vadd.f32 %v3594, %v3843
        %v3921 = vadd.f32 %v3595, %v3912
        %s3922 = scalar_lea.vmem %s1, 88
        %v3923 = vld [vmem:[%s3922] sm:$0xff]
        %3924 = vrot.lane.b32.xlu0 %v365, 26
        %v3925 = vpop.permute.xlu0 %3924
        %3926 = vrot.lane.b32.xlu0 %v366, 26
        %v3927 = vpop.permute.xlu0 %3926
        %3928 = vrot.lane.b32.xlu0 %v367, 26
        %v3929 = vpop.permute.xlu0 %3928
        %3930 = vrot.lane.b32.xlu0 %v368, 26
        %v3931 = vpop.permute.xlu0 %3930
        %3932 = vrot.lane.b32.xlu0 %v369, 26
        %v3933 = vpop.permute.xlu0 %3932
        %3934 = vrot.lane.b32.xlu0 %v370, 26
        %v3935 = vpop.permute.xlu0 %3934
        %3936 = vrot.lane.b32.xlu0 %v371, 26
        %v3937 = vpop.permute.xlu0 %3936
        %3938 = vrot.lane.b32.xlu0 %v373, 26
        %v3939 = vpop.permute.xlu0 %3938
        %vm3940 = vcmask 211968
        %v3941 = vsel %vm3940, %v3925, %v3927
        %v3942 = vsel %vm3940, %v3927, %v3929
        %v3943 = vsel %vm3940, %v3929, %v3931
        %v3944 = vsel %vm3940, %v3931, %v3933
        %v3945 = vsel %vm3940, %v3933, %v3935
        %v3946 = vsel %vm3940, %v3935, %v3937
        %v3947 = vsel %vm3940, %v3937, %v3939
        %v3956 = vsel %vm415, %v3923, 0
        %3958 = vmatprep.subr.mxu0 %v3942
        %3959 = vmatpush1.msra.mxu0 %v3941
        %3960 = vmatprep.subr.mxu0 0.0
        %3961 = vmatpush1.msra.mxu0 0.0
        %3962 = vmatprep.subr.mxu0 0.0
        %3963 = vmatpush1.msra.mxu0 0.0
        %3964 = vmatprep.subr.mxu0 0.0
        %3965 = vmatpush1.msra.mxu0 0.0
        %3966 = vmatprep.subr.mxu0 0.0
        %3967 = vmatpush1.msra.mxu0 0.0
        %3968 = vmatprep.subr.mxu0 0.0
        %3969 = vmatpush1.msra.mxu0 0.0
        %3970 = vmatprep.subr.mxu0 0.0
        %3971 = vmatpush1.msra.mxu0 0.0
        %3972 = vmatprep.subr.mxu0 0.0
        %3973 = vmatpush1.msra.mxu0 0.0
        %3974 = vmatprep.subr.mxu0 0.0
        %3975 = vmatpush1.msra.mxu0 0.0
        %3976 = vmatprep.subr.mxu0 0.0
        %3977 = vmatpush1.msra.mxu0 0.0
        %3978 = vmatprep.subr.mxu0 0.0
        %3979 = vmatpush1.msra.mxu0 0.0
        %3980 = vmatprep.subr.mxu0 0.0
        %3981 = vmatpush1.msra.mxu0 0.0
        %3982 = vmatprep.subr.mxu0 0.0
        %3983 = vmatpush1.msra.mxu0 0.0
        %3984 = vmatprep.subr.mxu0 0.0
        %3985 = vmatpush1.msra.mxu0 0.0
        %3986 = vmatprep.subr.mxu0 0.0
        %3987 = vmatpush1.msra.mxu0 0.0
        %3988 = vmatprep.subr.mxu0 0.0
        %3989 = vmatpush1.msra.mxu0 0.0
        %3990 = vmatprep.subr.mxu0 0.0
        %3991 = vmatpush1.msra.mxu0 0.0
        %3992 = vmatprep.subr.mxu0 0.0
        %3993 = vmatpush1.msra.mxu0 0.0
        %3994 = vmatprep.subr.mxu0 0.0
        %3995 = vmatpush1.msra.mxu0 0.0
        %3996 = vmatprep.subr.mxu0 0.0
        %3997 = vmatpush1.msra.mxu0 0.0
        %3998 = vmatprep.subr.mxu0 0.0
        %3999 = vmatpush1.msra.mxu0 0.0
        %4000 = vmatprep.subr.mxu0 0.0
        %4001 = vmatpush1.msra.mxu0 0.0
        %4002 = vmatprep.subr.mxu0 0.0
        %4003 = vmatpush1.msra.mxu0 0.0
        %4004 = vmatprep.subr.mxu0 0.0
        %4005 = vmatpush1.msra.mxu0 0.0
        %4006 = vmatprep.subr.mxu0 0.0
        %4007 = vmatpush1.msra.mxu0 0.0
        %4008 = vmatprep.subr.mxu0 0.0
        %4009 = vmatpush1.msra.mxu0 0.0
        %4010 = vmatprep.subr.mxu0 0.0
        %4011 = vmatpush1.msra.mxu0 0.0
        %4012 = vmatprep.subr.mxu0 0.0
        %4013 = vmatpush1.msra.mxu0 0.0
        %4014 = vmatprep.subr.mxu0 0.0
        %4015 = vmatpush1.msra.mxu0 0.0
        %4016 = vmatprep.subr.mxu0 0.0
        %4017 = vmatpush1.msra.mxu0 0.0
        %4018 = vmatprep.subr.mxu0 0.0
        %4019 = vmatpush1.msra.mxu0 0.0
        %4020 = vmatprep.subr.mxu0 0.0
        %4021 = vmatpush1.msra.mxu0 0.0
        %4022 = vmatprep.mubr.f32.mxu0 0.0
        %4023 = vmatmul.mubr.f32.gmra.mrb[0].mxu0 %v3956
        %v4024 = vpop.f32.mrb[0].mxu0
        %v4025 = vadd.f32 0.0, %v4024
        %v4026 = vpop.f32.mrb[0].mxu0
        %v4027 = vadd.f32 0.0, %v4026
        %4028 = vdwg.mxu0
        %4029 = vmatprep.subr.mxu0 %v3944
        %4030 = vmatpush1.msra.mxu0 %v3943
        %4031 = vmatprep.subr.mxu0 0.0
        %4032 = vmatpush1.msra.mxu0 0.0
        %4033 = vmatprep.subr.mxu0 0.0
        %4034 = vmatpush1.msra.mxu0 0.0
        %4035 = vmatprep.subr.mxu0 0.0
        %4036 = vmatpush1.msra.mxu0 0.0
        %4037 = vmatprep.subr.mxu0 0.0
        %4038 = vmatpush1.msra.mxu0 0.0
        %4039 = vmatprep.subr.mxu0 0.0
        %4040 = vmatpush1.msra.mxu0 0.0
        %4041 = vmatprep.subr.mxu0 0.0
        %4042 = vmatpush1.msra.mxu0 0.0
        %4043 = vmatprep.subr.mxu0 0.0
        %4044 = vmatpush1.msra.mxu0 0.0
        %4045 = vmatprep.subr.mxu0 0.0
        %4046 = vmatpush1.msra.mxu0 0.0
        %4047 = vmatprep.subr.mxu0 0.0
        %4048 = vmatpush1.msra.mxu0 0.0
        %4049 = vmatprep.subr.mxu0 0.0
        %4050 = vmatpush1.msra.mxu0 0.0
        %4051 = vmatprep.subr.mxu0 0.0
        %4052 = vmatpush1.msra.mxu0 0.0
        %4053 = vmatprep.subr.mxu0 0.0
        %4054 = vmatpush1.msra.mxu0 0.0
        %4055 = vmatprep.subr.mxu0 0.0
        %4056 = vmatpush1.msra.mxu0 0.0
        %4057 = vmatprep.subr.mxu0 0.0
        %4058 = vmatpush1.msra.mxu0 0.0
        %4059 = vmatprep.subr.mxu0 0.0
        %4060 = vmatpush1.msra.mxu0 0.0
        %4061 = vmatprep.subr.mxu0 0.0
        %4062 = vmatpush1.msra.mxu0 0.0
        %4063 = vmatprep.subr.mxu0 0.0
        %4064 = vmatpush1.msra.mxu0 0.0
        %4065 = vmatprep.subr.mxu0 0.0
        %4066 = vmatpush1.msra.mxu0 0.0
        %4067 = vmatprep.subr.mxu0 0.0
        %4068 = vmatpush1.msra.mxu0 0.0
        %4069 = vmatprep.subr.mxu0 0.0
        %4070 = vmatpush1.msra.mxu0 0.0
        %4071 = vmatprep.subr.mxu0 0.0
        %4072 = vmatpush1.msra.mxu0 0.0
        %4073 = vmatprep.subr.mxu0 0.0
        %4074 = vmatpush1.msra.mxu0 0.0
        %4075 = vmatprep.subr.mxu0 0.0
        %4076 = vmatpush1.msra.mxu0 0.0
        %4077 = vmatprep.subr.mxu0 0.0
        %4078 = vmatpush1.msra.mxu0 0.0
        %4079 = vmatprep.subr.mxu0 0.0
        %4080 = vmatpush1.msra.mxu0 0.0
        %4081 = vmatprep.subr.mxu0 0.0
        %4082 = vmatpush1.msra.mxu0 0.0
        %4083 = vmatprep.subr.mxu0 0.0
        %4084 = vmatpush1.msra.mxu0 0.0
        %4085 = vmatprep.subr.mxu0 0.0
        %4086 = vmatpush1.msra.mxu0 0.0
        %4087 = vmatprep.subr.mxu0 0.0
        %4088 = vmatpush1.msra.mxu0 0.0
        %4089 = vmatprep.subr.mxu0 0.0
        %4090 = vmatpush1.msra.mxu0 0.0
        %4091 = vmatprep.subr.mxu0 0.0
        %4092 = vmatpush1.msra.mxu0 0.0
        %4093 = vmatprep.mubr.f32.mxu0 0.0
        %4094 = vmatmul.mubr.f32.gmra.mrb[0].mxu0 %v3956
        %v4095 = vpop.f32.mrb[0].mxu0
        %v4096 = vadd.f32 0.0, %v4095
        %v4097 = vpop.f32.mrb[0].mxu0
        %v4098 = vadd.f32 0.0, %v4097
        %4099 = vdwg.mxu0
        %4100 = vmatprep.subr.mxu0 %v3946
        %4101 = vmatpush1.msra.mxu0 %v3945
        %4102 = vmatprep.subr.mxu0 0.0
        %4103 = vmatpush1.msra.mxu0 0.0
        %4104 = vmatprep.subr.mxu0 0.0
        %4105 = vmatpush1.msra.mxu0 0.0
        %4106 = vmatprep.subr.mxu0 0.0
        %4107 = vmatpush1.msra.mxu0 0.0
        %4108 = vmatprep.subr.mxu0 0.0
        %4109 = vmatpush1.msra.mxu0 0.0
        %4110 = vmatprep.subr.mxu0 0.0
        %4111 = vmatpush1.msra.mxu0 0.0
        %4112 = vmatprep.subr.mxu0 0.0
        %4113 = vmatpush1.msra.mxu0 0.0
        %4114 = vmatprep.subr.mxu0 0.0
        %4115 = vmatpush1.msra.mxu0 0.0
        %4116 = vmatprep.subr.mxu0 0.0
        %4117 = vmatpush1.msra.mxu0 0.0
        %4118 = vmatprep.subr.mxu0 0.0
        %4119 = vmatpush1.msra.mxu0 0.0
        %4120 = vmatprep.subr.mxu0 0.0
        %4121 = vmatpush1.msra.mxu0 0.0
        %4122 = vmatprep.subr.mxu0 0.0
        %4123 = vmatpush1.msra.mxu0 0.0
        %4124 = vmatprep.subr.mxu0 0.0
        %4125 = vmatpush1.msra.mxu0 0.0
        %4126 = vmatprep.subr.mxu0 0.0
        %4127 = vmatpush1.msra.mxu0 0.0
        %4128 = vmatprep.subr.mxu0 0.0
        %4129 = vmatpush1.msra.mxu0 0.0
        %4130 = vmatprep.subr.mxu0 0.0
        %4131 = vmatpush1.msra.mxu0 0.0
        %4132 = vmatprep.subr.mxu0 0.0
        %4133 = vmatpush1.msra.mxu0 0.0
        %4134 = vmatprep.subr.mxu0 0.0
        %4135 = vmatpush1.msra.mxu0 0.0
        %4136 = vmatprep.subr.mxu0 0.0
        %4137 = vmatpush1.msra.mxu0 0.0
        %4138 = vmatprep.subr.mxu0 0.0
        %4139 = vmatpush1.msra.mxu0 0.0
        %4140 = vmatprep.subr.mxu0 0.0
        %4141 = vmatpush1.msra.mxu0 0.0
        %4142 = vmatprep.subr.mxu0 0.0
        %4143 = vmatpush1.msra.mxu0 0.0
        %4144 = vmatprep.subr.mxu0 0.0
        %4145 = vmatpush1.msra.mxu0 0.0
        %4146 = vmatprep.subr.mxu0 0.0
        %4147 = vmatpush1.msra.mxu0 0.0
        %4148 = vmatprep.subr.mxu0 0.0
        %4149 = vmatpush1.msra.mxu0 0.0
        %4150 = vmatprep.subr.mxu0 0.0
        %4151 = vmatpush1.msra.mxu0 0.0
        %4152 = vmatprep.subr.mxu0 0.0
        %4153 = vmatpush1.msra.mxu0 0.0
        %4154 = vmatprep.subr.mxu0 0.0
        %4155 = vmatpush1.msra.mxu0 0.0
        %4156 = vmatprep.subr.mxu0 0.0
        %4157 = vmatpush1.msra.mxu0 0.0
        %4158 = vmatprep.subr.mxu0 0.0
        %4159 = vmatpush1.msra.mxu0 0.0
        %4160 = vmatprep.subr.mxu0 0.0
        %4161 = vmatpush1.msra.mxu0 0.0
        %4162 = vmatprep.subr.mxu0 0.0
        %4163 = vmatpush1.msra.mxu0 0.0
        %4164 = vmatprep.mubr.f32.mxu0 0.0
        %4165 = vmatmul.mubr.f32.gmra.mrb[0].mxu0 %v3956
        %v4166 = vpop.f32.mrb[0].mxu0
        %v4167 = vadd.f32 0.0, %v4166
        %v4168 = vpop.f32.mrb[0].mxu0
        %v4169 = vadd.f32 0.0, %v4168
        %4170 = vdwg.mxu0
        %4171 = vmatprep.subr.mxu0 0.0
        %4172 = vmatpush1.msra.mxu0 %v3947
        %4173 = vmatprep.subr.mxu0 0.0
        %4174 = vmatpush1.msra.mxu0 0.0
        %4175 = vmatprep.subr.mxu0 0.0
        %4176 = vmatpush1.msra.mxu0 0.0
        %4177 = vmatprep.subr.mxu0 0.0
        %4178 = vmatpush1.msra.mxu0 0.0
        %4179 = vmatprep.subr.mxu0 0.0
        %4180 = vmatpush1.msra.mxu0 0.0
        %4181 = vmatprep.subr.mxu0 0.0
        %4182 = vmatpush1.msra.mxu0 0.0
        %4183 = vmatprep.subr.mxu0 0.0
        %4184 = vmatpush1.msra.mxu0 0.0
        %4185 = vmatprep.subr.mxu0 0.0
        %4186 = vmatpush1.msra.mxu0 0.0
        %4187 = vmatprep.subr.mxu0 0.0
        %4188 = vmatpush1.msra.mxu0 0.0
        %4189 = vmatprep.subr.mxu0 0.0
        %4190 = vmatpush1.msra.mxu0 0.0
        %4191 = vmatprep.subr.mxu0 0.0
        %4192 = vmatpush1.msra.mxu0 0.0
        %4193 = vmatprep.subr.mxu0 0.0
        %4194 = vmatpush1.msra.mxu0 0.0
        %4195 = vmatprep.subr.mxu0 0.0
        %4196 = vmatpush1.msra.mxu0 0.0
        %4197 = vmatprep.subr.mxu0 0.0
        %4198 = vmatpush1.msra.mxu0 0.0
        %4199 = vmatprep.subr.mxu0 0.0
        %4200 = vmatpush1.msra.mxu0 0.0
        %4201 = vmatprep.subr.mxu0 0.0
        %4202 = vmatpush1.msra.mxu0 0.0
        %4203 = vmatprep.subr.mxu0 0.0
        %4204 = vmatpush1.msra.mxu0 0.0
        %4205 = vmatprep.subr.mxu0 0.0
        %4206 = vmatpush1.msra.mxu0 0.0
        %4207 = vmatprep.subr.mxu0 0.0
        %4208 = vmatpush1.msra.mxu0 0.0
        %4209 = vmatprep.subr.mxu0 0.0
        %4210 = vmatpush1.msra.mxu0 0.0
        %4211 = vmatprep.subr.mxu0 0.0
        %4212 = vmatpush1.msra.mxu0 0.0
        %4213 = vmatprep.subr.mxu0 0.0
        %4214 = vmatpush1.msra.mxu0 0.0
        %4215 = vmatprep.subr.mxu0 0.0
        %4216 = vmatpush1.msra.mxu0 0.0
        %4217 = vmatprep.subr.mxu0 0.0
        %4218 = vmatpush1.msra.mxu0 0.0
        %4219 = vmatprep.subr.mxu0 0.0
        %4220 = vmatpush1.msra.mxu0 0.0
        %4221 = vmatprep.subr.mxu0 0.0
        %4222 = vmatpush1.msra.mxu0 0.0
        %4223 = vmatprep.subr.mxu0 0.0
        %4224 = vmatpush1.msra.mxu0 0.0
        %4225 = vmatprep.subr.mxu0 0.0
        %4226 = vmatpush1.msra.mxu0 0.0
        %4227 = vmatprep.subr.mxu0 0.0
        %4228 = vmatpush1.msra.mxu0 0.0
        %4229 = vmatprep.subr.mxu0 0.0
        %4230 = vmatpush1.msra.mxu0 0.0
        %4231 = vmatprep.subr.mxu0 0.0
        %4232 = vmatpush1.msra.mxu0 0.0
        %4233 = vmatprep.subr.mxu0 0.0
        %4234 = vmatpush1.msra.mxu0 0.0
        %4235 = vmatprep.mubr.f32.mxu0 0.0
        %4236 = vmatmul.mubr.f32.gmra.mrb[0].mxu0 %v3956
        %v4237 = vpop.f32.mrb[0].mxu0
        %v4238 = vadd.f32 0.0, %v4237
        %v4239 = vpop.f32.mrb[0].mxu0
        %4240 = vdwg.mxu0
        %v4241 = vadd.f32 %v3915, %v4025
        %v4242 = vadd.f32 %v3916, %v4027
        %v4243 = vadd.f32 %v3917, %v4096
        %v4244 = vadd.f32 %v3918, %v4098
        %v4245 = vadd.f32 %v3919, %v4167
        %v4246 = vadd.f32 %v3920, %v4169
        %v4247 = vadd.f32 %v3921, %v4238
        %s4248 = scalar_lea.vmem %s1, 96
        %v4249 = vld [vmem:[%s4248] sm:$0xff]
        %4250 = vrot.lane.b32.xlu0 %v365, 18
        %v4251 = vpop.permute.xlu0 %4250
        %4252 = vrot.lane.b32.xlu0 %v366, 18
        %v4253 = vpop.permute.xlu0 %4252
        %4254 = vrot.lane.b32.xlu0 %v367, 18
        %v4255 = vpop.permute.xlu0 %4254
        %4256 = vrot.lane.b32.xlu0 %v368, 18
        %v4257 = vpop.permute.xlu0 %4256
        %4258 = vrot.lane.b32.xlu0 %v369, 18
        %v4259 = vpop.permute.xlu0 %4258
        %4260 = vrot.lane.b32.xlu0 %v370, 18
        %v4261 = vpop.permute.xlu0 %4260
        %4262 = vrot.lane.b32.xlu0 %v371, 18
        %v4263 = vpop.permute.xlu0 %4262
        %4264 = vrot.lane.b32.xlu0 %v373, 18
        %v4265 = vpop.permute.xlu0 %4264
        %vm4266 = vcmask 146432
        %v4267 = vsel %vm4266, %v4251, %v4253
        %v4268 = vsel %vm4266, %v4253, %v4255
        %v4269 = vsel %vm4266, %v4255, %v4257
        %v4270 = vsel %vm4266, %v4257, %v4259
        %v4271 = vsel %vm4266, %v4259, %v4261
        %v4272 = vsel %vm4266, %v4261, %v4263
        %v4273 = vsel %vm4266, %v4263, %v4265
        %v4282 = vsel %vm415, %v4249, 0
        %4284 = vmatprep.subr.mxu0 %v4268
        %4285 = vmatpush1.msra.mxu0 %v4267
        %4286 = vmatprep.subr.mxu0 0.0
        %4287 = vmatpush1.msra.mxu0 0.0
        %4288 = vmatprep.subr.mxu0 0.0
        %4289 = vmatpush1.msra.mxu0 0.0
        %4290 = vmatprep.subr.mxu0 0.0
        %4291 = vmatpush1.msra.mxu0 0.0
        %4292 = vmatprep.subr.mxu0 0.0
        %4293 = vmatpush1.msra.mxu0 0.0
        %4294 = vmatprep.subr.mxu0 0.0
        %4295 = vmatpush1.msra.mxu0 0.0
        %4296 = vmatprep.subr.mxu0 0.0
        %4297 = vmatpush1.msra.mxu0 0.0
        %4298 = vmatprep.subr.mxu0 0.0
        %4299 = vmatpush1.msra.mxu0 0.0
        %4300 = vmatprep.subr.mxu0 0.0
        %4301 = vmatpush1.msra.mxu0 0.0
        %4302 = vmatprep.subr.mxu0 0.0
        %4303 = vmatpush1.msra.mxu0 0.0
        %4304 = vmatprep.subr.mxu0 0.0
        %4305 = vmatpush1.msra.mxu0 0.0
        %4306 = vmatprep.subr.mxu0 0.0
        %4307 = vmatpush1.msra.mxu0 0.0
        %4308 = vmatprep.subr.mxu0 0.0
        %4309 = vmatpush1.msra.mxu0 0.0
        %4310 = vmatprep.subr.mxu0 0.0
        %4311 = vmatpush1.msra.mxu0 0.0
        %4312 = vmatprep.subr.mxu0 0.0
        %4313 = vmatpush1.msra.mxu0 0.0
        %4314 = vmatprep.subr.mxu0 0.0
        %4315 = vmatpush1.msra.mxu0 0.0
        %4316 = vmatprep.subr.mxu0 0.0
        %4317 = vmatpush1.msra.mxu0 0.0
        %4318 = vmatprep.subr.mxu0 0.0
        %4319 = vmatpush1.msra.mxu0 0.0
        %4320 = vmatprep.subr.mxu0 0.0
        %4321 = vmatpush1.msra.mxu0 0.0
        %4322 = vmatprep.subr.mxu0 0.0
        %4323 = vmatpush1.msra.mxu0 0.0
        %4324 = vmatprep.subr.mxu0 0.0
        %4325 = vmatpush1.msra.mxu0 0.0
        %4326 = vmatprep.subr.mxu0 0.0
        %4327 = vmatpush1.msra.mxu0 0.0
        %4328 = vmatprep.subr.mxu0 0.0
        %4329 = vmatpush1.msra.mxu0 0.0
        %4330 = vmatprep.subr.mxu0 0.0
        %4331 = vmatpush1.msra.mxu0 0.0
        %4332 = vmatprep.subr.mxu0 0.0
        %4333 = vmatpush1.msra.mxu0 0.0
        %4334 = vmatprep.subr.mxu0 0.0
        %4335 = vmatpush1.msra.mxu0 0.0
        %4336 = vmatprep.subr.mxu0 0.0
        %4337 = vmatpush1.msra.mxu0 0.0
        %4338 = vmatprep.subr.mxu0 0.0
        %4339 = vmatpush1.msra.mxu0 0.0
        %4340 = vmatprep.subr.mxu0 0.0
        %4341 = vmatpush1.msra.mxu0 0.0
        %4342 = vmatprep.subr.mxu0 0.0
        %4343 = vmatpush1.msra.mxu0 0.0
        %4344 = vmatprep.subr.mxu0 0.0
        %4345 = vmatpush1.msra.mxu0 0.0
        %4346 = vmatprep.subr.mxu0 0.0
        %4347 = vmatpush1.msra.mxu0 0.0
        %4348 = vmatprep.mubr.f32.mxu0 0.0
        %4349 = vmatmul.mubr.f32.gmra.mrb[0].mxu0 %v4282
        %v4350 = vpop.f32.mrb[0].mxu0
        %v4351 = vadd.f32 0.0, %v4350
        %v4352 = vpop.f32.mrb[0].mxu0
        %v4353 = vadd.f32 0.0, %v4352
        %4354 = vdwg.mxu0
        %4355 = vmatprep.subr.mxu0 %v4270
        %4356 = vmatpush1.msra.mxu0 %v4269
        %4357 = vmatprep.subr.mxu0 0.0
        %4358 = vmatpush1.msra.mxu0 0.0
        %4359 = vmatprep.subr.mxu0 0.0
        %4360 = vmatpush1.msra.mxu0 0.0
        %4361 = vmatprep.subr.mxu0 0.0
        %4362 = vmatpush1.msra.mxu0 0.0
        %4363 = vmatprep.subr.mxu0 0.0
        %4364 = vmatpush1.msra.mxu0 0.0
        %4365 = vmatprep.subr.mxu0 0.0
        %4366 = vmatpush1.msra.mxu0 0.0
        %4367 = vmatprep.subr.mxu0 0.0
        %4368 = vmatpush1.msra.mxu0 0.0
        %4369 = vmatprep.subr.mxu0 0.0
        %4370 = vmatpush1.msra.mxu0 0.0
        %4371 = vmatprep.subr.mxu0 0.0
        %4372 = vmatpush1.msra.mxu0 0.0
        %4373 = vmatprep.subr.mxu0 0.0
        %4374 = vmatpush1.msra.mxu0 0.0
        %4375 = vmatprep.subr.mxu0 0.0
        %4376 = vmatpush1.msra.mxu0 0.0
        %4377 = vmatprep.subr.mxu0 0.0
        %4378 = vmatpush1.msra.mxu0 0.0
        %4379 = vmatprep.subr.mxu0 0.0
        %4380 = vmatpush1.msra.mxu0 0.0
        %4381 = vmatprep.subr.mxu0 0.0
        %4382 = vmatpush1.msra.mxu0 0.0
        %4383 = vmatprep.subr.mxu0 0.0
        %4384 = vmatpush1.msra.mxu0 0.0
        %4385 = vmatprep.subr.mxu0 0.0
        %4386 = vmatpush1.msra.mxu0 0.0
        %4387 = vmatprep.subr.mxu0 0.0
        %4388 = vmatpush1.msra.mxu0 0.0
        %4389 = vmatprep.subr.mxu0 0.0
        %4390 = vmatpush1.msra.mxu0 0.0
        %4391 = vmatprep.subr.mxu0 0.0
        %4392 = vmatpush1.msra.mxu0 0.0
        %4393 = vmatprep.subr.mxu0 0.0
        %4394 = vmatpush1.msra.mxu0 0.0
        %4395 = vmatprep.subr.mxu0 0.0
        %4396 = vmatpush1.msra.mxu0 0.0
        %4397 = vmatprep.subr.mxu0 0.0
        %4398 = vmatpush1.msra.mxu0 0.0
        %4399 = vmatprep.subr.mxu0 0.0
        %4400 = vmatpush1.msra.mxu0 0.0
        %4401 = vmatprep.subr.mxu0 0.0
        %4402 = vmatpush1.msra.mxu0 0.0
        %4403 = vmatprep.subr.mxu0 0.0
        %4404 = vmatpush1.msra.mxu0 0.0
        %4405 = vmatprep.subr.mxu0 0.0
        %4406 = vmatpush1.msra.mxu0 0.0
        %4407 = vmatprep.subr.mxu0 0.0
        %4408 = vmatpush1.msra.mxu0 0.0
        %4409 = vmatprep.subr.mxu0 0.0
        %4410 = vmatpush1.msra.mxu0 0.0
        %4411 = vmatprep.subr.mxu0 0.0
        %4412 = vmatpush1.msra.mxu0 0.0
        %4413 = vmatprep.subr.mxu0 0.0
        %4414 = vmatpush1.msra.mxu0 0.0
        %4415 = vmatprep.subr.mxu0 0.0
        %4416 = vmatpush1.msra.mxu0 0.0
        %4417 = vmatprep.subr.mxu0 0.0
        %4418 = vmatpush1.msra.mxu0 0.0
        %4419 = vmatprep.mubr.f32.mxu0 0.0
        %4420 = vmatmul.mubr.f32.gmra.mrb[0].mxu0 %v4282
        %v4421 = vpop.f32.mrb[0].mxu0
        %v4422 = vadd.f32 0.0, %v4421
        %v4423 = vpop.f32.mrb[0].mxu0
        %v4424 = vadd.f32 0.0, %v4423
        %4425 = vdwg.mxu0
        %4426 = vmatprep.subr.mxu0 %v4272
        %4427 = vmatpush1.msra.mxu0 %v4271
        %4428 = vmatprep.subr.mxu0 0.0
        %4429 = vmatpush1.msra.mxu0 0.0
        %4430 = vmatprep.subr.mxu0 0.0
        %4431 = vmatpush1.msra.mxu0 0.0
        %4432 = vmatprep.subr.mxu0 0.0
        %4433 = vmatpush1.msra.mxu0 0.0
        %4434 = vmatprep.subr.mxu0 0.0
        %4435 = vmatpush1.msra.mxu0 0.0
        %4436 = vmatprep.subr.mxu0 0.0
        %4437 = vmatpush1.msra.mxu0 0.0
        %4438 = vmatprep.subr.mxu0 0.0
        %4439 = vmatpush1.msra.mxu0 0.0
        %4440 = vmatprep.subr.mxu0 0.0
        %4441 = vmatpush1.msra.mxu0 0.0
        %4442 = vmatprep.subr.mxu0 0.0
        %4443 = vmatpush1.msra.mxu0 0.0
        %4444 = vmatprep.subr.mxu0 0.0
        %4445 = vmatpush1.msra.mxu0 0.0
        %4446 = vmatprep.subr.mxu0 0.0
        %4447 = vmatpush1.msra.mxu0 0.0
        %4448 = vmatprep.subr.mxu0 0.0
        %4449 = vmatpush1.msra.mxu0 0.0
        %4450 = vmatprep.subr.mxu0 0.0
        %4451 = vmatpush1.msra.mxu0 0.0
        %4452 = vmatprep.subr.mxu0 0.0
        %4453 = vmatpush1.msra.mxu0 0.0
        %4454 = vmatprep.subr.mxu0 0.0
        %4455 = vmatpush1.msra.mxu0 0.0
        %4456 = vmatprep.subr.mxu0 0.0
        %4457 = vmatpush1.msra.mxu0 0.0
        %4458 = vmatprep.subr.mxu0 0.0
        %4459 = vmatpush1.msra.mxu0 0.0
        %4460 = vmatprep.subr.mxu0 0.0
        %4461 = vmatpush1.msra.mxu0 0.0
        %4462 = vmatprep.subr.mxu0 0.0
        %4463 = vmatpush1.msra.mxu0 0.0
        %4464 = vmatprep.subr.mxu0 0.0
        %4465 = vmatpush1.msra.mxu0 0.0
        %4466 = vmatprep.subr.mxu0 0.0
        %4467 = vmatpush1.msra.mxu0 0.0
        %4468 = vmatprep.subr.mxu0 0.0
        %4469 = vmatpush1.msra.mxu0 0.0
        %4470 = vmatprep.subr.mxu0 0.0
        %4471 = vmatpush1.msra.mxu0 0.0
        %4472 = vmatprep.subr.mxu0 0.0
        %4473 = vmatpush1.msra.mxu0 0.0
        %4474 = vmatprep.subr.mxu0 0.0
        %4475 = vmatpush1.msra.mxu0 0.0
        %4476 = vmatprep.subr.mxu0 0.0
        %4477 = vmatpush1.msra.mxu0 0.0
        %4478 = vmatprep.subr.mxu0 0.0
        %4479 = vmatpush1.msra.mxu0 0.0
        %4480 = vmatprep.subr.mxu0 0.0
        %4481 = vmatpush1.msra.mxu0 0.0
        %4482 = vmatprep.subr.mxu0 0.0
        %4483 = vmatpush1.msra.mxu0 0.0
        %4484 = vmatprep.subr.mxu0 0.0
        %4485 = vmatpush1.msra.mxu0 0.0
        %4486 = vmatprep.subr.mxu0 0.0
        %4487 = vmatpush1.msra.mxu0 0.0
        %4488 = vmatprep.subr.mxu0 0.0
        %4489 = vmatpush1.msra.mxu0 0.0
        %4490 = vmatprep.mubr.f32.mxu0 0.0
        %4491 = vmatmul.mubr.f32.gmra.mrb[0].mxu0 %v4282
        %v4492 = vpop.f32.mrb[0].mxu0
        %v4493 = vadd.f32 0.0, %v4492
        %v4494 = vpop.f32.mrb[0].mxu0
        %v4495 = vadd.f32 0.0, %v4494
        %4496 = vdwg.mxu0
        %4497 = vmatprep.subr.mxu0 0.0
        %4498 = vmatpush1.msra.mxu0 %v4273
        %4499 = vmatprep.subr.mxu0 0.0
        %4500 = vmatpush1.msra.mxu0 0.0
        %4501 = vmatprep.subr.mxu0 0.0
        %4502 = vmatpush1.msra.mxu0 0.0
        %4503 = vmatprep.subr.mxu0 0.0
        %4504 = vmatpush1.msra.mxu0 0.0
        %4505 = vmatprep.subr.mxu0 0.0
        %4506 = vmatpush1.msra.mxu0 0.0
        %4507 = vmatprep.subr.mxu0 0.0
        %4508 = vmatpush1.msra.mxu0 0.0
        %4509 = vmatprep.subr.mxu0 0.0
        %4510 = vmatpush1.msra.mxu0 0.0
        %4511 = vmatprep.subr.mxu0 0.0
        %4512 = vmatpush1.msra.mxu0 0.0
        %4513 = vmatprep.subr.mxu0 0.0
        %4514 = vmatpush1.msra.mxu0 0.0
        %4515 = vmatprep.subr.mxu0 0.0
        %4516 = vmatpush1.msra.mxu0 0.0
        %4517 = vmatprep.subr.mxu0 0.0
        %4518 = vmatpush1.msra.mxu0 0.0
        %4519 = vmatprep.subr.mxu0 0.0
        %4520 = vmatpush1.msra.mxu0 0.0
        %4521 = vmatprep.subr.mxu0 0.0
        %4522 = vmatpush1.msra.mxu0 0.0
        %4523 = vmatprep.subr.mxu0 0.0
        %4524 = vmatpush1.msra.mxu0 0.0
        %4525 = vmatprep.subr.mxu0 0.0
        %4526 = vmatpush1.msra.mxu0 0.0
        %4527 = vmatprep.subr.mxu0 0.0
        %4528 = vmatpush1.msra.mxu0 0.0
        %4529 = vmatprep.subr.mxu0 0.0
        %4530 = vmatpush1.msra.mxu0 0.0
        %4531 = vmatprep.subr.mxu0 0.0
        %4532 = vmatpush1.msra.mxu0 0.0
        %4533 = vmatprep.subr.mxu0 0.0
        %4534 = vmatpush1.msra.mxu0 0.0
        %4535 = vmatprep.subr.mxu0 0.0
        %4536 = vmatpush1.msra.mxu0 0.0
        %4537 = vmatprep.subr.mxu0 0.0
        %4538 = vmatpush1.msra.mxu0 0.0
        %4539 = vmatprep.subr.mxu0 0.0
        %4540 = vmatpush1.msra.mxu0 0.0
        %4541 = vmatprep.subr.mxu0 0.0
        %4542 = vmatpush1.msra.mxu0 0.0
        %4543 = vmatprep.subr.mxu0 0.0
        %4544 = vmatpush1.msra.mxu0 0.0
        %4545 = vmatprep.subr.mxu0 0.0
        %4546 = vmatpush1.msra.mxu0 0.0
        %4547 = vmatprep.subr.mxu0 0.0
        %4548 = vmatpush1.msra.mxu0 0.0
        %4549 = vmatprep.subr.mxu0 0.0
        %4550 = vmatpush1.msra.mxu0 0.0
        %4551 = vmatprep.subr.mxu0 0.0
        %4552 = vmatpush1.msra.mxu0 0.0
        %4553 = vmatprep.subr.mxu0 0.0
        %4554 = vmatpush1.msra.mxu0 0.0
        %4555 = vmatprep.subr.mxu0 0.0
        %4556 = vmatpush1.msra.mxu0 0.0
        %4557 = vmatprep.subr.mxu0 0.0
        %4558 = vmatpush1.msra.mxu0 0.0
        %4559 = vmatprep.subr.mxu0 0.0
        %4560 = vmatpush1.msra.mxu0 0.0
        %4561 = vmatprep.mubr.f32.mxu0 0.0
        %4562 = vmatmul.mubr.f32.gmra.mrb[0].mxu0 %v4282
        %v4563 = vpop.f32.mrb[0].mxu0
        %v4564 = vadd.f32 0.0, %v4563
        %v4565 = vpop.f32.mrb[0].mxu0
        %4566 = vdwg.mxu0
        %v4567 = vadd.f32 %v4241, %v4351
        %v4568 = vadd.f32 %v4242, %v4353
        %v4569 = vadd.f32 %v4243, %v4422
        %v4570 = vadd.f32 %v4244, %v4424
        %v4571 = vadd.f32 %v4245, %v4493
        %v4572 = vadd.f32 %v4246, %v4495
        %v4573 = vadd.f32 %v4247, %v4564
        %s4574 = scalar_lea.vmem %s1, 104
        %v4575 = vld [vmem:[%s4574] sm:$0xff]
        %4576 = vrot.lane.b32.xlu0 %v365, 17
        %v4577 = vpop.permute.xlu0 %4576
        %4578 = vrot.lane.b32.xlu0 %v366, 17
        %v4579 = vpop.permute.xlu0 %4578
        %4580 = vrot.lane.b32.xlu0 %v367, 17
        %v4581 = vpop.permute.xlu0 %4580
        %4582 = vrot.lane.b32.xlu0 %v368, 17
        %v4583 = vpop.permute.xlu0 %4582
        %4584 = vrot.lane.b32.xlu0 %v369, 17
        %v4585 = vpop.permute.xlu0 %4584
        %4586 = vrot.lane.b32.xlu0 %v370, 17
        %v4587 = vpop.permute.xlu0 %4586
        %4588 = vrot.lane.b32.xlu0 %v371, 17
        %v4589 = vpop.permute.xlu0 %4588
        %4590 = vrot.lane.b32.xlu0 %v373, 17
        %v4591 = vpop.permute.xlu0 %4590
        %vm4592 = vcmask 138240
        %v4593 = vsel %vm4592, %v4577, %v4579
        %v4594 = vsel %vm4592, %v4579, %v4581
        %v4595 = vsel %vm4592, %v4581, %v4583
        %v4596 = vsel %vm4592, %v4583, %v4585
        %v4597 = vsel %vm4592, %v4585, %v4587
        %v4598 = vsel %vm4592, %v4587, %v4589
        %v4599 = vsel %vm4592, %v4589, %v4591
        %v4608 = vsel %vm415, %v4575, 0
        %4610 = vmatprep.subr.mxu0 %v4594
        %4611 = vmatpush1.msra.mxu0 %v4593
        %4612 = vmatprep.subr.mxu0 0.0
        %4613 = vmatpush1.msra.mxu0 0.0
        %4614 = vmatprep.subr.mxu0 0.0
        %4615 = vmatpush1.msra.mxu0 0.0
        %4616 = vmatprep.subr.mxu0 0.0
        %4617 = vmatpush1.msra.mxu0 0.0
        %4618 = vmatprep.subr.mxu0 0.0
        %4619 = vmatpush1.msra.mxu0 0.0
        %4620 = vmatprep.subr.mxu0 0.0
        %4621 = vmatpush1.msra.mxu0 0.0
        %4622 = vmatprep.subr.mxu0 0.0
        %4623 = vmatpush1.msra.mxu0 0.0
        %4624 = vmatprep.subr.mxu0 0.0
        %4625 = vmatpush1.msra.mxu0 0.0
        %4626 = vmatprep.subr.mxu0 0.0
        %4627 = vmatpush1.msra.mxu0 0.0
        %4628 = vmatprep.subr.mxu0 0.0
        %4629 = vmatpush1.msra.mxu0 0.0
        %4630 = vmatprep.subr.mxu0 0.0
        %4631 = vmatpush1.msra.mxu0 0.0
        %4632 = vmatprep.subr.mxu0 0.0
        %4633 = vmatpush1.msra.mxu0 0.0
        %4634 = vmatprep.subr.mxu0 0.0
        %4635 = vmatpush1.msra.mxu0 0.0
        %4636 = vmatprep.subr.mxu0 0.0
        %4637 = vmatpush1.msra.mxu0 0.0
        %4638 = vmatprep.subr.mxu0 0.0
        %4639 = vmatpush1.msra.mxu0 0.0
        %4640 = vmatprep.subr.mxu0 0.0
        %4641 = vmatpush1.msra.mxu0 0.0
        %4642 = vmatprep.subr.mxu0 0.0
        %4643 = vmatpush1.msra.mxu0 0.0
        %4644 = vmatprep.subr.mxu0 0.0
        %4645 = vmatpush1.msra.mxu0 0.0
        %4646 = vmatprep.subr.mxu0 0.0
        %4647 = vmatpush1.msra.mxu0 0.0
        %4648 = vmatprep.subr.mxu0 0.0
        %4649 = vmatpush1.msra.mxu0 0.0
        %4650 = vmatprep.subr.mxu0 0.0
        %4651 = vmatpush1.msra.mxu0 0.0
        %4652 = vmatprep.subr.mxu0 0.0
        %4653 = vmatpush1.msra.mxu0 0.0
        %4654 = vmatprep.subr.mxu0 0.0
        %4655 = vmatpush1.msra.mxu0 0.0
        %4656 = vmatprep.subr.mxu0 0.0
        %4657 = vmatpush1.msra.mxu0 0.0
        %4658 = vmatprep.subr.mxu0 0.0
        %4659 = vmatpush1.msra.mxu0 0.0
        %4660 = vmatprep.subr.mxu0 0.0
        %4661 = vmatpush1.msra.mxu0 0.0
        %4662 = vmatprep.subr.mxu0 0.0
        %4663 = vmatpush1.msra.mxu0 0.0
        %4664 = vmatprep.subr.mxu0 0.0
        %4665 = vmatpush1.msra.mxu0 0.0
        %4666 = vmatprep.subr.mxu0 0.0
        %4667 = vmatpush1.msra.mxu0 0.0
        %4668 = vmatprep.subr.mxu0 0.0
        %4669 = vmatpush1.msra.mxu0 0.0
        %4670 = vmatprep.subr.mxu0 0.0
        %4671 = vmatpush1.msra.mxu0 0.0
        %4672 = vmatprep.subr.mxu0 0.0
        %4673 = vmatpush1.msra.mxu0 0.0
        %4674 = vmatprep.mubr.f32.mxu0 0.0
        %4675 = vmatmul.mubr.f32.gmra.mrb[0].mxu0 %v4608
        %v4676 = vpop.f32.mrb[0].mxu0
        %v4677 = vadd.f32 0.0, %v4676
        %v4678 = vpop.f32.mrb[0].mxu0
        %v4679 = vadd.f32 0.0, %v4678
        %4680 = vdwg.mxu0
        %4681 = vmatprep.subr.mxu0 %v4596
        %4682 = vmatpush1.msra.mxu0 %v4595
        %4683 = vmatprep.subr.mxu0 0.0
        %4684 = vmatpush1.msra.mxu0 0.0
        %4685 = vmatprep.subr.mxu0 0.0
        %4686 = vmatpush1.msra.mxu0 0.0
        %4687 = vmatprep.subr.mxu0 0.0
        %4688 = vmatpush1.msra.mxu0 0.0
        %4689 = vmatprep.subr.mxu0 0.0
        %4690 = vmatpush1.msra.mxu0 0.0
        %4691 = vmatprep.subr.mxu0 0.0
        %4692 = vmatpush1.msra.mxu0 0.0
        %4693 = vmatprep.subr.mxu0 0.0
        %4694 = vmatpush1.msra.mxu0 0.0
        %4695 = vmatprep.subr.mxu0 0.0
        %4696 = vmatpush1.msra.mxu0 0.0
        %4697 = vmatprep.subr.mxu0 0.0
        %4698 = vmatpush1.msra.mxu0 0.0
        %4699 = vmatprep.subr.mxu0 0.0
        %4700 = vmatpush1.msra.mxu0 0.0
        %4701 = vmatprep.subr.mxu0 0.0
        %4702 = vmatpush1.msra.mxu0 0.0
        %4703 = vmatprep.subr.mxu0 0.0
        %4704 = vmatpush1.msra.mxu0 0.0
        %4705 = vmatprep.subr.mxu0 0.0
        %4706 = vmatpush1.msra.mxu0 0.0
        %4707 = vmatprep.subr.mxu0 0.0
        %4708 = vmatpush1.msra.mxu0 0.0
        %4709 = vmatprep.subr.mxu0 0.0
        %4710 = vmatpush1.msra.mxu0 0.0
        %4711 = vmatprep.subr.mxu0 0.0
        %4712 = vmatpush1.msra.mxu0 0.0
        %4713 = vmatprep.subr.mxu0 0.0
        %4714 = vmatpush1.msra.mxu0 0.0
        %4715 = vmatprep.subr.mxu0 0.0
        %4716 = vmatpush1.msra.mxu0 0.0
        %4717 = vmatprep.subr.mxu0 0.0
        %4718 = vmatpush1.msra.mxu0 0.0
        %4719 = vmatprep.subr.mxu0 0.0
        %4720 = vmatpush1.msra.mxu0 0.0
        %4721 = vmatprep.subr.mxu0 0.0
        %4722 = vmatpush1.msra.mxu0 0.0
        %4723 = vmatprep.subr.mxu0 0.0
        %4724 = vmatpush1.msra.mxu0 0.0
        %4725 = vmatprep.subr.mxu0 0.0
        %4726 = vmatpush1.msra.mxu0 0.0
        %4727 = vmatprep.subr.mxu0 0.0
        %4728 = vmatpush1.msra.mxu0 0.0
        %4729 = vmatprep.subr.mxu0 0.0
        %4730 = vmatpush1.msra.mxu0 0.0
        %4731 = vmatprep.subr.mxu0 0.0
        %4732 = vmatpush1.msra.mxu0 0.0
        %4733 = vmatprep.subr.mxu0 0.0
        %4734 = vmatpush1.msra.mxu0 0.0
        %4735 = vmatprep.subr.mxu0 0.0
        %4736 = vmatpush1.msra.mxu0 0.0
        %4737 = vmatprep.subr.mxu0 0.0
        %4738 = vmatpush1.msra.mxu0 0.0
        %4739 = vmatprep.subr.mxu0 0.0
        %4740 = vmatpush1.msra.mxu0 0.0
        %4741 = vmatprep.subr.mxu0 0.0
        %4742 = vmatpush1.msra.mxu0 0.0
        %4743 = vmatprep.subr.mxu0 0.0
        %4744 = vmatpush1.msra.mxu0 0.0
        %4745 = vmatprep.mubr.f32.mxu0 0.0
        %4746 = vmatmul.mubr.f32.gmra.mrb[0].mxu0 %v4608
        %v4747 = vpop.f32.mrb[0].mxu0
        %v4748 = vadd.f32 0.0, %v4747
        %v4749 = vpop.f32.mrb[0].mxu0
        %v4750 = vadd.f32 0.0, %v4749
        %4751 = vdwg.mxu0
        %4752 = vmatprep.subr.mxu0 %v4598
        %4753 = vmatpush1.msra.mxu0 %v4597
        %4754 = vmatprep.subr.mxu0 0.0
        %4755 = vmatpush1.msra.mxu0 0.0
        %4756 = vmatprep.subr.mxu0 0.0
        %4757 = vmatpush1.msra.mxu0 0.0
        %4758 = vmatprep.subr.mxu0 0.0
        %4759 = vmatpush1.msra.mxu0 0.0
        %4760 = vmatprep.subr.mxu0 0.0
        %4761 = vmatpush1.msra.mxu0 0.0
        %4762 = vmatprep.subr.mxu0 0.0
        %4763 = vmatpush1.msra.mxu0 0.0
        %4764 = vmatprep.subr.mxu0 0.0
        %4765 = vmatpush1.msra.mxu0 0.0
        %4766 = vmatprep.subr.mxu0 0.0
        %4767 = vmatpush1.msra.mxu0 0.0
        %4768 = vmatprep.subr.mxu0 0.0
        %4769 = vmatpush1.msra.mxu0 0.0
        %4770 = vmatprep.subr.mxu0 0.0
        %4771 = vmatpush1.msra.mxu0 0.0
        %4772 = vmatprep.subr.mxu0 0.0
        %4773 = vmatpush1.msra.mxu0 0.0
        %4774 = vmatprep.subr.mxu0 0.0
        %4775 = vmatpush1.msra.mxu0 0.0
        %4776 = vmatprep.subr.mxu0 0.0
        %4777 = vmatpush1.msra.mxu0 0.0
        %4778 = vmatprep.subr.mxu0 0.0
        %4779 = vmatpush1.msra.mxu0 0.0
        %4780 = vmatprep.subr.mxu0 0.0
        %4781 = vmatpush1.msra.mxu0 0.0
        %4782 = vmatprep.subr.mxu0 0.0
        %4783 = vmatpush1.msra.mxu0 0.0
        %4784 = vmatprep.subr.mxu0 0.0
        %4785 = vmatpush1.msra.mxu0 0.0
        %4786 = vmatprep.subr.mxu0 0.0
        %4787 = vmatpush1.msra.mxu0 0.0
        %4788 = vmatprep.subr.mxu0 0.0
        %4789 = vmatpush1.msra.mxu0 0.0
        %4790 = vmatprep.subr.mxu0 0.0
        %4791 = vmatpush1.msra.mxu0 0.0
        %4792 = vmatprep.subr.mxu0 0.0
        %4793 = vmatpush1.msra.mxu0 0.0
        %4794 = vmatprep.subr.mxu0 0.0
        %4795 = vmatpush1.msra.mxu0 0.0
        %4796 = vmatprep.subr.mxu0 0.0
        %4797 = vmatpush1.msra.mxu0 0.0
        %4798 = vmatprep.subr.mxu0 0.0
        %4799 = vmatpush1.msra.mxu0 0.0
        %4800 = vmatprep.subr.mxu0 0.0
        %4801 = vmatpush1.msra.mxu0 0.0
        %4802 = vmatprep.subr.mxu0 0.0
        %4803 = vmatpush1.msra.mxu0 0.0
        %4804 = vmatprep.subr.mxu0 0.0
        %4805 = vmatpush1.msra.mxu0 0.0
        %4806 = vmatprep.subr.mxu0 0.0
        %4807 = vmatpush1.msra.mxu0 0.0
        %4808 = vmatprep.subr.mxu0 0.0
        %4809 = vmatpush1.msra.mxu0 0.0
        %4810 = vmatprep.subr.mxu0 0.0
        %4811 = vmatpush1.msra.mxu0 0.0
        %4812 = vmatprep.subr.mxu0 0.0
        %4813 = vmatpush1.msra.mxu0 0.0
        %4814 = vmatprep.subr.mxu0 0.0
        %4815 = vmatpush1.msra.mxu0 0.0
        %4816 = vmatprep.mubr.f32.mxu0 0.0
        %4817 = vmatmul.mubr.f32.gmra.mrb[0].mxu0 %v4608
        %v4818 = vpop.f32.mrb[0].mxu0
        %v4819 = vadd.f32 0.0, %v4818
        %v4820 = vpop.f32.mrb[0].mxu0
        %v4821 = vadd.f32 0.0, %v4820
        %4822 = vdwg.mxu0
        %4823 = vmatprep.subr.mxu0 0.0
        %4824 = vmatpush1.msra.mxu0 %v4599
        %4825 = vmatprep.subr.mxu0 0.0
        %4826 = vmatpush1.msra.mxu0 0.0
        %4827 = vmatprep.subr.mxu0 0.0
        %4828 = vmatpush1.msra.mxu0 0.0
        %4829 = vmatprep.subr.mxu0 0.0
        %4830 = vmatpush1.msra.mxu0 0.0
        %4831 = vmatprep.subr.mxu0 0.0
        %4832 = vmatpush1.msra.mxu0 0.0
        %4833 = vmatprep.subr.mxu0 0.0
        %4834 = vmatpush1.msra.mxu0 0.0
        %4835 = vmatprep.subr.mxu0 0.0
        %4836 = vmatpush1.msra.mxu0 0.0
        %4837 = vmatprep.subr.mxu0 0.0
        %4838 = vmatpush1.msra.mxu0 0.0
        %4839 = vmatprep.subr.mxu0 0.0
        %4840 = vmatpush1.msra.mxu0 0.0
        %4841 = vmatprep.subr.mxu0 0.0
        %4842 = vmatpush1.msra.mxu0 0.0
        %4843 = vmatprep.subr.mxu0 0.0
        %4844 = vmatpush1.msra.mxu0 0.0
        %4845 = vmatprep.subr.mxu0 0.0
        %4846 = vmatpush1.msra.mxu0 0.0
        %4847 = vmatprep.subr.mxu0 0.0
        %4848 = vmatpush1.msra.mxu0 0.0
        %4849 = vmatprep.subr.mxu0 0.0
        %4850 = vmatpush1.msra.mxu0 0.0
        %4851 = vmatprep.subr.mxu0 0.0
        %4852 = vmatpush1.msra.mxu0 0.0
        %4853 = vmatprep.subr.mxu0 0.0
        %4854 = vmatpush1.msra.mxu0 0.0
        %4855 = vmatprep.subr.mxu0 0.0
        %4856 = vmatpush1.msra.mxu0 0.0
        %4857 = vmatprep.subr.mxu0 0.0
        %4858 = vmatpush1.msra.mxu0 0.0
        %4859 = vmatprep.subr.mxu0 0.0
        %4860 = vmatpush1.msra.mxu0 0.0
        %4861 = vmatprep.subr.mxu0 0.0
        %4862 = vmatpush1.msra.mxu0 0.0
        %4863 = vmatprep.subr.mxu0 0.0
        %4864 = vmatpush1.msra.mxu0 0.0
        %4865 = vmatprep.subr.mxu0 0.0
        %4866 = vmatpush1.msra.mxu0 0.0
        %4867 = vmatprep.subr.mxu0 0.0
        %4868 = vmatpush1.msra.mxu0 0.0
        %4869 = vmatprep.subr.mxu0 0.0
        %4870 = vmatpush1.msra.mxu0 0.0
        %4871 = vmatprep.subr.mxu0 0.0
        %4872 = vmatpush1.msra.mxu0 0.0
        %4873 = vmatprep.subr.mxu0 0.0
        %4874 = vmatpush1.msra.mxu0 0.0
        %4875 = vmatprep.subr.mxu0 0.0
        %4876 = vmatpush1.msra.mxu0 0.0
        %4877 = vmatprep.subr.mxu0 0.0
        %4878 = vmatpush1.msra.mxu0 0.0
        %4879 = vmatprep.subr.mxu0 0.0
        %4880 = vmatpush1.msra.mxu0 0.0
        %4881 = vmatprep.subr.mxu0 0.0
        %4882 = vmatpush1.msra.mxu0 0.0
        %4883 = vmatprep.subr.mxu0 0.0
        %4884 = vmatpush1.msra.mxu0 0.0
        %4885 = vmatprep.subr.mxu0 0.0
        %4886 = vmatpush1.msra.mxu0 0.0
        %4887 = vmatprep.mubr.f32.mxu0 0.0
        %4888 = vmatmul.mubr.f32.gmra.mrb[0].mxu0 %v4608
        %v4889 = vpop.f32.mrb[0].mxu0
        %v4890 = vadd.f32 0.0, %v4889
        %v4891 = vpop.f32.mrb[0].mxu0
        %4892 = vdwg.mxu0
        %v4893 = vadd.f32 %v4567, %v4677
        %v4894 = vadd.f32 %v4568, %v4679
        %v4895 = vadd.f32 %v4569, %v4748
        %v4896 = vadd.f32 %v4570, %v4750
        %v4897 = vadd.f32 %v4571, %v4819
        %v4898 = vadd.f32 %v4572, %v4821
        %v4899 = vadd.f32 %v4573, %v4890
        %s4900 = scalar_lea.vmem %s1, 112
        %v4901 = vld [vmem:[%s4900] sm:$0xff]
        %4902 = vrot.lane.b32.xlu0 %v365, 16
        %v4903 = vpop.permute.xlu0 %4902
        %4904 = vrot.lane.b32.xlu0 %v366, 16
        %v4905 = vpop.permute.xlu0 %4904
        %4906 = vrot.lane.b32.xlu0 %v367, 16
        %v4907 = vpop.permute.xlu0 %4906
        %4908 = vrot.lane.b32.xlu0 %v368, 16
        %v4909 = vpop.permute.xlu0 %4908
        %4910 = vrot.lane.b32.xlu0 %v369, 16
        %v4911 = vpop.permute.xlu0 %4910
        %4912 = vrot.lane.b32.xlu0 %v370, 16
        %v4913 = vpop.permute.xlu0 %4912
        %4914 = vrot.lane.b32.xlu0 %v371, 16
        %v4915 = vpop.permute.xlu0 %4914
        %4916 = vrot.lane.b32.xlu0 %v373, 16
        %v4917 = vpop.permute.xlu0 %4916
        %vm4918 = vcmask 130048
        %v4919 = vsel %vm4918, %v4903, %v4905
        %v4920 = vsel %vm4918, %v4905, %v4907
        %v4921 = vsel %vm4918, %v4907, %v4909
        %v4922 = vsel %vm4918, %v4909, %v4911
        %v4923 = vsel %vm4918, %v4911, %v4913
        %v4924 = vsel %vm4918, %v4913, %v4915
        %v4925 = vsel %vm4918, %v4915, %v4917
        %v4934 = vsel %vm415, %v4901, 0
        %4936 = vmatprep.subr.mxu0 %v4920
        %4937 = vmatpush1.msra.mxu0 %v4919
        %4938 = vmatprep.subr.mxu0 0.0
        %4939 = vmatpush1.msra.mxu0 0.0
        %4940 = vmatprep.subr.mxu0 0.0
        %4941 = vmatpush1.msra.mxu0 0.0
        %4942 = vmatprep.subr.mxu0 0.0
        %4943 = vmatpush1.msra.mxu0 0.0
        %4944 = vmatprep.subr.mxu0 0.0
        %4945 = vmatpush1.msra.mxu0 0.0
        %4946 = vmatprep.subr.mxu0 0.0
        %4947 = vmatpush1.msra.mxu0 0.0
        %4948 = vmatprep.subr.mxu0 0.0
        %4949 = vmatpush1.msra.mxu0 0.0
        %4950 = vmatprep.subr.mxu0 0.0
        %4951 = vmatpush1.msra.mxu0 0.0
        %4952 = vmatprep.subr.mxu0 0.0
        %4953 = vmatpush1.msra.mxu0 0.0
        %4954 = vmatprep.subr.mxu0 0.0
        %4955 = vmatpush1.msra.mxu0 0.0
        %4956 = vmatprep.subr.mxu0 0.0
        %4957 = vmatpush1.msra.mxu0 0.0
        %4958 = vmatprep.subr.mxu0 0.0
        %4959 = vmatpush1.msra.mxu0 0.0
        %4960 = vmatprep.subr.mxu0 0.0
        %4961 = vmatpush1.msra.mxu0 0.0
        %4962 = vmatprep.subr.mxu0 0.0
        %4963 = vmatpush1.msra.mxu0 0.0
        %4964 = vmatprep.subr.mxu0 0.0
        %4965 = vmatpush1.msra.mxu0 0.0
        %4966 = vmatprep.subr.mxu0 0.0
        %4967 = vmatpush1.msra.mxu0 0.0
        %4968 = vmatprep.subr.mxu0 0.0
        %4969 = vmatpush1.msra.mxu0 0.0
        %4970 = vmatprep.subr.mxu0 0.0
        %4971 = vmatpush1.msra.mxu0 0.0
        %4972 = vmatprep.subr.mxu0 0.0
        %4973 = vmatpush1.msra.mxu0 0.0
        %4974 = vmatprep.subr.mxu0 0.0
        %4975 = vmatpush1.msra.mxu0 0.0
        %4976 = vmatprep.subr.mxu0 0.0
        %4977 = vmatpush1.msra.mxu0 0.0
        %4978 = vmatprep.subr.mxu0 0.0
        %4979 = vmatpush1.msra.mxu0 0.0
        %4980 = vmatprep.subr.mxu0 0.0
        %4981 = vmatpush1.msra.mxu0 0.0
        %4982 = vmatprep.subr.mxu0 0.0
        %4983 = vmatpush1.msra.mxu0 0.0
        %4984 = vmatprep.subr.mxu0 0.0
        %4985 = vmatpush1.msra.mxu0 0.0
        %4986 = vmatprep.subr.mxu0 0.0
        %4987 = vmatpush1.msra.mxu0 0.0
        %4988 = vmatprep.subr.mxu0 0.0
        %4989 = vmatpush1.msra.mxu0 0.0
        %4990 = vmatprep.subr.mxu0 0.0
        %4991 = vmatpush1.msra.mxu0 0.0
        %4992 = vmatprep.subr.mxu0 0.0
        %4993 = vmatpush1.msra.mxu0 0.0
        %4994 = vmatprep.subr.mxu0 0.0
        %4995 = vmatpush1.msra.mxu0 0.0
        %4996 = vmatprep.subr.mxu0 0.0
        %4997 = vmatpush1.msra.mxu0 0.0
        %4998 = vmatprep.subr.mxu0 0.0
        %4999 = vmatpush1.msra.mxu0 0.0
        %5000 = vmatprep.mubr.f32.mxu0 0.0
        %5001 = vmatmul.mubr.f32.gmra.mrb[0].mxu0 %v4934
        %v5002 = vpop.f32.mrb[0].mxu0
        %v5003 = vadd.f32 0.0, %v5002
        %v5004 = vpop.f32.mrb[0].mxu0
        %v5005 = vadd.f32 0.0, %v5004
        %5006 = vdwg.mxu0
        %5007 = vmatprep.subr.mxu0 %v4922
        %5008 = vmatpush1.msra.mxu0 %v4921
        %5009 = vmatprep.subr.mxu0 0.0
        %5010 = vmatpush1.msra.mxu0 0.0
        %5011 = vmatprep.subr.mxu0 0.0
        %5012 = vmatpush1.msra.mxu0 0.0
        %5013 = vmatprep.subr.mxu0 0.0
        %5014 = vmatpush1.msra.mxu0 0.0
        %5015 = vmatprep.subr.mxu0 0.0
        %5016 = vmatpush1.msra.mxu0 0.0
        %5017 = vmatprep.subr.mxu0 0.0
        %5018 = vmatpush1.msra.mxu0 0.0
        %5019 = vmatprep.subr.mxu0 0.0
        %5020 = vmatpush1.msra.mxu0 0.0
        %5021 = vmatprep.subr.mxu0 0.0
        %5022 = vmatpush1.msra.mxu0 0.0
        %5023 = vmatprep.subr.mxu0 0.0
        %5024 = vmatpush1.msra.mxu0 0.0
        %5025 = vmatprep.subr.mxu0 0.0
        %5026 = vmatpush1.msra.mxu0 0.0
        %5027 = vmatprep.subr.mxu0 0.0
        %5028 = vmatpush1.msra.mxu0 0.0
        %5029 = vmatprep.subr.mxu0 0.0
        %5030 = vmatpush1.msra.mxu0 0.0
        %5031 = vmatprep.subr.mxu0 0.0
        %5032 = vmatpush1.msra.mxu0 0.0
        %5033 = vmatprep.subr.mxu0 0.0
        %5034 = vmatpush1.msra.mxu0 0.0
        %5035 = vmatprep.subr.mxu0 0.0
        %5036 = vmatpush1.msra.mxu0 0.0
        %5037 = vmatprep.subr.mxu0 0.0
        %5038 = vmatpush1.msra.mxu0 0.0
        %5039 = vmatprep.subr.mxu0 0.0
        %5040 = vmatpush1.msra.mxu0 0.0
        %5041 = vmatprep.subr.mxu0 0.0
        %5042 = vmatpush1.msra.mxu0 0.0
        %5043 = vmatprep.subr.mxu0 0.0
        %5044 = vmatpush1.msra.mxu0 0.0
        %5045 = vmatprep.subr.mxu0 0.0
        %5046 = vmatpush1.msra.mxu0 0.0
        %5047 = vmatprep.subr.mxu0 0.0
        %5048 = vmatpush1.msra.mxu0 0.0
        %5049 = vmatprep.subr.mxu0 0.0
        %5050 = vmatpush1.msra.mxu0 0.0
        %5051 = vmatprep.subr.mxu0 0.0
        %5052 = vmatpush1.msra.mxu0 0.0
        %5053 = vmatprep.subr.mxu0 0.0
        %5054 = vmatpush1.msra.mxu0 0.0
        %5055 = vmatprep.subr.mxu0 0.0
        %5056 = vmatpush1.msra.mxu0 0.0
        %5057 = vmatprep.subr.mxu0 0.0
        %5058 = vmatpush1.msra.mxu0 0.0
        %5059 = vmatprep.subr.mxu0 0.0
        %5060 = vmatpush1.msra.mxu0 0.0
        %5061 = vmatprep.subr.mxu0 0.0
        %5062 = vmatpush1.msra.mxu0 0.0
        %5063 = vmatprep.subr.mxu0 0.0
        %5064 = vmatpush1.msra.mxu0 0.0
        %5065 = vmatprep.subr.mxu0 0.0
        %5066 = vmatpush1.msra.mxu0 0.0
        %5067 = vmatprep.subr.mxu0 0.0
        %5068 = vmatpush1.msra.mxu0 0.0
        %5069 = vmatprep.subr.mxu0 0.0
        %5070 = vmatpush1.msra.mxu0 0.0
        %5071 = vmatprep.mubr.f32.mxu0 0.0
        %5072 = vmatmul.mubr.f32.gmra.mrb[0].mxu0 %v4934
        %v5073 = vpop.f32.mrb[0].mxu0
        %v5074 = vadd.f32 0.0, %v5073
        %v5075 = vpop.f32.mrb[0].mxu0
        %v5076 = vadd.f32 0.0, %v5075
        %5077 = vdwg.mxu0
        %5078 = vmatprep.subr.mxu0 %v4924
        %5079 = vmatpush1.msra.mxu0 %v4923
        %5080 = vmatprep.subr.mxu0 0.0
        %5081 = vmatpush1.msra.mxu0 0.0
        %5082 = vmatprep.subr.mxu0 0.0
        %5083 = vmatpush1.msra.mxu0 0.0
        %5084 = vmatprep.subr.mxu0 0.0
        %5085 = vmatpush1.msra.mxu0 0.0
        %5086 = vmatprep.subr.mxu0 0.0
        %5087 = vmatpush1.msra.mxu0 0.0
        %5088 = vmatprep.subr.mxu0 0.0
        %5089 = vmatpush1.msra.mxu0 0.0
        %5090 = vmatprep.subr.mxu0 0.0
        %5091 = vmatpush1.msra.mxu0 0.0
        %5092 = vmatprep.subr.mxu0 0.0
        %5093 = vmatpush1.msra.mxu0 0.0
        %5094 = vmatprep.subr.mxu0 0.0
        %5095 = vmatpush1.msra.mxu0 0.0
        %5096 = vmatprep.subr.mxu0 0.0
        %5097 = vmatpush1.msra.mxu0 0.0
        %5098 = vmatprep.subr.mxu0 0.0
        %5099 = vmatpush1.msra.mxu0 0.0
        %5100 = vmatprep.subr.mxu0 0.0
        %5101 = vmatpush1.msra.mxu0 0.0
        %5102 = vmatprep.subr.mxu0 0.0
        %5103 = vmatpush1.msra.mxu0 0.0
        %5104 = vmatprep.subr.mxu0 0.0
        %5105 = vmatpush1.msra.mxu0 0.0
        %5106 = vmatprep.subr.mxu0 0.0
        %5107 = vmatpush1.msra.mxu0 0.0
        %5108 = vmatprep.subr.mxu0 0.0
        %5109 = vmatpush1.msra.mxu0 0.0
        %5110 = vmatprep.subr.mxu0 0.0
        %5111 = vmatpush1.msra.mxu0 0.0
        %5112 = vmatprep.subr.mxu0 0.0
        %5113 = vmatpush1.msra.mxu0 0.0
        %5114 = vmatprep.subr.mxu0 0.0
        %5115 = vmatpush1.msra.mxu0 0.0
        %5116 = vmatprep.subr.mxu0 0.0
        %5117 = vmatpush1.msra.mxu0 0.0
        %5118 = vmatprep.subr.mxu0 0.0
        %5119 = vmatpush1.msra.mxu0 0.0
        %5120 = vmatprep.subr.mxu0 0.0
        %5121 = vmatpush1.msra.mxu0 0.0
        %5122 = vmatprep.subr.mxu0 0.0
        %5123 = vmatpush1.msra.mxu0 0.0
        %5124 = vmatprep.subr.mxu0 0.0
        %5125 = vmatpush1.msra.mxu0 0.0
        %5126 = vmatprep.subr.mxu0 0.0
        %5127 = vmatpush1.msra.mxu0 0.0
        %5128 = vmatprep.subr.mxu0 0.0
        %5129 = vmatpush1.msra.mxu0 0.0
        %5130 = vmatprep.subr.mxu0 0.0
        %5131 = vmatpush1.msra.mxu0 0.0
        %5132 = vmatprep.subr.mxu0 0.0
        %5133 = vmatpush1.msra.mxu0 0.0
        %5134 = vmatprep.subr.mxu0 0.0
        %5135 = vmatpush1.msra.mxu0 0.0
        %5136 = vmatprep.subr.mxu0 0.0
        %5137 = vmatpush1.msra.mxu0 0.0
        %5138 = vmatprep.subr.mxu0 0.0
        %5139 = vmatpush1.msra.mxu0 0.0
        %5140 = vmatprep.subr.mxu0 0.0
        %5141 = vmatpush1.msra.mxu0 0.0
        %5142 = vmatprep.mubr.f32.mxu0 0.0
        %5143 = vmatmul.mubr.f32.gmra.mrb[0].mxu0 %v4934
        %v5144 = vpop.f32.mrb[0].mxu0
        %v5145 = vadd.f32 0.0, %v5144
        %v5146 = vpop.f32.mrb[0].mxu0
        %v5147 = vadd.f32 0.0, %v5146
        %5148 = vdwg.mxu0
        %5149 = vmatprep.subr.mxu0 0.0
        %5150 = vmatpush1.msra.mxu0 %v4925
        %5151 = vmatprep.subr.mxu0 0.0
        %5152 = vmatpush1.msra.mxu0 0.0
        %5153 = vmatprep.subr.mxu0 0.0
        %5154 = vmatpush1.msra.mxu0 0.0
        %5155 = vmatprep.subr.mxu0 0.0
        %5156 = vmatpush1.msra.mxu0 0.0
        %5157 = vmatprep.subr.mxu0 0.0
        %5158 = vmatpush1.msra.mxu0 0.0
        %5159 = vmatprep.subr.mxu0 0.0
        %5160 = vmatpush1.msra.mxu0 0.0
        %5161 = vmatprep.subr.mxu0 0.0
        %5162 = vmatpush1.msra.mxu0 0.0
        %5163 = vmatprep.subr.mxu0 0.0
        %5164 = vmatpush1.msra.mxu0 0.0
        %5165 = vmatprep.subr.mxu0 0.0
        %5166 = vmatpush1.msra.mxu0 0.0
        %5167 = vmatprep.subr.mxu0 0.0
        %5168 = vmatpush1.msra.mxu0 0.0
        %5169 = vmatprep.subr.mxu0 0.0
        %5170 = vmatpush1.msra.mxu0 0.0
        %5171 = vmatprep.subr.mxu0 0.0
        %5172 = vmatpush1.msra.mxu0 0.0
        %5173 = vmatprep.subr.mxu0 0.0
        %5174 = vmatpush1.msra.mxu0 0.0
        %5175 = vmatprep.subr.mxu0 0.0
        %5176 = vmatpush1.msra.mxu0 0.0
        %5177 = vmatprep.subr.mxu0 0.0
        %5178 = vmatpush1.msra.mxu0 0.0
        %5179 = vmatprep.subr.mxu0 0.0
        %5180 = vmatpush1.msra.mxu0 0.0
        %5181 = vmatprep.subr.mxu0 0.0
        %5182 = vmatpush1.msra.mxu0 0.0
        %5183 = vmatprep.subr.mxu0 0.0
        %5184 = vmatpush1.msra.mxu0 0.0
        %5185 = vmatprep.subr.mxu0 0.0
        %5186 = vmatpush1.msra.mxu0 0.0
        %5187 = vmatprep.subr.mxu0 0.0
        %5188 = vmatpush1.msra.mxu0 0.0
        %5189 = vmatprep.subr.mxu0 0.0
        %5190 = vmatpush1.msra.mxu0 0.0
        %5191 = vmatprep.subr.mxu0 0.0
        %5192 = vmatpush1.msra.mxu0 0.0
        %5193 = vmatprep.subr.mxu0 0.0
        %5194 = vmatpush1.msra.mxu0 0.0
        %5195 = vmatprep.subr.mxu0 0.0
        %5196 = vmatpush1.msra.mxu0 0.0
        %5197 = vmatprep.subr.mxu0 0.0
        %5198 = vmatpush1.msra.mxu0 0.0
        %5199 = vmatprep.subr.mxu0 0.0
        %5200 = vmatpush1.msra.mxu0 0.0
        %5201 = vmatprep.subr.mxu0 0.0
        %5202 = vmatpush1.msra.mxu0 0.0
        %5203 = vmatprep.subr.mxu0 0.0
        %5204 = vmatpush1.msra.mxu0 0.0
        %5205 = vmatprep.subr.mxu0 0.0
        %5206 = vmatpush1.msra.mxu0 0.0
        %5207 = vmatprep.subr.mxu0 0.0
        %5208 = vmatpush1.msra.mxu0 0.0
        %5209 = vmatprep.subr.mxu0 0.0
        %5210 = vmatpush1.msra.mxu0 0.0
        %5211 = vmatprep.subr.mxu0 0.0
        %5212 = vmatpush1.msra.mxu0 0.0
        %5213 = vmatprep.mubr.f32.mxu0 0.0
        %5214 = vmatmul.mubr.f32.gmra.mrb[0].mxu0 %v4934
        %v5215 = vpop.f32.mrb[0].mxu0
        %v5216 = vadd.f32 0.0, %v5215
        %v5217 = vpop.f32.mrb[0].mxu0
        %5218 = vdwg.mxu0
        %v5219 = vadd.f32 %v4893, %v5003
        %v5220 = vadd.f32 %v4894, %v5005
        %v5221 = vadd.f32 %v4895, %v5074
        %v5222 = vadd.f32 %v4896, %v5076
        %v5223 = vadd.f32 %v4897, %v5145
        %v5224 = vadd.f32 %v4898, %v5147
        %v5225 = vadd.f32 %v4899, %v5216
        %s5226 = scalar_lea.vmem %s1, 120
        %v5227 = vld [vmem:[%s5226] sm:$0xff]
        %5228 = vrot.lane.b32.xlu0 %v365, 8
        %v5229 = vpop.permute.xlu0 %5228
        %5230 = vrot.lane.b32.xlu0 %v366, 8
        %v5231 = vpop.permute.xlu0 %5230
        %5232 = vrot.lane.b32.xlu0 %v367, 8
        %v5233 = vpop.permute.xlu0 %5232
        %5234 = vrot.lane.b32.xlu0 %v368, 8
        %v5235 = vpop.permute.xlu0 %5234
        %5236 = vrot.lane.b32.xlu0 %v369, 8
        %v5237 = vpop.permute.xlu0 %5236
        %5238 = vrot.lane.b32.xlu0 %v370, 8
        %v5239 = vpop.permute.xlu0 %5238
        %5240 = vrot.lane.b32.xlu0 %v371, 8
        %v5241 = vpop.permute.xlu0 %5240
        %5242 = vrot.lane.b32.xlu0 %v373, 8
        %v5243 = vpop.permute.xlu0 %5242
        %v5244 = vsel %vm415, %v5229, %v5231
        %v5245 = vsel %vm415, %v5231, %v5233
        %v5246 = vsel %vm415, %v5233, %v5235
        %v5247 = vsel %vm415, %v5235, %v5237
        %v5248 = vsel %vm415, %v5237, %v5239
        %v5249 = vsel %vm415, %v5239, %v5241
        %v5250 = vsel %vm415, %v5241, %v5243
        %v5259 = vsel %vm415, %v5227, 0
        %5261 = vmatprep.subr.mxu0 %v5245
        %5262 = vmatpush1.msra.mxu0 %v5244
        %5263 = vmatprep.subr.mxu0 0.0
        %5264 = vmatpush1.msra.mxu0 0.0
        %5265 = vmatprep.subr.mxu0 0.0
        %5266 = vmatpush1.msra.mxu0 0.0
        %5267 = vmatprep.subr.mxu0 0.0
        %5268 = vmatpush1.msra.mxu0 0.0
        %5269 = vmatprep.subr.mxu0 0.0
        %5270 = vmatpush1.msra.mxu0 0.0
        %5271 = vmatprep.subr.mxu0 0.0
        %5272 = vmatpush1.msra.mxu0 0.0
        %5273 = vmatprep.subr.mxu0 0.0
        %5274 = vmatpush1.msra.mxu0 0.0
        %5275 = vmatprep.subr.mxu0 0.0
        %5276 = vmatpush1.msra.mxu0 0.0
        %5277 = vmatprep.subr.mxu0 0.0
        %5278 = vmatpush1.msra.mxu0 0.0
        %5279 = vmatprep.subr.mxu0 0.0
        %5280 = vmatpush1.msra.mxu0 0.0
        %5281 = vmatprep.subr.mxu0 0.0
        %5282 = vmatpush1.msra.mxu0 0.0
        %5283 = vmatprep.subr.mxu0 0.0
        %5284 = vmatpush1.msra.mxu0 0.0
        %5285 = vmatprep.subr.mxu0 0.0
        %5286 = vmatpush1.msra.mxu0 0.0
        %5287 = vmatprep.subr.mxu0 0.0
        %5288 = vmatpush1.msra.mxu0 0.0
        %5289 = vmatprep.subr.mxu0 0.0
        %5290 = vmatpush1.msra.mxu0 0.0
        %5291 = vmatprep.subr.mxu0 0.0
        %5292 = vmatpush1.msra.mxu0 0.0
        %5293 = vmatprep.subr.mxu0 0.0
        %5294 = vmatpush1.msra.mxu0 0.0
        %5295 = vmatprep.subr.mxu0 0.0
        %5296 = vmatpush1.msra.mxu0 0.0
        %5297 = vmatprep.subr.mxu0 0.0
        %5298 = vmatpush1.msra.mxu0 0.0
        %5299 = vmatprep.subr.mxu0 0.0
        %5300 = vmatpush1.msra.mxu0 0.0
        %5301 = vmatprep.subr.mxu0 0.0
        %5302 = vmatpush1.msra.mxu0 0.0
        %5303 = vmatprep.subr.mxu0 0.0
        %5304 = vmatpush1.msra.mxu0 0.0
        %5305 = vmatprep.subr.mxu0 0.0
        %5306 = vmatpush1.msra.mxu0 0.0
        %5307 = vmatprep.subr.mxu0 0.0
        %5308 = vmatpush1.msra.mxu0 0.0
        %5309 = vmatprep.subr.mxu0 0.0
        %5310 = vmatpush1.msra.mxu0 0.0
        %5311 = vmatprep.subr.mxu0 0.0
        %5312 = vmatpush1.msra.mxu0 0.0
        %5313 = vmatprep.subr.mxu0 0.0
        %5314 = vmatpush1.msra.mxu0 0.0
        %5315 = vmatprep.subr.mxu0 0.0
        %5316 = vmatpush1.msra.mxu0 0.0
        %5317 = vmatprep.subr.mxu0 0.0
        %5318 = vmatpush1.msra.mxu0 0.0
        %5319 = vmatprep.subr.mxu0 0.0
        %5320 = vmatpush1.msra.mxu0 0.0
        %5321 = vmatprep.subr.mxu0 0.0
        %5322 = vmatpush1.msra.mxu0 0.0
        %5323 = vmatprep.subr.mxu0 0.0
        %5324 = vmatpush1.msra.mxu0 0.0
        %5325 = vmatprep.mubr.f32.mxu0 0.0
        %5326 = vmatmul.mubr.f32.gmra.mrb[0].mxu0 %v5259
        %v5327 = vpop.f32.mrb[0].mxu0
        %v5328 = vadd.f32 0.0, %v5327
        %v5329 = vpop.f32.mrb[0].mxu0
        %v5330 = vadd.f32 0.0, %v5329
        %5331 = vdwg.mxu0
        %5332 = vmatprep.subr.mxu0 %v5247
        %5333 = vmatpush1.msra.mxu0 %v5246
        %5334 = vmatprep.subr.mxu0 0.0
        %5335 = vmatpush1.msra.mxu0 0.0
        %5336 = vmatprep.subr.mxu0 0.0
        %5337 = vmatpush1.msra.mxu0 0.0
        %5338 = vmatprep.subr.mxu0 0.0
        %5339 = vmatpush1.msra.mxu0 0.0
        %5340 = vmatprep.subr.mxu0 0.0
        %5341 = vmatpush1.msra.mxu0 0.0
        %5342 = vmatprep.subr.mxu0 0.0
        %5343 = vmatpush1.msra.mxu0 0.0
        %5344 = vmatprep.subr.mxu0 0.0
        %5345 = vmatpush1.msra.mxu0 0.0
        %5346 = vmatprep.subr.mxu0 0.0
        %5347 = vmatpush1.msra.mxu0 0.0
        %5348 = vmatprep.subr.mxu0 0.0
        %5349 = vmatpush1.msra.mxu0 0.0
        %5350 = vmatprep.subr.mxu0 0.0
        %5351 = vmatpush1.msra.mxu0 0.0
        %5352 = vmatprep.subr.mxu0 0.0
        %5353 = vmatpush1.msra.mxu0 0.0
        %5354 = vmatprep.subr.mxu0 0.0
        %5355 = vmatpush1.msra.mxu0 0.0
        %5356 = vmatprep.subr.mxu0 0.0
        %5357 = vmatpush1.msra.mxu0 0.0
        %5358 = vmatprep.subr.mxu0 0.0
        %5359 = vmatpush1.msra.mxu0 0.0
        %5360 = vmatprep.subr.mxu0 0.0
        %5361 = vmatpush1.msra.mxu0 0.0
        %5362 = vmatprep.subr.mxu0 0.0
        %5363 = vmatpush1.msra.mxu0 0.0
        %5364 = vmatprep.subr.mxu0 0.0
        %5365 = vmatpush1.msra.mxu0 0.0
        %5366 = vmatprep.subr.mxu0 0.0
        %5367 = vmatpush1.msra.mxu0 0.0
        %5368 = vmatprep.subr.mxu0 0.0
        %5369 = vmatpush1.msra.mxu0 0.0
        %5370 = vmatprep.subr.mxu0 0.0
        %5371 = vmatpush1.msra.mxu0 0.0
        %5372 = vmatprep.subr.mxu0 0.0
        %5373 = vmatpush1.msra.mxu0 0.0
        %5374 = vmatprep.subr.mxu0 0.0
        %5375 = vmatpush1.msra.mxu0 0.0
        %5376 = vmatprep.subr.mxu0 0.0
        %5377 = vmatpush1.msra.mxu0 0.0
        %5378 = vmatprep.subr.mxu0 0.0
        %5379 = vmatpush1.msra.mxu0 0.0
        %5380 = vmatprep.subr.mxu0 0.0
        %5381 = vmatpush1.msra.mxu0 0.0
        %5382 = vmatprep.subr.mxu0 0.0
        %5383 = vmatpush1.msra.mxu0 0.0
        %5384 = vmatprep.subr.mxu0 0.0
        %5385 = vmatpush1.msra.mxu0 0.0
        %5386 = vmatprep.subr.mxu0 0.0
        %5387 = vmatpush1.msra.mxu0 0.0
        %5388 = vmatprep.subr.mxu0 0.0
        %5389 = vmatpush1.msra.mxu0 0.0
        %5390 = vmatprep.subr.mxu0 0.0
        %5391 = vmatpush1.msra.mxu0 0.0
        %5392 = vmatprep.subr.mxu0 0.0
        %5393 = vmatpush1.msra.mxu0 0.0
        %5394 = vmatprep.subr.mxu0 0.0
        %5395 = vmatpush1.msra.mxu0 0.0
        %5396 = vmatprep.mubr.f32.mxu0 0.0
        %5397 = vmatmul.mubr.f32.gmra.mrb[0].mxu0 %v5259
        %v5398 = vpop.f32.mrb[0].mxu0
        %v5399 = vadd.f32 0.0, %v5398
        %v5400 = vpop.f32.mrb[0].mxu0
        %v5401 = vadd.f32 0.0, %v5400
        %5402 = vdwg.mxu0
        %5403 = vmatprep.subr.mxu0 %v5249
        %5404 = vmatpush1.msra.mxu0 %v5248
        %5405 = vmatprep.subr.mxu0 0.0
        %5406 = vmatpush1.msra.mxu0 0.0
        %5407 = vmatprep.subr.mxu0 0.0
        %5408 = vmatpush1.msra.mxu0 0.0
        %5409 = vmatprep.subr.mxu0 0.0
        %5410 = vmatpush1.msra.mxu0 0.0
        %5411 = vmatprep.subr.mxu0 0.0
        %5412 = vmatpush1.msra.mxu0 0.0
        %5413 = vmatprep.subr.mxu0 0.0
        %5414 = vmatpush1.msra.mxu0 0.0
        %5415 = vmatprep.subr.mxu0 0.0
        %5416 = vmatpush1.msra.mxu0 0.0
        %5417 = vmatprep.subr.mxu0 0.0
        %5418 = vmatpush1.msra.mxu0 0.0
        %5419 = vmatprep.subr.mxu0 0.0
        %5420 = vmatpush1.msra.mxu0 0.0
        %5421 = vmatprep.subr.mxu0 0.0
        %5422 = vmatpush1.msra.mxu0 0.0
        %5423 = vmatprep.subr.mxu0 0.0
        %5424 = vmatpush1.msra.mxu0 0.0
        %5425 = vmatprep.subr.mxu0 0.0
        %5426 = vmatpush1.msra.mxu0 0.0
        %5427 = vmatprep.subr.mxu0 0.0
        %5428 = vmatpush1.msra.mxu0 0.0
        %5429 = vmatprep.subr.mxu0 0.0
        %5430 = vmatpush1.msra.mxu0 0.0
        %5431 = vmatprep.subr.mxu0 0.0
        %5432 = vmatpush1.msra.mxu0 0.0
        %5433 = vmatprep.subr.mxu0 0.0
        %5434 = vmatpush1.msra.mxu0 0.0
        %5435 = vmatprep.subr.mxu0 0.0
        %5436 = vmatpush1.msra.mxu0 0.0
        %5437 = vmatprep.subr.mxu0 0.0
        %5438 = vmatpush1.msra.mxu0 0.0
        %5439 = vmatprep.subr.mxu0 0.0
        %5440 = vmatpush1.msra.mxu0 0.0
        %5441 = vmatprep.subr.mxu0 0.0
        %5442 = vmatpush1.msra.mxu0 0.0
        %5443 = vmatprep.subr.mxu0 0.0
        %5444 = vmatpush1.msra.mxu0 0.0
        %5445 = vmatprep.subr.mxu0 0.0
        %5446 = vmatpush1.msra.mxu0 0.0
        %5447 = vmatprep.subr.mxu0 0.0
        %5448 = vmatpush1.msra.mxu0 0.0
        %5449 = vmatprep.subr.mxu0 0.0
        %5450 = vmatpush1.msra.mxu0 0.0
        %5451 = vmatprep.subr.mxu0 0.0
        %5452 = vmatpush1.msra.mxu0 0.0
        %5453 = vmatprep.subr.mxu0 0.0
        %5454 = vmatpush1.msra.mxu0 0.0
        %5455 = vmatprep.subr.mxu0 0.0
        %5456 = vmatpush1.msra.mxu0 0.0
        %5457 = vmatprep.subr.mxu0 0.0
        %5458 = vmatpush1.msra.mxu0 0.0
        %5459 = vmatprep.subr.mxu0 0.0
        %5460 = vmatpush1.msra.mxu0 0.0
        %5461 = vmatprep.subr.mxu0 0.0
        %5462 = vmatpush1.msra.mxu0 0.0
        %5463 = vmatprep.subr.mxu0 0.0
        %5464 = vmatpush1.msra.mxu0 0.0
        %5465 = vmatprep.subr.mxu0 0.0
        %5466 = vmatpush1.msra.mxu0 0.0
        %5467 = vmatprep.mubr.f32.mxu0 0.0
        %5468 = vmatmul.mubr.f32.gmra.mrb[0].mxu0 %v5259
        %v5469 = vpop.f32.mrb[0].mxu0
        %v5470 = vadd.f32 0.0, %v5469
        %v5471 = vpop.f32.mrb[0].mxu0
        %v5472 = vadd.f32 0.0, %v5471
        %5473 = vdwg.mxu0
        %5474 = vmatprep.subr.mxu0 0.0
        %5475 = vmatpush1.msra.mxu0 %v5250
        %5476 = vmatprep.subr.mxu0 0.0
        %5477 = vmatpush1.msra.mxu0 0.0
        %5478 = vmatprep.subr.mxu0 0.0
        %5479 = vmatpush1.msra.mxu0 0.0
        %5480 = vmatprep.subr.mxu0 0.0
        %5481 = vmatpush1.msra.mxu0 0.0
        %5482 = vmatprep.subr.mxu0 0.0
        %5483 = vmatpush1.msra.mxu0 0.0
        %5484 = vmatprep.subr.mxu0 0.0
        %5485 = vmatpush1.msra.mxu0 0.0
        %5486 = vmatprep.subr.mxu0 0.0
        %5487 = vmatpush1.msra.mxu0 0.0
        %5488 = vmatprep.subr.mxu0 0.0
        %5489 = vmatpush1.msra.mxu0 0.0
        %5490 = vmatprep.subr.mxu0 0.0
        %5491 = vmatpush1.msra.mxu0 0.0
        %5492 = vmatprep.subr.mxu0 0.0
        %5493 = vmatpush1.msra.mxu0 0.0
        %5494 = vmatprep.subr.mxu0 0.0
        %5495 = vmatpush1.msra.mxu0 0.0
        %5496 = vmatprep.subr.mxu0 0.0
        %5497 = vmatpush1.msra.mxu0 0.0
        %5498 = vmatprep.subr.mxu0 0.0
        %5499 = vmatpush1.msra.mxu0 0.0
        %5500 = vmatprep.subr.mxu0 0.0
        %5501 = vmatpush1.msra.mxu0 0.0
        %5502 = vmatprep.subr.mxu0 0.0
        %5503 = vmatpush1.msra.mxu0 0.0
        %5504 = vmatprep.subr.mxu0 0.0
        %5505 = vmatpush1.msra.mxu0 0.0
        %5506 = vmatprep.subr.mxu0 0.0
        %5507 = vmatpush1.msra.mxu0 0.0
        %5508 = vmatprep.subr.mxu0 0.0
        %5509 = vmatpush1.msra.mxu0 0.0
        %5510 = vmatprep.subr.mxu0 0.0
        %5511 = vmatpush1.msra.mxu0 0.0
        %5512 = vmatprep.subr.mxu0 0.0
        %5513 = vmatpush1.msra.mxu0 0.0
        %5514 = vmatprep.subr.mxu0 0.0
        %5515 = vmatpush1.msra.mxu0 0.0
        %5516 = vmatprep.subr.mxu0 0.0
        %5517 = vmatpush1.msra.mxu0 0.0
        %5518 = vmatprep.subr.mxu0 0.0
        %5519 = vmatpush1.msra.mxu0 0.0
        %5520 = vmatprep.subr.mxu0 0.0
        %5521 = vmatpush1.msra.mxu0 0.0
        %5522 = vmatprep.subr.mxu0 0.0
        %5523 = vmatpush1.msra.mxu0 0.0
        %5524 = vmatprep.subr.mxu0 0.0
        %5525 = vmatpush1.msra.mxu0 0.0
        %5526 = vmatprep.subr.mxu0 0.0
        %5527 = vmatpush1.msra.mxu0 0.0
        %5528 = vmatprep.subr.mxu0 0.0
        %5529 = vmatpush1.msra.mxu0 0.0
        %5530 = vmatprep.subr.mxu0 0.0
        %5531 = vmatpush1.msra.mxu0 0.0
        %5532 = vmatprep.subr.mxu0 0.0
        %5533 = vmatpush1.msra.mxu0 0.0
        %5534 = vmatprep.subr.mxu0 0.0
        %5535 = vmatpush1.msra.mxu0 0.0
        %5536 = vmatprep.subr.mxu0 0.0
        %5537 = vmatpush1.msra.mxu0 0.0
        %5538 = vmatprep.mubr.f32.mxu0 0.0
        %5539 = vmatmul.mubr.f32.gmra.mrb[0].mxu0 %v5259
        %v5540 = vpop.f32.mrb[0].mxu0
        %v5541 = vadd.f32 0.0, %v5540
        %v5542 = vpop.f32.mrb[0].mxu0
        %5543 = vdwg.mxu0
        %v5544 = vadd.f32 %v5219, %v5328
        %v5545 = vadd.f32 %v5220, %v5330
        %v5546 = vadd.f32 %v5221, %v5399
        %v5547 = vadd.f32 %v5222, %v5401
        %v5548 = vadd.f32 %v5223, %v5470
        %v5549 = vadd.f32 %v5224, %v5472
        %v5550 = vadd.f32 %v5225, %v5541
        %s5551 = scalar_lea.vmem %s1, 128
        %v5552 = vld [vmem:[%s5551] sm:$0xff]
        %5553 = vrot.lane.b32.xlu0 %v365, 7
        %v5554 = vpop.permute.xlu0 %5553
        %5555 = vrot.lane.b32.xlu0 %v366, 7
        %v5556 = vpop.permute.xlu0 %5555
        %5557 = vrot.lane.b32.xlu0 %v367, 7
        %v5558 = vpop.permute.xlu0 %5557
        %5559 = vrot.lane.b32.xlu0 %v368, 7
        %v5560 = vpop.permute.xlu0 %5559
        %5561 = vrot.lane.b32.xlu0 %v369, 7
        %v5562 = vpop.permute.xlu0 %5561
        %5563 = vrot.lane.b32.xlu0 %v370, 7
        %v5564 = vpop.permute.xlu0 %5563
        %5565 = vrot.lane.b32.xlu0 %v371, 7
        %v5566 = vpop.permute.xlu0 %5565
        %5567 = vrot.lane.b32.xlu0 %v373, 7
        %v5568 = vpop.permute.xlu0 %5567
        %vm5569 = vcmask 56320
        %v5570 = vsel %vm5569, %v5554, %v5556
        %v5571 = vsel %vm5569, %v5556, %v5558
        %v5572 = vsel %vm5569, %v5558, %v5560
        %v5573 = vsel %vm5569, %v5560, %v5562
        %v5574 = vsel %vm5569, %v5562, %v5564
        %v5575 = vsel %vm5569, %v5564, %v5566
        %v5576 = vsel %vm5569, %v5566, %v5568
        %v5585 = vsel %vm415, %v5552, 0
        %5587 = vmatprep.subr.mxu0 %v5571
        %5588 = vmatpush1.msra.mxu0 %v5570
        %5589 = vmatprep.subr.mxu0 0.0
        %5590 = vmatpush1.msra.mxu0 0.0
        %5591 = vmatprep.subr.mxu0 0.0
        %5592 = vmatpush1.msra.mxu0 0.0
        %5593 = vmatprep.subr.mxu0 0.0
        %5594 = vmatpush1.msra.mxu0 0.0
        %5595 = vmatprep.subr.mxu0 0.0
        %5596 = vmatpush1.msra.mxu0 0.0
        %5597 = vmatprep.subr.mxu0 0.0
        %5598 = vmatpush1.msra.mxu0 0.0
        %5599 = vmatprep.subr.mxu0 0.0
        %5600 = vmatpush1.msra.mxu0 0.0
        %5601 = vmatprep.subr.mxu0 0.0
        %5602 = vmatpush1.msra.mxu0 0.0
        %5603 = vmatprep.subr.mxu0 0.0
        %5604 = vmatpush1.msra.mxu0 0.0
        %5605 = vmatprep.subr.mxu0 0.0
        %5606 = vmatpush1.msra.mxu0 0.0
        %5607 = vmatprep.subr.mxu0 0.0
        %5608 = vmatpush1.msra.mxu0 0.0
        %5609 = vmatprep.subr.mxu0 0.0
        %5610 = vmatpush1.msra.mxu0 0.0
        %5611 = vmatprep.subr.mxu0 0.0
        %5612 = vmatpush1.msra.mxu0 0.0
        %5613 = vmatprep.subr.mxu0 0.0
        %5614 = vmatpush1.msra.mxu0 0.0
        %5615 = vmatprep.subr.mxu0 0.0
        %5616 = vmatpush1.msra.mxu0 0.0
        %5617 = vmatprep.subr.mxu0 0.0
        %5618 = vmatpush1.msra.mxu0 0.0
        %5619 = vmatprep.subr.mxu0 0.0
        %5620 = vmatpush1.msra.mxu0 0.0
        %5621 = vmatprep.subr.mxu0 0.0
        %5622 = vmatpush1.msra.mxu0 0.0
        %5623 = vmatprep.subr.mxu0 0.0
        %5624 = vmatpush1.msra.mxu0 0.0
        %5625 = vmatprep.subr.mxu0 0.0
        %5626 = vmatpush1.msra.mxu0 0.0
        %5627 = vmatprep.subr.mxu0 0.0
        %5628 = vmatpush1.msra.mxu0 0.0
        %5629 = vmatprep.subr.mxu0 0.0
        %5630 = vmatpush1.msra.mxu0 0.0
        %5631 = vmatprep.subr.mxu0 0.0
        %5632 = vmatpush1.msra.mxu0 0.0
        %5633 = vmatprep.subr.mxu0 0.0
        %5634 = vmatpush1.msra.mxu0 0.0
        %5635 = vmatprep.subr.mxu0 0.0
        %5636 = vmatpush1.msra.mxu0 0.0
        %5637 = vmatprep.subr.mxu0 0.0
        %5638 = vmatpush1.msra.mxu0 0.0
        %5639 = vmatprep.subr.mxu0 0.0
        %5640 = vmatpush1.msra.mxu0 0.0
        %5641 = vmatprep.subr.mxu0 0.0
        %5642 = vmatpush1.msra.mxu0 0.0
        %5643 = vmatprep.subr.mxu0 0.0
        %5644 = vmatpush1.msra.mxu0 0.0
        %5645 = vmatprep.subr.mxu0 0.0
        %5646 = vmatpush1.msra.mxu0 0.0
        %5647 = vmatprep.subr.mxu0 0.0
        %5648 = vmatpush1.msra.mxu0 0.0
        %5649 = vmatprep.subr.mxu0 0.0
        %5650 = vmatpush1.msra.mxu0 0.0
        %5651 = vmatprep.mubr.f32.mxu0 0.0
        %5652 = vmatmul.mubr.f32.gmra.mrb[0].mxu0 %v5585
        %v5653 = vpop.f32.mrb[0].mxu0
        %v5654 = vadd.f32 0.0, %v5653
        %v5655 = vpop.f32.mrb[0].mxu0
        %v5656 = vadd.f32 0.0, %v5655
        %5657 = vdwg.mxu0
        %5658 = vmatprep.subr.mxu0 %v5573
        %5659 = vmatpush1.msra.mxu0 %v5572
        %5660 = vmatprep.subr.mxu0 0.0
        %5661 = vmatpush1.msra.mxu0 0.0
        %5662 = vmatprep.subr.mxu0 0.0
        %5663 = vmatpush1.msra.mxu0 0.0
        %5664 = vmatprep.subr.mxu0 0.0
        %5665 = vmatpush1.msra.mxu0 0.0
        %5666 = vmatprep.subr.mxu0 0.0
        %5667 = vmatpush1.msra.mxu0 0.0
        %5668 = vmatprep.subr.mxu0 0.0
        %5669 = vmatpush1.msra.mxu0 0.0
        %5670 = vmatprep.subr.mxu0 0.0
        %5671 = vmatpush1.msra.mxu0 0.0
        %5672 = vmatprep.subr.mxu0 0.0
        %5673 = vmatpush1.msra.mxu0 0.0
        %5674 = vmatprep.subr.mxu0 0.0
        %5675 = vmatpush1.msra.mxu0 0.0
        %5676 = vmatprep.subr.mxu0 0.0
        %5677 = vmatpush1.msra.mxu0 0.0
        %5678 = vmatprep.subr.mxu0 0.0
        %5679 = vmatpush1.msra.mxu0 0.0
        %5680 = vmatprep.subr.mxu0 0.0
        %5681 = vmatpush1.msra.mxu0 0.0
        %5682 = vmatprep.subr.mxu0 0.0
        %5683 = vmatpush1.msra.mxu0 0.0
        %5684 = vmatprep.subr.mxu0 0.0
        %5685 = vmatpush1.msra.mxu0 0.0
        %5686 = vmatprep.subr.mxu0 0.0
        %5687 = vmatpush1.msra.mxu0 0.0
        %5688 = vmatprep.subr.mxu0 0.0
        %5689 = vmatpush1.msra.mxu0 0.0
        %5690 = vmatprep.subr.mxu0 0.0
        %5691 = vmatpush1.msra.mxu0 0.0
        %5692 = vmatprep.subr.mxu0 0.0
        %5693 = vmatpush1.msra.mxu0 0.0
        %5694 = vmatprep.subr.mxu0 0.0
        %5695 = vmatpush1.msra.mxu0 0.0
        %5696 = vmatprep.subr.mxu0 0.0
        %5697 = vmatpush1.msra.mxu0 0.0
        %5698 = vmatprep.subr.mxu0 0.0
        %5699 = vmatpush1.msra.mxu0 0.0
        %5700 = vmatprep.subr.mxu0 0.0
        %5701 = vmatpush1.msra.mxu0 0.0
        %5702 = vmatprep.subr.mxu0 0.0
        %5703 = vmatpush1.msra.mxu0 0.0
        %5704 = vmatprep.subr.mxu0 0.0
        %5705 = vmatpush1.msra.mxu0 0.0
        %5706 = vmatprep.subr.mxu0 0.0
        %5707 = vmatpush1.msra.mxu0 0.0
        %5708 = vmatprep.subr.mxu0 0.0
        %5709 = vmatpush1.msra.mxu0 0.0
        %5710 = vmatprep.subr.mxu0 0.0
        %5711 = vmatpush1.msra.mxu0 0.0
        %5712 = vmatprep.subr.mxu0 0.0
        %5713 = vmatpush1.msra.mxu0 0.0
        %5714 = vmatprep.subr.mxu0 0.0
        %5715 = vmatpush1.msra.mxu0 0.0
        %5716 = vmatprep.subr.mxu0 0.0
        %5717 = vmatpush1.msra.mxu0 0.0
        %5718 = vmatprep.subr.mxu0 0.0
        %5719 = vmatpush1.msra.mxu0 0.0
        %5720 = vmatprep.subr.mxu0 0.0
        %5721 = vmatpush1.msra.mxu0 0.0
        %5722 = vmatprep.mubr.f32.mxu0 0.0
        %5723 = vmatmul.mubr.f32.gmra.mrb[0].mxu0 %v5585
        %v5724 = vpop.f32.mrb[0].mxu0
        %v5725 = vadd.f32 0.0, %v5724
        %v5726 = vpop.f32.mrb[0].mxu0
        %v5727 = vadd.f32 0.0, %v5726
        %5728 = vdwg.mxu0
        %5729 = vmatprep.subr.mxu0 %v5575
        %5730 = vmatpush1.msra.mxu0 %v5574
        %5731 = vmatprep.subr.mxu0 0.0
        %5732 = vmatpush1.msra.mxu0 0.0
        %5733 = vmatprep.subr.mxu0 0.0
        %5734 = vmatpush1.msra.mxu0 0.0
        %5735 = vmatprep.subr.mxu0 0.0
        %5736 = vmatpush1.msra.mxu0 0.0
        %5737 = vmatprep.subr.mxu0 0.0
        %5738 = vmatpush1.msra.mxu0 0.0
        %5739 = vmatprep.subr.mxu0 0.0
        %5740 = vmatpush1.msra.mxu0 0.0
        %5741 = vmatprep.subr.mxu0 0.0
        %5742 = vmatpush1.msra.mxu0 0.0
        %5743 = vmatprep.subr.mxu0 0.0
        %5744 = vmatpush1.msra.mxu0 0.0
        %5745 = vmatprep.subr.mxu0 0.0
        %5746 = vmatpush1.msra.mxu0 0.0
        %5747 = vmatprep.subr.mxu0 0.0
        %5748 = vmatpush1.msra.mxu0 0.0
        %5749 = vmatprep.subr.mxu0 0.0
        %5750 = vmatpush1.msra.mxu0 0.0
        %5751 = vmatprep.subr.mxu0 0.0
        %5752 = vmatpush1.msra.mxu0 0.0
        %5753 = vmatprep.subr.mxu0 0.0
        %5754 = vmatpush1.msra.mxu0 0.0
        %5755 = vmatprep.subr.mxu0 0.0
        %5756 = vmatpush1.msra.mxu0 0.0
        %5757 = vmatprep.subr.mxu0 0.0
        %5758 = vmatpush1.msra.mxu0 0.0
        %5759 = vmatprep.subr.mxu0 0.0
        %5760 = vmatpush1.msra.mxu0 0.0
        %5761 = vmatprep.subr.mxu0 0.0
        %5762 = vmatpush1.msra.mxu0 0.0
        %5763 = vmatprep.subr.mxu0 0.0
        %5764 = vmatpush1.msra.mxu0 0.0
        %5765 = vmatprep.subr.mxu0 0.0
        %5766 = vmatpush1.msra.mxu0 0.0
        %5767 = vmatprep.subr.mxu0 0.0
        %5768 = vmatpush1.msra.mxu0 0.0
        %5769 = vmatprep.subr.mxu0 0.0
        %5770 = vmatpush1.msra.mxu0 0.0
        %5771 = vmatprep.subr.mxu0 0.0
        %5772 = vmatpush1.msra.mxu0 0.0
        %5773 = vmatprep.subr.mxu0 0.0
        %5774 = vmatpush1.msra.mxu0 0.0
        %5775 = vmatprep.subr.mxu0 0.0
        %5776 = vmatpush1.msra.mxu0 0.0
        %5777 = vmatprep.subr.mxu0 0.0
        %5778 = vmatpush1.msra.mxu0 0.0
        %5779 = vmatprep.subr.mxu0 0.0
        %5780 = vmatpush1.msra.mxu0 0.0
        %5781 = vmatprep.subr.mxu0 0.0
        %5782 = vmatpush1.msra.mxu0 0.0
        %5783 = vmatprep.subr.mxu0 0.0
        %5784 = vmatpush1.msra.mxu0 0.0
        %5785 = vmatprep.subr.mxu0 0.0
        %5786 = vmatpush1.msra.mxu0 0.0
        %5787 = vmatprep.subr.mxu0 0.0
        %5788 = vmatpush1.msra.mxu0 0.0
        %5789 = vmatprep.subr.mxu0 0.0
        %5790 = vmatpush1.msra.mxu0 0.0
        %5791 = vmatprep.subr.mxu0 0.0
        %5792 = vmatpush1.msra.mxu0 0.0
        %5793 = vmatprep.mubr.f32.mxu0 0.0
        %5794 = vmatmul.mubr.f32.gmra.mrb[0].mxu0 %v5585
        %v5795 = vpop.f32.mrb[0].mxu0
        %v5796 = vadd.f32 0.0, %v5795
        %v5797 = vpop.f32.mrb[0].mxu0
        %v5798 = vadd.f32 0.0, %v5797
        %5799 = vdwg.mxu0
        %5800 = vmatprep.subr.mxu0 0.0
        %5801 = vmatpush1.msra.mxu0 %v5576
        %5802 = vmatprep.subr.mxu0 0.0
        %5803 = vmatpush1.msra.mxu0 0.0
        %5804 = vmatprep.subr.mxu0 0.0
        %5805 = vmatpush1.msra.mxu0 0.0
        %5806 = vmatprep.subr.mxu0 0.0
        %5807 = vmatpush1.msra.mxu0 0.0
        %5808 = vmatprep.subr.mxu0 0.0
        %5809 = vmatpush1.msra.mxu0 0.0
        %5810 = vmatprep.subr.mxu0 0.0
        %5811 = vmatpush1.msra.mxu0 0.0
        %5812 = vmatprep.subr.mxu0 0.0
        %5813 = vmatpush1.msra.mxu0 0.0
        %5814 = vmatprep.subr.mxu0 0.0
        %5815 = vmatpush1.msra.mxu0 0.0
        %5816 = vmatprep.subr.mxu0 0.0
        %5817 = vmatpush1.msra.mxu0 0.0
        %5818 = vmatprep.subr.mxu0 0.0
        %5819 = vmatpush1.msra.mxu0 0.0
        %5820 = vmatprep.subr.mxu0 0.0
        %5821 = vmatpush1.msra.mxu0 0.0
        %5822 = vmatprep.subr.mxu0 0.0
        %5823 = vmatpush1.msra.mxu0 0.0
        %5824 = vmatprep.subr.mxu0 0.0
        %5825 = vmatpush1.msra.mxu0 0.0
        %5826 = vmatprep.subr.mxu0 0.0
        %5827 = vmatpush1.msra.mxu0 0.0
        %5828 = vmatprep.subr.mxu0 0.0
        %5829 = vmatpush1.msra.mxu0 0.0
        %5830 = vmatprep.subr.mxu0 0.0
        %5831 = vmatpush1.msra.mxu0 0.0
        %5832 = vmatprep.subr.mxu0 0.0
        %5833 = vmatpush1.msra.mxu0 0.0
        %5834 = vmatprep.subr.mxu0 0.0
        %5835 = vmatpush1.msra.mxu0 0.0
        %5836 = vmatprep.subr.mxu0 0.0
        %5837 = vmatpush1.msra.mxu0 0.0
        %5838 = vmatprep.subr.mxu0 0.0
        %5839 = vmatpush1.msra.mxu0 0.0
        %5840 = vmatprep.subr.mxu0 0.0
        %5841 = vmatpush1.msra.mxu0 0.0
        %5842 = vmatprep.subr.mxu0 0.0
        %5843 = vmatpush1.msra.mxu0 0.0
        %5844 = vmatprep.subr.mxu0 0.0
        %5845 = vmatpush1.msra.mxu0 0.0
        %5846 = vmatprep.subr.mxu0 0.0
        %5847 = vmatpush1.msra.mxu0 0.0
        %5848 = vmatprep.subr.mxu0 0.0
        %5849 = vmatpush1.msra.mxu0 0.0
        %5850 = vmatprep.subr.mxu0 0.0
        %5851 = vmatpush1.msra.mxu0 0.0
        %5852 = vmatprep.subr.mxu0 0.0
        %5853 = vmatpush1.msra.mxu0 0.0
        %5854 = vmatprep.subr.mxu0 0.0
        %5855 = vmatpush1.msra.mxu0 0.0
        %5856 = vmatprep.subr.mxu0 0.0
        %5857 = vmatpush1.msra.mxu0 0.0
        %5858 = vmatprep.subr.mxu0 0.0
        %5859 = vmatpush1.msra.mxu0 0.0
        %5860 = vmatprep.subr.mxu0 0.0
        %5861 = vmatpush1.msra.mxu0 0.0
        %5862 = vmatprep.subr.mxu0 0.0
        %5863 = vmatpush1.msra.mxu0 0.0
        %5864 = vmatprep.mubr.f32.mxu0 0.0
        %5865 = vmatmul.mubr.f32.gmra.mrb[0].mxu0 %v5585
        %v5866 = vpop.f32.mrb[0].mxu0
        %v5867 = vadd.f32 0.0, %v5866
        %v5868 = vpop.f32.mrb[0].mxu0
        %5869 = vdwg.mxu0
        %v5870 = vadd.f32 %v5544, %v5654
        %v5871 = vadd.f32 %v5545, %v5656
        %v5872 = vadd.f32 %v5546, %v5725
        %v5873 = vadd.f32 %v5547, %v5727
        %v5874 = vadd.f32 %v5548, %v5796
        %v5875 = vadd.f32 %v5549, %v5798
        %v5876 = vadd.f32 %v5550, %v5867
        %s5877 = scalar_lea.vmem %s1, 136
        %v5878 = vld [vmem:[%s5877] sm:$0xff]
        %5879 = vrot.lane.b32.xlu0 %v365, 6
        %v5880 = vpop.permute.xlu0 %5879
        %5881 = vrot.lane.b32.xlu0 %v366, 6
        %v5882 = vpop.permute.xlu0 %5881
        %5883 = vrot.lane.b32.xlu0 %v367, 6
        %v5884 = vpop.permute.xlu0 %5883
        %5885 = vrot.lane.b32.xlu0 %v368, 6
        %v5886 = vpop.permute.xlu0 %5885
        %5887 = vrot.lane.b32.xlu0 %v369, 6
        %v5888 = vpop.permute.xlu0 %5887
        %5889 = vrot.lane.b32.xlu0 %v370, 6
        %v5890 = vpop.permute.xlu0 %5889
        %5891 = vrot.lane.b32.xlu0 %v371, 6
        %v5892 = vpop.permute.xlu0 %5891
        %5893 = vrot.lane.b32.xlu0 %v373, 6
        %v5894 = vpop.permute.xlu0 %5893
        %vm5895 = vcmask 48128
        %v5896 = vsel %vm5895, %v5880, %v5882
        %v5897 = vsel %vm5895, %v5882, %v5884
        %v5898 = vsel %vm5895, %v5884, %v5886
        %v5899 = vsel %vm5895, %v5886, %v5888
        %v5900 = vsel %vm5895, %v5888, %v5890
        %v5901 = vsel %vm5895, %v5890, %v5892
        %v5902 = vsel %vm5895, %v5892, %v5894
        %v5911 = vsel %vm415, %v5878, 0
        %5913 = vmatprep.subr.mxu0 %v5897
        %5914 = vmatpush1.msra.mxu0 %v5896
        %5915 = vmatprep.subr.mxu0 0.0
        %5916 = vmatpush1.msra.mxu0 0.0
        %5917 = vmatprep.subr.mxu0 0.0
        %5918 = vmatpush1.msra.mxu0 0.0
        %5919 = vmatprep.subr.mxu0 0.0
        %5920 = vmatpush1.msra.mxu0 0.0
        %5921 = vmatprep.subr.mxu0 0.0
        %5922 = vmatpush1.msra.mxu0 0.0
        %5923 = vmatprep.subr.mxu0 0.0
        %5924 = vmatpush1.msra.mxu0 0.0
        %5925 = vmatprep.subr.mxu0 0.0
        %5926 = vmatpush1.msra.mxu0 0.0
        %5927 = vmatprep.subr.mxu0 0.0
        %5928 = vmatpush1.msra.mxu0 0.0
        %5929 = vmatprep.subr.mxu0 0.0
        %5930 = vmatpush1.msra.mxu0 0.0
        %5931 = vmatprep.subr.mxu0 0.0
        %5932 = vmatpush1.msra.mxu0 0.0
        %5933 = vmatprep.subr.mxu0 0.0
        %5934 = vmatpush1.msra.mxu0 0.0
        %5935 = vmatprep.subr.mxu0 0.0
        %5936 = vmatpush1.msra.mxu0 0.0
        %5937 = vmatprep.subr.mxu0 0.0
        %5938 = vmatpush1.msra.mxu0 0.0
        %5939 = vmatprep.subr.mxu0 0.0
        %5940 = vmatpush1.msra.mxu0 0.0
        %5941 = vmatprep.subr.mxu0 0.0
        %5942 = vmatpush1.msra.mxu0 0.0
        %5943 = vmatprep.subr.mxu0 0.0
        %5944 = vmatpush1.msra.mxu0 0.0
        %5945 = vmatprep.subr.mxu0 0.0
        %5946 = vmatpush1.msra.mxu0 0.0
        %5947 = vmatprep.subr.mxu0 0.0
        %5948 = vmatpush1.msra.mxu0 0.0
        %5949 = vmatprep.subr.mxu0 0.0
        %5950 = vmatpush1.msra.mxu0 0.0
        %5951 = vmatprep.subr.mxu0 0.0
        %5952 = vmatpush1.msra.mxu0 0.0
        %5953 = vmatprep.subr.mxu0 0.0
        %5954 = vmatpush1.msra.mxu0 0.0
        %5955 = vmatprep.subr.mxu0 0.0
        %5956 = vmatpush1.msra.mxu0 0.0
        %5957 = vmatprep.subr.mxu0 0.0
        %5958 = vmatpush1.msra.mxu0 0.0
        %5959 = vmatprep.subr.mxu0 0.0
        %5960 = vmatpush1.msra.mxu0 0.0
        %5961 = vmatprep.subr.mxu0 0.0
        %5962 = vmatpush1.msra.mxu0 0.0
        %5963 = vmatprep.subr.mxu0 0.0
        %5964 = vmatpush1.msra.mxu0 0.0
        %5965 = vmatprep.subr.mxu0 0.0
        %5966 = vmatpush1.msra.mxu0 0.0
        %5967 = vmatprep.subr.mxu0 0.0
        %5968 = vmatpush1.msra.mxu0 0.0
        %5969 = vmatprep.subr.mxu0 0.0
        %5970 = vmatpush1.msra.mxu0 0.0
        %5971 = vmatprep.subr.mxu0 0.0
        %5972 = vmatpush1.msra.mxu0 0.0
        %5973 = vmatprep.subr.mxu0 0.0
        %5974 = vmatpush1.msra.mxu0 0.0
        %5975 = vmatprep.subr.mxu0 0.0
        %5976 = vmatpush1.msra.mxu0 0.0
        %5977 = vmatprep.mubr.f32.mxu0 0.0
        %5978 = vmatmul.mubr.f32.gmra.mrb[0].mxu0 %v5911
        %v5979 = vpop.f32.mrb[0].mxu0
        %v5980 = vadd.f32 0.0, %v5979
        %v5981 = vpop.f32.mrb[0].mxu0
        %v5982 = vadd.f32 0.0, %v5981
        %5983 = vdwg.mxu0
        %5984 = vmatprep.subr.mxu0 %v5899
        %5985 = vmatpush1.msra.mxu0 %v5898
        %5986 = vmatprep.subr.mxu0 0.0
        %5987 = vmatpush1.msra.mxu0 0.0
        %5988 = vmatprep.subr.mxu0 0.0
        %5989 = vmatpush1.msra.mxu0 0.0
        %5990 = vmatprep.subr.mxu0 0.0
        %5991 = vmatpush1.msra.mxu0 0.0
        %5992 = vmatprep.subr.mxu0 0.0
        %5993 = vmatpush1.msra.mxu0 0.0
        %5994 = vmatprep.subr.mxu0 0.0
        %5995 = vmatpush1.msra.mxu0 0.0
        %5996 = vmatprep.subr.mxu0 0.0
        %5997 = vmatpush1.msra.mxu0 0.0
        %5998 = vmatprep.subr.mxu0 0.0
        %5999 = vmatpush1.msra.mxu0 0.0
        %6000 = vmatprep.subr.mxu0 0.0
        %6001 = vmatpush1.msra.mxu0 0.0
        %6002 = vmatprep.subr.mxu0 0.0
        %6003 = vmatpush1.msra.mxu0 0.0
        %6004 = vmatprep.subr.mxu0 0.0
        %6005 = vmatpush1.msra.mxu0 0.0
        %6006 = vmatprep.subr.mxu0 0.0
        %6007 = vmatpush1.msra.mxu0 0.0
        %6008 = vmatprep.subr.mxu0 0.0
        %6009 = vmatpush1.msra.mxu0 0.0
        %6010 = vmatprep.subr.mxu0 0.0
        %6011 = vmatpush1.msra.mxu0 0.0
        %6012 = vmatprep.subr.mxu0 0.0
        %6013 = vmatpush1.msra.mxu0 0.0
        %6014 = vmatprep.subr.mxu0 0.0
        %6015 = vmatpush1.msra.mxu0 0.0
        %6016 = vmatprep.subr.mxu0 0.0
        %6017 = vmatpush1.msra.mxu0 0.0
        %6018 = vmatprep.subr.mxu0 0.0
        %6019 = vmatpush1.msra.mxu0 0.0
        %6020 = vmatprep.subr.mxu0 0.0
        %6021 = vmatpush1.msra.mxu0 0.0
        %6022 = vmatprep.subr.mxu0 0.0
        %6023 = vmatpush1.msra.mxu0 0.0
        %6024 = vmatprep.subr.mxu0 0.0
        %6025 = vmatpush1.msra.mxu0 0.0
        %6026 = vmatprep.subr.mxu0 0.0
        %6027 = vmatpush1.msra.mxu0 0.0
        %6028 = vmatprep.subr.mxu0 0.0
        %6029 = vmatpush1.msra.mxu0 0.0
        %6030 = vmatprep.subr.mxu0 0.0
        %6031 = vmatpush1.msra.mxu0 0.0
        %6032 = vmatprep.subr.mxu0 0.0
        %6033 = vmatpush1.msra.mxu0 0.0
        %6034 = vmatprep.subr.mxu0 0.0
        %6035 = vmatpush1.msra.mxu0 0.0
        %6036 = vmatprep.subr.mxu0 0.0
        %6037 = vmatpush1.msra.mxu0 0.0
        %6038 = vmatprep.subr.mxu0 0.0
        %6039 = vmatpush1.msra.mxu0 0.0
        %6040 = vmatprep.subr.mxu0 0.0
        %6041 = vmatpush1.msra.mxu0 0.0
        %6042 = vmatprep.subr.mxu0 0.0
        %6043 = vmatpush1.msra.mxu0 0.0
        %6044 = vmatprep.subr.mxu0 0.0
        %6045 = vmatpush1.msra.mxu0 0.0
        %6046 = vmatprep.subr.mxu0 0.0
        %6047 = vmatpush1.msra.mxu0 0.0
        %6048 = vmatprep.mubr.f32.mxu0 0.0
        %6049 = vmatmul.mubr.f32.gmra.mrb[0].mxu0 %v5911
        %v6050 = vpop.f32.mrb[0].mxu0
        %v6051 = vadd.f32 0.0, %v6050
        %v6052 = vpop.f32.mrb[0].mxu0
        %v6053 = vadd.f32 0.0, %v6052
        %6054 = vdwg.mxu0
        %6055 = vmatprep.subr.mxu0 %v5901
        %6056 = vmatpush1.msra.mxu0 %v5900
        %6057 = vmatprep.subr.mxu0 0.0
        %6058 = vmatpush1.msra.mxu0 0.0
        %6059 = vmatprep.subr.mxu0 0.0
        %6060 = vmatpush1.msra.mxu0 0.0
        %6061 = vmatprep.subr.mxu0 0.0
        %6062 = vmatpush1.msra.mxu0 0.0
        %6063 = vmatprep.subr.mxu0 0.0
        %6064 = vmatpush1.msra.mxu0 0.0
        %6065 = vmatprep.subr.mxu0 0.0
        %6066 = vmatpush1.msra.mxu0 0.0
        %6067 = vmatprep.subr.mxu0 0.0
        %6068 = vmatpush1.msra.mxu0 0.0
        %6069 = vmatprep.subr.mxu0 0.0
        %6070 = vmatpush1.msra.mxu0 0.0
        %6071 = vmatprep.subr.mxu0 0.0
        %6072 = vmatpush1.msra.mxu0 0.0
        %6073 = vmatprep.subr.mxu0 0.0
        %6074 = vmatpush1.msra.mxu0 0.0
        %6075 = vmatprep.subr.mxu0 0.0
        %6076 = vmatpush1.msra.mxu0 0.0
        %6077 = vmatprep.subr.mxu0 0.0
        %6078 = vmatpush1.msra.mxu0 0.0
        %6079 = vmatprep.subr.mxu0 0.0
        %6080 = vmatpush1.msra.mxu0 0.0
        %6081 = vmatprep.subr.mxu0 0.0
        %6082 = vmatpush1.msra.mxu0 0.0
        %6083 = vmatprep.subr.mxu0 0.0
        %6084 = vmatpush1.msra.mxu0 0.0
        %6085 = vmatprep.subr.mxu0 0.0
        %6086 = vmatpush1.msra.mxu0 0.0
        %6087 = vmatprep.subr.mxu0 0.0
        %6088 = vmatpush1.msra.mxu0 0.0
        %6089 = vmatprep.subr.mxu0 0.0
        %6090 = vmatpush1.msra.mxu0 0.0
        %6091 = vmatprep.subr.mxu0 0.0
        %6092 = vmatpush1.msra.mxu0 0.0
        %6093 = vmatprep.subr.mxu0 0.0
        %6094 = vmatpush1.msra.mxu0 0.0
        %6095 = vmatprep.subr.mxu0 0.0
        %6096 = vmatpush1.msra.mxu0 0.0
        %6097 = vmatprep.subr.mxu0 0.0
        %6098 = vmatpush1.msra.mxu0 0.0
        %6099 = vmatprep.subr.mxu0 0.0
        %6100 = vmatpush1.msra.mxu0 0.0
        %6101 = vmatprep.subr.mxu0 0.0
        %6102 = vmatpush1.msra.mxu0 0.0
        %6103 = vmatprep.subr.mxu0 0.0
        %6104 = vmatpush1.msra.mxu0 0.0
        %6105 = vmatprep.subr.mxu0 0.0
        %6106 = vmatpush1.msra.mxu0 0.0
        %6107 = vmatprep.subr.mxu0 0.0
        %6108 = vmatpush1.msra.mxu0 0.0
        %6109 = vmatprep.subr.mxu0 0.0
        %6110 = vmatpush1.msra.mxu0 0.0
        %6111 = vmatprep.subr.mxu0 0.0
        %6112 = vmatpush1.msra.mxu0 0.0
        %6113 = vmatprep.subr.mxu0 0.0
        %6114 = vmatpush1.msra.mxu0 0.0
        %6115 = vmatprep.subr.mxu0 0.0
        %6116 = vmatpush1.msra.mxu0 0.0
        %6117 = vmatprep.subr.mxu0 0.0
        %6118 = vmatpush1.msra.mxu0 0.0
        %6119 = vmatprep.mubr.f32.mxu0 0.0
        %6120 = vmatmul.mubr.f32.gmra.mrb[0].mxu0 %v5911
        %v6121 = vpop.f32.mrb[0].mxu0
        %v6122 = vadd.f32 0.0, %v6121
        %v6123 = vpop.f32.mrb[0].mxu0
        %v6124 = vadd.f32 0.0, %v6123
        %6125 = vdwg.mxu0
        %6126 = vmatprep.subr.mxu0 0.0
        %6127 = vmatpush1.msra.mxu0 %v5902
        %6128 = vmatprep.subr.mxu0 0.0
        %6129 = vmatpush1.msra.mxu0 0.0
        %6130 = vmatprep.subr.mxu0 0.0
        %6131 = vmatpush1.msra.mxu0 0.0
        %6132 = vmatprep.subr.mxu0 0.0
        %6133 = vmatpush1.msra.mxu0 0.0
        %6134 = vmatprep.subr.mxu0 0.0
        %6135 = vmatpush1.msra.mxu0 0.0
        %6136 = vmatprep.subr.mxu0 0.0
        %6137 = vmatpush1.msra.mxu0 0.0
        %6138 = vmatprep.subr.mxu0 0.0
        %6139 = vmatpush1.msra.mxu0 0.0
        %6140 = vmatprep.subr.mxu0 0.0
        %6141 = vmatpush1.msra.mxu0 0.0
        %6142 = vmatprep.subr.mxu0 0.0
        %6143 = vmatpush1.msra.mxu0 0.0
        %6144 = vmatprep.subr.mxu0 0.0
        %6145 = vmatpush1.msra.mxu0 0.0
        %6146 = vmatprep.subr.mxu0 0.0
        %6147 = vmatpush1.msra.mxu0 0.0
        %6148 = vmatprep.subr.mxu0 0.0
        %6149 = vmatpush1.msra.mxu0 0.0
        %6150 = vmatprep.subr.mxu0 0.0
        %6151 = vmatpush1.msra.mxu0 0.0
        %6152 = vmatprep.subr.mxu0 0.0
        %6153 = vmatpush1.msra.mxu0 0.0
        %6154 = vmatprep.subr.mxu0 0.0
        %6155 = vmatpush1.msra.mxu0 0.0
        %6156 = vmatprep.subr.mxu0 0.0
        %6157 = vmatpush1.msra.mxu0 0.0
        %6158 = vmatprep.subr.mxu0 0.0
        %6159 = vmatpush1.msra.mxu0 0.0
        %6160 = vmatprep.subr.mxu0 0.0
        %6161 = vmatpush1.msra.mxu0 0.0
        %6162 = vmatprep.subr.mxu0 0.0
        %6163 = vmatpush1.msra.mxu0 0.0
        %6164 = vmatprep.subr.mxu0 0.0
        %6165 = vmatpush1.msra.mxu0 0.0
        %6166 = vmatprep.subr.mxu0 0.0
        %6167 = vmatpush1.msra.mxu0 0.0
        %6168 = vmatprep.subr.mxu0 0.0
        %6169 = vmatpush1.msra.mxu0 0.0
        %6170 = vmatprep.subr.mxu0 0.0
        %6171 = vmatpush1.msra.mxu0 0.0
        %6172 = vmatprep.subr.mxu0 0.0
        %6173 = vmatpush1.msra.mxu0 0.0
        %6174 = vmatprep.subr.mxu0 0.0
        %6175 = vmatpush1.msra.mxu0 0.0
        %6176 = vmatprep.subr.mxu0 0.0
        %6177 = vmatpush1.msra.mxu0 0.0
        %6178 = vmatprep.subr.mxu0 0.0
        %6179 = vmatpush1.msra.mxu0 0.0
        %6180 = vmatprep.subr.mxu0 0.0
        %6181 = vmatpush1.msra.mxu0 0.0
        %6182 = vmatprep.subr.mxu0 0.0
        %6183 = vmatpush1.msra.mxu0 0.0
        %6184 = vmatprep.subr.mxu0 0.0
        %6185 = vmatpush1.msra.mxu0 0.0
        %6186 = vmatprep.subr.mxu0 0.0
        %6187 = vmatpush1.msra.mxu0 0.0
        %6188 = vmatprep.subr.mxu0 0.0
        %6189 = vmatpush1.msra.mxu0 0.0
        %6190 = vmatprep.mubr.f32.mxu0 0.0
        %6191 = vmatmul.mubr.f32.gmra.mrb[0].mxu0 %v5911
        %v6192 = vpop.f32.mrb[0].mxu0
        %v6193 = vadd.f32 0.0, %v6192
        %v6194 = vpop.f32.mrb[0].mxu0
        %6195 = vdwg.mxu0
        %v6196 = vadd.f32 %v5870, %v5980
        %v6197 = vadd.f32 %v5871, %v5982
        %v6198 = vadd.f32 %v5872, %v6051
        %v6199 = vadd.f32 %v5873, %v6053
        %v6200 = vadd.f32 %v5874, %v6122
        %v6201 = vadd.f32 %v5875, %v6124
        %v6202 = vadd.f32 %v5876, %v6193
        %v6203 = vld [vmem:[%s356 + $0x8] sm:$0xff]
        %v6204 = vld [vmem:[%s356 + $0x10] sm:$0xff]
        %v6205 = vld [vmem:[%s356 + $0x18] sm:$0xff]
        %v6206 = vld [vmem:[%s356 + $0x20] sm:$0xff]
        %v6207 = vld [vmem:[%s356 + $0x28] sm:$0xff]
        %v6208 = vld [vmem:[%s356 + $0x30] sm:$0xff]
        %v6209 = vld [vmem:[%s356 + $0x38] sm:$0xff]
        %v6210 = vld [vmem:[%s356 + $0x40] sm:$0xff]
        %s6211 = scalar_lea.vmem %s1, 144
        %v6212 = vld [vmem:[%s6211] sm:$0xff]
        %6221 = vrot.lane.b32.xlu0 %v6203, 56
        %v6222 = vpop.permute.xlu0 %6221
        %6223 = vrot.lane.b32.xlu0 %v6204, 56
        %v6224 = vpop.permute.xlu0 %6223
        %6225 = vrot.lane.b32.xlu0 %v6205, 56
        %v6226 = vpop.permute.xlu0 %6225
        %6227 = vrot.lane.b32.xlu0 %v6206, 56
        %v6228 = vpop.permute.xlu0 %6227
        %6229 = vrot.lane.b32.xlu0 %v6207, 56
        %v6230 = vpop.permute.xlu0 %6229
        %6231 = vrot.lane.b32.xlu0 %v6208, 56
        %v6232 = vpop.permute.xlu0 %6231
        %6233 = vrot.lane.b32.xlu0 %v6209, 56
        %v6234 = vpop.permute.xlu0 %6233
        %6235 = vrot.lane.b32.xlu0 %v6210, 56
        %v6236 = vpop.permute.xlu0 %6235
        %vm6237 = vcmask 457728
        %v6238 = vsel %vm6237, %v6222, %v6224
        %v6239 = vsel %vm6237, %v6224, %v6226
        %v6240 = vsel %vm6237, %v6226, %v6228
        %v6241 = vsel %vm6237, %v6228, %v6230
        %v6242 = vsel %vm6237, %v6230, %v6232
        %v6243 = vsel %vm6237, %v6232, %v6234
        %v6244 = vsel %vm6237, %v6234, %v6236
        %v6253 = vsel %vm415, %v6212, 0
        %6255 = vmatprep.subr.mxu0 %v6239
        %6256 = vmatpush1.msra.mxu0 %v6238
        %6257 = vmatprep.subr.mxu0 0.0
        %6258 = vmatpush1.msra.mxu0 0.0
        %6259 = vmatprep.subr.mxu0 0.0
        %6260 = vmatpush1.msra.mxu0 0.0
        %6261 = vmatprep.subr.mxu0 0.0
        %6262 = vmatpush1.msra.mxu0 0.0
        %6263 = vmatprep.subr.mxu0 0.0
        %6264 = vmatpush1.msra.mxu0 0.0
        %6265 = vmatprep.subr.mxu0 0.0
        %6266 = vmatpush1.msra.mxu0 0.0
        %6267 = vmatprep.subr.mxu0 0.0
        %6268 = vmatpush1.msra.mxu0 0.0
        %6269 = vmatprep.subr.mxu0 0.0
        %6270 = vmatpush1.msra.mxu0 0.0
        %6271 = vmatprep.subr.mxu0 0.0
        %6272 = vmatpush1.msra.mxu0 0.0
        %6273 = vmatprep.subr.mxu0 0.0
        %6274 = vmatpush1.msra.mxu0 0.0
        %6275 = vmatprep.subr.mxu0 0.0
        %6276 = vmatpush1.msra.mxu0 0.0
        %6277 = vmatprep.subr.mxu0 0.0
        %6278 = vmatpush1.msra.mxu0 0.0
        %6279 = vmatprep.subr.mxu0 0.0
        %6280 = vmatpush1.msra.mxu0 0.0
        %6281 = vmatprep.subr.mxu0 0.0
        %6282 = vmatpush1.msra.mxu0 0.0
        %6283 = vmatprep.subr.mxu0 0.0
        %6284 = vmatpush1.msra.mxu0 0.0
        %6285 = vmatprep.subr.mxu0 0.0
        %6286 = vmatpush1.msra.mxu0 0.0
        %6287 = vmatprep.subr.mxu0 0.0
        %6288 = vmatpush1.msra.mxu0 0.0
        %6289 = vmatprep.subr.mxu0 0.0
        %6290 = vmatpush1.msra.mxu0 0.0
        %6291 = vmatprep.subr.mxu0 0.0
        %6292 = vmatpush1.msra.mxu0 0.0
        %6293 = vmatprep.subr.mxu0 0.0
        %6294 = vmatpush1.msra.mxu0 0.0
        %6295 = vmatprep.subr.mxu0 0.0
        %6296 = vmatpush1.msra.mxu0 0.0
        %6297 = vmatprep.subr.mxu0 0.0
        %6298 = vmatpush1.msra.mxu0 0.0
        %6299 = vmatprep.subr.mxu0 0.0
        %6300 = vmatpush1.msra.mxu0 0.0
        %6301 = vmatprep.subr.mxu0 0.0
        %6302 = vmatpush1.msra.mxu0 0.0
        %6303 = vmatprep.subr.mxu0 0.0
        %6304 = vmatpush1.msra.mxu0 0.0
        %6305 = vmatprep.subr.mxu0 0.0
        %6306 = vmatpush1.msra.mxu0 0.0
        %6307 = vmatprep.subr.mxu0 0.0
        %6308 = vmatpush1.msra.mxu0 0.0
        %6309 = vmatprep.subr.mxu0 0.0
        %6310 = vmatpush1.msra.mxu0 0.0
        %6311 = vmatprep.subr.mxu0 0.0
        %6312 = vmatpush1.msra.mxu0 0.0
        %6313 = vmatprep.subr.mxu0 0.0
        %6314 = vmatpush1.msra.mxu0 0.0
        %6315 = vmatprep.subr.mxu0 0.0
        %6316 = vmatpush1.msra.mxu0 0.0
        %6317 = vmatprep.subr.mxu0 0.0
        %6318 = vmatpush1.msra.mxu0 0.0
        %6319 = vmatprep.mubr.f32.mxu0 0.0
        %6320 = vmatmul.mubr.f32.gmra.mrb[0].mxu0 %v6253
        %v6321 = vpop.f32.mrb[0].mxu0
        %v6322 = vadd.f32 0.0, %v6321
        %v6323 = vpop.f32.mrb[0].mxu0
        %v6324 = vadd.f32 0.0, %v6323
        %6325 = vdwg.mxu0
        %6326 = vmatprep.subr.mxu0 %v6241
        %6327 = vmatpush1.msra.mxu0 %v6240
        %6328 = vmatprep.subr.mxu0 0.0
        %6329 = vmatpush1.msra.mxu0 0.0
        %6330 = vmatprep.subr.mxu0 0.0
        %6331 = vmatpush1.msra.mxu0 0.0
        %6332 = vmatprep.subr.mxu0 0.0
        %6333 = vmatpush1.msra.mxu0 0.0
        %6334 = vmatprep.subr.mxu0 0.0
        %6335 = vmatpush1.msra.mxu0 0.0
        %6336 = vmatprep.subr.mxu0 0.0
        %6337 = vmatpush1.msra.mxu0 0.0
        %6338 = vmatprep.subr.mxu0 0.0
        %6339 = vmatpush1.msra.mxu0 0.0
        %6340 = vmatprep.subr.mxu0 0.0
        %6341 = vmatpush1.msra.mxu0 0.0
        %6342 = vmatprep.subr.mxu0 0.0
        %6343 = vmatpush1.msra.mxu0 0.0
        %6344 = vmatprep.subr.mxu0 0.0
        %6345 = vmatpush1.msra.mxu0 0.0
        %6346 = vmatprep.subr.mxu0 0.0
        %6347 = vmatpush1.msra.mxu0 0.0
        %6348 = vmatprep.subr.mxu0 0.0
        %6349 = vmatpush1.msra.mxu0 0.0
        %6350 = vmatprep.subr.mxu0 0.0
        %6351 = vmatpush1.msra.mxu0 0.0
        %6352 = vmatprep.subr.mxu0 0.0
        %6353 = vmatpush1.msra.mxu0 0.0
        %6354 = vmatprep.subr.mxu0 0.0
        %6355 = vmatpush1.msra.mxu0 0.0
        %6356 = vmatprep.subr.mxu0 0.0
        %6357 = vmatpush1.msra.mxu0 0.0
        %6358 = vmatprep.subr.mxu0 0.0
        %6359 = vmatpush1.msra.mxu0 0.0
        %6360 = vmatprep.subr.mxu0 0.0
        %6361 = vmatpush1.msra.mxu0 0.0
        %6362 = vmatprep.subr.mxu0 0.0
        %6363 = vmatpush1.msra.mxu0 0.0
        %6364 = vmatprep.subr.mxu0 0.0
        %6365 = vmatpush1.msra.mxu0 0.0
        %6366 = vmatprep.subr.mxu0 0.0
        %6367 = vmatpush1.msra.mxu0 0.0
        %6368 = vmatprep.subr.mxu0 0.0
        %6369 = vmatpush1.msra.mxu0 0.0
        %6370 = vmatprep.subr.mxu0 0.0
        %6371 = vmatpush1.msra.mxu0 0.0
        %6372 = vmatprep.subr.mxu0 0.0
        %6373 = vmatpush1.msra.mxu0 0.0
        %6374 = vmatprep.subr.mxu0 0.0
        %6375 = vmatpush1.msra.mxu0 0.0
        %6376 = vmatprep.subr.mxu0 0.0
        %6377 = vmatpush1.msra.mxu0 0.0
        %6378 = vmatprep.subr.mxu0 0.0
        %6379 = vmatpush1.msra.mxu0 0.0
        %6380 = vmatprep.subr.mxu0 0.0
        %6381 = vmatpush1.msra.mxu0 0.0
        %6382 = vmatprep.subr.mxu0 0.0
        %6383 = vmatpush1.msra.mxu0 0.0
        %6384 = vmatprep.subr.mxu0 0.0
        %6385 = vmatpush1.msra.mxu0 0.0
        %6386 = vmatprep.subr.mxu0 0.0
        %6387 = vmatpush1.msra.mxu0 0.0
        %6388 = vmatprep.subr.mxu0 0.0
        %6389 = vmatpush1.msra.mxu0 0.0
        %6390 = vmatprep.mubr.f32.mxu0 0.0
        %6391 = vmatmul.mubr.f32.gmra.mrb[0].mxu0 %v6253
        %v6392 = vpop.f32.mrb[0].mxu0
        %v6393 = vadd.f32 0.0, %v6392
        %v6394 = vpop.f32.mrb[0].mxu0
        %v6395 = vadd.f32 0.0, %v6394
        %6396 = vdwg.mxu0
        %6397 = vmatprep.subr.mxu0 %v6243
        %6398 = vmatpush1.msra.mxu0 %v6242
        %6399 = vmatprep.subr.mxu0 0.0
        %6400 = vmatpush1.msra.mxu0 0.0
        %6401 = vmatprep.subr.mxu0 0.0
        %6402 = vmatpush1.msra.mxu0 0.0
        %6403 = vmatprep.subr.mxu0 0.0
        %6404 = vmatpush1.msra.mxu0 0.0
        %6405 = vmatprep.subr.mxu0 0.0
        %6406 = vmatpush1.msra.mxu0 0.0
        %6407 = vmatprep.subr.mxu0 0.0
        %6408 = vmatpush1.msra.mxu0 0.0
        %6409 = vmatprep.subr.mxu0 0.0
        %6410 = vmatpush1.msra.mxu0 0.0
        %6411 = vmatprep.subr.mxu0 0.0
        %6412 = vmatpush1.msra.mxu0 0.0
        %6413 = vmatprep.subr.mxu0 0.0
        %6414 = vmatpush1.msra.mxu0 0.0
        %6415 = vmatprep.subr.mxu0 0.0
        %6416 = vmatpush1.msra.mxu0 0.0
        %6417 = vmatprep.subr.mxu0 0.0
        %6418 = vmatpush1.msra.mxu0 0.0
        %6419 = vmatprep.subr.mxu0 0.0
        %6420 = vmatpush1.msra.mxu0 0.0
        %6421 = vmatprep.subr.mxu0 0.0
        %6422 = vmatpush1.msra.mxu0 0.0
        %6423 = vmatprep.subr.mxu0 0.0
        %6424 = vmatpush1.msra.mxu0 0.0
        %6425 = vmatprep.subr.mxu0 0.0
        %6426 = vmatpush1.msra.mxu0 0.0
        %6427 = vmatprep.subr.mxu0 0.0
        %6428 = vmatpush1.msra.mxu0 0.0
        %6429 = vmatprep.subr.mxu0 0.0
        %6430 = vmatpush1.msra.mxu0 0.0
        %6431 = vmatprep.subr.mxu0 0.0
        %6432 = vmatpush1.msra.mxu0 0.0
        %6433 = vmatprep.subr.mxu0 0.0
        %6434 = vmatpush1.msra.mxu0 0.0
        %6435 = vmatprep.subr.mxu0 0.0
        %6436 = vmatpush1.msra.mxu0 0.0
        %6437 = vmatprep.subr.mxu0 0.0
        %6438 = vmatpush1.msra.mxu0 0.0
        %6439 = vmatprep.subr.mxu0 0.0
        %6440 = vmatpush1.msra.mxu0 0.0
        %6441 = vmatprep.subr.mxu0 0.0
        %6442 = vmatpush1.msra.mxu0 0.0
        %6443 = vmatprep.subr.mxu0 0.0
        %6444 = vmatpush1.msra.mxu0 0.0
        %6445 = vmatprep.subr.mxu0 0.0
        %6446 = vmatpush1.msra.mxu0 0.0
        %6447 = vmatprep.subr.mxu0 0.0
        %6448 = vmatpush1.msra.mxu0 0.0
        %6449 = vmatprep.subr.mxu0 0.0
        %6450 = vmatpush1.msra.mxu0 0.0
        %6451 = vmatprep.subr.mxu0 0.0
        %6452 = vmatpush1.msra.mxu0 0.0
        %6453 = vmatprep.subr.mxu0 0.0
        %6454 = vmatpush1.msra.mxu0 0.0
        %6455 = vmatprep.subr.mxu0 0.0
        %6456 = vmatpush1.msra.mxu0 0.0
        %6457 = vmatprep.subr.mxu0 0.0
        %6458 = vmatpush1.msra.mxu0 0.0
        %6459 = vmatprep.subr.mxu0 0.0
        %6460 = vmatpush1.msra.mxu0 0.0
        %6461 = vmatprep.mubr.f32.mxu0 0.0
        %6462 = vmatmul.mubr.f32.gmra.mrb[0].mxu0 %v6253
        %v6463 = vpop.f32.mrb[0].mxu0
        %v6464 = vadd.f32 0.0, %v6463
        %v6465 = vpop.f32.mrb[0].mxu0
        %v6466 = vadd.f32 0.0, %v6465
        %6467 = vdwg.mxu0
        %6468 = vmatprep.subr.mxu0 0.0
        %6469 = vmatpush1.msra.mxu0 %v6244
        %6470 = vmatprep.subr.mxu0 0.0
        %6471 = vmatpush1.msra.mxu0 0.0
        %6472 = vmatprep.subr.mxu0 0.0
        %6473 = vmatpush1.msra.mxu0 0.0
        %6474 = vmatprep.subr.mxu0 0.0
        %6475 = vmatpush1.msra.mxu0 0.0
        %6476 = vmatprep.subr.mxu0 0.0
        %6477 = vmatpush1.msra.mxu0 0.0
        %6478 = vmatprep.subr.mxu0 0.0
        %6479 = vmatpush1.msra.mxu0 0.0
        %6480 = vmatprep.subr.mxu0 0.0
        %6481 = vmatpush1.msra.mxu0 0.0
        %6482 = vmatprep.subr.mxu0 0.0
        %6483 = vmatpush1.msra.mxu0 0.0
        %6484 = vmatprep.subr.mxu0 0.0
        %6485 = vmatpush1.msra.mxu0 0.0
        %6486 = vmatprep.subr.mxu0 0.0
        %6487 = vmatpush1.msra.mxu0 0.0
        %6488 = vmatprep.subr.mxu0 0.0
        %6489 = vmatpush1.msra.mxu0 0.0
        %6490 = vmatprep.subr.mxu0 0.0
        %6491 = vmatpush1.msra.mxu0 0.0
        %6492 = vmatprep.subr.mxu0 0.0
        %6493 = vmatpush1.msra.mxu0 0.0
        %6494 = vmatprep.subr.mxu0 0.0
        %6495 = vmatpush1.msra.mxu0 0.0
        %6496 = vmatprep.subr.mxu0 0.0
        %6497 = vmatpush1.msra.mxu0 0.0
        %6498 = vmatprep.subr.mxu0 0.0
        %6499 = vmatpush1.msra.mxu0 0.0
        %6500 = vmatprep.subr.mxu0 0.0
        %6501 = vmatpush1.msra.mxu0 0.0
        %6502 = vmatprep.subr.mxu0 0.0
        %6503 = vmatpush1.msra.mxu0 0.0
        %6504 = vmatprep.subr.mxu0 0.0
        %6505 = vmatpush1.msra.mxu0 0.0
        %6506 = vmatprep.subr.mxu0 0.0
        %6507 = vmatpush1.msra.mxu0 0.0
        %6508 = vmatprep.subr.mxu0 0.0
        %6509 = vmatpush1.msra.mxu0 0.0
        %6510 = vmatprep.subr.mxu0 0.0
        %6511 = vmatpush1.msra.mxu0 0.0
        %6512 = vmatprep.subr.mxu0 0.0
        %6513 = vmatpush1.msra.mxu0 0.0
        %6514 = vmatprep.subr.mxu0 0.0
        %6515 = vmatpush1.msra.mxu0 0.0
        %6516 = vmatprep.subr.mxu0 0.0
        %6517 = vmatpush1.msra.mxu0 0.0
        %6518 = vmatprep.subr.mxu0 0.0
        %6519 = vmatpush1.msra.mxu0 0.0
        %6520 = vmatprep.subr.mxu0 0.0
        %6521 = vmatpush1.msra.mxu0 0.0
        %6522 = vmatprep.subr.mxu0 0.0
        %6523 = vmatpush1.msra.mxu0 0.0
        %6524 = vmatprep.subr.mxu0 0.0
        %6525 = vmatpush1.msra.mxu0 0.0
        %6526 = vmatprep.subr.mxu0 0.0
        %6527 = vmatpush1.msra.mxu0 0.0
        %6528 = vmatprep.subr.mxu0 0.0
        %6529 = vmatpush1.msra.mxu0 0.0
        %6530 = vmatprep.subr.mxu0 0.0
        %6531 = vmatpush1.msra.mxu0 0.0
        %6532 = vmatprep.mubr.f32.mxu0 0.0
        %6533 = vmatmul.mubr.f32.gmra.mrb[0].mxu0 %v6253
        %v6534 = vpop.f32.mrb[0].mxu0
        %v6535 = vadd.f32 0.0, %v6534
        %v6536 = vpop.f32.mrb[0].mxu0
        %6537 = vdwg.mxu0
        %v6538 = vadd.f32 %v6196, %v6322
        %v6539 = vadd.f32 %v6197, %v6324
        %v6540 = vadd.f32 %v6198, %v6393
        %v6541 = vadd.f32 %v6199, %v6395
        %v6542 = vadd.f32 %v6200, %v6464
        %v6543 = vadd.f32 %v6201, %v6466
        %v6544 = vadd.f32 %v6202, %v6535
        %s6545 = scalar_lea.vmem %s1, 152
        %v6546 = vld [vmem:[%s6545] sm:$0xff]
        %6547 = vrot.lane.b32.xlu0 %v6203, 55
        %v6548 = vpop.permute.xlu0 %6547
        %6549 = vrot.lane.b32.xlu0 %v6204, 55
        %v6550 = vpop.permute.xlu0 %6549
        %6551 = vrot.lane.b32.xlu0 %v6205, 55
        %v6552 = vpop.permute.xlu0 %6551
        %6553 = vrot.lane.b32.xlu0 %v6206, 55
        %v6554 = vpop.permute.xlu0 %6553
        %6555 = vrot.lane.b32.xlu0 %v6207, 55
        %v6556 = vpop.permute.xlu0 %6555
        %6557 = vrot.lane.b32.xlu0 %v6208, 55
        %v6558 = vpop.permute.xlu0 %6557
        %6559 = vrot.lane.b32.xlu0 %v6209, 55
        %v6560 = vpop.permute.xlu0 %6559
        %6561 = vrot.lane.b32.xlu0 %v6210, 55
        %v6562 = vpop.permute.xlu0 %6561
        %vm6563 = vcmask 449536
        %v6564 = vsel %vm6563, %v6548, %v6550
        %v6565 = vsel %vm6563, %v6550, %v6552
        %v6566 = vsel %vm6563, %v6552, %v6554
        %v6567 = vsel %vm6563, %v6554, %v6556
        %v6568 = vsel %vm6563, %v6556, %v6558
        %v6569 = vsel %vm6563, %v6558, %v6560
        %v6570 = vsel %vm6563, %v6560, %v6562
        %v6579 = vsel %vm415, %v6546, 0
        %6581 = vmatprep.subr.mxu0 %v6565
        %6582 = vmatpush1.msra.mxu0 %v6564
        %6583 = vmatprep.subr.mxu0 0.0
        %6584 = vmatpush1.msra.mxu0 0.0
        %6585 = vmatprep.subr.mxu0 0.0
        %6586 = vmatpush1.msra.mxu0 0.0
        %6587 = vmatprep.subr.mxu0 0.0
        %6588 = vmatpush1.msra.mxu0 0.0
        %6589 = vmatprep.subr.mxu0 0.0
        %6590 = vmatpush1.msra.mxu0 0.0
        %6591 = vmatprep.subr.mxu0 0.0
        %6592 = vmatpush1.msra.mxu0 0.0
        %6593 = vmatprep.subr.mxu0 0.0
        %6594 = vmatpush1.msra.mxu0 0.0
        %6595 = vmatprep.subr.mxu0 0.0
        %6596 = vmatpush1.msra.mxu0 0.0
        %6597 = vmatprep.subr.mxu0 0.0
        %6598 = vmatpush1.msra.mxu0 0.0
        %6599 = vmatprep.subr.mxu0 0.0
        %6600 = vmatpush1.msra.mxu0 0.0
        %6601 = vmatprep.subr.mxu0 0.0
        %6602 = vmatpush1.msra.mxu0 0.0
        %6603 = vmatprep.subr.mxu0 0.0
        %6604 = vmatpush1.msra.mxu0 0.0
        %6605 = vmatprep.subr.mxu0 0.0
        %6606 = vmatpush1.msra.mxu0 0.0
        %6607 = vmatprep.subr.mxu0 0.0
        %6608 = vmatpush1.msra.mxu0 0.0
        %6609 = vmatprep.subr.mxu0 0.0
        %6610 = vmatpush1.msra.mxu0 0.0
        %6611 = vmatprep.subr.mxu0 0.0
        %6612 = vmatpush1.msra.mxu0 0.0
        %6613 = vmatprep.subr.mxu0 0.0
        %6614 = vmatpush1.msra.mxu0 0.0
        %6615 = vmatprep.subr.mxu0 0.0
        %6616 = vmatpush1.msra.mxu0 0.0
        %6617 = vmatprep.subr.mxu0 0.0
        %6618 = vmatpush1.msra.mxu0 0.0
        %6619 = vmatprep.subr.mxu0 0.0
        %6620 = vmatpush1.msra.mxu0 0.0
        %6621 = vmatprep.subr.mxu0 0.0
        %6622 = vmatpush1.msra.mxu0 0.0
        %6623 = vmatprep.subr.mxu0 0.0
        %6624 = vmatpush1.msra.mxu0 0.0
        %6625 = vmatprep.subr.mxu0 0.0
        %6626 = vmatpush1.msra.mxu0 0.0
        %6627 = vmatprep.subr.mxu0 0.0
        %6628 = vmatpush1.msra.mxu0 0.0
        %6629 = vmatprep.subr.mxu0 0.0
        %6630 = vmatpush1.msra.mxu0 0.0
        %6631 = vmatprep.subr.mxu0 0.0
        %6632 = vmatpush1.msra.mxu0 0.0
        %6633 = vmatprep.subr.mxu0 0.0
        %6634 = vmatpush1.msra.mxu0 0.0
        %6635 = vmatprep.subr.mxu0 0.0
        %6636 = vmatpush1.msra.mxu0 0.0
        %6637 = vmatprep.subr.mxu0 0.0
        %6638 = vmatpush1.msra.mxu0 0.0
        %6639 = vmatprep.subr.mxu0 0.0
        %6640 = vmatpush1.msra.mxu0 0.0
        %6641 = vmatprep.subr.mxu0 0.0
        %6642 = vmatpush1.msra.mxu0 0.0
        %6643 = vmatprep.subr.mxu0 0.0
        %6644 = vmatpush1.msra.mxu0 0.0
        %6645 = vmatprep.mubr.f32.mxu0 0.0
        %6646 = vmatmul.mubr.f32.gmra.mrb[0].mxu0 %v6579
        %v6647 = vpop.f32.mrb[0].mxu0
        %v6648 = vadd.f32 0.0, %v6647
        %v6649 = vpop.f32.mrb[0].mxu0
        %v6650 = vadd.f32 0.0, %v6649
        %6651 = vdwg.mxu0
        %6652 = vmatprep.subr.mxu0 %v6567
        %6653 = vmatpush1.msra.mxu0 %v6566
        %6654 = vmatprep.subr.mxu0 0.0
        %6655 = vmatpush1.msra.mxu0 0.0
        %6656 = vmatprep.subr.mxu0 0.0
        %6657 = vmatpush1.msra.mxu0 0.0
        %6658 = vmatprep.subr.mxu0 0.0
        %6659 = vmatpush1.msra.mxu0 0.0
        %6660 = vmatprep.subr.mxu0 0.0
        %6661 = vmatpush1.msra.mxu0 0.0
        %6662 = vmatprep.subr.mxu0 0.0
        %6663 = vmatpush1.msra.mxu0 0.0
        %6664 = vmatprep.subr.mxu0 0.0
        %6665 = vmatpush1.msra.mxu0 0.0
        %6666 = vmatprep.subr.mxu0 0.0
        %6667 = vmatpush1.msra.mxu0 0.0
        %6668 = vmatprep.subr.mxu0 0.0
        %6669 = vmatpush1.msra.mxu0 0.0
        %6670 = vmatprep.subr.mxu0 0.0
        %6671 = vmatpush1.msra.mxu0 0.0
        %6672 = vmatprep.subr.mxu0 0.0
        %6673 = vmatpush1.msra.mxu0 0.0
        %6674 = vmatprep.subr.mxu0 0.0
        %6675 = vmatpush1.msra.mxu0 0.0
        %6676 = vmatprep.subr.mxu0 0.0
        %6677 = vmatpush1.msra.mxu0 0.0
        %6678 = vmatprep.subr.mxu0 0.0
        %6679 = vmatpush1.msra.mxu0 0.0
        %6680 = vmatprep.subr.mxu0 0.0
        %6681 = vmatpush1.msra.mxu0 0.0
        %6682 = vmatprep.subr.mxu0 0.0
        %6683 = vmatpush1.msra.mxu0 0.0
        %6684 = vmatprep.subr.mxu0 0.0
        %6685 = vmatpush1.msra.mxu0 0.0
        %6686 = vmatprep.subr.mxu0 0.0
        %6687 = vmatpush1.msra.mxu0 0.0
        %6688 = vmatprep.subr.mxu0 0.0
        %6689 = vmatpush1.msra.mxu0 0.0
        %6690 = vmatprep.subr.mxu0 0.0
        %6691 = vmatpush1.msra.mxu0 0.0
        %6692 = vmatprep.subr.mxu0 0.0
        %6693 = vmatpush1.msra.mxu0 0.0
        %6694 = vmatprep.subr.mxu0 0.0
        %6695 = vmatpush1.msra.mxu0 0.0
        %6696 = vmatprep.subr.mxu0 0.0
        %6697 = vmatpush1.msra.mxu0 0.0
        %6698 = vmatprep.subr.mxu0 0.0
        %6699 = vmatpush1.msra.mxu0 0.0
        %6700 = vmatprep.subr.mxu0 0.0
        %6701 = vmatpush1.msra.mxu0 0.0
        %6702 = vmatprep.subr.mxu0 0.0
        %6703 = vmatpush1.msra.mxu0 0.0
        %6704 = vmatprep.subr.mxu0 0.0
        %6705 = vmatpush1.msra.mxu0 0.0
        %6706 = vmatprep.subr.mxu0 0.0
        %6707 = vmatpush1.msra.mxu0 0.0
        %6708 = vmatprep.subr.mxu0 0.0
        %6709 = vmatpush1.msra.mxu0 0.0
        %6710 = vmatprep.subr.mxu0 0.0
        %6711 = vmatpush1.msra.mxu0 0.0
        %6712 = vmatprep.subr.mxu0 0.0
        %6713 = vmatpush1.msra.mxu0 0.0
        %6714 = vmatprep.subr.mxu0 0.0
        %6715 = vmatpush1.msra.mxu0 0.0
        %6716 = vmatprep.mubr.f32.mxu0 0.0
        %6717 = vmatmul.mubr.f32.gmra.mrb[0].mxu0 %v6579
        %v6718 = vpop.f32.mrb[0].mxu0
        %v6719 = vadd.f32 0.0, %v6718
        %v6720 = vpop.f32.mrb[0].mxu0
        %v6721 = vadd.f32 0.0, %v6720
        %6722 = vdwg.mxu0
        %6723 = vmatprep.subr.mxu0 %v6569
        %6724 = vmatpush1.msra.mxu0 %v6568
        %6725 = vmatprep.subr.mxu0 0.0
        %6726 = vmatpush1.msra.mxu0 0.0
        %6727 = vmatprep.subr.mxu0 0.0
        %6728 = vmatpush1.msra.mxu0 0.0
        %6729 = vmatprep.subr.mxu0 0.0
        %6730 = vmatpush1.msra.mxu0 0.0
        %6731 = vmatprep.subr.mxu0 0.0
        %6732 = vmatpush1.msra.mxu0 0.0
        %6733 = vmatprep.subr.mxu0 0.0
        %6734 = vmatpush1.msra.mxu0 0.0
        %6735 = vmatprep.subr.mxu0 0.0
        %6736 = vmatpush1.msra.mxu0 0.0
        %6737 = vmatprep.subr.mxu0 0.0
        %6738 = vmatpush1.msra.mxu0 0.0
        %6739 = vmatprep.subr.mxu0 0.0
        %6740 = vmatpush1.msra.mxu0 0.0
        %6741 = vmatprep.subr.mxu0 0.0
        %6742 = vmatpush1.msra.mxu0 0.0
        %6743 = vmatprep.subr.mxu0 0.0
        %6744 = vmatpush1.msra.mxu0 0.0
        %6745 = vmatprep.subr.mxu0 0.0
        %6746 = vmatpush1.msra.mxu0 0.0
        %6747 = vmatprep.subr.mxu0 0.0
        %6748 = vmatpush1.msra.mxu0 0.0
        %6749 = vmatprep.subr.mxu0 0.0
        %6750 = vmatpush1.msra.mxu0 0.0
        %6751 = vmatprep.subr.mxu0 0.0
        %6752 = vmatpush1.msra.mxu0 0.0
        %6753 = vmatprep.subr.mxu0 0.0
        %6754 = vmatpush1.msra.mxu0 0.0
        %6755 = vmatprep.subr.mxu0 0.0
        %6756 = vmatpush1.msra.mxu0 0.0
        %6757 = vmatprep.subr.mxu0 0.0
        %6758 = vmatpush1.msra.mxu0 0.0
        %6759 = vmatprep.subr.mxu0 0.0
        %6760 = vmatpush1.msra.mxu0 0.0
        %6761 = vmatprep.subr.mxu0 0.0
        %6762 = vmatpush1.msra.mxu0 0.0
        %6763 = vmatprep.subr.mxu0 0.0
        %6764 = vmatpush1.msra.mxu0 0.0
        %6765 = vmatprep.subr.mxu0 0.0
        %6766 = vmatpush1.msra.mxu0 0.0
        %6767 = vmatprep.subr.mxu0 0.0
        %6768 = vmatpush1.msra.mxu0 0.0
        %6769 = vmatprep.subr.mxu0 0.0
        %6770 = vmatpush1.msra.mxu0 0.0
        %6771 = vmatprep.subr.mxu0 0.0
        %6772 = vmatpush1.msra.mxu0 0.0
        %6773 = vmatprep.subr.mxu0 0.0
        %6774 = vmatpush1.msra.mxu0 0.0
        %6775 = vmatprep.subr.mxu0 0.0
        %6776 = vmatpush1.msra.mxu0 0.0
        %6777 = vmatprep.subr.mxu0 0.0
        %6778 = vmatpush1.msra.mxu0 0.0
        %6779 = vmatprep.subr.mxu0 0.0
        %6780 = vmatpush1.msra.mxu0 0.0
        %6781 = vmatprep.subr.mxu0 0.0
        %6782 = vmatpush1.msra.mxu0 0.0
        %6783 = vmatprep.subr.mxu0 0.0
        %6784 = vmatpush1.msra.mxu0 0.0
        %6785 = vmatprep.subr.mxu0 0.0
        %6786 = vmatpush1.msra.mxu0 0.0
        %6787 = vmatprep.mubr.f32.mxu0 0.0
        %6788 = vmatmul.mubr.f32.gmra.mrb[0].mxu0 %v6579
        %v6789 = vpop.f32.mrb[0].mxu0
        %v6790 = vadd.f32 0.0, %v6789
        %v6791 = vpop.f32.mrb[0].mxu0
        %v6792 = vadd.f32 0.0, %v6791
        %6793 = vdwg.mxu0
        %6794 = vmatprep.subr.mxu0 0.0
        %6795 = vmatpush1.msra.mxu0 %v6570
        %6796 = vmatprep.subr.mxu0 0.0
        %6797 = vmatpush1.msra.mxu0 0.0
        %6798 = vmatprep.subr.mxu0 0.0
        %6799 = vmatpush1.msra.mxu0 0.0
        %6800 = vmatprep.subr.mxu0 0.0
        %6801 = vmatpush1.msra.mxu0 0.0
        %6802 = vmatprep.subr.mxu0 0.0
        %6803 = vmatpush1.msra.mxu0 0.0
        %6804 = vmatprep.subr.mxu0 0.0
        %6805 = vmatpush1.msra.mxu0 0.0
        %6806 = vmatprep.subr.mxu0 0.0
        %6807 = vmatpush1.msra.mxu0 0.0
        %6808 = vmatprep.subr.mxu0 0.0
        %6809 = vmatpush1.msra.mxu0 0.0
        %6810 = vmatprep.subr.mxu0 0.0
        %6811 = vmatpush1.msra.mxu0 0.0
        %6812 = vmatprep.subr.mxu0 0.0
        %6813 = vmatpush1.msra.mxu0 0.0
        %6814 = vmatprep.subr.mxu0 0.0
        %6815 = vmatpush1.msra.mxu0 0.0
        %6816 = vmatprep.subr.mxu0 0.0
        %6817 = vmatpush1.msra.mxu0 0.0
        %6818 = vmatprep.subr.mxu0 0.0
        %6819 = vmatpush1.msra.mxu0 0.0
        %6820 = vmatprep.subr.mxu0 0.0
        %6821 = vmatpush1.msra.mxu0 0.0
        %6822 = vmatprep.subr.mxu0 0.0
        %6823 = vmatpush1.msra.mxu0 0.0
        %6824 = vmatprep.subr.mxu0 0.0
        %6825 = vmatpush1.msra.mxu0 0.0
        %6826 = vmatprep.subr.mxu0 0.0
        %6827 = vmatpush1.msra.mxu0 0.0
        %6828 = vmatprep.subr.mxu0 0.0
        %6829 = vmatpush1.msra.mxu0 0.0
        %6830 = vmatprep.subr.mxu0 0.0
        %6831 = vmatpush1.msra.mxu0 0.0
        %6832 = vmatprep.subr.mxu0 0.0
        %6833 = vmatpush1.msra.mxu0 0.0
        %6834 = vmatprep.subr.mxu0 0.0
        %6835 = vmatpush1.msra.mxu0 0.0
        %6836 = vmatprep.subr.mxu0 0.0
        %6837 = vmatpush1.msra.mxu0 0.0
        %6838 = vmatprep.subr.mxu0 0.0
        %6839 = vmatpush1.msra.mxu0 0.0
        %6840 = vmatprep.subr.mxu0 0.0
        %6841 = vmatpush1.msra.mxu0 0.0
        %6842 = vmatprep.subr.mxu0 0.0
        %6843 = vmatpush1.msra.mxu0 0.0
        %6844 = vmatprep.subr.mxu0 0.0
        %6845 = vmatpush1.msra.mxu0 0.0
        %6846 = vmatprep.subr.mxu0 0.0
        %6847 = vmatpush1.msra.mxu0 0.0
        %6848 = vmatprep.subr.mxu0 0.0
        %6849 = vmatpush1.msra.mxu0 0.0
        %6850 = vmatprep.subr.mxu0 0.0
        %6851 = vmatpush1.msra.mxu0 0.0
        %6852 = vmatprep.subr.mxu0 0.0
        %6853 = vmatpush1.msra.mxu0 0.0
        %6854 = vmatprep.subr.mxu0 0.0
        %6855 = vmatpush1.msra.mxu0 0.0
        %6856 = vmatprep.subr.mxu0 0.0
        %6857 = vmatpush1.msra.mxu0 0.0
        %6858 = vmatprep.mubr.f32.mxu0 0.0
        %6859 = vmatmul.mubr.f32.gmra.mrb[0].mxu0 %v6579
        %v6860 = vpop.f32.mrb[0].mxu0
        %v6861 = vadd.f32 0.0, %v6860
        %v6862 = vpop.f32.mrb[0].mxu0
        %6863 = vdwg.mxu0
        %v6864 = vadd.f32 %v6538, %v6648
        %v6865 = vadd.f32 %v6539, %v6650
        %v6866 = vadd.f32 %v6540, %v6719
        %v6867 = vadd.f32 %v6541, %v6721
        %v6868 = vadd.f32 %v6542, %v6790
        %v6869 = vadd.f32 %v6543, %v6792
        %v6870 = vadd.f32 %v6544, %v6861
        %s6871 = scalar_lea.vmem %s1, 160
        %v6872 = vld [vmem:[%s6871] sm:$0xff]
        %6873 = vrot.lane.b32.xlu0 %v6203, 54
        %v6874 = vpop.permute.xlu0 %6873
        %6875 = vrot.lane.b32.xlu0 %v6204, 54
        %v6876 = vpop.permute.xlu0 %6875
        %6877 = vrot.lane.b32.xlu0 %v6205, 54
        %v6878 = vpop.permute.xlu0 %6877
        %6879 = vrot.lane.b32.xlu0 %v6206, 54
        %v6880 = vpop.permute.xlu0 %6879
        %6881 = vrot.lane.b32.xlu0 %v6207, 54
        %v6882 = vpop.permute.xlu0 %6881
        %6883 = vrot.lane.b32.xlu0 %v6208, 54
        %v6884 = vpop.permute.xlu0 %6883
        %6885 = vrot.lane.b32.xlu0 %v6209, 54
        %v6886 = vpop.permute.xlu0 %6885
        %6887 = vrot.lane.b32.xlu0 %v6210, 54
        %v6888 = vpop.permute.xlu0 %6887
        %vm6889 = vcmask 441344
        %v6890 = vsel %vm6889, %v6874, %v6876
        %v6891 = vsel %vm6889, %v6876, %v6878
        %v6892 = vsel %vm6889, %v6878, %v6880
        %v6893 = vsel %vm6889, %v6880, %v6882
        %v6894 = vsel %vm6889, %v6882, %v6884
        %v6895 = vsel %vm6889, %v6884, %v6886
        %v6896 = vsel %vm6889, %v6886, %v6888
        %v6905 = vsel %vm415, %v6872, 0
        %6907 = vmatprep.subr.mxu0 %v6891
        %6908 = vmatpush1.msra.mxu0 %v6890
        %6909 = vmatprep.subr.mxu0 0.0
        %6910 = vmatpush1.msra.mxu0 0.0
        %6911 = vmatprep.subr.mxu0 0.0
        %6912 = vmatpush1.msra.mxu0 0.0
        %6913 = vmatprep.subr.mxu0 0.0
        %6914 = vmatpush1.msra.mxu0 0.0
        %6915 = vmatprep.subr.mxu0 0.0
        %6916 = vmatpush1.msra.mxu0 0.0
        %6917 = vmatprep.subr.mxu0 0.0
        %6918 = vmatpush1.msra.mxu0 0.0
        %6919 = vmatprep.subr.mxu0 0.0
        %6920 = vmatpush1.msra.mxu0 0.0
        %6921 = vmatprep.subr.mxu0 0.0
        %6922 = vmatpush1.msra.mxu0 0.0
        %6923 = vmatprep.subr.mxu0 0.0
        %6924 = vmatpush1.msra.mxu0 0.0
        %6925 = vmatprep.subr.mxu0 0.0
        %6926 = vmatpush1.msra.mxu0 0.0
        %6927 = vmatprep.subr.mxu0 0.0
        %6928 = vmatpush1.msra.mxu0 0.0
        %6929 = vmatprep.subr.mxu0 0.0
        %6930 = vmatpush1.msra.mxu0 0.0
        %6931 = vmatprep.subr.mxu0 0.0
        %6932 = vmatpush1.msra.mxu0 0.0
        %6933 = vmatprep.subr.mxu0 0.0
        %6934 = vmatpush1.msra.mxu0 0.0
        %6935 = vmatprep.subr.mxu0 0.0
        %6936 = vmatpush1.msra.mxu0 0.0
        %6937 = vmatprep.subr.mxu0 0.0
        %6938 = vmatpush1.msra.mxu0 0.0
        %6939 = vmatprep.subr.mxu0 0.0
        %6940 = vmatpush1.msra.mxu0 0.0
        %6941 = vmatprep.subr.mxu0 0.0
        %6942 = vmatpush1.msra.mxu0 0.0
        %6943 = vmatprep.subr.mxu0 0.0
        %6944 = vmatpush1.msra.mxu0 0.0
        %6945 = vmatprep.subr.mxu0 0.0
        %6946 = vmatpush1.msra.mxu0 0.0
        %6947 = vmatprep.subr.mxu0 0.0
        %6948 = vmatpush1.msra.mxu0 0.0
        %6949 = vmatprep.subr.mxu0 0.0
        %6950 = vmatpush1.msra.mxu0 0.0
        %6951 = vmatprep.subr.mxu0 0.0
        %6952 = vmatpush1.msra.mxu0 0.0
        %6953 = vmatprep.subr.mxu0 0.0
        %6954 = vmatpush1.msra.mxu0 0.0
        %6955 = vmatprep.subr.mxu0 0.0
        %6956 = vmatpush1.msra.mxu0 0.0
        %6957 = vmatprep.subr.mxu0 0.0
        %6958 = vmatpush1.msra.mxu0 0.0
        %6959 = vmatprep.subr.mxu0 0.0
        %6960 = vmatpush1.msra.mxu0 0.0
        %6961 = vmatprep.subr.mxu0 0.0
        %6962 = vmatpush1.msra.mxu0 0.0
        %6963 = vmatprep.subr.mxu0 0.0
        %6964 = vmatpush1.msra.mxu0 0.0
        %6965 = vmatprep.subr.mxu0 0.0
        %6966 = vmatpush1.msra.mxu0 0.0
        %6967 = vmatprep.subr.mxu0 0.0
        %6968 = vmatpush1.msra.mxu0 0.0
        %6969 = vmatprep.subr.mxu0 0.0
        %6970 = vmatpush1.msra.mxu0 0.0
        %6971 = vmatprep.mubr.f32.mxu0 0.0
        %6972 = vmatmul.mubr.f32.gmra.mrb[0].mxu0 %v6905
        %v6973 = vpop.f32.mrb[0].mxu0
        %v6974 = vadd.f32 0.0, %v6973
        %v6975 = vpop.f32.mrb[0].mxu0
        %v6976 = vadd.f32 0.0, %v6975
        %6977 = vdwg.mxu0
        %6978 = vmatprep.subr.mxu0 %v6893
        %6979 = vmatpush1.msra.mxu0 %v6892
        %6980 = vmatprep.subr.mxu0 0.0
        %6981 = vmatpush1.msra.mxu0 0.0
        %6982 = vmatprep.subr.mxu0 0.0
        %6983 = vmatpush1.msra.mxu0 0.0
        %6984 = vmatprep.subr.mxu0 0.0
        %6985 = vmatpush1.msra.mxu0 0.0
        %6986 = vmatprep.subr.mxu0 0.0
        %6987 = vmatpush1.msra.mxu0 0.0
        %6988 = vmatprep.subr.mxu0 0.0
        %6989 = vmatpush1.msra.mxu0 0.0
        %6990 = vmatprep.subr.mxu0 0.0
        %6991 = vmatpush1.msra.mxu0 0.0
        %6992 = vmatprep.subr.mxu0 0.0
        %6993 = vmatpush1.msra.mxu0 0.0
        %6994 = vmatprep.subr.mxu0 0.0
        %6995 = vmatpush1.msra.mxu0 0.0
        %6996 = vmatprep.subr.mxu0 0.0
        %6997 = vmatpush1.msra.mxu0 0.0
        %6998 = vmatprep.subr.mxu0 0.0
        %6999 = vmatpush1.msra.mxu0 0.0
        %7000 = vmatprep.subr.mxu0 0.0
        %7001 = vmatpush1.msra.mxu0 0.0
        %7002 = vmatprep.subr.mxu0 0.0
        %7003 = vmatpush1.msra.mxu0 0.0
        %7004 = vmatprep.subr.mxu0 0.0
        %7005 = vmatpush1.msra.mxu0 0.0
        %7006 = vmatprep.subr.mxu0 0.0
        %7007 = vmatpush1.msra.mxu0 0.0
        %7008 = vmatprep.subr.mxu0 0.0
        %7009 = vmatpush1.msra.mxu0 0.0
        %7010 = vmatprep.subr.mxu0 0.0
        %7011 = vmatpush1.msra.mxu0 0.0
        %7012 = vmatprep.subr.mxu0 0.0
        %7013 = vmatpush1.msra.mxu0 0.0
        %7014 = vmatprep.subr.mxu0 0.0
        %7015 = vmatpush1.msra.mxu0 0.0
        %7016 = vmatprep.subr.mxu0 0.0
        %7017 = vmatpush1.msra.mxu0 0.0
        %7018 = vmatprep.subr.mxu0 0.0
        %7019 = vmatpush1.msra.mxu0 0.0
        %7020 = vmatprep.subr.mxu0 0.0
        %7021 = vmatpush1.msra.mxu0 0.0
        %7022 = vmatprep.subr.mxu0 0.0
        %7023 = vmatpush1.msra.mxu0 0.0
        %7024 = vmatprep.subr.mxu0 0.0
        %7025 = vmatpush1.msra.mxu0 0.0
        %7026 = vmatprep.subr.mxu0 0.0
        %7027 = vmatpush1.msra.mxu0 0.0
        %7028 = vmatprep.subr.mxu0 0.0
        %7029 = vmatpush1.msra.mxu0 0.0
        %7030 = vmatprep.subr.mxu0 0.0
        %7031 = vmatpush1.msra.mxu0 0.0
        %7032 = vmatprep.subr.mxu0 0.0
        %7033 = vmatpush1.msra.mxu0 0.0
        %7034 = vmatprep.subr.mxu0 0.0
        %7035 = vmatpush1.msra.mxu0 0.0
        %7036 = vmatprep.subr.mxu0 0.0
        %7037 = vmatpush1.msra.mxu0 0.0
        %7038 = vmatprep.subr.mxu0 0.0
        %7039 = vmatpush1.msra.mxu0 0.0
        %7040 = vmatprep.subr.mxu0 0.0
        %7041 = vmatpush1.msra.mxu0 0.0
        %7042 = vmatprep.mubr.f32.mxu0 0.0
        %7043 = vmatmul.mubr.f32.gmra.mrb[0].mxu0 %v6905
        %v7044 = vpop.f32.mrb[0].mxu0
        %v7045 = vadd.f32 0.0, %v7044
        %v7046 = vpop.f32.mrb[0].mxu0
        %v7047 = vadd.f32 0.0, %v7046
        %7048 = vdwg.mxu0
        %7049 = vmatprep.subr.mxu0 %v6895
        %7050 = vmatpush1.msra.mxu0 %v6894
        %7051 = vmatprep.subr.mxu0 0.0
        %7052 = vmatpush1.msra.mxu0 0.0
        %7053 = vmatprep.subr.mxu0 0.0
        %7054 = vmatpush1.msra.mxu0 0.0
        %7055 = vmatprep.subr.mxu0 0.0
        %7056 = vmatpush1.msra.mxu0 0.0
        %7057 = vmatprep.subr.mxu0 0.0
        %7058 = vmatpush1.msra.mxu0 0.0
        %7059 = vmatprep.subr.mxu0 0.0
        %7060 = vmatpush1.msra.mxu0 0.0
        %7061 = vmatprep.subr.mxu0 0.0
        %7062 = vmatpush1.msra.mxu0 0.0
        %7063 = vmatprep.subr.mxu0 0.0
        %7064 = vmatpush1.msra.mxu0 0.0
        %7065 = vmatprep.subr.mxu0 0.0
        %7066 = vmatpush1.msra.mxu0 0.0
        %7067 = vmatprep.subr.mxu0 0.0
        %7068 = vmatpush1.msra.mxu0 0.0
        %7069 = vmatprep.subr.mxu0 0.0
        %7070 = vmatpush1.msra.mxu0 0.0
        %7071 = vmatprep.subr.mxu0 0.0
        %7072 = vmatpush1.msra.mxu0 0.0
        %7073 = vmatprep.subr.mxu0 0.0
        %7074 = vmatpush1.msra.mxu0 0.0
        %7075 = vmatprep.subr.mxu0 0.0
        %7076 = vmatpush1.msra.mxu0 0.0
        %7077 = vmatprep.subr.mxu0 0.0
        %7078 = vmatpush1.msra.mxu0 0.0
        %7079 = vmatprep.subr.mxu0 0.0
        %7080 = vmatpush1.msra.mxu0 0.0
        %7081 = vmatprep.subr.mxu0 0.0
        %7082 = vmatpush1.msra.mxu0 0.0
        %7083 = vmatprep.subr.mxu0 0.0
        %7084 = vmatpush1.msra.mxu0 0.0
        %7085 = vmatprep.subr.mxu0 0.0
        %7086 = vmatpush1.msra.mxu0 0.0
        %7087 = vmatprep.subr.mxu0 0.0
        %7088 = vmatpush1.msra.mxu0 0.0
        %7089 = vmatprep.subr.mxu0 0.0
        %7090 = vmatpush1.msra.mxu0 0.0
        %7091 = vmatprep.subr.mxu0 0.0
        %7092 = vmatpush1.msra.mxu0 0.0
        %7093 = vmatprep.subr.mxu0 0.0
        %7094 = vmatpush1.msra.mxu0 0.0
        %7095 = vmatprep.subr.mxu0 0.0
        %7096 = vmatpush1.msra.mxu0 0.0
        %7097 = vmatprep.subr.mxu0 0.0
        %7098 = vmatpush1.msra.mxu0 0.0
        %7099 = vmatprep.subr.mxu0 0.0
        %7100 = vmatpush1.msra.mxu0 0.0
        %7101 = vmatprep.subr.mxu0 0.0
        %7102 = vmatpush1.msra.mxu0 0.0
        %7103 = vmatprep.subr.mxu0 0.0
        %7104 = vmatpush1.msra.mxu0 0.0
        %7105 = vmatprep.subr.mxu0 0.0
        %7106 = vmatpush1.msra.mxu0 0.0
        %7107 = vmatprep.subr.mxu0 0.0
        %7108 = vmatpush1.msra.mxu0 0.0
        %7109 = vmatprep.subr.mxu0 0.0
        %7110 = vmatpush1.msra.mxu0 0.0
        %7111 = vmatprep.subr.mxu0 0.0
        %7112 = vmatpush1.msra.mxu0 0.0
        %7113 = vmatprep.mubr.f32.mxu0 0.0
        %7114 = vmatmul.mubr.f32.gmra.mrb[0].mxu0 %v6905
        %v7115 = vpop.f32.mrb[0].mxu0
        %v7116 = vadd.f32 0.0, %v7115
        %v7117 = vpop.f32.mrb[0].mxu0
        %v7118 = vadd.f32 0.0, %v7117
        %7119 = vdwg.mxu0
        %7120 = vmatprep.subr.mxu0 0.0
        %7121 = vmatpush1.msra.mxu0 %v6896
        %7122 = vmatprep.subr.mxu0 0.0
        %7123 = vmatpush1.msra.mxu0 0.0
        %7124 = vmatprep.subr.mxu0 0.0
        %7125 = vmatpush1.msra.mxu0 0.0
        %7126 = vmatprep.subr.mxu0 0.0
        %7127 = vmatpush1.msra.mxu0 0.0
        %7128 = vmatprep.subr.mxu0 0.0
        %7129 = vmatpush1.msra.mxu0 0.0
        %7130 = vmatprep.subr.mxu0 0.0
        %7131 = vmatpush1.msra.mxu0 0.0
        %7132 = vmatprep.subr.mxu0 0.0
        %7133 = vmatpush1.msra.mxu0 0.0
        %7134 = vmatprep.subr.mxu0 0.0
        %7135 = vmatpush1.msra.mxu0 0.0
        %7136 = vmatprep.subr.mxu0 0.0
        %7137 = vmatpush1.msra.mxu0 0.0
        %7138 = vmatprep.subr.mxu0 0.0
        %7139 = vmatpush1.msra.mxu0 0.0
        %7140 = vmatprep.subr.mxu0 0.0
        %7141 = vmatpush1.msra.mxu0 0.0
        %7142 = vmatprep.subr.mxu0 0.0
        %7143 = vmatpush1.msra.mxu0 0.0
        %7144 = vmatprep.subr.mxu0 0.0
        %7145 = vmatpush1.msra.mxu0 0.0
        %7146 = vmatprep.subr.mxu0 0.0
        %7147 = vmatpush1.msra.mxu0 0.0
        %7148 = vmatprep.subr.mxu0 0.0
        %7149 = vmatpush1.msra.mxu0 0.0
        %7150 = vmatprep.subr.mxu0 0.0
        %7151 = vmatpush1.msra.mxu0 0.0
        %7152 = vmatprep.subr.mxu0 0.0
        %7153 = vmatpush1.msra.mxu0 0.0
        %7154 = vmatprep.subr.mxu0 0.0
        %7155 = vmatpush1.msra.mxu0 0.0
        %7156 = vmatprep.subr.mxu0 0.0
        %7157 = vmatpush1.msra.mxu0 0.0
        %7158 = vmatprep.subr.mxu0 0.0
        %7159 = vmatpush1.msra.mxu0 0.0
        %7160 = vmatprep.subr.mxu0 0.0
        %7161 = vmatpush1.msra.mxu0 0.0
        %7162 = vmatprep.subr.mxu0 0.0
        %7163 = vmatpush1.msra.mxu0 0.0
        %7164 = vmatprep.subr.mxu0 0.0
        %7165 = vmatpush1.msra.mxu0 0.0
        %7166 = vmatprep.subr.mxu0 0.0
        %7167 = vmatpush1.msra.mxu0 0.0
        %7168 = vmatprep.subr.mxu0 0.0
        %7169 = vmatpush1.msra.mxu0 0.0
        %7170 = vmatprep.subr.mxu0 0.0
        %7171 = vmatpush1.msra.mxu0 0.0
        %7172 = vmatprep.subr.mxu0 0.0
        %7173 = vmatpush1.msra.mxu0 0.0
        %7174 = vmatprep.subr.mxu0 0.0
        %7175 = vmatpush1.msra.mxu0 0.0
        %7176 = vmatprep.subr.mxu0 0.0
        %7177 = vmatpush1.msra.mxu0 0.0
        %7178 = vmatprep.subr.mxu0 0.0
        %7179 = vmatpush1.msra.mxu0 0.0
        %7180 = vmatprep.subr.mxu0 0.0
        %7181 = vmatpush1.msra.mxu0 0.0
        %7182 = vmatprep.subr.mxu0 0.0
        %7183 = vmatpush1.msra.mxu0 0.0
        %7184 = vmatprep.mubr.f32.mxu0 0.0
        %7185 = vmatmul.mubr.f32.gmra.mrb[0].mxu0 %v6905
        %v7186 = vpop.f32.mrb[0].mxu0
        %v7187 = vadd.f32 0.0, %v7186
        %v7188 = vpop.f32.mrb[0].mxu0
        %7189 = vdwg.mxu0
        %v7190 = vadd.f32 %v6864, %v6974
        %v7191 = vadd.f32 %v6865, %v6976
        %v7192 = vadd.f32 %v6866, %v7045
        %v7193 = vadd.f32 %v6867, %v7047
        %v7194 = vadd.f32 %v6868, %v7116
        %v7195 = vadd.f32 %v6869, %v7118
        %v7196 = vadd.f32 %v6870, %v7187
        %s7197 = scalar_lea.vmem %s1, 168
        %v7198 = vld [vmem:[%s7197] sm:$0xff]
        %7199 = vrot.lane.b32.xlu0 %v6203, 46
        %v7200 = vpop.permute.xlu0 %7199
        %7201 = vrot.lane.b32.xlu0 %v6204, 46
        %v7202 = vpop.permute.xlu0 %7201
        %7203 = vrot.lane.b32.xlu0 %v6205, 46
        %v7204 = vpop.permute.xlu0 %7203
        %7205 = vrot.lane.b32.xlu0 %v6206, 46
        %v7206 = vpop.permute.xlu0 %7205
        %7207 = vrot.lane.b32.xlu0 %v6207, 46
        %v7208 = vpop.permute.xlu0 %7207
        %7209 = vrot.lane.b32.xlu0 %v6208, 46
        %v7210 = vpop.permute.xlu0 %7209
        %7211 = vrot.lane.b32.xlu0 %v6209, 46
        %v7212 = vpop.permute.xlu0 %7211
        %7213 = vrot.lane.b32.xlu0 %v6210, 46
        %v7214 = vpop.permute.xlu0 %7213
        %vm7215 = vcmask 375808
        %v7216 = vsel %vm7215, %v7200, %v7202
        %v7217 = vsel %vm7215, %v7202, %v7204
        %v7218 = vsel %vm7215, %v7204, %v7206
        %v7219 = vsel %vm7215, %v7206, %v7208
        %v7220 = vsel %vm7215, %v7208, %v7210
        %v7221 = vsel %vm7215, %v7210, %v7212
        %v7222 = vsel %vm7215, %v7212, %v7214
        %v7231 = vsel %vm415, %v7198, 0
        %7233 = vmatprep.subr.mxu0 %v7217
        %7234 = vmatpush1.msra.mxu0 %v7216
        %7235 = vmatprep.subr.mxu0 0.0
        %7236 = vmatpush1.msra.mxu0 0.0
        %7237 = vmatprep.subr.mxu0 0.0
        %7238 = vmatpush1.msra.mxu0 0.0
        %7239 = vmatprep.subr.mxu0 0.0
        %7240 = vmatpush1.msra.mxu0 0.0
        %7241 = vmatprep.subr.mxu0 0.0
        %7242 = vmatpush1.msra.mxu0 0.0
        %7243 = vmatprep.subr.mxu0 0.0
        %7244 = vmatpush1.msra.mxu0 0.0
        %7245 = vmatprep.subr.mxu0 0.0
        %7246 = vmatpush1.msra.mxu0 0.0
        %7247 = vmatprep.subr.mxu0 0.0
        %7248 = vmatpush1.msra.mxu0 0.0
        %7249 = vmatprep.subr.mxu0 0.0
        %7250 = vmatpush1.msra.mxu0 0.0
        %7251 = vmatprep.subr.mxu0 0.0
        %7252 = vmatpush1.msra.mxu0 0.0
        %7253 = vmatprep.subr.mxu0 0.0
        %7254 = vmatpush1.msra.mxu0 0.0
        %7255 = vmatprep.subr.mxu0 0.0
        %7256 = vmatpush1.msra.mxu0 0.0
        %7257 = vmatprep.subr.mxu0 0.0
        %7258 = vmatpush1.msra.mxu0 0.0
        %7259 = vmatprep.subr.mxu0 0.0
        %7260 = vmatpush1.msra.mxu0 0.0
        %7261 = vmatprep.subr.mxu0 0.0
        %7262 = vmatpush1.msra.mxu0 0.0
        %7263 = vmatprep.subr.mxu0 0.0
        %7264 = vmatpush1.msra.mxu0 0.0
        %7265 = vmatprep.subr.mxu0 0.0
        %7266 = vmatpush1.msra.mxu0 0.0
        %7267 = vmatprep.subr.mxu0 0.0
        %7268 = vmatpush1.msra.mxu0 0.0
        %7269 = vmatprep.subr.mxu0 0.0
        %7270 = vmatpush1.msra.mxu0 0.0
        %7271 = vmatprep.subr.mxu0 0.0
        %7272 = vmatpush1.msra.mxu0 0.0
        %7273 = vmatprep.subr.mxu0 0.0
        %7274 = vmatpush1.msra.mxu0 0.0
        %7275 = vmatprep.subr.mxu0 0.0
        %7276 = vmatpush1.msra.mxu0 0.0
        %7277 = vmatprep.subr.mxu0 0.0
        %7278 = vmatpush1.msra.mxu0 0.0
        %7279 = vmatprep.subr.mxu0 0.0
        %7280 = vmatpush1.msra.mxu0 0.0
        %7281 = vmatprep.subr.mxu0 0.0
        %7282 = vmatpush1.msra.mxu0 0.0
        %7283 = vmatprep.subr.mxu0 0.0
        %7284 = vmatpush1.msra.mxu0 0.0
        %7285 = vmatprep.subr.mxu0 0.0
        %7286 = vmatpush1.msra.mxu0 0.0
        %7287 = vmatprep.subr.mxu0 0.0
        %7288 = vmatpush1.msra.mxu0 0.0
        %7289 = vmatprep.subr.mxu0 0.0
        %7290 = vmatpush1.msra.mxu0 0.0
        %7291 = vmatprep.subr.mxu0 0.0
        %7292 = vmatpush1.msra.mxu0 0.0
        %7293 = vmatprep.subr.mxu0 0.0
        %7294 = vmatpush1.msra.mxu0 0.0
        %7295 = vmatprep.subr.mxu0 0.0
        %7296 = vmatpush1.msra.mxu0 0.0
        %7297 = vmatprep.mubr.f32.mxu0 0.0
        %7298 = vmatmul.mubr.f32.gmra.mrb[0].mxu0 %v7231
        %v7299 = vpop.f32.mrb[0].mxu0
        %v7300 = vadd.f32 0.0, %v7299
        %v7301 = vpop.f32.mrb[0].mxu0
        %v7302 = vadd.f32 0.0, %v7301
        %7303 = vdwg.mxu0
        %7304 = vmatprep.subr.mxu0 %v7219
        %7305 = vmatpush1.msra.mxu0 %v7218
        %7306 = vmatprep.subr.mxu0 0.0
        %7307 = vmatpush1.msra.mxu0 0.0
        %7308 = vmatprep.subr.mxu0 0.0
        %7309 = vmatpush1.msra.mxu0 0.0
        %7310 = vmatprep.subr.mxu0 0.0
        %7311 = vmatpush1.msra.mxu0 0.0
        %7312 = vmatprep.subr.mxu0 0.0
        %7313 = vmatpush1.msra.mxu0 0.0
        %7314 = vmatprep.subr.mxu0 0.0
        %7315 = vmatpush1.msra.mxu0 0.0
        %7316 = vmatprep.subr.mxu0 0.0
        %7317 = vmatpush1.msra.mxu0 0.0
        %7318 = vmatprep.subr.mxu0 0.0
        %7319 = vmatpush1.msra.mxu0 0.0
        %7320 = vmatprep.subr.mxu0 0.0
        %7321 = vmatpush1.msra.mxu0 0.0
        %7322 = vmatprep.subr.mxu0 0.0
        %7323 = vmatpush1.msra.mxu0 0.0
        %7324 = vmatprep.subr.mxu0 0.0
        %7325 = vmatpush1.msra.mxu0 0.0
        %7326 = vmatprep.subr.mxu0 0.0
        %7327 = vmatpush1.msra.mxu0 0.0
        %7328 = vmatprep.subr.mxu0 0.0
        %7329 = vmatpush1.msra.mxu0 0.0
        %7330 = vmatprep.subr.mxu0 0.0
        %7331 = vmatpush1.msra.mxu0 0.0
        %7332 = vmatprep.subr.mxu0 0.0
        %7333 = vmatpush1.msra.mxu0 0.0
        %7334 = vmatprep.subr.mxu0 0.0
        %7335 = vmatpush1.msra.mxu0 0.0
        %7336 = vmatprep.subr.mxu0 0.0
        %7337 = vmatpush1.msra.mxu0 0.0
        %7338 = vmatprep.subr.mxu0 0.0
        %7339 = vmatpush1.msra.mxu0 0.0
        %7340 = vmatprep.subr.mxu0 0.0
        %7341 = vmatpush1.msra.mxu0 0.0
        %7342 = vmatprep.subr.mxu0 0.0
        %7343 = vmatpush1.msra.mxu0 0.0
        %7344 = vmatprep.subr.mxu0 0.0
        %7345 = vmatpush1.msra.mxu0 0.0
        %7346 = vmatprep.subr.mxu0 0.0
        %7347 = vmatpush1.msra.mxu0 0.0
        %7348 = vmatprep.subr.mxu0 0.0
        %7349 = vmatpush1.msra.mxu0 0.0
        %7350 = vmatprep.subr.mxu0 0.0
        %7351 = vmatpush1.msra.mxu0 0.0
        %7352 = vmatprep.subr.mxu0 0.0
        %7353 = vmatpush1.msra.mxu0 0.0
        %7354 = vmatprep.subr.mxu0 0.0
        %7355 = vmatpush1.msra.mxu0 0.0
        %7356 = vmatprep.subr.mxu0 0.0
        %7357 = vmatpush1.msra.mxu0 0.0
        %7358 = vmatprep.subr.mxu0 0.0
        %7359 = vmatpush1.msra.mxu0 0.0
        %7360 = vmatprep.subr.mxu0 0.0
        %7361 = vmatpush1.msra.mxu0 0.0
        %7362 = vmatprep.subr.mxu0 0.0
        %7363 = vmatpush1.msra.mxu0 0.0
        %7364 = vmatprep.subr.mxu0 0.0
        %7365 = vmatpush1.msra.mxu0 0.0
        %7366 = vmatprep.subr.mxu0 0.0
        %7367 = vmatpush1.msra.mxu0 0.0
        %7368 = vmatprep.mubr.f32.mxu0 0.0
        %7369 = vmatmul.mubr.f32.gmra.mrb[0].mxu0 %v7231
        %v7370 = vpop.f32.mrb[0].mxu0
        %v7371 = vadd.f32 0.0, %v7370
        %v7372 = vpop.f32.mrb[0].mxu0
        %v7373 = vadd.f32 0.0, %v7372
        %7374 = vdwg.mxu0
        %7375 = vmatprep.subr.mxu0 %v7221
        %7376 = vmatpush1.msra.mxu0 %v7220
        %7377 = vmatprep.subr.mxu0 0.0
        %7378 = vmatpush1.msra.mxu0 0.0
        %7379 = vmatprep.subr.mxu0 0.0
        %7380 = vmatpush1.msra.mxu0 0.0
        %7381 = vmatprep.subr.mxu0 0.0
        %7382 = vmatpush1.msra.mxu0 0.0
        %7383 = vmatprep.subr.mxu0 0.0
        %7384 = vmatpush1.msra.mxu0 0.0
        %7385 = vmatprep.subr.mxu0 0.0
        %7386 = vmatpush1.msra.mxu0 0.0
        %7387 = vmatprep.subr.mxu0 0.0
        %7388 = vmatpush1.msra.mxu0 0.0
        %7389 = vmatprep.subr.mxu0 0.0
        %7390 = vmatpush1.msra.mxu0 0.0
        %7391 = vmatprep.subr.mxu0 0.0
        %7392 = vmatpush1.msra.mxu0 0.0
        %7393 = vmatprep.subr.mxu0 0.0
        %7394 = vmatpush1.msra.mxu0 0.0
        %7395 = vmatprep.subr.mxu0 0.0
        %7396 = vmatpush1.msra.mxu0 0.0
        %7397 = vmatprep.subr.mxu0 0.0
        %7398 = vmatpush1.msra.mxu0 0.0
        %7399 = vmatprep.subr.mxu0 0.0
        %7400 = vmatpush1.msra.mxu0 0.0
        %7401 = vmatprep.subr.mxu0 0.0
        %7402 = vmatpush1.msra.mxu0 0.0
        %7403 = vmatprep.subr.mxu0 0.0
        %7404 = vmatpush1.msra.mxu0 0.0
        %7405 = vmatprep.subr.mxu0 0.0
        %7406 = vmatpush1.msra.mxu0 0.0
        %7407 = vmatprep.subr.mxu0 0.0
        %7408 = vmatpush1.msra.mxu0 0.0
        %7409 = vmatprep.subr.mxu0 0.0
        %7410 = vmatpush1.msra.mxu0 0.0
        %7411 = vmatprep.subr.mxu0 0.0
        %7412 = vmatpush1.msra.mxu0 0.0
        %7413 = vmatprep.subr.mxu0 0.0
        %7414 = vmatpush1.msra.mxu0 0.0
        %7415 = vmatprep.subr.mxu0 0.0
        %7416 = vmatpush1.msra.mxu0 0.0
        %7417 = vmatprep.subr.mxu0 0.0
        %7418 = vmatpush1.msra.mxu0 0.0
        %7419 = vmatprep.subr.mxu0 0.0
        %7420 = vmatpush1.msra.mxu0 0.0
        %7421 = vmatprep.subr.mxu0 0.0
        %7422 = vmatpush1.msra.mxu0 0.0
        %7423 = vmatprep.subr.mxu0 0.0
        %7424 = vmatpush1.msra.mxu0 0.0
        %7425 = vmatprep.subr.mxu0 0.0
        %7426 = vmatpush1.msra.mxu0 0.0
        %7427 = vmatprep.subr.mxu0 0.0
        %7428 = vmatpush1.msra.mxu0 0.0
        %7429 = vmatprep.subr.mxu0 0.0
        %7430 = vmatpush1.msra.mxu0 0.0
        %7431 = vmatprep.subr.mxu0 0.0
        %7432 = vmatpush1.msra.mxu0 0.0
        %7433 = vmatprep.subr.mxu0 0.0
        %7434 = vmatpush1.msra.mxu0 0.0
        %7435 = vmatprep.subr.mxu0 0.0
        %7436 = vmatpush1.msra.mxu0 0.0
        %7437 = vmatprep.subr.mxu0 0.0
        %7438 = vmatpush1.msra.mxu0 0.0
        %7439 = vmatprep.mubr.f32.mxu0 0.0
        %7440 = vmatmul.mubr.f32.gmra.mrb[0].mxu0 %v7231
        %v7441 = vpop.f32.mrb[0].mxu0
        %v7442 = vadd.f32 0.0, %v7441
        %v7443 = vpop.f32.mrb[0].mxu0
        %v7444 = vadd.f32 0.0, %v7443
        %7445 = vdwg.mxu0
        %7446 = vmatprep.subr.mxu0 0.0
        %7447 = vmatpush1.msra.mxu0 %v7222
        %7448 = vmatprep.subr.mxu0 0.0
        %7449 = vmatpush1.msra.mxu0 0.0
        %7450 = vmatprep.subr.mxu0 0.0
        %7451 = vmatpush1.msra.mxu0 0.0
        %7452 = vmatprep.subr.mxu0 0.0
        %7453 = vmatpush1.msra.mxu0 0.0
        %7454 = vmatprep.subr.mxu0 0.0
        %7455 = vmatpush1.msra.mxu0 0.0
        %7456 = vmatprep.subr.mxu0 0.0
        %7457 = vmatpush1.msra.mxu0 0.0
        %7458 = vmatprep.subr.mxu0 0.0
        %7459 = vmatpush1.msra.mxu0 0.0
        %7460 = vmatprep.subr.mxu0 0.0
        %7461 = vmatpush1.msra.mxu0 0.0
        %7462 = vmatprep.subr.mxu0 0.0
        %7463 = vmatpush1.msra.mxu0 0.0
        %7464 = vmatprep.subr.mxu0 0.0
        %7465 = vmatpush1.msra.mxu0 0.0
        %7466 = vmatprep.subr.mxu0 0.0
        %7467 = vmatpush1.msra.mxu0 0.0
        %7468 = vmatprep.subr.mxu0 0.0
        %7469 = vmatpush1.msra.mxu0 0.0
        %7470 = vmatprep.subr.mxu0 0.0
        %7471 = vmatpush1.msra.mxu0 0.0
        %7472 = vmatprep.subr.mxu0 0.0
        %7473 = vmatpush1.msra.mxu0 0.0
        %7474 = vmatprep.subr.mxu0 0.0
        %7475 = vmatpush1.msra.mxu0 0.0
        %7476 = vmatprep.subr.mxu0 0.0
        %7477 = vmatpush1.msra.mxu0 0.0
        %7478 = vmatprep.subr.mxu0 0.0
        %7479 = vmatpush1.msra.mxu0 0.0
        %7480 = vmatprep.subr.mxu0 0.0
        %7481 = vmatpush1.msra.mxu0 0.0
        %7482 = vmatprep.subr.mxu0 0.0
        %7483 = vmatpush1.msra.mxu0 0.0
        %7484 = vmatprep.subr.mxu0 0.0
        %7485 = vmatpush1.msra.mxu0 0.0
        %7486 = vmatprep.subr.mxu0 0.0
        %7487 = vmatpush1.msra.mxu0 0.0
        %7488 = vmatprep.subr.mxu0 0.0
        %7489 = vmatpush1.msra.mxu0 0.0
        %7490 = vmatprep.subr.mxu0 0.0
        %7491 = vmatpush1.msra.mxu0 0.0
        %7492 = vmatprep.subr.mxu0 0.0
        %7493 = vmatpush1.msra.mxu0 0.0
        %7494 = vmatprep.subr.mxu0 0.0
        %7495 = vmatpush1.msra.mxu0 0.0
        %7496 = vmatprep.subr.mxu0 0.0
        %7497 = vmatpush1.msra.mxu0 0.0
        %7498 = vmatprep.subr.mxu0 0.0
        %7499 = vmatpush1.msra.mxu0 0.0
        %7500 = vmatprep.subr.mxu0 0.0
        %7501 = vmatpush1.msra.mxu0 0.0
        %7502 = vmatprep.subr.mxu0 0.0
        %7503 = vmatpush1.msra.mxu0 0.0
        %7504 = vmatprep.subr.mxu0 0.0
        %7505 = vmatpush1.msra.mxu0 0.0
        %7506 = vmatprep.subr.mxu0 0.0
        %7507 = vmatpush1.msra.mxu0 0.0
        %7508 = vmatprep.subr.mxu0 0.0
        %7509 = vmatpush1.msra.mxu0 0.0
        %7510 = vmatprep.mubr.f32.mxu0 0.0
        %7511 = vmatmul.mubr.f32.gmra.mrb[0].mxu0 %v7231
        %v7512 = vpop.f32.mrb[0].mxu0
        %v7513 = vadd.f32 0.0, %v7512
        %v7514 = vpop.f32.mrb[0].mxu0
        %7515 = vdwg.mxu0
        %v7516 = vadd.f32 %v7190, %v7300
        %v7517 = vadd.f32 %v7191, %v7302
        %v7518 = vadd.f32 %v7192, %v7371
        %v7519 = vadd.f32 %v7193, %v7373
        %v7520 = vadd.f32 %v7194, %v7442
        %v7521 = vadd.f32 %v7195, %v7444
        %v7522 = vadd.f32 %v7196, %v7513
        %s7523 = scalar_lea.vmem %s1, 176
        %v7524 = vld [vmem:[%s7523] sm:$0xff]
        %7525 = vrot.lane.b32.xlu0 %v6203, 45
        %v7526 = vpop.permute.xlu0 %7525
        %7527 = vrot.lane.b32.xlu0 %v6204, 45
        %v7528 = vpop.permute.xlu0 %7527
        %7529 = vrot.lane.b32.xlu0 %v6205, 45
        %v7530 = vpop.permute.xlu0 %7529
        %7531 = vrot.lane.b32.xlu0 %v6206, 45
        %v7532 = vpop.permute.xlu0 %7531
        %7533 = vrot.lane.b32.xlu0 %v6207, 45
        %v7534 = vpop.permute.xlu0 %7533
        %7535 = vrot.lane.b32.xlu0 %v6208, 45
        %v7536 = vpop.permute.xlu0 %7535
        %7537 = vrot.lane.b32.xlu0 %v6209, 45
        %v7538 = vpop.permute.xlu0 %7537
        %7539 = vrot.lane.b32.xlu0 %v6210, 45
        %v7540 = vpop.permute.xlu0 %7539
        %vm7541 = vcmask 367616
        %v7542 = vsel %vm7541, %v7526, %v7528
        %v7543 = vsel %vm7541, %v7528, %v7530
        %v7544 = vsel %vm7541, %v7530, %v7532
        %v7545 = vsel %vm7541, %v7532, %v7534
        %v7546 = vsel %vm7541, %v7534, %v7536
        %v7547 = vsel %vm7541, %v7536, %v7538
        %v7548 = vsel %vm7541, %v7538, %v7540
        %v7557 = vsel %vm415, %v7524, 0
        %7559 = vmatprep.subr.mxu0 %v7543
        %7560 = vmatpush1.msra.mxu0 %v7542
        %7561 = vmatprep.subr.mxu0 0.0
        %7562 = vmatpush1.msra.mxu0 0.0
        %7563 = vmatprep.subr.mxu0 0.0
        %7564 = vmatpush1.msra.mxu0 0.0
        %7565 = vmatprep.subr.mxu0 0.0
        %7566 = vmatpush1.msra.mxu0 0.0
        %7567 = vmatprep.subr.mxu0 0.0
        %7568 = vmatpush1.msra.mxu0 0.0
        %7569 = vmatprep.subr.mxu0 0.0
        %7570 = vmatpush1.msra.mxu0 0.0
        %7571 = vmatprep.subr.mxu0 0.0
        %7572 = vmatpush1.msra.mxu0 0.0
        %7573 = vmatprep.subr.mxu0 0.0
        %7574 = vmatpush1.msra.mxu0 0.0
        %7575 = vmatprep.subr.mxu0 0.0
        %7576 = vmatpush1.msra.mxu0 0.0
        %7577 = vmatprep.subr.mxu0 0.0
        %7578 = vmatpush1.msra.mxu0 0.0
        %7579 = vmatprep.subr.mxu0 0.0
        %7580 = vmatpush1.msra.mxu0 0.0
        %7581 = vmatprep.subr.mxu0 0.0
        %7582 = vmatpush1.msra.mxu0 0.0
        %7583 = vmatprep.subr.mxu0 0.0
        %7584 = vmatpush1.msra.mxu0 0.0
        %7585 = vmatprep.subr.mxu0 0.0
        %7586 = vmatpush1.msra.mxu0 0.0
        %7587 = vmatprep.subr.mxu0 0.0
        %7588 = vmatpush1.msra.mxu0 0.0
        %7589 = vmatprep.subr.mxu0 0.0
        %7590 = vmatpush1.msra.mxu0 0.0
        %7591 = vmatprep.subr.mxu0 0.0
        %7592 = vmatpush1.msra.mxu0 0.0
        %7593 = vmatprep.subr.mxu0 0.0
        %7594 = vmatpush1.msra.mxu0 0.0
        %7595 = vmatprep.subr.mxu0 0.0
        %7596 = vmatpush1.msra.mxu0 0.0
        %7597 = vmatprep.subr.mxu0 0.0
        %7598 = vmatpush1.msra.mxu0 0.0
        %7599 = vmatprep.subr.mxu0 0.0
        %7600 = vmatpush1.msra.mxu0 0.0
        %7601 = vmatprep.subr.mxu0 0.0
        %7602 = vmatpush1.msra.mxu0 0.0
        %7603 = vmatprep.subr.mxu0 0.0
        %7604 = vmatpush1.msra.mxu0 0.0
        %7605 = vmatprep.subr.mxu0 0.0
        %7606 = vmatpush1.msra.mxu0 0.0
        %7607 = vmatprep.subr.mxu0 0.0
        %7608 = vmatpush1.msra.mxu0 0.0
        %7609 = vmatprep.subr.mxu0 0.0
        %7610 = vmatpush1.msra.mxu0 0.0
        %7611 = vmatprep.subr.mxu0 0.0
        %7612 = vmatpush1.msra.mxu0 0.0
        %7613 = vmatprep.subr.mxu0 0.0
        %7614 = vmatpush1.msra.mxu0 0.0
        %7615 = vmatprep.subr.mxu0 0.0
        %7616 = vmatpush1.msra.mxu0 0.0
        %7617 = vmatprep.subr.mxu0 0.0
        %7618 = vmatpush1.msra.mxu0 0.0
        %7619 = vmatprep.subr.mxu0 0.0
        %7620 = vmatpush1.msra.mxu0 0.0
        %7621 = vmatprep.subr.mxu0 0.0
        %7622 = vmatpush1.msra.mxu0 0.0
        %7623 = vmatprep.mubr.f32.mxu0 0.0
        %7624 = vmatmul.mubr.f32.gmra.mrb[0].mxu0 %v7557
        %v7625 = vpop.f32.mrb[0].mxu0
        %v7626 = vadd.f32 0.0, %v7625
        %v7627 = vpop.f32.mrb[0].mxu0
        %v7628 = vadd.f32 0.0, %v7627
        %7629 = vdwg.mxu0
        %7630 = vmatprep.subr.mxu0 %v7545
        %7631 = vmatpush1.msra.mxu0 %v7544
        %7632 = vmatprep.subr.mxu0 0.0
        %7633 = vmatpush1.msra.mxu0 0.0
        %7634 = vmatprep.subr.mxu0 0.0
        %7635 = vmatpush1.msra.mxu0 0.0
        %7636 = vmatprep.subr.mxu0 0.0
        %7637 = vmatpush1.msra.mxu0 0.0
        %7638 = vmatprep.subr.mxu0 0.0
        %7639 = vmatpush1.msra.mxu0 0.0
        %7640 = vmatprep.subr.mxu0 0.0
        %7641 = vmatpush1.msra.mxu0 0.0
        %7642 = vmatprep.subr.mxu0 0.0
        %7643 = vmatpush1.msra.mxu0 0.0
        %7644 = vmatprep.subr.mxu0 0.0
        %7645 = vmatpush1.msra.mxu0 0.0
        %7646 = vmatprep.subr.mxu0 0.0
        %7647 = vmatpush1.msra.mxu0 0.0
        %7648 = vmatprep.subr.mxu0 0.0
        %7649 = vmatpush1.msra.mxu0 0.0
        %7650 = vmatprep.subr.mxu0 0.0
        %7651 = vmatpush1.msra.mxu0 0.0
        %7652 = vmatprep.subr.mxu0 0.0
        %7653 = vmatpush1.msra.mxu0 0.0
        %7654 = vmatprep.subr.mxu0 0.0
        %7655 = vmatpush1.msra.mxu0 0.0
        %7656 = vmatprep.subr.mxu0 0.0
        %7657 = vmatpush1.msra.mxu0 0.0
        %7658 = vmatprep.subr.mxu0 0.0
        %7659 = vmatpush1.msra.mxu0 0.0
        %7660 = vmatprep.subr.mxu0 0.0
        %7661 = vmatpush1.msra.mxu0 0.0
        %7662 = vmatprep.subr.mxu0 0.0
        %7663 = vmatpush1.msra.mxu0 0.0
        %7664 = vmatprep.subr.mxu0 0.0
        %7665 = vmatpush1.msra.mxu0 0.0
        %7666 = vmatprep.subr.mxu0 0.0
        %7667 = vmatpush1.msra.mxu0 0.0
        %7668 = vmatprep.subr.mxu0 0.0
        %7669 = vmatpush1.msra.mxu0 0.0
        %7670 = vmatprep.subr.mxu0 0.0
        %7671 = vmatpush1.msra.mxu0 0.0
        %7672 = vmatprep.subr.mxu0 0.0
        %7673 = vmatpush1.msra.mxu0 0.0
        %7674 = vmatprep.subr.mxu0 0.0
        %7675 = vmatpush1.msra.mxu0 0.0
        %7676 = vmatprep.subr.mxu0 0.0
        %7677 = vmatpush1.msra.mxu0 0.0
        %7678 = vmatprep.subr.mxu0 0.0
        %7679 = vmatpush1.msra.mxu0 0.0
        %7680 = vmatprep.subr.mxu0 0.0
        %7681 = vmatpush1.msra.mxu0 0.0
        %7682 = vmatprep.subr.mxu0 0.0
        %7683 = vmatpush1.msra.mxu0 0.0
        %7684 = vmatprep.subr.mxu0 0.0
        %7685 = vmatpush1.msra.mxu0 0.0
        %7686 = vmatprep.subr.mxu0 0.0
        %7687 = vmatpush1.msra.mxu0 0.0
        %7688 = vmatprep.subr.mxu0 0.0
        %7689 = vmatpush1.msra.mxu0 0.0
        %7690 = vmatprep.subr.mxu0 0.0
        %7691 = vmatpush1.msra.mxu0 0.0
        %7692 = vmatprep.subr.mxu0 0.0
        %7693 = vmatpush1.msra.mxu0 0.0
        %7694 = vmatprep.mubr.f32.mxu0 0.0
        %7695 = vmatmul.mubr.f32.gmra.mrb[0].mxu0 %v7557
        %v7696 = vpop.f32.mrb[0].mxu0
        %v7697 = vadd.f32 0.0, %v7696
        %v7698 = vpop.f32.mrb[0].mxu0
        %v7699 = vadd.f32 0.0, %v7698
        %7700 = vdwg.mxu0
        %7701 = vmatprep.subr.mxu0 %v7547
        %7702 = vmatpush1.msra.mxu0 %v7546
        %7703 = vmatprep.subr.mxu0 0.0
        %7704 = vmatpush1.msra.mxu0 0.0
        %7705 = vmatprep.subr.mxu0 0.0
        %7706 = vmatpush1.msra.mxu0 0.0
        %7707 = vmatprep.subr.mxu0 0.0
        %7708 = vmatpush1.msra.mxu0 0.0
        %7709 = vmatprep.subr.mxu0 0.0
        %7710 = vmatpush1.msra.mxu0 0.0
        %7711 = vmatprep.subr.mxu0 0.0
        %7712 = vmatpush1.msra.mxu0 0.0
        %7713 = vmatprep.subr.mxu0 0.0
        %7714 = vmatpush1.msra.mxu0 0.0
        %7715 = vmatprep.subr.mxu0 0.0
        %7716 = vmatpush1.msra.mxu0 0.0
        %7717 = vmatprep.subr.mxu0 0.0
        %7718 = vmatpush1.msra.mxu0 0.0
        %7719 = vmatprep.subr.mxu0 0.0
        %7720 = vmatpush1.msra.mxu0 0.0
        %7721 = vmatprep.subr.mxu0 0.0
        %7722 = vmatpush1.msra.mxu0 0.0
        %7723 = vmatprep.subr.mxu0 0.0
        %7724 = vmatpush1.msra.mxu0 0.0
        %7725 = vmatprep.subr.mxu0 0.0
        %7726 = vmatpush1.msra.mxu0 0.0
        %7727 = vmatprep.subr.mxu0 0.0
        %7728 = vmatpush1.msra.mxu0 0.0
        %7729 = vmatprep.subr.mxu0 0.0
        %7730 = vmatpush1.msra.mxu0 0.0
        %7731 = vmatprep.subr.mxu0 0.0
        %7732 = vmatpush1.msra.mxu0 0.0
        %7733 = vmatprep.subr.mxu0 0.0
        %7734 = vmatpush1.msra.mxu0 0.0
        %7735 = vmatprep.subr.mxu0 0.0
        %7736 = vmatpush1.msra.mxu0 0.0
        %7737 = vmatprep.subr.mxu0 0.0
        %7738 = vmatpush1.msra.mxu0 0.0
        %7739 = vmatprep.subr.mxu0 0.0
        %7740 = vmatpush1.msra.mxu0 0.0
        %7741 = vmatprep.subr.mxu0 0.0
        %7742 = vmatpush1.msra.mxu0 0.0
        %7743 = vmatprep.subr.mxu0 0.0
        %7744 = vmatpush1.msra.mxu0 0.0
        %7745 = vmatprep.subr.mxu0 0.0
        %7746 = vmatpush1.msra.mxu0 0.0
        %7747 = vmatprep.subr.mxu0 0.0
        %7748 = vmatpush1.msra.mxu0 0.0
        %7749 = vmatprep.subr.mxu0 0.0
        %7750 = vmatpush1.msra.mxu0 0.0
        %7751 = vmatprep.subr.mxu0 0.0
        %7752 = vmatpush1.msra.mxu0 0.0
        %7753 = vmatprep.subr.mxu0 0.0
        %7754 = vmatpush1.msra.mxu0 0.0
        %7755 = vmatprep.subr.mxu0 0.0
        %7756 = vmatpush1.msra.mxu0 0.0
        %7757 = vmatprep.subr.mxu0 0.0
        %7758 = vmatpush1.msra.mxu0 0.0
        %7759 = vmatprep.subr.mxu0 0.0
        %7760 = vmatpush1.msra.mxu0 0.0
        %7761 = vmatprep.subr.mxu0 0.0
        %7762 = vmatpush1.msra.mxu0 0.0
        %7763 = vmatprep.subr.mxu0 0.0
        %7764 = vmatpush1.msra.mxu0 0.0
        %7765 = vmatprep.mubr.f32.mxu0 0.0
        %7766 = vmatmul.mubr.f32.gmra.mrb[0].mxu0 %v7557
        %v7767 = vpop.f32.mrb[0].mxu0
        %v7768 = vadd.f32 0.0, %v7767
        %v7769 = vpop.f32.mrb[0].mxu0
        %v7770 = vadd.f32 0.0, %v7769
        %7771 = vdwg.mxu0
        %7772 = vmatprep.subr.mxu0 0.0
        %7773 = vmatpush1.msra.mxu0 %v7548
        %7774 = vmatprep.subr.mxu0 0.0
        %7775 = vmatpush1.msra.mxu0 0.0
        %7776 = vmatprep.subr.mxu0 0.0
        %7777 = vmatpush1.msra.mxu0 0.0
        %7778 = vmatprep.subr.mxu0 0.0
        %7779 = vmatpush1.msra.mxu0 0.0
        %7780 = vmatprep.subr.mxu0 0.0
        %7781 = vmatpush1.msra.mxu0 0.0
        %7782 = vmatprep.subr.mxu0 0.0
        %7783 = vmatpush1.msra.mxu0 0.0
        %7784 = vmatprep.subr.mxu0 0.0
        %7785 = vmatpush1.msra.mxu0 0.0
        %7786 = vmatprep.subr.mxu0 0.0
        %7787 = vmatpush1.msra.mxu0 0.0
        %7788 = vmatprep.subr.mxu0 0.0
        %7789 = vmatpush1.msra.mxu0 0.0
        %7790 = vmatprep.subr.mxu0 0.0
        %7791 = vmatpush1.msra.mxu0 0.0
        %7792 = vmatprep.subr.mxu0 0.0
        %7793 = vmatpush1.msra.mxu0 0.0
        %7794 = vmatprep.subr.mxu0 0.0
        %7795 = vmatpush1.msra.mxu0 0.0
        %7796 = vmatprep.subr.mxu0 0.0
        %7797 = vmatpush1.msra.mxu0 0.0
        %7798 = vmatprep.subr.mxu0 0.0
        %7799 = vmatpush1.msra.mxu0 0.0
        %7800 = vmatprep.subr.mxu0 0.0
        %7801 = vmatpush1.msra.mxu0 0.0
        %7802 = vmatprep.subr.mxu0 0.0
        %7803 = vmatpush1.msra.mxu0 0.0
        %7804 = vmatprep.subr.mxu0 0.0
        %7805 = vmatpush1.msra.mxu0 0.0
        %7806 = vmatprep.subr.mxu0 0.0
        %7807 = vmatpush1.msra.mxu0 0.0
        %7808 = vmatprep.subr.mxu0 0.0
        %7809 = vmatpush1.msra.mxu0 0.0
        %7810 = vmatprep.subr.mxu0 0.0
        %7811 = vmatpush1.msra.mxu0 0.0
        %7812 = vmatprep.subr.mxu0 0.0
        %7813 = vmatpush1.msra.mxu0 0.0
        %7814 = vmatprep.subr.mxu0 0.0
        %7815 = vmatpush1.msra.mxu0 0.0
        %7816 = vmatprep.subr.mxu0 0.0
        %7817 = vmatpush1.msra.mxu0 0.0
        %7818 = vmatprep.subr.mxu0 0.0
        %7819 = vmatpush1.msra.mxu0 0.0
        %7820 = vmatprep.subr.mxu0 0.0
        %7821 = vmatpush1.msra.mxu0 0.0
        %7822 = vmatprep.subr.mxu0 0.0
        %7823 = vmatpush1.msra.mxu0 0.0
        %7824 = vmatprep.subr.mxu0 0.0
        %7825 = vmatpush1.msra.mxu0 0.0
        %7826 = vmatprep.subr.mxu0 0.0
        %7827 = vmatpush1.msra.mxu0 0.0
        %7828 = vmatprep.subr.mxu0 0.0
        %7829 = vmatpush1.msra.mxu0 0.0
        %7830 = vmatprep.subr.mxu0 0.0
        %7831 = vmatpush1.msra.mxu0 0.0
        %7832 = vmatprep.subr.mxu0 0.0
        %7833 = vmatpush1.msra.mxu0 0.0
        %7834 = vmatprep.subr.mxu0 0.0
        %7835 = vmatpush1.msra.mxu0 0.0
        %7836 = vmatprep.mubr.f32.mxu0 0.0
        %7837 = vmatmul.mubr.f32.gmra.mrb[0].mxu0 %v7557
        %v7838 = vpop.f32.mrb[0].mxu0
        %v7839 = vadd.f32 0.0, %v7838
        %v7840 = vpop.f32.mrb[0].mxu0
        %7841 = vdwg.mxu0
        %v7842 = vadd.f32 %v7516, %v7626
        %v7843 = vadd.f32 %v7517, %v7628
        %v7844 = vadd.f32 %v7518, %v7697
        %v7845 = vadd.f32 %v7519, %v7699
        %v7846 = vadd.f32 %v7520, %v7768
        %v7847 = vadd.f32 %v7521, %v7770
        %v7848 = vadd.f32 %v7522, %v7839
        %s7849 = scalar_lea.vmem %s1, 184
        %v7850 = vld [vmem:[%s7849] sm:$0xff]
        %7851 = vrot.lane.b32.xlu0 %v6203, 44
        %v7852 = vpop.permute.xlu0 %7851
        %7853 = vrot.lane.b32.xlu0 %v6204, 44
        %v7854 = vpop.permute.xlu0 %7853
        %7855 = vrot.lane.b32.xlu0 %v6205, 44
        %v7856 = vpop.permute.xlu0 %7855
        %7857 = vrot.lane.b32.xlu0 %v6206, 44
        %v7858 = vpop.permute.xlu0 %7857
        %7859 = vrot.lane.b32.xlu0 %v6207, 44
        %v7860 = vpop.permute.xlu0 %7859
        %7861 = vrot.lane.b32.xlu0 %v6208, 44
        %v7862 = vpop.permute.xlu0 %7861
        %7863 = vrot.lane.b32.xlu0 %v6209, 44
        %v7864 = vpop.permute.xlu0 %7863
        %7865 = vrot.lane.b32.xlu0 %v6210, 44
        %v7866 = vpop.permute.xlu0 %7865
        %vm7867 = vcmask 359424
        %v7868 = vsel %vm7867, %v7852, %v7854
        %v7869 = vsel %vm7867, %v7854, %v7856
        %v7870 = vsel %vm7867, %v7856, %v7858
        %v7871 = vsel %vm7867, %v7858, %v7860
        %v7872 = vsel %vm7867, %v7860, %v7862
        %v7873 = vsel %vm7867, %v7862, %v7864
        %v7874 = vsel %vm7867, %v7864, %v7866
        %v7883 = vsel %vm415, %v7850, 0
        %7885 = vmatprep.subr.mxu0 %v7869
        %7886 = vmatpush1.msra.mxu0 %v7868
        %7887 = vmatprep.subr.mxu0 0.0
        %7888 = vmatpush1.msra.mxu0 0.0
        %7889 = vmatprep.subr.mxu0 0.0
        %7890 = vmatpush1.msra.mxu0 0.0
        %7891 = vmatprep.subr.mxu0 0.0
        %7892 = vmatpush1.msra.mxu0 0.0
        %7893 = vmatprep.subr.mxu0 0.0
        %7894 = vmatpush1.msra.mxu0 0.0
        %7895 = vmatprep.subr.mxu0 0.0
        %7896 = vmatpush1.msra.mxu0 0.0
        %7897 = vmatprep.subr.mxu0 0.0
        %7898 = vmatpush1.msra.mxu0 0.0
        %7899 = vmatprep.subr.mxu0 0.0
        %7900 = vmatpush1.msra.mxu0 0.0
        %7901 = vmatprep.subr.mxu0 0.0
        %7902 = vmatpush1.msra.mxu0 0.0
        %7903 = vmatprep.subr.mxu0 0.0
        %7904 = vmatpush1.msra.mxu0 0.0
        %7905 = vmatprep.subr.mxu0 0.0
        %7906 = vmatpush1.msra.mxu0 0.0
        %7907 = vmatprep.subr.mxu0 0.0
        %7908 = vmatpush1.msra.mxu0 0.0
        %7909 = vmatprep.subr.mxu0 0.0
        %7910 = vmatpush1.msra.mxu0 0.0
        %7911 = vmatprep.subr.mxu0 0.0
        %7912 = vmatpush1.msra.mxu0 0.0
        %7913 = vmatprep.subr.mxu0 0.0
        %7914 = vmatpush1.msra.mxu0 0.0
        %7915 = vmatprep.subr.mxu0 0.0
        %7916 = vmatpush1.msra.mxu0 0.0
        %7917 = vmatprep.subr.mxu0 0.0
        %7918 = vmatpush1.msra.mxu0 0.0
        %7919 = vmatprep.subr.mxu0 0.0
        %7920 = vmatpush1.msra.mxu0 0.0
        %7921 = vmatprep.subr.mxu0 0.0
        %7922 = vmatpush1.msra.mxu0 0.0
        %7923 = vmatprep.subr.mxu0 0.0
        %7924 = vmatpush1.msra.mxu0 0.0
        %7925 = vmatprep.subr.mxu0 0.0
        %7926 = vmatpush1.msra.mxu0 0.0
        %7927 = vmatprep.subr.mxu0 0.0
        %7928 = vmatpush1.msra.mxu0 0.0
        %7929 = vmatprep.subr.mxu0 0.0
        %7930 = vmatpush1.msra.mxu0 0.0
        %7931 = vmatprep.subr.mxu0 0.0
        %7932 = vmatpush1.msra.mxu0 0.0
        %7933 = vmatprep.subr.mxu0 0.0
        %7934 = vmatpush1.msra.mxu0 0.0
        %7935 = vmatprep.subr.mxu0 0.0
        %7936 = vmatpush1.msra.mxu0 0.0
        %7937 = vmatprep.subr.mxu0 0.0
        %7938 = vmatpush1.msra.mxu0 0.0
        %7939 = vmatprep.subr.mxu0 0.0
        %7940 = vmatpush1.msra.mxu0 0.0
        %7941 = vmatprep.subr.mxu0 0.0
        %7942 = vmatpush1.msra.mxu0 0.0
        %7943 = vmatprep.subr.mxu0 0.0
        %7944 = vmatpush1.msra.mxu0 0.0
        %7945 = vmatprep.subr.mxu0 0.0
        %7946 = vmatpush1.msra.mxu0 0.0
        %7947 = vmatprep.subr.mxu0 0.0
        %7948 = vmatpush1.msra.mxu0 0.0
        %7949 = vmatprep.mubr.f32.mxu0 0.0
        %7950 = vmatmul.mubr.f32.gmra.mrb[0].mxu0 %v7883
        %v7951 = vpop.f32.mrb[0].mxu0
        %v7952 = vadd.f32 0.0, %v7951
        %v7953 = vpop.f32.mrb[0].mxu0
        %v7954 = vadd.f32 0.0, %v7953
        %7955 = vdwg.mxu0
        %7956 = vmatprep.subr.mxu0 %v7871
        %7957 = vmatpush1.msra.mxu0 %v7870
        %7958 = vmatprep.subr.mxu0 0.0
        %7959 = vmatpush1.msra.mxu0 0.0
        %7960 = vmatprep.subr.mxu0 0.0
        %7961 = vmatpush1.msra.mxu0 0.0
        %7962 = vmatprep.subr.mxu0 0.0
        %7963 = vmatpush1.msra.mxu0 0.0
        %7964 = vmatprep.subr.mxu0 0.0
        %7965 = vmatpush1.msra.mxu0 0.0
        %7966 = vmatprep.subr.mxu0 0.0
        %7967 = vmatpush1.msra.mxu0 0.0
        %7968 = vmatprep.subr.mxu0 0.0
        %7969 = vmatpush1.msra.mxu0 0.0
        %7970 = vmatprep.subr.mxu0 0.0
        %7971 = vmatpush1.msra.mxu0 0.0
        %7972 = vmatprep.subr.mxu0 0.0
        %7973 = vmatpush1.msra.mxu0 0.0
        %7974 = vmatprep.subr.mxu0 0.0
        %7975 = vmatpush1.msra.mxu0 0.0
        %7976 = vmatprep.subr.mxu0 0.0
        %7977 = vmatpush1.msra.mxu0 0.0
        %7978 = vmatprep.subr.mxu0 0.0
        %7979 = vmatpush1.msra.mxu0 0.0
        %7980 = vmatprep.subr.mxu0 0.0
        %7981 = vmatpush1.msra.mxu0 0.0
        %7982 = vmatprep.subr.mxu0 0.0
        %7983 = vmatpush1.msra.mxu0 0.0
        %7984 = vmatprep.subr.mxu0 0.0
        %7985 = vmatpush1.msra.mxu0 0.0
        %7986 = vmatprep.subr.mxu0 0.0
        %7987 = vmatpush1.msra.mxu0 0.0
        %7988 = vmatprep.subr.mxu0 0.0
        %7989 = vmatpush1.msra.mxu0 0.0
        %7990 = vmatprep.subr.mxu0 0.0
        %7991 = vmatpush1.msra.mxu0 0.0
        %7992 = vmatprep.subr.mxu0 0.0
        %7993 = vmatpush1.msra.mxu0 0.0
        %7994 = vmatprep.subr.mxu0 0.0
        %7995 = vmatpush1.msra.mxu0 0.0
        %7996 = vmatprep.subr.mxu0 0.0
        %7997 = vmatpush1.msra.mxu0 0.0
        %7998 = vmatprep.subr.mxu0 0.0
        %7999 = vmatpush1.msra.mxu0 0.0
        %8000 = vmatprep.subr.mxu0 0.0
        %8001 = vmatpush1.msra.mxu0 0.0
        %8002 = vmatprep.subr.mxu0 0.0
        %8003 = vmatpush1.msra.mxu0 0.0
        %8004 = vmatprep.subr.mxu0 0.0
        %8005 = vmatpush1.msra.mxu0 0.0
        %8006 = vmatprep.subr.mxu0 0.0
        %8007 = vmatpush1.msra.mxu0 0.0
        %8008 = vmatprep.subr.mxu0 0.0
        %8009 = vmatpush1.msra.mxu0 0.0
        %8010 = vmatprep.subr.mxu0 0.0
        %8011 = vmatpush1.msra.mxu0 0.0
        %8012 = vmatprep.subr.mxu0 0.0
        %8013 = vmatpush1.msra.mxu0 0.0
        %8014 = vmatprep.subr.mxu0 0.0
        %8015 = vmatpush1.msra.mxu0 0.0
        %8016 = vmatprep.subr.mxu0 0.0
        %8017 = vmatpush1.msra.mxu0 0.0
        %8018 = vmatprep.subr.mxu0 0.0
        %8019 = vmatpush1.msra.mxu0 0.0
        %8020 = vmatprep.mubr.f32.mxu0 0.0
        %8021 = vmatmul.mubr.f32.gmra.mrb[0].mxu0 %v7883
        %v8022 = vpop.f32.mrb[0].mxu0
        %v8023 = vadd.f32 0.0, %v8022
        %v8024 = vpop.f32.mrb[0].mxu0
        %v8025 = vadd.f32 0.0, %v8024
        %8026 = vdwg.mxu0
        %8027 = vmatprep.subr.mxu0 %v7873
        %8028 = vmatpush1.msra.mxu0 %v7872
        %8029 = vmatprep.subr.mxu0 0.0
        %8030 = vmatpush1.msra.mxu0 0.0
        %8031 = vmatprep.subr.mxu0 0.0
        %8032 = vmatpush1.msra.mxu0 0.0
        %8033 = vmatprep.subr.mxu0 0.0
        %8034 = vmatpush1.msra.mxu0 0.0
        %8035 = vmatprep.subr.mxu0 0.0
        %8036 = vmatpush1.msra.mxu0 0.0
        %8037 = vmatprep.subr.mxu0 0.0
        %8038 = vmatpush1.msra.mxu0 0.0
        %8039 = vmatprep.subr.mxu0 0.0
        %8040 = vmatpush1.msra.mxu0 0.0
        %8041 = vmatprep.subr.mxu0 0.0
        %8042 = vmatpush1.msra.mxu0 0.0
        %8043 = vmatprep.subr.mxu0 0.0
        %8044 = vmatpush1.msra.mxu0 0.0
        %8045 = vmatprep.subr.mxu0 0.0
        %8046 = vmatpush1.msra.mxu0 0.0
        %8047 = vmatprep.subr.mxu0 0.0
        %8048 = vmatpush1.msra.mxu0 0.0
        %8049 = vmatprep.subr.mxu0 0.0
        %8050 = vmatpush1.msra.mxu0 0.0
        %8051 = vmatprep.subr.mxu0 0.0
        %8052 = vmatpush1.msra.mxu0 0.0
        %8053 = vmatprep.subr.mxu0 0.0
        %8054 = vmatpush1.msra.mxu0 0.0
        %8055 = vmatprep.subr.mxu0 0.0
        %8056 = vmatpush1.msra.mxu0 0.0
        %8057 = vmatprep.subr.mxu0 0.0
        %8058 = vmatpush1.msra.mxu0 0.0
        %8059 = vmatprep.subr.mxu0 0.0
        %8060 = vmatpush1.msra.mxu0 0.0
        %8061 = vmatprep.subr.mxu0 0.0
        %8062 = vmatpush1.msra.mxu0 0.0
        %8063 = vmatprep.subr.mxu0 0.0
        %8064 = vmatpush1.msra.mxu0 0.0
        %8065 = vmatprep.subr.mxu0 0.0
        %8066 = vmatpush1.msra.mxu0 0.0
        %8067 = vmatprep.subr.mxu0 0.0
        %8068 = vmatpush1.msra.mxu0 0.0
        %8069 = vmatprep.subr.mxu0 0.0
        %8070 = vmatpush1.msra.mxu0 0.0
        %8071 = vmatprep.subr.mxu0 0.0
        %8072 = vmatpush1.msra.mxu0 0.0
        %8073 = vmatprep.subr.mxu0 0.0
        %8074 = vmatpush1.msra.mxu0 0.0
        %8075 = vmatprep.subr.mxu0 0.0
        %8076 = vmatpush1.msra.mxu0 0.0
        %8077 = vmatprep.subr.mxu0 0.0
        %8078 = vmatpush1.msra.mxu0 0.0
        %8079 = vmatprep.subr.mxu0 0.0
        %8080 = vmatpush1.msra.mxu0 0.0
        %8081 = vmatprep.subr.mxu0 0.0
        %8082 = vmatpush1.msra.mxu0 0.0
        %8083 = vmatprep.subr.mxu0 0.0
        %8084 = vmatpush1.msra.mxu0 0.0
        %8085 = vmatprep.subr.mxu0 0.0
        %8086 = vmatpush1.msra.mxu0 0.0
        %8087 = vmatprep.subr.mxu0 0.0
        %8088 = vmatpush1.msra.mxu0 0.0
        %8089 = vmatprep.subr.mxu0 0.0
        %8090 = vmatpush1.msra.mxu0 0.0
        %8091 = vmatprep.mubr.f32.mxu0 0.0
        %8092 = vmatmul.mubr.f32.gmra.mrb[0].mxu0 %v7883
        %v8093 = vpop.f32.mrb[0].mxu0
        %v8094 = vadd.f32 0.0, %v8093
        %v8095 = vpop.f32.mrb[0].mxu0
        %v8096 = vadd.f32 0.0, %v8095
        %8097 = vdwg.mxu0
        %8098 = vmatprep.subr.mxu0 0.0
        %8099 = vmatpush1.msra.mxu0 %v7874
        %8100 = vmatprep.subr.mxu0 0.0
        %8101 = vmatpush1.msra.mxu0 0.0
        %8102 = vmatprep.subr.mxu0 0.0
        %8103 = vmatpush1.msra.mxu0 0.0
        %8104 = vmatprep.subr.mxu0 0.0
        %8105 = vmatpush1.msra.mxu0 0.0
        %8106 = vmatprep.subr.mxu0 0.0
        %8107 = vmatpush1.msra.mxu0 0.0
        %8108 = vmatprep.subr.mxu0 0.0
        %8109 = vmatpush1.msra.mxu0 0.0
        %8110 = vmatprep.subr.mxu0 0.0
        %8111 = vmatpush1.msra.mxu0 0.0
        %8112 = vmatprep.subr.mxu0 0.0
        %8113 = vmatpush1.msra.mxu0 0.0
        %8114 = vmatprep.subr.mxu0 0.0
        %8115 = vmatpush1.msra.mxu0 0.0
        %8116 = vmatprep.subr.mxu0 0.0
        %8117 = vmatpush1.msra.mxu0 0.0
        %8118 = vmatprep.subr.mxu0 0.0
        %8119 = vmatpush1.msra.mxu0 0.0
        %8120 = vmatprep.subr.mxu0 0.0
        %8121 = vmatpush1.msra.mxu0 0.0
        %8122 = vmatprep.subr.mxu0 0.0
        %8123 = vmatpush1.msra.mxu0 0.0
        %8124 = vmatprep.subr.mxu0 0.0
        %8125 = vmatpush1.msra.mxu0 0.0
        %8126 = vmatprep.subr.mxu0 0.0
        %8127 = vmatpush1.msra.mxu0 0.0
        %8128 = vmatprep.subr.mxu0 0.0
        %8129 = vmatpush1.msra.mxu0 0.0
        %8130 = vmatprep.subr.mxu0 0.0
        %8131 = vmatpush1.msra.mxu0 0.0
        %8132 = vmatprep.subr.mxu0 0.0
        %8133 = vmatpush1.msra.mxu0 0.0
        %8134 = vmatprep.subr.mxu0 0.0
        %8135 = vmatpush1.msra.mxu0 0.0
        %8136 = vmatprep.subr.mxu0 0.0
        %8137 = vmatpush1.msra.mxu0 0.0
        %8138 = vmatprep.subr.mxu0 0.0
        %8139 = vmatpush1.msra.mxu0 0.0
        %8140 = vmatprep.subr.mxu0 0.0
        %8141 = vmatpush1.msra.mxu0 0.0
        %8142 = vmatprep.subr.mxu0 0.0
        %8143 = vmatpush1.msra.mxu0 0.0
        %8144 = vmatprep.subr.mxu0 0.0
        %8145 = vmatpush1.msra.mxu0 0.0
        %8146 = vmatprep.subr.mxu0 0.0
        %8147 = vmatpush1.msra.mxu0 0.0
        %8148 = vmatprep.subr.mxu0 0.0
        %8149 = vmatpush1.msra.mxu0 0.0
        %8150 = vmatprep.subr.mxu0 0.0
        %8151 = vmatpush1.msra.mxu0 0.0
        %8152 = vmatprep.subr.mxu0 0.0
        %8153 = vmatpush1.msra.mxu0 0.0
        %8154 = vmatprep.subr.mxu0 0.0
        %8155 = vmatpush1.msra.mxu0 0.0
        %8156 = vmatprep.subr.mxu0 0.0
        %8157 = vmatpush1.msra.mxu0 0.0
        %8158 = vmatprep.subr.mxu0 0.0
        %8159 = vmatpush1.msra.mxu0 0.0
        %8160 = vmatprep.subr.mxu0 0.0
        %8161 = vmatpush1.msra.mxu0 0.0
        %8162 = vmatprep.mubr.f32.mxu0 0.0
        %8163 = vmatmul.mubr.f32.gmra.mrb[0].mxu0 %v7883
        %v8164 = vpop.f32.mrb[0].mxu0
        %v8165 = vadd.f32 0.0, %v8164
        %v8166 = vpop.f32.mrb[0].mxu0
        %8167 = vdwg.mxu0
        %v8168 = vadd.f32 %v7842, %v7952
        %v8169 = vadd.f32 %v7843, %v7954
        %v8170 = vadd.f32 %v7844, %v8023
        %v8171 = vadd.f32 %v7845, %v8025
        %v8172 = vadd.f32 %v7846, %v8094
        %v8173 = vadd.f32 %v7847, %v8096
        %v8174 = vadd.f32 %v7848, %v8165
        %s8175 = scalar_lea.vmem %s1, 192
        %v8176 = vld [vmem:[%s8175] sm:$0xff]
        %8177 = vrot.lane.b32.xlu0 %v6203, 36
        %v8178 = vpop.permute.xlu0 %8177
        %8179 = vrot.lane.b32.xlu0 %v6204, 36
        %v8180 = vpop.permute.xlu0 %8179
        %8181 = vrot.lane.b32.xlu0 %v6205, 36
        %v8182 = vpop.permute.xlu0 %8181
        %8183 = vrot.lane.b32.xlu0 %v6206, 36
        %v8184 = vpop.permute.xlu0 %8183
        %8185 = vrot.lane.b32.xlu0 %v6207, 36
        %v8186 = vpop.permute.xlu0 %8185
        %8187 = vrot.lane.b32.xlu0 %v6208, 36
        %v8188 = vpop.permute.xlu0 %8187
        %8189 = vrot.lane.b32.xlu0 %v6209, 36
        %v8190 = vpop.permute.xlu0 %8189
        %8191 = vrot.lane.b32.xlu0 %v6210, 36
        %v8192 = vpop.permute.xlu0 %8191
        %vm8193 = vcmask 293888
        %v8194 = vsel %vm8193, %v8178, %v8180
        %v8195 = vsel %vm8193, %v8180, %v8182
        %v8196 = vsel %vm8193, %v8182, %v8184
        %v8197 = vsel %vm8193, %v8184, %v8186
        %v8198 = vsel %vm8193, %v8186, %v8188
        %v8199 = vsel %vm8193, %v8188, %v8190
        %v8200 = vsel %vm8193, %v8190, %v8192
        %v8209 = vsel %vm415, %v8176, 0
        %8211 = vmatprep.subr.mxu0 %v8195
        %8212 = vmatpush1.msra.mxu0 %v8194
        %8213 = vmatprep.subr.mxu0 0.0
        %8214 = vmatpush1.msra.mxu0 0.0
        %8215 = vmatprep.subr.mxu0 0.0
        %8216 = vmatpush1.msra.mxu0 0.0
        %8217 = vmatprep.subr.mxu0 0.0
        %8218 = vmatpush1.msra.mxu0 0.0
        %8219 = vmatprep.subr.mxu0 0.0
        %8220 = vmatpush1.msra.mxu0 0.0
        %8221 = vmatprep.subr.mxu0 0.0
        %8222 = vmatpush1.msra.mxu0 0.0
        %8223 = vmatprep.subr.mxu0 0.0
        %8224 = vmatpush1.msra.mxu0 0.0
        %8225 = vmatprep.subr.mxu0 0.0
        %8226 = vmatpush1.msra.mxu0 0.0
        %8227 = vmatprep.subr.mxu0 0.0
        %8228 = vmatpush1.msra.mxu0 0.0
        %8229 = vmatprep.subr.mxu0 0.0
        %8230 = vmatpush1.msra.mxu0 0.0
        %8231 = vmatprep.subr.mxu0 0.0
        %8232 = vmatpush1.msra.mxu0 0.0
        %8233 = vmatprep.subr.mxu0 0.0
        %8234 = vmatpush1.msra.mxu0 0.0
        %8235 = vmatprep.subr.mxu0 0.0
        %8236 = vmatpush1.msra.mxu0 0.0
        %8237 = vmatprep.subr.mxu0 0.0
        %8238 = vmatpush1.msra.mxu0 0.0
        %8239 = vmatprep.subr.mxu0 0.0
        %8240 = vmatpush1.msra.mxu0 0.0
        %8241 = vmatprep.subr.mxu0 0.0
        %8242 = vmatpush1.msra.mxu0 0.0
        %8243 = vmatprep.subr.mxu0 0.0
        %8244 = vmatpush1.msra.mxu0 0.0
        %8245 = vmatprep.subr.mxu0 0.0
        %8246 = vmatpush1.msra.mxu0 0.0
        %8247 = vmatprep.subr.mxu0 0.0
        %8248 = vmatpush1.msra.mxu0 0.0
        %8249 = vmatprep.subr.mxu0 0.0
        %8250 = vmatpush1.msra.mxu0 0.0
        %8251 = vmatprep.subr.mxu0 0.0
        %8252 = vmatpush1.msra.mxu0 0.0
        %8253 = vmatprep.subr.mxu0 0.0
        %8254 = vmatpush1.msra.mxu0 0.0
        %8255 = vmatprep.subr.mxu0 0.0
        %8256 = vmatpush1.msra.mxu0 0.0
        %8257 = vmatprep.subr.mxu0 0.0
        %8258 = vmatpush1.msra.mxu0 0.0
        %8259 = vmatprep.subr.mxu0 0.0
        %8260 = vmatpush1.msra.mxu0 0.0
        %8261 = vmatprep.subr.mxu0 0.0
        %8262 = vmatpush1.msra.mxu0 0.0
        %8263 = vmatprep.subr.mxu0 0.0
        %8264 = vmatpush1.msra.mxu0 0.0
        %8265 = vmatprep.subr.mxu0 0.0
        %8266 = vmatpush1.msra.mxu0 0.0
        %8267 = vmatprep.subr.mxu0 0.0
        %8268 = vmatpush1.msra.mxu0 0.0
        %8269 = vmatprep.subr.mxu0 0.0
        %8270 = vmatpush1.msra.mxu0 0.0
        %8271 = vmatprep.subr.mxu0 0.0
        %8272 = vmatpush1.msra.mxu0 0.0
        %8273 = vmatprep.subr.mxu0 0.0
        %8274 = vmatpush1.msra.mxu0 0.0
        %8275 = vmatprep.mubr.f32.mxu0 0.0
        %8276 = vmatmul.mubr.f32.gmra.mrb[0].mxu0 %v8209
        %v8277 = vpop.f32.mrb[0].mxu0
        %v8278 = vadd.f32 0.0, %v8277
        %v8279 = vpop.f32.mrb[0].mxu0
        %v8280 = vadd.f32 0.0, %v8279
        %8281 = vdwg.mxu0
        %8282 = vmatprep.subr.mxu0 %v8197
        %8283 = vmatpush1.msra.mxu0 %v8196
        %8284 = vmatprep.subr.mxu0 0.0
        %8285 = vmatpush1.msra.mxu0 0.0
        %8286 = vmatprep.subr.mxu0 0.0
        %8287 = vmatpush1.msra.mxu0 0.0
        %8288 = vmatprep.subr.mxu0 0.0
        %8289 = vmatpush1.msra.mxu0 0.0
        %8290 = vmatprep.subr.mxu0 0.0
        %8291 = vmatpush1.msra.mxu0 0.0
        %8292 = vmatprep.subr.mxu0 0.0
        %8293 = vmatpush1.msra.mxu0 0.0
        %8294 = vmatprep.subr.mxu0 0.0
        %8295 = vmatpush1.msra.mxu0 0.0
        %8296 = vmatprep.subr.mxu0 0.0
        %8297 = vmatpush1.msra.mxu0 0.0
        %8298 = vmatprep.subr.mxu0 0.0
        %8299 = vmatpush1.msra.mxu0 0.0
        %8300 = vmatprep.subr.mxu0 0.0
        %8301 = vmatpush1.msra.mxu0 0.0
        %8302 = vmatprep.subr.mxu0 0.0
        %8303 = vmatpush1.msra.mxu0 0.0
        %8304 = vmatprep.subr.mxu0 0.0
        %8305 = vmatpush1.msra.mxu0 0.0
        %8306 = vmatprep.subr.mxu0 0.0
        %8307 = vmatpush1.msra.mxu0 0.0
        %8308 = vmatprep.subr.mxu0 0.0
        %8309 = vmatpush1.msra.mxu0 0.0
        %8310 = vmatprep.subr.mxu0 0.0
        %8311 = vmatpush1.msra.mxu0 0.0
        %8312 = vmatprep.subr.mxu0 0.0
        %8313 = vmatpush1.msra.mxu0 0.0
        %8314 = vmatprep.subr.mxu0 0.0
        %8315 = vmatpush1.msra.mxu0 0.0
        %8316 = vmatprep.subr.mxu0 0.0
        %8317 = vmatpush1.msra.mxu0 0.0
        %8318 = vmatprep.subr.mxu0 0.0
        %8319 = vmatpush1.msra.mxu0 0.0
        %8320 = vmatprep.subr.mxu0 0.0
        %8321 = vmatpush1.msra.mxu0 0.0
        %8322 = vmatprep.subr.mxu0 0.0
        %8323 = vmatpush1.msra.mxu0 0.0
        %8324 = vmatprep.subr.mxu0 0.0
        %8325 = vmatpush1.msra.mxu0 0.0
        %8326 = vmatprep.subr.mxu0 0.0
        %8327 = vmatpush1.msra.mxu0 0.0
        %8328 = vmatprep.subr.mxu0 0.0
        %8329 = vmatpush1.msra.mxu0 0.0
        %8330 = vmatprep.subr.mxu0 0.0
        %8331 = vmatpush1.msra.mxu0 0.0
        %8332 = vmatprep.subr.mxu0 0.0
        %8333 = vmatpush1.msra.mxu0 0.0
        %8334 = vmatprep.subr.mxu0 0.0
        %8335 = vmatpush1.msra.mxu0 0.0
        %8336 = vmatprep.subr.mxu0 0.0
        %8337 = vmatpush1.msra.mxu0 0.0
        %8338 = vmatprep.subr.mxu0 0.0
        %8339 = vmatpush1.msra.mxu0 0.0
        %8340 = vmatprep.subr.mxu0 0.0
        %8341 = vmatpush1.msra.mxu0 0.0
        %8342 = vmatprep.subr.mxu0 0.0
        %8343 = vmatpush1.msra.mxu0 0.0
        %8344 = vmatprep.subr.mxu0 0.0
        %8345 = vmatpush1.msra.mxu0 0.0
        %8346 = vmatprep.mubr.f32.mxu0 0.0
        %8347 = vmatmul.mubr.f32.gmra.mrb[0].mxu0 %v8209
        %v8348 = vpop.f32.mrb[0].mxu0
        %v8349 = vadd.f32 0.0, %v8348
        %v8350 = vpop.f32.mrb[0].mxu0
        %v8351 = vadd.f32 0.0, %v8350
        %8352 = vdwg.mxu0
        %8353 = vmatprep.subr.mxu0 %v8199
        %8354 = vmatpush1.msra.mxu0 %v8198
        %8355 = vmatprep.subr.mxu0 0.0
        %8356 = vmatpush1.msra.mxu0 0.0
        %8357 = vmatprep.subr.mxu0 0.0
        %8358 = vmatpush1.msra.mxu0 0.0
        %8359 = vmatprep.subr.mxu0 0.0
        %8360 = vmatpush1.msra.mxu0 0.0
        %8361 = vmatprep.subr.mxu0 0.0
        %8362 = vmatpush1.msra.mxu0 0.0
        %8363 = vmatprep.subr.mxu0 0.0
        %8364 = vmatpush1.msra.mxu0 0.0
        %8365 = vmatprep.subr.mxu0 0.0
        %8366 = vmatpush1.msra.mxu0 0.0
        %8367 = vmatprep.subr.mxu0 0.0
        %8368 = vmatpush1.msra.mxu0 0.0
        %8369 = vmatprep.subr.mxu0 0.0
        %8370 = vmatpush1.msra.mxu0 0.0
        %8371 = vmatprep.subr.mxu0 0.0
        %8372 = vmatpush1.msra.mxu0 0.0
        %8373 = vmatprep.subr.mxu0 0.0
        %8374 = vmatpush1.msra.mxu0 0.0
        %8375 = vmatprep.subr.mxu0 0.0
        %8376 = vmatpush1.msra.mxu0 0.0
        %8377 = vmatprep.subr.mxu0 0.0
        %8378 = vmatpush1.msra.mxu0 0.0
        %8379 = vmatprep.subr.mxu0 0.0
        %8380 = vmatpush1.msra.mxu0 0.0
        %8381 = vmatprep.subr.mxu0 0.0
        %8382 = vmatpush1.msra.mxu0 0.0
        %8383 = vmatprep.subr.mxu0 0.0
        %8384 = vmatpush1.msra.mxu0 0.0
        %8385 = vmatprep.subr.mxu0 0.0
        %8386 = vmatpush1.msra.mxu0 0.0
        %8387 = vmatprep.subr.mxu0 0.0
        %8388 = vmatpush1.msra.mxu0 0.0
        %8389 = vmatprep.subr.mxu0 0.0
        %8390 = vmatpush1.msra.mxu0 0.0
        %8391 = vmatprep.subr.mxu0 0.0
        %8392 = vmatpush1.msra.mxu0 0.0
        %8393 = vmatprep.subr.mxu0 0.0
        %8394 = vmatpush1.msra.mxu0 0.0
        %8395 = vmatprep.subr.mxu0 0.0
        %8396 = vmatpush1.msra.mxu0 0.0
        %8397 = vmatprep.subr.mxu0 0.0
        %8398 = vmatpush1.msra.mxu0 0.0
        %8399 = vmatprep.subr.mxu0 0.0
        %8400 = vmatpush1.msra.mxu0 0.0
        %8401 = vmatprep.subr.mxu0 0.0
        %8402 = vmatpush1.msra.mxu0 0.0
        %8403 = vmatprep.subr.mxu0 0.0
        %8404 = vmatpush1.msra.mxu0 0.0
        %8405 = vmatprep.subr.mxu0 0.0
        %8406 = vmatpush1.msra.mxu0 0.0
        %8407 = vmatprep.subr.mxu0 0.0
        %8408 = vmatpush1.msra.mxu0 0.0
        %8409 = vmatprep.subr.mxu0 0.0
        %8410 = vmatpush1.msra.mxu0 0.0
        %8411 = vmatprep.subr.mxu0 0.0
        %8412 = vmatpush1.msra.mxu0 0.0
        %8413 = vmatprep.subr.mxu0 0.0
        %8414 = vmatpush1.msra.mxu0 0.0
        %8415 = vmatprep.subr.mxu0 0.0
        %8416 = vmatpush1.msra.mxu0 0.0
        %8417 = vmatprep.mubr.f32.mxu0 0.0
        %8418 = vmatmul.mubr.f32.gmra.mrb[0].mxu0 %v8209
        %v8419 = vpop.f32.mrb[0].mxu0
        %v8420 = vadd.f32 0.0, %v8419
        %v8421 = vpop.f32.mrb[0].mxu0
        %v8422 = vadd.f32 0.0, %v8421
        %8423 = vdwg.mxu0
        %8424 = vmatprep.subr.mxu0 0.0
        %8425 = vmatpush1.msra.mxu0 %v8200
        %8426 = vmatprep.subr.mxu0 0.0
        %8427 = vmatpush1.msra.mxu0 0.0
        %8428 = vmatprep.subr.mxu0 0.0
        %8429 = vmatpush1.msra.mxu0 0.0
        %8430 = vmatprep.subr.mxu0 0.0
        %8431 = vmatpush1.msra.mxu0 0.0
        %8432 = vmatprep.subr.mxu0 0.0
        %8433 = vmatpush1.msra.mxu0 0.0
        %8434 = vmatprep.subr.mxu0 0.0
        %8435 = vmatpush1.msra.mxu0 0.0
        %8436 = vmatprep.subr.mxu0 0.0
        %8437 = vmatpush1.msra.mxu0 0.0
        %8438 = vmatprep.subr.mxu0 0.0
        %8439 = vmatpush1.msra.mxu0 0.0
        %8440 = vmatprep.subr.mxu0 0.0
        %8441 = vmatpush1.msra.mxu0 0.0
        %8442 = vmatprep.subr.mxu0 0.0
        %8443 = vmatpush1.msra.mxu0 0.0
        %8444 = vmatprep.subr.mxu0 0.0
        %8445 = vmatpush1.msra.mxu0 0.0
        %8446 = vmatprep.subr.mxu0 0.0
        %8447 = vmatpush1.msra.mxu0 0.0
        %8448 = vmatprep.subr.mxu0 0.0
        %8449 = vmatpush1.msra.mxu0 0.0
        %8450 = vmatprep.subr.mxu0 0.0
        %8451 = vmatpush1.msra.mxu0 0.0
        %8452 = vmatprep.subr.mxu0 0.0
        %8453 = vmatpush1.msra.mxu0 0.0
        %8454 = vmatprep.subr.mxu0 0.0
        %8455 = vmatpush1.msra.mxu0 0.0
        %8456 = vmatprep.subr.mxu0 0.0
        %8457 = vmatpush1.msra.mxu0 0.0
        %8458 = vmatprep.subr.mxu0 0.0
        %8459 = vmatpush1.msra.mxu0 0.0
        %8460 = vmatprep.subr.mxu0 0.0
        %8461 = vmatpush1.msra.mxu0 0.0
        %8462 = vmatprep.subr.mxu0 0.0
        %8463 = vmatpush1.msra.mxu0 0.0
        %8464 = vmatprep.subr.mxu0 0.0
        %8465 = vmatpush1.msra.mxu0 0.0
        %8466 = vmatprep.subr.mxu0 0.0
        %8467 = vmatpush1.msra.mxu0 0.0
        %8468 = vmatprep.subr.mxu0 0.0
        %8469 = vmatpush1.msra.mxu0 0.0
        %8470 = vmatprep.subr.mxu0 0.0
        %8471 = vmatpush1.msra.mxu0 0.0
        %8472 = vmatprep.subr.mxu0 0.0
        %8473 = vmatpush1.msra.mxu0 0.0
        %8474 = vmatprep.subr.mxu0 0.0
        %8475 = vmatpush1.msra.mxu0 0.0
        %8476 = vmatprep.subr.mxu0 0.0
        %8477 = vmatpush1.msra.mxu0 0.0
        %8478 = vmatprep.subr.mxu0 0.0
        %8479 = vmatpush1.msra.mxu0 0.0
        %8480 = vmatprep.subr.mxu0 0.0
        %8481 = vmatpush1.msra.mxu0 0.0
        %8482 = vmatprep.subr.mxu0 0.0
        %8483 = vmatpush1.msra.mxu0 0.0
        %8484 = vmatprep.subr.mxu0 0.0
        %8485 = vmatpush1.msra.mxu0 0.0
        %8486 = vmatprep.subr.mxu0 0.0
        %8487 = vmatpush1.msra.mxu0 0.0
        %8488 = vmatprep.mubr.f32.mxu0 0.0
        %8489 = vmatmul.mubr.f32.gmra.mrb[0].mxu0 %v8209
        %v8490 = vpop.f32.mrb[0].mxu0
        %v8491 = vadd.f32 0.0, %v8490
        %v8492 = vpop.f32.mrb[0].mxu0
        %8493 = vdwg.mxu0
        %v8494 = vadd.f32 %v8168, %v8278
        %v8495 = vadd.f32 %v8169, %v8280
        %v8496 = vadd.f32 %v8170, %v8349
        %v8497 = vadd.f32 %v8171, %v8351
        %v8498 = vadd.f32 %v8172, %v8420
        %v8499 = vadd.f32 %v8173, %v8422
        %v8500 = vadd.f32 %v8174, %v8491
        %s8501 = scalar_lea.vmem %s1, 200
        %v8502 = vld [vmem:[%s8501] sm:$0xff]
        %8503 = vrot.lane.b32.xlu0 %v6203, 35
        %v8504 = vpop.permute.xlu0 %8503
        %8505 = vrot.lane.b32.xlu0 %v6204, 35
        %v8506 = vpop.permute.xlu0 %8505
        %8507 = vrot.lane.b32.xlu0 %v6205, 35
        %v8508 = vpop.permute.xlu0 %8507
        %8509 = vrot.lane.b32.xlu0 %v6206, 35
        %v8510 = vpop.permute.xlu0 %8509
        %8511 = vrot.lane.b32.xlu0 %v6207, 35
        %v8512 = vpop.permute.xlu0 %8511
        %8513 = vrot.lane.b32.xlu0 %v6208, 35
        %v8514 = vpop.permute.xlu0 %8513
        %8515 = vrot.lane.b32.xlu0 %v6209, 35
        %v8516 = vpop.permute.xlu0 %8515
        %8517 = vrot.lane.b32.xlu0 %v6210, 35
        %v8518 = vpop.permute.xlu0 %8517
        %vm8519 = vcmask 285696
        %v8520 = vsel %vm8519, %v8504, %v8506
        %v8521 = vsel %vm8519, %v8506, %v8508
        %v8522 = vsel %vm8519, %v8508, %v8510
        %v8523 = vsel %vm8519, %v8510, %v8512
        %v8524 = vsel %vm8519, %v8512, %v8514
        %v8525 = vsel %vm8519, %v8514, %v8516
        %v8526 = vsel %vm8519, %v8516, %v8518
        %v8535 = vsel %vm415, %v8502, 0
        %8537 = vmatprep.subr.mxu0 %v8521
        %8538 = vmatpush1.msra.mxu0 %v8520
        %8539 = vmatprep.subr.mxu0 0.0
        %8540 = vmatpush1.msra.mxu0 0.0
        %8541 = vmatprep.subr.mxu0 0.0
        %8542 = vmatpush1.msra.mxu0 0.0
        %8543 = vmatprep.subr.mxu0 0.0
        %8544 = vmatpush1.msra.mxu0 0.0
        %8545 = vmatprep.subr.mxu0 0.0
        %8546 = vmatpush1.msra.mxu0 0.0
        %8547 = vmatprep.subr.mxu0 0.0
        %8548 = vmatpush1.msra.mxu0 0.0
        %8549 = vmatprep.subr.mxu0 0.0
        %8550 = vmatpush1.msra.mxu0 0.0
        %8551 = vmatprep.subr.mxu0 0.0
        %8552 = vmatpush1.msra.mxu0 0.0
        %8553 = vmatprep.subr.mxu0 0.0
        %8554 = vmatpush1.msra.mxu0 0.0
        %8555 = vmatprep.subr.mxu0 0.0
        %8556 = vmatpush1.msra.mxu0 0.0
        %8557 = vmatprep.subr.mxu0 0.0
        %8558 = vmatpush1.msra.mxu0 0.0
        %8559 = vmatprep.subr.mxu0 0.0
        %8560 = vmatpush1.msra.mxu0 0.0
        %8561 = vmatprep.subr.mxu0 0.0
        %8562 = vmatpush1.msra.mxu0 0.0
        %8563 = vmatprep.subr.mxu0 0.0
        %8564 = vmatpush1.msra.mxu0 0.0
        %8565 = vmatprep.subr.mxu0 0.0
        %8566 = vmatpush1.msra.mxu0 0.0
        %8567 = vmatprep.subr.mxu0 0.0
        %8568 = vmatpush1.msra.mxu0 0.0
        %8569 = vmatprep.subr.mxu0 0.0
        %8570 = vmatpush1.msra.mxu0 0.0
        %8571 = vmatprep.subr.mxu0 0.0
        %8572 = vmatpush1.msra.mxu0 0.0
        %8573 = vmatprep.subr.mxu0 0.0
        %8574 = vmatpush1.msra.mxu0 0.0
        %8575 = vmatprep.subr.mxu0 0.0
        %8576 = vmatpush1.msra.mxu0 0.0
        %8577 = vmatprep.subr.mxu0 0.0
        %8578 = vmatpush1.msra.mxu0 0.0
        %8579 = vmatprep.subr.mxu0 0.0
        %8580 = vmatpush1.msra.mxu0 0.0
        %8581 = vmatprep.subr.mxu0 0.0
        %8582 = vmatpush1.msra.mxu0 0.0
        %8583 = vmatprep.subr.mxu0 0.0
        %8584 = vmatpush1.msra.mxu0 0.0
        %8585 = vmatprep.subr.mxu0 0.0
        %8586 = vmatpush1.msra.mxu0 0.0
        %8587 = vmatprep.subr.mxu0 0.0
        %8588 = vmatpush1.msra.mxu0 0.0
        %8589 = vmatprep.subr.mxu0 0.0
        %8590 = vmatpush1.msra.mxu0 0.0
        %8591 = vmatprep.subr.mxu0 0.0
        %8592 = vmatpush1.msra.mxu0 0.0
        %8593 = vmatprep.subr.mxu0 0.0
        %8594 = vmatpush1.msra.mxu0 0.0
        %8595 = vmatprep.subr.mxu0 0.0
        %8596 = vmatpush1.msra.mxu0 0.0
        %8597 = vmatprep.subr.mxu0 0.0
        %8598 = vmatpush1.msra.mxu0 0.0
        %8599 = vmatprep.subr.mxu0 0.0
        %8600 = vmatpush1.msra.mxu0 0.0
        %8601 = vmatprep.mubr.f32.mxu0 0.0
        %8602 = vmatmul.mubr.f32.gmra.mrb[0].mxu0 %v8535
        %v8603 = vpop.f32.mrb[0].mxu0
        %v8604 = vadd.f32 0.0, %v8603
        %v8605 = vpop.f32.mrb[0].mxu0
        %v8606 = vadd.f32 0.0, %v8605
        %8607 = vdwg.mxu0
        %8608 = vmatprep.subr.mxu0 %v8523
        %8609 = vmatpush1.msra.mxu0 %v8522
        %8610 = vmatprep.subr.mxu0 0.0
        %8611 = vmatpush1.msra.mxu0 0.0
        %8612 = vmatprep.subr.mxu0 0.0
        %8613 = vmatpush1.msra.mxu0 0.0
        %8614 = vmatprep.subr.mxu0 0.0
        %8615 = vmatpush1.msra.mxu0 0.0
        %8616 = vmatprep.subr.mxu0 0.0
        %8617 = vmatpush1.msra.mxu0 0.0
        %8618 = vmatprep.subr.mxu0 0.0
        %8619 = vmatpush1.msra.mxu0 0.0
        %8620 = vmatprep.subr.mxu0 0.0
        %8621 = vmatpush1.msra.mxu0 0.0
        %8622 = vmatprep.subr.mxu0 0.0
        %8623 = vmatpush1.msra.mxu0 0.0
        %8624 = vmatprep.subr.mxu0 0.0
        %8625 = vmatpush1.msra.mxu0 0.0
        %8626 = vmatprep.subr.mxu0 0.0
        %8627 = vmatpush1.msra.mxu0 0.0
        %8628 = vmatprep.subr.mxu0 0.0
        %8629 = vmatpush1.msra.mxu0 0.0
        %8630 = vmatprep.subr.mxu0 0.0
        %8631 = vmatpush1.msra.mxu0 0.0
        %8632 = vmatprep.subr.mxu0 0.0
        %8633 = vmatpush1.msra.mxu0 0.0
        %8634 = vmatprep.subr.mxu0 0.0
        %8635 = vmatpush1.msra.mxu0 0.0
        %8636 = vmatprep.subr.mxu0 0.0
        %8637 = vmatpush1.msra.mxu0 0.0
        %8638 = vmatprep.subr.mxu0 0.0
        %8639 = vmatpush1.msra.mxu0 0.0
        %8640 = vmatprep.subr.mxu0 0.0
        %8641 = vmatpush1.msra.mxu0 0.0
        %8642 = vmatprep.subr.mxu0 0.0
        %8643 = vmatpush1.msra.mxu0 0.0
        %8644 = vmatprep.subr.mxu0 0.0
        %8645 = vmatpush1.msra.mxu0 0.0
        %8646 = vmatprep.subr.mxu0 0.0
        %8647 = vmatpush1.msra.mxu0 0.0
        %8648 = vmatprep.subr.mxu0 0.0
        %8649 = vmatpush1.msra.mxu0 0.0
        %8650 = vmatprep.subr.mxu0 0.0
        %8651 = vmatpush1.msra.mxu0 0.0
        %8652 = vmatprep.subr.mxu0 0.0
        %8653 = vmatpush1.msra.mxu0 0.0
        %8654 = vmatprep.subr.mxu0 0.0
        %8655 = vmatpush1.msra.mxu0 0.0
        %8656 = vmatprep.subr.mxu0 0.0
        %8657 = vmatpush1.msra.mxu0 0.0
        %8658 = vmatprep.subr.mxu0 0.0
        %8659 = vmatpush1.msra.mxu0 0.0
        %8660 = vmatprep.subr.mxu0 0.0
        %8661 = vmatpush1.msra.mxu0 0.0
        %8662 = vmatprep.subr.mxu0 0.0
        %8663 = vmatpush1.msra.mxu0 0.0
        %8664 = vmatprep.subr.mxu0 0.0
        %8665 = vmatpush1.msra.mxu0 0.0
        %8666 = vmatprep.subr.mxu0 0.0
        %8667 = vmatpush1.msra.mxu0 0.0
        %8668 = vmatprep.subr.mxu0 0.0
        %8669 = vmatpush1.msra.mxu0 0.0
        %8670 = vmatprep.subr.mxu0 0.0
        %8671 = vmatpush1.msra.mxu0 0.0
        %8672 = vmatprep.mubr.f32.mxu0 0.0
        %8673 = vmatmul.mubr.f32.gmra.mrb[0].mxu0 %v8535
        %v8674 = vpop.f32.mrb[0].mxu0
        %v8675 = vadd.f32 0.0, %v8674
        %v8676 = vpop.f32.mrb[0].mxu0
        %v8677 = vadd.f32 0.0, %v8676
        %8678 = vdwg.mxu0
        %8679 = vmatprep.subr.mxu0 %v8525
        %8680 = vmatpush1.msra.mxu0 %v8524
        %8681 = vmatprep.subr.mxu0 0.0
        %8682 = vmatpush1.msra.mxu0 0.0
        %8683 = vmatprep.subr.mxu0 0.0
        %8684 = vmatpush1.msra.mxu0 0.0
        %8685 = vmatprep.subr.mxu0 0.0
        %8686 = vmatpush1.msra.mxu0 0.0
        %8687 = vmatprep.subr.mxu0 0.0
        %8688 = vmatpush1.msra.mxu0 0.0
        %8689 = vmatprep.subr.mxu0 0.0
        %8690 = vmatpush1.msra.mxu0 0.0
        %8691 = vmatprep.subr.mxu0 0.0
        %8692 = vmatpush1.msra.mxu0 0.0
        %8693 = vmatprep.subr.mxu0 0.0
        %8694 = vmatpush1.msra.mxu0 0.0
        %8695 = vmatprep.subr.mxu0 0.0
        %8696 = vmatpush1.msra.mxu0 0.0
        %8697 = vmatprep.subr.mxu0 0.0
        %8698 = vmatpush1.msra.mxu0 0.0
        %8699 = vmatprep.subr.mxu0 0.0
        %8700 = vmatpush1.msra.mxu0 0.0
        %8701 = vmatprep.subr.mxu0 0.0
        %8702 = vmatpush1.msra.mxu0 0.0
        %8703 = vmatprep.subr.mxu0 0.0
        %8704 = vmatpush1.msra.mxu0 0.0
        %8705 = vmatprep.subr.mxu0 0.0
        %8706 = vmatpush1.msra.mxu0 0.0
        %8707 = vmatprep.subr.mxu0 0.0
        %8708 = vmatpush1.msra.mxu0 0.0
        %8709 = vmatprep.subr.mxu0 0.0
        %8710 = vmatpush1.msra.mxu0 0.0
        %8711 = vmatprep.subr.mxu0 0.0
        %8712 = vmatpush1.msra.mxu0 0.0
        %8713 = vmatprep.subr.mxu0 0.0
        %8714 = vmatpush1.msra.mxu0 0.0
        %8715 = vmatprep.subr.mxu0 0.0
        %8716 = vmatpush1.msra.mxu0 0.0
        %8717 = vmatprep.subr.mxu0 0.0
        %8718 = vmatpush1.msra.mxu0 0.0
        %8719 = vmatprep.subr.mxu0 0.0
        %8720 = vmatpush1.msra.mxu0 0.0
        %8721 = vmatprep.subr.mxu0 0.0
        %8722 = vmatpush1.msra.mxu0 0.0
        %8723 = vmatprep.subr.mxu0 0.0
        %8724 = vmatpush1.msra.mxu0 0.0
        %8725 = vmatprep.subr.mxu0 0.0
        %8726 = vmatpush1.msra.mxu0 0.0
        %8727 = vmatprep.subr.mxu0 0.0
        %8728 = vmatpush1.msra.mxu0 0.0
        %8729 = vmatprep.subr.mxu0 0.0
        %8730 = vmatpush1.msra.mxu0 0.0
        %8731 = vmatprep.subr.mxu0 0.0
        %8732 = vmatpush1.msra.mxu0 0.0
        %8733 = vmatprep.subr.mxu0 0.0
        %8734 = vmatpush1.msra.mxu0 0.0
        %8735 = vmatprep.subr.mxu0 0.0
        %8736 = vmatpush1.msra.mxu0 0.0
        %8737 = vmatprep.subr.mxu0 0.0
        %8738 = vmatpush1.msra.mxu0 0.0
        %8739 = vmatprep.subr.mxu0 0.0
        %8740 = vmatpush1.msra.mxu0 0.0
        %8741 = vmatprep.subr.mxu0 0.0
        %8742 = vmatpush1.msra.mxu0 0.0
        %8743 = vmatprep.mubr.f32.mxu0 0.0
        %8744 = vmatmul.mubr.f32.gmra.mrb[0].mxu0 %v8535
        %v8745 = vpop.f32.mrb[0].mxu0
        %v8746 = vadd.f32 0.0, %v8745
        %v8747 = vpop.f32.mrb[0].mxu0
        %v8748 = vadd.f32 0.0, %v8747
        %8749 = vdwg.mxu0
        %8750 = vmatprep.subr.mxu0 0.0
        %8751 = vmatpush1.msra.mxu0 %v8526
        %8752 = vmatprep.subr.mxu0 0.0
        %8753 = vmatpush1.msra.mxu0 0.0
        %8754 = vmatprep.subr.mxu0 0.0
        %8755 = vmatpush1.msra.mxu0 0.0
        %8756 = vmatprep.subr.mxu0 0.0
        %8757 = vmatpush1.msra.mxu0 0.0
        %8758 = vmatprep.subr.mxu0 0.0
        %8759 = vmatpush1.msra.mxu0 0.0
        %8760 = vmatprep.subr.mxu0 0.0
        %8761 = vmatpush1.msra.mxu0 0.0
        %8762 = vmatprep.subr.mxu0 0.0
        %8763 = vmatpush1.msra.mxu0 0.0
        %8764 = vmatprep.subr.mxu0 0.0
        %8765 = vmatpush1.msra.mxu0 0.0
        %8766 = vmatprep.subr.mxu0 0.0
        %8767 = vmatpush1.msra.mxu0 0.0
        %8768 = vmatprep.subr.mxu0 0.0
        %8769 = vmatpush1.msra.mxu0 0.0
        %8770 = vmatprep.subr.mxu0 0.0
        %8771 = vmatpush1.msra.mxu0 0.0
        %8772 = vmatprep.subr.mxu0 0.0
        %8773 = vmatpush1.msra.mxu0 0.0
        %8774 = vmatprep.subr.mxu0 0.0
        %8775 = vmatpush1.msra.mxu0 0.0
        %8776 = vmatprep.subr.mxu0 0.0
        %8777 = vmatpush1.msra.mxu0 0.0
        %8778 = vmatprep.subr.mxu0 0.0
        %8779 = vmatpush1.msra.mxu0 0.0
        %8780 = vmatprep.subr.mxu0 0.0
        %8781 = vmatpush1.msra.mxu0 0.0
        %8782 = vmatprep.subr.mxu0 0.0
        %8783 = vmatpush1.msra.mxu0 0.0
        %8784 = vmatprep.subr.mxu0 0.0
        %8785 = vmatpush1.msra.mxu0 0.0
        %8786 = vmatprep.subr.mxu0 0.0
        %8787 = vmatpush1.msra.mxu0 0.0
        %8788 = vmatprep.subr.mxu0 0.0
        %8789 = vmatpush1.msra.mxu0 0.0
        %8790 = vmatprep.subr.mxu0 0.0
        %8791 = vmatpush1.msra.mxu0 0.0
        %8792 = vmatprep.subr.mxu0 0.0
        %8793 = vmatpush1.msra.mxu0 0.0
        %8794 = vmatprep.subr.mxu0 0.0
        %8795 = vmatpush1.msra.mxu0 0.0
        %8796 = vmatprep.subr.mxu0 0.0
        %8797 = vmatpush1.msra.mxu0 0.0
        %8798 = vmatprep.subr.mxu0 0.0
        %8799 = vmatpush1.msra.mxu0 0.0
        %8800 = vmatprep.subr.mxu0 0.0
        %8801 = vmatpush1.msra.mxu0 0.0
        %8802 = vmatprep.subr.mxu0 0.0
        %8803 = vmatpush1.msra.mxu0 0.0
        %8804 = vmatprep.subr.mxu0 0.0
        %8805 = vmatpush1.msra.mxu0 0.0
        %8806 = vmatprep.subr.mxu0 0.0
        %8807 = vmatpush1.msra.mxu0 0.0
        %8808 = vmatprep.subr.mxu0 0.0
        %8809 = vmatpush1.msra.mxu0 0.0
        %8810 = vmatprep.subr.mxu0 0.0
        %8811 = vmatpush1.msra.mxu0 0.0
        %8812 = vmatprep.subr.mxu0 0.0
        %8813 = vmatpush1.msra.mxu0 0.0
        %8814 = vmatprep.mubr.f32.mxu0 0.0
        %8815 = vmatmul.mubr.f32.gmra.mrb[0].mxu0 %v8535
        %v8816 = vpop.f32.mrb[0].mxu0
        %v8817 = vadd.f32 0.0, %v8816
        %v8818 = vpop.f32.mrb[0].mxu0
        %8819 = vdwg.mxu0
        %v8820 = vadd.f32 %v8494, %v8604
        %v8821 = vadd.f32 %v8495, %v8606
        %v8822 = vadd.f32 %v8496, %v8675
        %v8823 = vadd.f32 %v8497, %v8677
        %v8824 = vadd.f32 %v8498, %v8746
        %v8825 = vadd.f32 %v8499, %v8748
        %v8826 = vadd.f32 %v8500, %v8817
        %s8827 = scalar_lea.vmem %s1, 208
        %v8828 = vld [vmem:[%s8827] sm:$0xff]
        %8829 = vrot.lane.b32.xlu0 %v6203, 34
        %v8830 = vpop.permute.xlu0 %8829
        %8831 = vrot.lane.b32.xlu0 %v6204, 34
        %v8832 = vpop.permute.xlu0 %8831
        %8833 = vrot.lane.b32.xlu0 %v6205, 34
        %v8834 = vpop.permute.xlu0 %8833
        %8835 = vrot.lane.b32.xlu0 %v6206, 34
        %v8836 = vpop.permute.xlu0 %8835
        %8837 = vrot.lane.b32.xlu0 %v6207, 34
        %v8838 = vpop.permute.xlu0 %8837
        %8839 = vrot.lane.b32.xlu0 %v6208, 34
        %v8840 = vpop.permute.xlu0 %8839
        %8841 = vrot.lane.b32.xlu0 %v6209, 34
        %v8842 = vpop.permute.xlu0 %8841
        %8843 = vrot.lane.b32.xlu0 %v6210, 34
        %v8844 = vpop.permute.xlu0 %8843
        %vm8845 = vcmask 277504
        %v8846 = vsel %vm8845, %v8830, %v8832
        %v8847 = vsel %vm8845, %v8832, %v8834
        %v8848 = vsel %vm8845, %v8834, %v8836
        %v8849 = vsel %vm8845, %v8836, %v8838
        %v8850 = vsel %vm8845, %v8838, %v8840
        %v8851 = vsel %vm8845, %v8840, %v8842
        %v8852 = vsel %vm8845, %v8842, %v8844
        %v8861 = vsel %vm415, %v8828, 0
        %8863 = vmatprep.subr.mxu0 %v8847
        %8864 = vmatpush1.msra.mxu0 %v8846
        %8865 = vmatprep.subr.mxu0 0.0
        %8866 = vmatpush1.msra.mxu0 0.0
        %8867 = vmatprep.subr.mxu0 0.0
        %8868 = vmatpush1.msra.mxu0 0.0
        %8869 = vmatprep.subr.mxu0 0.0
        %8870 = vmatpush1.msra.mxu0 0.0
        %8871 = vmatprep.subr.mxu0 0.0
        %8872 = vmatpush1.msra.mxu0 0.0
        %8873 = vmatprep.subr.mxu0 0.0
        %8874 = vmatpush1.msra.mxu0 0.0
        %8875 = vmatprep.subr.mxu0 0.0
        %8876 = vmatpush1.msra.mxu0 0.0
        %8877 = vmatprep.subr.mxu0 0.0
        %8878 = vmatpush1.msra.mxu0 0.0
        %8879 = vmatprep.subr.mxu0 0.0
        %8880 = vmatpush1.msra.mxu0 0.0
        %8881 = vmatprep.subr.mxu0 0.0
        %8882 = vmatpush1.msra.mxu0 0.0
        %8883 = vmatprep.subr.mxu0 0.0
        %8884 = vmatpush1.msra.mxu0 0.0
        %8885 = vmatprep.subr.mxu0 0.0
        %8886 = vmatpush1.msra.mxu0 0.0
        %8887 = vmatprep.subr.mxu0 0.0
        %8888 = vmatpush1.msra.mxu0 0.0
        %8889 = vmatprep.subr.mxu0 0.0
        %8890 = vmatpush1.msra.mxu0 0.0
        %8891 = vmatprep.subr.mxu0 0.0
        %8892 = vmatpush1.msra.mxu0 0.0
        %8893 = vmatprep.subr.mxu0 0.0
        %8894 = vmatpush1.msra.mxu0 0.0
        %8895 = vmatprep.subr.mxu0 0.0
        %8896 = vmatpush1.msra.mxu0 0.0
        %8897 = vmatprep.subr.mxu0 0.0
        %8898 = vmatpush1.msra.mxu0 0.0
        %8899 = vmatprep.subr.mxu0 0.0
        %8900 = vmatpush1.msra.mxu0 0.0
        %8901 = vmatprep.subr.mxu0 0.0
        %8902 = vmatpush1.msra.mxu0 0.0
        %8903 = vmatprep.subr.mxu0 0.0
        %8904 = vmatpush1.msra.mxu0 0.0
        %8905 = vmatprep.subr.mxu0 0.0
        %8906 = vmatpush1.msra.mxu0 0.0
        %8907 = vmatprep.subr.mxu0 0.0
        %8908 = vmatpush1.msra.mxu0 0.0
        %8909 = vmatprep.subr.mxu0 0.0
        %8910 = vmatpush1.msra.mxu0 0.0
        %8911 = vmatprep.subr.mxu0 0.0
        %8912 = vmatpush1.msra.mxu0 0.0
        %8913 = vmatprep.subr.mxu0 0.0
        %8914 = vmatpush1.msra.mxu0 0.0
        %8915 = vmatprep.subr.mxu0 0.0
        %8916 = vmatpush1.msra.mxu0 0.0
        %8917 = vmatprep.subr.mxu0 0.0
        %8918 = vmatpush1.msra.mxu0 0.0
        %8919 = vmatprep.subr.mxu0 0.0
        %8920 = vmatpush1.msra.mxu0 0.0
        %8921 = vmatprep.subr.mxu0 0.0
        %8922 = vmatpush1.msra.mxu0 0.0
        %8923 = vmatprep.subr.mxu0 0.0
        %8924 = vmatpush1.msra.mxu0 0.0
        %8925 = vmatprep.subr.mxu0 0.0
        %8926 = vmatpush1.msra.mxu0 0.0
        %8927 = vmatprep.mubr.f32.mxu0 0.0
        %8928 = vmatmul.mubr.f32.gmra.mrb[0].mxu0 %v8861
        %v8929 = vpop.f32.mrb[0].mxu0
        %v8930 = vadd.f32 0.0, %v8929
        %v8931 = vpop.f32.mrb[0].mxu0
        %v8932 = vadd.f32 0.0, %v8931
        %8933 = vdwg.mxu0
        %8934 = vmatprep.subr.mxu0 %v8849
        %8935 = vmatpush1.msra.mxu0 %v8848
        %8936 = vmatprep.subr.mxu0 0.0
        %8937 = vmatpush1.msra.mxu0 0.0
        %8938 = vmatprep.subr.mxu0 0.0
        %8939 = vmatpush1.msra.mxu0 0.0
        %8940 = vmatprep.subr.mxu0 0.0
        %8941 = vmatpush1.msra.mxu0 0.0
        %8942 = vmatprep.subr.mxu0 0.0
        %8943 = vmatpush1.msra.mxu0 0.0
        %8944 = vmatprep.subr.mxu0 0.0
        %8945 = vmatpush1.msra.mxu0 0.0
        %8946 = vmatprep.subr.mxu0 0.0
        %8947 = vmatpush1.msra.mxu0 0.0
        %8948 = vmatprep.subr.mxu0 0.0
        %8949 = vmatpush1.msra.mxu0 0.0
        %8950 = vmatprep.subr.mxu0 0.0
        %8951 = vmatpush1.msra.mxu0 0.0
        %8952 = vmatprep.subr.mxu0 0.0
        %8953 = vmatpush1.msra.mxu0 0.0
        %8954 = vmatprep.subr.mxu0 0.0
        %8955 = vmatpush1.msra.mxu0 0.0
        %8956 = vmatprep.subr.mxu0 0.0
        %8957 = vmatpush1.msra.mxu0 0.0
        %8958 = vmatprep.subr.mxu0 0.0
        %8959 = vmatpush1.msra.mxu0 0.0
        %8960 = vmatprep.subr.mxu0 0.0
        %8961 = vmatpush1.msra.mxu0 0.0
        %8962 = vmatprep.subr.mxu0 0.0
        %8963 = vmatpush1.msra.mxu0 0.0
        %8964 = vmatprep.subr.mxu0 0.0
        %8965 = vmatpush1.msra.mxu0 0.0
        %8966 = vmatprep.subr.mxu0 0.0
        %8967 = vmatpush1.msra.mxu0 0.0
        %8968 = vmatprep.subr.mxu0 0.0
        %8969 = vmatpush1.msra.mxu0 0.0
        %8970 = vmatprep.subr.mxu0 0.0
        %8971 = vmatpush1.msra.mxu0 0.0
        %8972 = vmatprep.subr.mxu0 0.0
        %8973 = vmatpush1.msra.mxu0 0.0
        %8974 = vmatprep.subr.mxu0 0.0
        %8975 = vmatpush1.msra.mxu0 0.0
        %8976 = vmatprep.subr.mxu0 0.0
        %8977 = vmatpush1.msra.mxu0 0.0
        %8978 = vmatprep.subr.mxu0 0.0
        %8979 = vmatpush1.msra.mxu0 0.0
        %8980 = vmatprep.subr.mxu0 0.0
        %8981 = vmatpush1.msra.mxu0 0.0
        %8982 = vmatprep.subr.mxu0 0.0
        %8983 = vmatpush1.msra.mxu0 0.0
        %8984 = vmatprep.subr.mxu0 0.0
        %8985 = vmatpush1.msra.mxu0 0.0
        %8986 = vmatprep.subr.mxu0 0.0
        %8987 = vmatpush1.msra.mxu0 0.0
        %8988 = vmatprep.subr.mxu0 0.0
        %8989 = vmatpush1.msra.mxu0 0.0
        %8990 = vmatprep.subr.mxu0 0.0
        %8991 = vmatpush1.msra.mxu0 0.0
        %8992 = vmatprep.subr.mxu0 0.0
        %8993 = vmatpush1.msra.mxu0 0.0
        %8994 = vmatprep.subr.mxu0 0.0
        %8995 = vmatpush1.msra.mxu0 0.0
        %8996 = vmatprep.subr.mxu0 0.0
        %8997 = vmatpush1.msra.mxu0 0.0
        %8998 = vmatprep.mubr.f32.mxu0 0.0
        %8999 = vmatmul.mubr.f32.gmra.mrb[0].mxu0 %v8861
        %v9000 = vpop.f32.mrb[0].mxu0
        %v9001 = vadd.f32 0.0, %v9000
        %v9002 = vpop.f32.mrb[0].mxu0
        %v9003 = vadd.f32 0.0, %v9002
        %9004 = vdwg.mxu0
        %9005 = vmatprep.subr.mxu0 %v8851
        %9006 = vmatpush1.msra.mxu0 %v8850
        %9007 = vmatprep.subr.mxu0 0.0
        %9008 = vmatpush1.msra.mxu0 0.0
        %9009 = vmatprep.subr.mxu0 0.0
        %9010 = vmatpush1.msra.mxu0 0.0
        %9011 = vmatprep.subr.mxu0 0.0
        %9012 = vmatpush1.msra.mxu0 0.0
        %9013 = vmatprep.subr.mxu0 0.0
        %9014 = vmatpush1.msra.mxu0 0.0
        %9015 = vmatprep.subr.mxu0 0.0
        %9016 = vmatpush1.msra.mxu0 0.0
        %9017 = vmatprep.subr.mxu0 0.0
        %9018 = vmatpush1.msra.mxu0 0.0
        %9019 = vmatprep.subr.mxu0 0.0
        %9020 = vmatpush1.msra.mxu0 0.0
        %9021 = vmatprep.subr.mxu0 0.0
        %9022 = vmatpush1.msra.mxu0 0.0
        %9023 = vmatprep.subr.mxu0 0.0
        %9024 = vmatpush1.msra.mxu0 0.0
        %9025 = vmatprep.subr.mxu0 0.0
        %9026 = vmatpush1.msra.mxu0 0.0
        %9027 = vmatprep.subr.mxu0 0.0
        %9028 = vmatpush1.msra.mxu0 0.0
        %9029 = vmatprep.subr.mxu0 0.0
        %9030 = vmatpush1.msra.mxu0 0.0
        %9031 = vmatprep.subr.mxu0 0.0
        %9032 = vmatpush1.msra.mxu0 0.0
        %9033 = vmatprep.subr.mxu0 0.0
        %9034 = vmatpush1.msra.mxu0 0.0
        %9035 = vmatprep.subr.mxu0 0.0
        %9036 = vmatpush1.msra.mxu0 0.0
        %9037 = vmatprep.subr.mxu0 0.0
        %9038 = vmatpush1.msra.mxu0 0.0
        %9039 = vmatprep.subr.mxu0 0.0
        %9040 = vmatpush1.msra.mxu0 0.0
        %9041 = vmatprep.subr.mxu0 0.0
        %9042 = vmatpush1.msra.mxu0 0.0
        %9043 = vmatprep.subr.mxu0 0.0
        %9044 = vmatpush1.msra.mxu0 0.0
        %9045 = vmatprep.subr.mxu0 0.0
        %9046 = vmatpush1.msra.mxu0 0.0
        %9047 = vmatprep.subr.mxu0 0.0
        %9048 = vmatpush1.msra.mxu0 0.0
        %9049 = vmatprep.subr.mxu0 0.0
        %9050 = vmatpush1.msra.mxu0 0.0
        %9051 = vmatprep.subr.mxu0 0.0
        %9052 = vmatpush1.msra.mxu0 0.0
        %9053 = vmatprep.subr.mxu0 0.0
        %9054 = vmatpush1.msra.mxu0 0.0
        %9055 = vmatprep.subr.mxu0 0.0
        %9056 = vmatpush1.msra.mxu0 0.0
        %9057 = vmatprep.subr.mxu0 0.0
        %9058 = vmatpush1.msra.mxu0 0.0
        %9059 = vmatprep.subr.mxu0 0.0
        %9060 = vmatpush1.msra.mxu0 0.0
        %9061 = vmatprep.subr.mxu0 0.0
        %9062 = vmatpush1.msra.mxu0 0.0
        %9063 = vmatprep.subr.mxu0 0.0
        %9064 = vmatpush1.msra.mxu0 0.0
        %9065 = vmatprep.subr.mxu0 0.0
        %9066 = vmatpush1.msra.mxu0 0.0
        %9067 = vmatprep.subr.mxu0 0.0
        %9068 = vmatpush1.msra.mxu0 0.0
        %9069 = vmatprep.mubr.f32.mxu0 0.0
        %9070 = vmatmul.mubr.f32.gmra.mrb[0].mxu0 %v8861
        %v9071 = vpop.f32.mrb[0].mxu0
        %v9072 = vadd.f32 0.0, %v9071
        %v9073 = vpop.f32.mrb[0].mxu0
        %v9074 = vadd.f32 0.0, %v9073
        %9075 = vdwg.mxu0
        %9076 = vmatprep.subr.mxu0 0.0
        %9077 = vmatpush1.msra.mxu0 %v8852
        %9078 = vmatprep.subr.mxu0 0.0
        %9079 = vmatpush1.msra.mxu0 0.0
        %9080 = vmatprep.subr.mxu0 0.0
        %9081 = vmatpush1.msra.mxu0 0.0
        %9082 = vmatprep.subr.mxu0 0.0
        %9083 = vmatpush1.msra.mxu0 0.0
        %9084 = vmatprep.subr.mxu0 0.0
        %9085 = vmatpush1.msra.mxu0 0.0
        %9086 = vmatprep.subr.mxu0 0.0
        %9087 = vmatpush1.msra.mxu0 0.0
        %9088 = vmatprep.subr.mxu0 0.0
        %9089 = vmatpush1.msra.mxu0 0.0
        %9090 = vmatprep.subr.mxu0 0.0
        %9091 = vmatpush1.msra.mxu0 0.0
        %9092 = vmatprep.subr.mxu0 0.0
        %9093 = vmatpush1.msra.mxu0 0.0
        %9094 = vmatprep.subr.mxu0 0.0
        %9095 = vmatpush1.msra.mxu0 0.0
        %9096 = vmatprep.subr.mxu0 0.0
        %9097 = vmatpush1.msra.mxu0 0.0
        %9098 = vmatprep.subr.mxu0 0.0
        %9099 = vmatpush1.msra.mxu0 0.0
        %9100 = vmatprep.subr.mxu0 0.0
        %9101 = vmatpush1.msra.mxu0 0.0
        %9102 = vmatprep.subr.mxu0 0.0
        %9103 = vmatpush1.msra.mxu0 0.0
        %9104 = vmatprep.subr.mxu0 0.0
        %9105 = vmatpush1.msra.mxu0 0.0
        %9106 = vmatprep.subr.mxu0 0.0
        %9107 = vmatpush1.msra.mxu0 0.0
        %9108 = vmatprep.subr.mxu0 0.0
        %9109 = vmatpush1.msra.mxu0 0.0
        %9110 = vmatprep.subr.mxu0 0.0
        %9111 = vmatpush1.msra.mxu0 0.0
        %9112 = vmatprep.subr.mxu0 0.0
        %9113 = vmatpush1.msra.mxu0 0.0
        %9114 = vmatprep.subr.mxu0 0.0
        %9115 = vmatpush1.msra.mxu0 0.0
        %9116 = vmatprep.subr.mxu0 0.0
        %9117 = vmatpush1.msra.mxu0 0.0
        %9118 = vmatprep.subr.mxu0 0.0
        %9119 = vmatpush1.msra.mxu0 0.0
        %9120 = vmatprep.subr.mxu0 0.0
        %9121 = vmatpush1.msra.mxu0 0.0
        %9122 = vmatprep.subr.mxu0 0.0
        %9123 = vmatpush1.msra.mxu0 0.0
        %9124 = vmatprep.subr.mxu0 0.0
        %9125 = vmatpush1.msra.mxu0 0.0
        %9126 = vmatprep.subr.mxu0 0.0
        %9127 = vmatpush1.msra.mxu0 0.0
        %9128 = vmatprep.subr.mxu0 0.0
        %9129 = vmatpush1.msra.mxu0 0.0
        %9130 = vmatprep.subr.mxu0 0.0
        %9131 = vmatpush1.msra.mxu0 0.0
        %9132 = vmatprep.subr.mxu0 0.0
        %9133 = vmatpush1.msra.mxu0 0.0
        %9134 = vmatprep.subr.mxu0 0.0
        %9135 = vmatpush1.msra.mxu0 0.0
        %9136 = vmatprep.subr.mxu0 0.0
        %9137 = vmatpush1.msra.mxu0 0.0
        %9138 = vmatprep.subr.mxu0 0.0
        %9139 = vmatpush1.msra.mxu0 0.0
        %9140 = vmatprep.mubr.f32.mxu0 0.0
        %9141 = vmatmul.mubr.f32.gmra.mrb[0].mxu0 %v8861
        %v9142 = vpop.f32.mrb[0].mxu0
        %v9143 = vadd.f32 0.0, %v9142
        %v9144 = vpop.f32.mrb[0].mxu0
        %9145 = vdwg.mxu0
        %v9146 = vadd.f32 %v8820, %v8930
        %v9147 = vadd.f32 %v8821, %v8932
        %v9148 = vadd.f32 %v8822, %v9001
        %v9149 = vadd.f32 %v8823, %v9003
        %v9150 = vadd.f32 %v8824, %v9072
        %v9151 = vadd.f32 %v8825, %v9074
        %v9152 = vadd.f32 %v8826, %v9143
        %v9153 = vld [vmem:[%s2] sm:$0xff]
        %9155 = vset.pattern.permute.xlu0 0
        %9156 = vperm.xlu0 %9155, %v9153
        %v9157 = vpop.permute.xlu0 %9156
        %v9159 = vadd.f32 %v9146, %v9157
        %v9160 = vadd.f32 %v9147, %v9157
        %v9161 = vadd.f32 %v9148, %v9157
        %v9162 = vadd.f32 %v9149, %v9157
        %v9163 = vadd.f32 %v9150, %v9157
        %v9164 = vadd.f32 %v9151, %v9157
        %v9165 = vadd.f32 %v9152, %v9157
        %v9166 = vld [vmem:[%s6] sm:$0xff]
        %v9168 = vlaneseq
        %v9169 = vshrl.u32 %v9168, 7
        %v9170 = vsub.s32 0, %v9169
        %v9171 = vrot.slane %v9166, %v9170
        %v9172 = vlaneseq
        %v9173 = vshrl.u32 %v9172, 7
        %v9174 = vsub.s32 1, %v9173
        %v9175 = vrot.slane %v9166, %v9174
        %v9176 = vlaneseq
        %v9177 = vshrl.u32 %v9176, 7
        %v9178 = vsub.s32 2, %v9177
        %v9179 = vrot.slane %v9166, %v9178
        %v9180 = vlaneseq
        %v9181 = vshrl.u32 %v9180, 7
        %v9182 = vsub.s32 3, %v9181
        %v9183 = vrot.slane %v9166, %v9182
        %v9184 = vlaneseq
        %v9185 = vshrl.u32 %v9184, 7
        %v9186 = vsub.s32 4, %v9185
        %v9187 = vrot.slane %v9166, %v9186
        %v9188 = vlaneseq
        %v9189 = vshrl.u32 %v9188, 7
        %v9190 = vsub.s32 5, %v9189
        %v9191 = vrot.slane %v9166, %v9190
        %v9192 = vlaneseq
        %v9193 = vshrl.u32 %v9192, 7
        %v9194 = vsub.s32 6, %v9193
        %v9195 = vrot.slane %v9166, %v9194
        %v9203 = vmul.f32 %v9159, %v9171
        %v9204 = vmul.f32 %v9160, %v9175
        %v9205 = vmul.f32 %v9161, %v9179
        %v9206 = vmul.f32 %v9162, %v9183
        %v9207 = vmul.f32 %v9163, %v9187
        %v9208 = vmul.f32 %v9164, %v9191
        %v9209 = vmul.f32 %v9165, %v9195
        %v9210 = vadd.f32 %v9203, %v9204
        %v9211 = vadd.f32 %v9210, %v9205
        %v9212 = vadd.f32 %v9211, %v9206
        %v9213 = vadd.f32 %v9212, %v9207
        %v9214 = vadd.f32 %v9213, %v9208
        %v9215 = vadd.f32 %v9214, %v9209
        %9216 = vadd.xlane.f32.xlu0 %v9215
        %v9217 = vpop.xlane.xlu0 %9216
        %v9218 = vmul.f32 %v9217, 0.001953125
        %v9219 = vld [vmem:[%s5] sm:$0xff]
        %v9221 = vsel %vm415, %v9219, 0
        %9223 = vmatprep.subr.mxu0 0.0
        %9224 = vmatpush1.msra.mxu0 %v9218
        %9225 = vmatprep.subr.mxu0 0.0
        %9226 = vmatpush1.msra.mxu0 0.0
        %9227 = vmatprep.subr.mxu0 0.0
        %9228 = vmatpush1.msra.mxu0 0.0
        %9229 = vmatprep.subr.mxu0 0.0
        %9230 = vmatpush1.msra.mxu0 0.0
        %9231 = vmatprep.subr.mxu0 0.0
        %9232 = vmatpush1.msra.mxu0 0.0
        %9233 = vmatprep.subr.mxu0 0.0
        %9234 = vmatpush1.msra.mxu0 0.0
        %9235 = vmatprep.subr.mxu0 0.0
        %9236 = vmatpush1.msra.mxu0 0.0
        %9237 = vmatprep.subr.mxu0 0.0
        %9238 = vmatpush1.msra.mxu0 0.0
        %9239 = vmatprep.subr.mxu0 0.0
        %9240 = vmatpush1.msra.mxu0 0.0
        %9241 = vmatprep.subr.mxu0 0.0
        %9242 = vmatpush1.msra.mxu0 0.0
        %9243 = vmatprep.subr.mxu0 0.0
        %9244 = vmatpush1.msra.mxu0 0.0
        %9245 = vmatprep.subr.mxu0 0.0
        %9246 = vmatpush1.msra.mxu0 0.0
        %9247 = vmatprep.subr.mxu0 0.0
        %9248 = vmatpush1.msra.mxu0 0.0
        %9249 = vmatprep.subr.mxu0 0.0
        %9250 = vmatpush1.msra.mxu0 0.0
        %9251 = vmatprep.subr.mxu0 0.0
        %9252 = vmatpush1.msra.mxu0 0.0
        %9253 = vmatprep.subr.mxu0 0.0
        %9254 = vmatpush1.msra.mxu0 0.0
        %9255 = vmatprep.subr.mxu0 0.0
        %9256 = vmatpush1.msra.mxu0 0.0
        %9257 = vmatprep.subr.mxu0 0.0
        %9258 = vmatpush1.msra.mxu0 0.0
        %9259 = vmatprep.subr.mxu0 0.0
        %9260 = vmatpush1.msra.mxu0 0.0
        %9261 = vmatprep.subr.mxu0 0.0
        %9262 = vmatpush1.msra.mxu0 0.0
        %9263 = vmatprep.subr.mxu0 0.0
        %9264 = vmatpush1.msra.mxu0 0.0
        %9265 = vmatprep.subr.mxu0 0.0
        %9266 = vmatpush1.msra.mxu0 0.0
        %9267 = vmatprep.subr.mxu0 0.0
        %9268 = vmatpush1.msra.mxu0 0.0
        %9269 = vmatprep.subr.mxu0 0.0
        %9270 = vmatpush1.msra.mxu0 0.0
        %9271 = vmatprep.subr.mxu0 0.0
        %9272 = vmatpush1.msra.mxu0 0.0
        %9273 = vmatprep.subr.mxu0 0.0
        %9274 = vmatpush1.msra.mxu0 0.0
        %9275 = vmatprep.subr.mxu0 0.0
        %9276 = vmatpush1.msra.mxu0 0.0
        %9277 = vmatprep.subr.mxu0 0.0
        %9278 = vmatpush1.msra.mxu0 0.0
        %9279 = vmatprep.subr.mxu0 0.0
        %9280 = vmatpush1.msra.mxu0 0.0
        %9281 = vmatprep.subr.mxu0 0.0
        %9282 = vmatpush1.msra.mxu0 0.0
        %9283 = vmatprep.subr.mxu0 0.0
        %9284 = vmatpush1.msra.mxu0 0.0
        %9285 = vmatprep.subr.mxu0 0.0
        %9286 = vmatpush1.msra.mxu0 0.0
        %9287 = vmatprep.mubr.f32.mxu0 0.0
        %9288 = vmatmul.mubr.f32.gmra.mrb[0].mxu0 %v9221
        %v9289 = vpop.f32.mrb[0].mxu0
        %v9290 = vadd.f32 0.0, %v9289
        %v9291 = vpop.f32.mrb[0].mxu0
        %9292 = vdwg.mxu0
        %9294 = vset.pattern.permute.xlu0 0
        %9295 = vperm.xlu0 %9294, %v9290
        %v9296 = vpop.permute.xlu0 %9295
        %v9298 = vsub.f32 %v9159, %v9296
        %v9299 = vsub.f32 %v9160, %v9296
        %v9300 = vsub.f32 %v9161, %v9296
        %v9301 = vsub.f32 %v9162, %v9296
        %v9302 = vsub.f32 %v9163, %v9296
        %v9303 = vsub.f32 %v9164, %v9296
        %v9304 = vsub.f32 %v9165, %v9296
        %v9305 = vmul.f32 %v9298, %v9298
        %v9306 = vmul.f32 %v9299, %v9299
        %v9307 = vmul.f32 %v9300, %v9300
        %v9308 = vmul.f32 %v9301, %v9301
        %v9309 = vmul.f32 %v9302, %v9302
        %v9310 = vmul.f32 %v9303, %v9303
        %v9311 = vmul.f32 %v9304, %v9304
        %v9312 = vmul.f32 %v9305, %v9171
        %v9313 = vmul.f32 %v9306, %v9175
        %v9314 = vmul.f32 %v9307, %v9179
        %v9315 = vmul.f32 %v9308, %v9183
        %v9316 = vmul.f32 %v9309, %v9187
        %v9317 = vmul.f32 %v9310, %v9191
        %v9318 = vmul.f32 %v9311, %v9195
        %v9319 = vadd.f32 %v9312, %v9313
        %v9320 = vadd.f32 %v9319, %v9314
        %v9321 = vadd.f32 %v9320, %v9315
        %v9322 = vadd.f32 %v9321, %v9316
        %v9323 = vadd.f32 %v9322, %v9317
        %v9324 = vadd.f32 %v9323, %v9318
        %9325 = vadd.xlane.f32.xlu0 %v9324
        %v9326 = vpop.xlane.xlu0 %9325
        %v9327 = vmul.f32 %v9326, 0.001953125
        %9328 = vmatprep.subr.mxu0 0.0
        %9329 = vmatpush1.msra.mxu0 %v9327
        %9330 = vmatprep.subr.mxu0 0.0
        %9331 = vmatpush1.msra.mxu0 0.0
        %9332 = vmatprep.subr.mxu0 0.0
        %9333 = vmatpush1.msra.mxu0 0.0
        %9334 = vmatprep.subr.mxu0 0.0
        %9335 = vmatpush1.msra.mxu0 0.0
        %9336 = vmatprep.subr.mxu0 0.0
        %9337 = vmatpush1.msra.mxu0 0.0
        %9338 = vmatprep.subr.mxu0 0.0
        %9339 = vmatpush1.msra.mxu0 0.0
        %9340 = vmatprep.subr.mxu0 0.0
        %9341 = vmatpush1.msra.mxu0 0.0
        %9342 = vmatprep.subr.mxu0 0.0
        %9343 = vmatpush1.msra.mxu0 0.0
        %9344 = vmatprep.subr.mxu0 0.0
        %9345 = vmatpush1.msra.mxu0 0.0
        %9346 = vmatprep.subr.mxu0 0.0
        %9347 = vmatpush1.msra.mxu0 0.0
        %9348 = vmatprep.subr.mxu0 0.0
        %9349 = vmatpush1.msra.mxu0 0.0
        %9350 = vmatprep.subr.mxu0 0.0
        %9351 = vmatpush1.msra.mxu0 0.0
        %9352 = vmatprep.subr.mxu0 0.0
        %9353 = vmatpush1.msra.mxu0 0.0
        %9354 = vmatprep.subr.mxu0 0.0
        %9355 = vmatpush1.msra.mxu0 0.0
        %9356 = vmatprep.subr.mxu0 0.0
        %9357 = vmatpush1.msra.mxu0 0.0
        %9358 = vmatprep.subr.mxu0 0.0
        %9359 = vmatpush1.msra.mxu0 0.0
        %9360 = vmatprep.subr.mxu0 0.0
        %9361 = vmatpush1.msra.mxu0 0.0
        %9362 = vmatprep.subr.mxu0 0.0
        %9363 = vmatpush1.msra.mxu0 0.0
        %9364 = vmatprep.subr.mxu0 0.0
        %9365 = vmatpush1.msra.mxu0 0.0
        %9366 = vmatprep.subr.mxu0 0.0
        %9367 = vmatpush1.msra.mxu0 0.0
        %9368 = vmatprep.subr.mxu0 0.0
        %9369 = vmatpush1.msra.mxu0 0.0
        %9370 = vmatprep.subr.mxu0 0.0
        %9371 = vmatpush1.msra.mxu0 0.0
        %9372 = vmatprep.subr.mxu0 0.0
        %9373 = vmatpush1.msra.mxu0 0.0
        %9374 = vmatprep.subr.mxu0 0.0
        %9375 = vmatpush1.msra.mxu0 0.0
        %9376 = vmatprep.subr.mxu0 0.0
        %9377 = vmatpush1.msra.mxu0 0.0
        %9378 = vmatprep.subr.mxu0 0.0
        %9379 = vmatpush1.msra.mxu0 0.0
        %9380 = vmatprep.subr.mxu0 0.0
        %9381 = vmatpush1.msra.mxu0 0.0
        %9382 = vmatprep.subr.mxu0 0.0
        %9383 = vmatpush1.msra.mxu0 0.0
        %9384 = vmatprep.subr.mxu0 0.0
        %9385 = vmatpush1.msra.mxu0 0.0
        %9386 = vmatprep.subr.mxu0 0.0
        %9387 = vmatpush1.msra.mxu0 0.0
        %9388 = vmatprep.subr.mxu0 0.0
        %9389 = vmatpush1.msra.mxu0 0.0
        %9390 = vmatprep.subr.mxu0 0.0
        %9391 = vmatpush1.msra.mxu0 0.0
        %9392 = vmatprep.mubr.f32.mxu0 0.0
        %9393 = vmatmul.mubr.f32.gmra.mrb[0].mxu0 %v9221
        %v9394 = vpop.f32.mrb[0].mxu0
        %v9395 = vadd.f32 1e-05, %v9394
        %v9396 = vpop.f32.mrb[0].mxu0
        %9397 = vdwg.mxu0
        %v9398 = vrsqrt.pop %v9395
        %9400 = vset.pattern.permute.xlu0 0
        %9401 = vperm.xlu0 %9400, %v9398
        %v9402 = vpop.permute.xlu0 %9401
        %v9404 = vmul.f32 %v9298, %v9402
        %v9405 = vmul.f32 %v9299, %v9402
        %v9406 = vmul.f32 %v9300, %v9402
        %v9407 = vmul.f32 %v9301, %v9402
        %v9408 = vmul.f32 %v9302, %v9402
        %v9409 = vmul.f32 %v9303, %v9402
        %v9410 = vmul.f32 %v9304, %v9402
        %v9411 = vld [vmem:[%s3] sm:$0xff]
        %9413 = vset.pattern.permute.xlu0 0
        %9414 = vperm.xlu0 %9413, %v9411
        %v9415 = vpop.permute.xlu0 %9414
        %v9417 = vmul.f32 %v9404, %v9415
        %v9418 = vmul.f32 %v9405, %v9415
        %v9419 = vmul.f32 %v9406, %v9415
        %v9420 = vmul.f32 %v9407, %v9415
        %v9421 = vmul.f32 %v9408, %v9415
        %v9422 = vmul.f32 %v9409, %v9415
        %v9423 = vmul.f32 %v9410, %v9415
        %v9424 = vld [vmem:[%s4] sm:$0xff]
        %9426 = vset.pattern.permute.xlu0 0
        %9427 = vperm.xlu0 %9426, %v9424
        %v9428 = vpop.permute.xlu0 %9427
        %v9430 = vadd.f32 %v9417, %v9428
        %v9431 = vadd.f32 %v9418, %v9428
        %v9432 = vadd.f32 %v9419, %v9428
        %v9433 = vadd.f32 %v9420, %v9428
        %v9434 = vadd.f32 %v9421, %v9428
        %v9435 = vadd.f32 %v9422, %v9428
        %v9436 = vadd.f32 %v9423, %v9428
        %v9437 = vld [vmem:[%s360] sm:$0xff]
        %v9438 = vadd.f32 %v9437, 1.0
        %9440 = vset.pattern.permute.xlu0 0
        %9441 = vperm.xlu0 %9440, %v9438
        %v9442 = vpop.permute.xlu0 %9441
        %v9444 = vmul.f32 %v9430, %v9442
        %v9445 = vmul.f32 %v9431, %v9442
        %v9446 = vmul.f32 %v9432, %v9442
        %v9447 = vmul.f32 %v9433, %v9442
        %v9448 = vmul.f32 %v9434, %v9442
        %v9449 = vmul.f32 %v9435, %v9442
        %v9450 = vmul.f32 %v9436, %v9442
        %v9451 = vld [vmem:[%s364] sm:$0xff]
        %9453 = vset.pattern.permute.xlu0 0
        %9454 = vperm.xlu0 %9453, %v9451
        %v9455 = vpop.permute.xlu0 %9454
        %v9457 = vadd.f32 %v9444, %v9455
        %v9458 = vadd.f32 %v9445, %v9455
        %v9459 = vadd.f32 %v9446, %v9455
        %v9460 = vadd.f32 %v9447, %v9455
        %v9461 = vadd.f32 %v9448, %v9455
        %v9462 = vadd.f32 %v9449, %v9455
        %v9463 = vadd.f32 %v9450, %v9455
        %v9464 = vsub.f32 0.0, %v9457
        %v9465 = vsub.f32 0.0, %v9458
        %v9466 = vsub.f32 0.0, %v9459
        %v9467 = vsub.f32 0.0, %v9460
        %v9468 = vsub.f32 0.0, %v9461
        %v9469 = vsub.f32 0.0, %v9462
        %v9470 = vsub.f32 0.0, %v9463
        %v9471 = vmul.f32 %v9464, 1.442695
        %v9472 = vpow.pop %v9471
        %v9473 = vmul.f32 %v9465, 1.442695
        %v9474 = vpow.pop %v9473
        %v9475 = vmul.f32 %v9466, 1.442695
        %v9476 = vpow.pop %v9475
        %v9477 = vmul.f32 %v9467, 1.442695
        %v9478 = vpow.pop %v9477
        %v9479 = vmul.f32 %v9468, 1.442695
        %v9480 = vpow.pop %v9479
        %v9481 = vmul.f32 %v9469, 1.442695
        %v9482 = vpow.pop %v9481
        %v9483 = vmul.f32 %v9470, 1.442695
        %v9484 = vpow.pop %v9483
        %v9485 = vadd.f32 %v9472, 1.0
        %v9486 = vadd.f32 %v9474, 1.0
        %v9487 = vadd.f32 %v9476, 1.0
        %v9488 = vadd.f32 %v9478, 1.0
        %v9489 = vadd.f32 %v9480, 1.0
        %v9490 = vadd.f32 %v9482, 1.0
        %v9491 = vadd.f32 %v9484, 1.0
        %v9492 = vrcp.pop %v9485
        %v9493 = vrcp.pop %v9486
        %v9494 = vrcp.pop %v9487
        %v9495 = vrcp.pop %v9488
        %v9496 = vrcp.pop %v9489
        %v9497 = vrcp.pop %v9490
        %v9498 = vrcp.pop %v9491
        %v9499 = vmul.f32 %v9457, %v9492
        %v9500 = vmul.f32 %v9458, %v9493
        %v9501 = vmul.f32 %v9459, %v9494
        %v9502 = vmul.f32 %v9460, %v9495
        %v9503 = vmul.f32 %v9461, %v9496
        %v9504 = vmul.f32 %v9462, %v9497
        %v9505 = vmul.f32 %v9463, %v9498
        %9506 = vst [vmem:[%s351] sm:$0xff] %v9499
        %9507 = vst [vmem:[%s351 + $0x8] sm:$0xff] %v9500
        %9508 = vst [vmem:[%s351 + $0x10] sm:$0xff] %v9501
        %9509 = vst [vmem:[%s351 + $0x18] sm:$0xff] %v9502
        %9510 = vst [vmem:[%s351 + $0x20] sm:$0xff] %v9503
        %9511 = vst [vmem:[%s351 + $0x28] sm:$0xff] %v9504
        %9512 = vst [vmem:[%s351 + $0x30] sm:$0xff] %v9505
        %s9513 = sand.u32 %s235, 1
        %s9514 = scalar_lea.sflag [#allocation3], %s9513
        %s9515 = sand.u32 %s235, 1
        %s9516 = smul.addr %s9515, 56
        %s9517 = scalar_lea.vmem [#allocation2], %s9516
        // Predicated region
        $region57: #{tpu_custom_call.1} parent=55 // pred_check
          %p9518 = pneg %p245
        $region58: #{tpu_custom_call.1} parent=55 // pred_check_branch
          %9520 = sbr.rel (%p9518) target = $region60
        $region59: #{tpu_custom_call.1} parent=55 // pred_region
          %s9522 = ssub.s32 896, 896
          %9523 = vsyncadd %s9514, %s9522
          %s9524 = smul.addr %s23, 7
          %s9525 = smul.addr %s9524, 128
          %s9526 = scalar_lea.hbm %s9, %s9525
          %s9528 = sshll.u32 %s9517, 4
          %s9529 = int_to_ptr.vmem [resolvable:$true] %s9528
          %9531 = dma.vmem_to_hbm [thread:$0]  %s9529, 896, %s9526, %s9514
        $region60: #{tpu_custom_call.1} parent=55 // pred_fallthru
          _
      $region56: #{tpu_custom_call.1} parent=5 // pred_fallthru
        _
      %p9532 = scmp.le.s32.totalorder 2, %s18
      // Predicated region
      $region61: #{tpu_custom_call.1} parent=5 // pred_check
        %p9533 = pneg %p9532
      $region62: #{tpu_custom_call.1} parent=5 // pred_check_branch
        %9535 = sbr.rel (%p9533) target = $region64
      $region63: #{tpu_custom_call.1} parent=5 // pred_region
        %s9536 = ssub.s32 %s18, 2
        // Predicated region
        $region65: #{tpu_custom_call.1} parent=63 // pred_check
          %p9537 = pneg %p251
        $region66: #{tpu_custom_call.1} parent=63 // pred_check_branch
          %9539 = sbr.rel (%p9537) target = $region68
        $region67: #{tpu_custom_call.1} parent=63 // pred_region
          %s9540 = sand.u32 %s236, 1
          %s9541 = scalar_lea.sflag [#allocation3], %s9540
          %s9542 = sand.u32 %s236, 1
          %s9543 = smul.addr %s9542, 56
          %s9544 = scalar_lea.vmem [#allocation2], %s9543
          %9545 = dma.done %s9541, 896
        $region68: #{tpu_custom_call.1} parent=63 // pred_fallthru
          _
      $region64: #{tpu_custom_call.1} parent=5 // pred_fallthru
        _
    $region6: #{tpu_custom_call.1} parent=1 // loop_footer
      %s22 = sadd.s32 1, %s18
    $region7: #{tpu_custom_call.1} parent=1 // loop_footer_branch
      %17 = sbr.rel target = $region3
    $region8: #{tpu_custom_call.1} parent=1 // loop_exit
      _
    %9546 = vsyncpa [#allocation3], 1
    %s9547 = scalar_lea.sflag [#allocation3], 1
    %9548 = vsyncpa %s9547, 1

</llo_original>
